<compile_context>
chip_gen: v7x
topology: tpu7x:2x2x1
jax: 0.10.0
libtpu: 0.0.40
codegen_flags: <defaults>
</compile_context>

<pallas_src>
import functools
import math

import jax
import jax.numpy as jnp
import numpy as np
from jax.experimental import pallas as pl
from jax.experimental.pallas import tpu as pltpu

EPS = 1e-10
ALPHA = 1.0
FFT_SIZES = [2048, 512, 256, 128, 64]


def _round_up(x, m):
    return (x + m - 1) // m * m


def _cdiv(a, b):
    return -(-a // b)


@functools.lru_cache(maxsize=None)
def _vmem_limit_bytes():
    """Scoped-VMEM budget derived from the actual chip: ~96 MiB on v5e/v6e
    (128 MiB physical), ~48 MiB on v7x (64 MiB physical); safe fallback 48 MiB."""
    try:
        cap = pltpu.get_tpu_info().vmem_capacity_bytes
    except Exception:  # any failure (CPU trace, missing attr) -> safe default
        cap = 64 * 1024 * 1024
    return int(min(cap * 3 // 4, 96 * 1024 * 1024))


def _freq_blocking(n_freq):
    """Pad n_freq to a multiple of 128 lanes; split into the widest (<=512 lane)
    frequency blocks that tile the padded width.  Returns (kb, n_kb)."""
    kp = _round_up(n_freq, 128)
    for kb in range(min(kp, 512), 0, -128):
        if kp % kb == 0:
            return kb, kp // kb
    return 128, kp // 128   # unreachable: kp is always a multiple of 128


# ---------------------------------------------------------------------------
# Kernel: one (frame-tile, frequency-block) step of the spectral L1 loss.
# ---------------------------------------------------------------------------
def _spec_l1_kernel(fr_ref, w_ref, lin_ref, log_ref, *, kb, n_kb):
    j = pl.program_id(1)                 # frequency block (reduction axis)

    @pl.when(j == 0)
    def _():
        lin_ref[...] = jnp.zeros_like(lin_ref)
        log_ref[...] = jnp.zeros_like(log_ref)

    fr = fr_ref[...]                     # (2*TF, n_fft) bf16: [out | target] rows
    # W is VMEM-resident (constant index map -> fetched from HBM only once).
    # Select this step's frequency block by indexing its leading axis.
    w = w_ref[0] if n_kb == 1 else w_ref[j]        # (n_fft, 2*kb) bf16
    tf = fr.shape[0] // 2

    # Single fused MXU matmul per step (both signals in M, real+imag in N).
    ri = jnp.dot(fr, w, preferred_element_type=jnp.float32)   # (2*TF, 2*kb) f32

    ro, io = ri[:tf, :kb], ri[:tf, kb:]
    rt, it = ri[tf:, :kb], ri[tf:, kb:]
    so = ro * ro + io * io               # power spectrogram (power=2)
    st = rt * rt + it * it

    lin = jnp.abs(so - st)
    # One log (EUP) instead of two: log(a) - log(b) == log(a / b).  Exact f32
    # divide keeps reference numerics; padded zeros give log(EPS/EPS) = 0.
    lg = jnp.abs(jnp.log((so + EPS) / (st + EPS)))

    # Per-(sublane, lane) partial sums: only VPU adds in the hot loop; the tiny
    # cross-lane reduce happens once in the wrapper.  Zero-padded frames and
    # zero-padded frequency columns contribute exactly 0 to both terms.
    lin_ref[...] += jnp.sum(lin.reshape(tf // 8, 8, kb), axis=0)
    log_ref[...] += jnp.sum(lg.reshape(tf // 8, 8, kb), axis=0)


# ---------------------------------------------------------------------------
# Glue: framing and window-folded DFT basis.
# ---------------------------------------------------------------------------
def _frame(wav, n_fft, hop):
    """torchaudio framing (center=True, reflect pad) without an XLA gather:
    reshape into hop-chunks and concatenate 4 shifted views (n_fft == 4*hop)."""
    B, T = wav.shape
    pad = n_fft // 2
    assert n_fft == 4 * hop, "framing trick assumes hop == n_fft // 4"
    n_frames = 1 + T // hop
    assert (n_frames + 3) * hop <= T + 2 * pad, "frames exceed padded signal"
    padded = jnp.pad(wav, ((0, 0), (pad, pad)), mode="reflect")
    chunks = padded[:, : (n_frames + 3) * hop].reshape(B, n_frames + 3, hop)
    frames = jnp.concatenate(
        [chunks[:, s:s + n_frames, :] for s in range(4)], axis=2)
    return frames.reshape(B * n_frames, n_fft), n_frames


@functools.lru_cache(maxsize=None)
def _dft_w(n_fft, kb, n_kb):
    """(n_kb, n_fft, 2*kb) bf16 basis with per-block layout [win*cos | -win*sin],
    frequency zero-padded up to kb*n_kb columns.  Built once on host per scale."""
    n_freq = n_fft // 2 + 1
    kp = kb * n_kb
    n = np.arange(n_fft, dtype=np.float64)
    k = np.arange(n_freq, dtype=np.float64)
    win = 0.5 * (1.0 - np.cos(2.0 * math.pi * n / n_fft))   # hann (periodic)
    ang = 2.0 * math.pi * n[:, None] * k[None, :] / n_fft
    wc = np.zeros((n_fft, kp), np.float64)
    ws = np.zeros((n_fft, kp), np.float64)
    wc[:, :n_freq] = win[:, None] * np.cos(ang)
    ws[:, :n_freq] = -win[:, None] * np.sin(ang)
    w = np.concatenate(
        [wc.reshape(n_fft, n_kb, kb), ws.reshape(n_fft, n_kb, kb)], axis=2)
    w = np.transpose(w, (1, 0, 2))                           # (n_kb, n_fft, 2*kb)
    return jnp.asarray(w, dtype=jnp.bfloat16)


def _scale_loss(wav_out, wav_tgt, n_fft):
    hop = n_fft // 4
    B, T = wav_out.shape
    assert T > n_fft // 2, "reflect padding requires T > n_fft // 2"
    n_freq = n_fft // 2 + 1
    kb, n_kb = _freq_blocking(n_freq)

    # TODO(synk): build the MXU LHS in-kernel from hop-strided waveform chunks
    # (and fuse the small scales into one pallas_call) to cut remaining HBM
    # traffic and XLA framing glue.
    fo, n_frames = _frame(wav_out, n_fft, hop)       # (B*n_frames, n_fft)
    ft, _ = _frame(wav_tgt, n_fft, hop)
    F = B * n_frames

    # Frame-axis tiling: TF<=512 keeps VMEM bounded on every generation while
    # keeping per-step MXU work well above the ~0.35us pipeline overhead; force
    # at least two tiles so the "parallel" axis can split across v7x's 2 TCs.
    tile_max = 512
    n_t = max(2, _cdiv(F, tile_max))
    tile_f = _round_up(_cdiv(F, n_t), 8)
    n_ftiles = _cdiv(F, tile_f)
    fp = n_ftiles * tile_f

    fo = jnp.pad(fo, ((0, fp - F), (0, 0))).reshape(n_ftiles, tile_f, n_fft)
    ft = jnp.pad(ft, ((0, fp - F), (0, 0))).reshape(n_ftiles, tile_f, n_fft)
    # Stack out/target along M inside each tile -> one MXU LHS per grid step.
    frames = jnp.concatenate([fo, ft], axis=1)       # (n_ftiles, 2*tile_f, n_fft)
    frames = frames.reshape(n_ftiles * 2 * tile_f, n_fft).astype(jnp.bfloat16)

    w = _dft_w(n_fft, kb, n_kb)                      # (n_kb, n_fft, 2*kb) bf16

    kernel = functools.partial(_spec_l1_kernel, kb=kb, n_kb=n_kb)
    lin_p, log_p = pl.pallas_call(
        kernel,
        out_shape=(jax.ShapeDtypeStruct((n_ftiles * 8, kb), jnp.float32),
                   jax.ShapeDtypeStruct((n_ftiles * 8, kb), jnp.float32)),
        grid_spec=pltpu.PrefetchScalarGridSpec(
            num_scalar_prefetch=0,
            grid=(n_ftiles, n_kb),
            in_specs=[
                pl.BlockSpec((2 * tile_f, n_fft), lambda t, j: (t, 0)),
                # Full-array block + constant index map => W stays resident in
                # VMEM for the whole grid (fetched from HBM exactly once).
                pl.BlockSpec((n_kb, n_fft, 2 * kb), lambda t, j: (0, 0, 0)),
            ],
            out_specs=[
                pl.BlockSpec((8, kb), lambda t, j: (t, 0)),
                pl.BlockSpec((8, kb), lambda t, j: (t, 0)),
            ],
        ),
        compiler_params=pltpu.CompilerParams(
            dimension_semantics=("parallel", "arbitrary"),
            vmem_limit_bytes=_vmem_limit_bytes()),
    )(frames, w)

    count = jnp.float32(B * n_freq * n_frames)       # nn.L1Loss mean denominator
    return (jnp.sum(lin_p) + ALPHA * jnp.sum(log_p)) / count


def multi_scale_spectral_loss(wav_out, wav_target):
    loss = jnp.float32(0.0)
    for n_fft in FFT_SIZES:
        loss = loss + _scale_loss(wav_out, wav_target, n_fft)
    return loss


# ---------------------------------------------------------------------------
# Pure-JAX f32 reference (torchaudio Spectrogram semantics) for validation.
# ---------------------------------------------------------------------------
def _reference_loss(wav_out, wav_target):
    total = jnp.float32(0.0)
    for n_fft in FFT_SIZES:
        hop = n_fft // 4
        pad = n_fft // 2
        n = jnp.arange(n_fft, dtype=jnp.float32)
        win = 0.5 * (1.0 - jnp.cos(2.0 * math.pi * n / n_fft))

        def spec(wav):
            B, T = wav.shape
            padded = jnp.pad(wav, ((0, 0), (pad, pad)), mode="reflect")
            n_frames = 1 + T // hop
            idx = jnp.arange(n_frames)[:, None] * hop + jnp.arange(n_fft)[None, :]
            frames = padded[:, idx] * win[None, None, :]
            return jnp.abs(jnp.fft.rfft(frames, axis=-1)) ** 2

        so, st = spec(wav_out), spec(wav_target)
        total = total + jnp.mean(jnp.abs(so - st))
        total = total + ALPHA * jnp.mean(
            jnp.abs(jnp.log(so + EPS) - jnp.log(st + EPS)))
    return total


if __name__ == "__main__":
    key = jax.random.PRNGKey(0)
    k1, k2 = jax.random.split(key)
    B, T = 2, 4096                        # T must exceed max(n_fft)//2 for reflect pad
    wav_out = jax.random.normal(k1, (B, T), dtype=jnp.float32)
    wav_target = jax.random.normal(k2, (B, T), dtype=jnp.float32)

    loss = jax.jit(multi_scale_spectral_loss)(wav_out, wav_target)
    jax.block_until_ready(loss)

    # bf16-input / f32-accumulation kernel vs pure f32 reference.
    ref = jax.jit(_reference_loss)(wav_out, wav_target)
    rel_err = float(jnp.abs(loss - ref) / jnp.abs(ref))
    assert rel_err < 2e-2, f"kernel/reference mismatch: rel_err={rel_err:.4e}"

    print("KERNEL_OK")
</pallas_src>

<mosaic_0001>
module attributes {stable_mosaic.version = 11 : i64} {
  func.func @_spec_l1_kernel(%arg0: i32, %arg1: i32, %arg2: memref<32x2048xbf16, #tpu.memory_space<vmem>>, %arg3: memref<3x2048x768xbf16, #tpu.memory_space<vmem>>, %arg4: memref<8x384xf32, #tpu.memory_space<vmem>>, %arg5: memref<8x384xf32, #tpu.memory_space<vmem>>) attributes {dimension_semantics = [#tpu.dimension_semantics<parallel>, #tpu.dimension_semantics<arbitrary>], iteration_bounds = array<i64: 2, 3>, scalar_prefetch = 0 : i64, scratch_operands = 0 : i64, tpu.core_type = #tpu.core_type<tc>, window_params = [{transform_indices = @transform_0, window_bounds = array<i64: 32, 2048>}, {pipeline_mode = #tpu.pipeline_mode<synchronous>, transform_indices = @transform_1, window_bounds = array<i64: 3, 2048, 768>}, {transform_indices = @transform_2, window_bounds = array<i64: 8, 384>}, {transform_indices = @transform_3, window_bounds = array<i64: 8, 384>}]} {
    %c0_i32 = arith.constant 0 : i32
    %0 = arith.cmpi eq, %arg1, %c0_i32 : i32
    %1 = arith.extui %0 : i1 to i32
    %c0_i32_0 = arith.constant 0 : i32
    %2 = arith.cmpi ne, %1, %c0_i32_0 : i32
    scf.if %2 {
      %cst_16 = arith.constant 0.000000e+00 : f32
      %37 = vector.broadcast %cst_16 : f32 to vector<8x384xf32>
      %c0_17 = arith.constant 0 : index
      %c0_18 = arith.constant 0 : index
      %38 = vector.load %arg4[%c0_17, %c0_18] : memref<8x384xf32, #tpu.memory_space<vmem>>, vector<8x384xf32>
      tpu.vector_store %arg4[%c0_17, %c0_18], %37 {strides = array<i32>} : memref<8x384xf32, #tpu.memory_space<vmem>>, vector<8x384xf32>,
      %cst_19 = arith.constant 0.000000e+00 : f32
      %39 = vector.broadcast %cst_19 : f32 to vector<8x384xf32>
      %c0_20 = arith.constant 0 : index
      %c0_21 = arith.constant 0 : index
      %40 = vector.load %arg5[%c0_20, %c0_21] : memref<8x384xf32, #tpu.memory_space<vmem>>, vector<8x384xf32>
      tpu.vector_store %arg5[%c0_20, %c0_21], %39 {strides = array<i32>} : memref<8x384xf32, #tpu.memory_space<vmem>>, vector<8x384xf32>,
    } else {
    }
    %c0 = arith.constant 0 : index
    %c0_1 = arith.constant 0 : index
    %3 = vector.load %arg2[%c0, %c0_1] : memref<32x2048xbf16, #tpu.memory_space<vmem>>, vector<32x2048xbf16>
    %4 = arith.index_cast %arg1 : i32 to index
    %c0_2 = arith.constant 0 : index
    %c0_3 = arith.constant 0 : index
    %5 = vector.load %arg3[%4, %c0_2, %c0_3] : memref<3x2048x768xbf16, #tpu.memory_space<vmem>>, vector<1x2048x768xbf16>
    %6 = vector.shape_cast %5 : vector<1x2048x768xbf16> to vector<2048x768xbf16>
    %cst = arith.constant dense<0.000000e+00> : vector<32x768xf32>
    %7 = tpu.matmul %3, %6, %cst {dimension_numbers = #tpu.dot_dimension_numbers<[1], [0], [0], [1], [0, 0, 1, 1], [], []>} : vector<32x2048xbf16>, vector<2048x768xbf16>, vector<32x768xf32> -> vector<32x768xf32>
    %8 = vector.extract_strided_slice %7 {offsets = [0, 0], sizes = [16, 384], strides = [1, 1]} : vector<32x768xf32> to vector<16x384xf32>
    %9 = vector.extract_strided_slice %7 {offsets = [0, 384], sizes = [16, 384], strides = [1, 1]} : vector<32x768xf32> to vector<16x384xf32>
    %10 = vector.extract_strided_slice %7 {offsets = [16, 0], sizes = [16, 384], strides = [1, 1]} : vector<32x768xf32> to vector<16x384xf32>
    %11 = vector.extract_strided_slice %7 {offsets = [16, 384], sizes = [16, 384], strides = [1, 1]} : vector<32x768xf32> to vector<16x384xf32>
    %12 = arith.mulf %8, %8 : vector<16x384xf32>
    %13 = arith.mulf %9, %9 : vector<16x384xf32>
    %14 = arith.addf %12, %13 : vector<16x384xf32>
    %15 = arith.mulf %10, %10 : vector<16x384xf32>
    %16 = arith.mulf %11, %11 : vector<16x384xf32>
    %17 = arith.addf %15, %16 : vector<16x384xf32>
    %18 = arith.subf %14, %17 : vector<16x384xf32>
    %19 = math.absf %18 : vector<16x384xf32>
    %cst_4 = arith.constant 1.000000e-10 : f32
    %20 = vector.broadcast %cst_4 : f32 to vector<16x384xf32>
    %21 = arith.addf %14, %20 : vector<16x384xf32>
    %cst_5 = arith.constant 1.000000e-10 : f32
    %22 = vector.broadcast %cst_5 : f32 to vector<16x384xf32>
    %23 = arith.addf %17, %22 : vector<16x384xf32>
    %24 = arith.divf %21, %23 : vector<16x384xf32>
    %25 = math.log %24 : vector<16x384xf32>
    %26 = math.absf %25 : vector<16x384xf32>
    %c0_6 = arith.constant 0 : index
    %c0_7 = arith.constant 0 : index
    %27 = vector.load %arg4[%c0_6, %c0_7] : memref<8x384xf32, #tpu.memory_space<vmem>>, vector<8x384xf32>
    %28 = vector.shape_cast %19 : vector<16x384xf32> to vector<2x8x384xf32>
    %cst_8 = arith.constant dense<0.000000e+00> : vector<8x384xf32>
    %29 = vector.multi_reduction <add>, %28, %cst_8 [0] : vector<2x8x384xf32> to vector<8x384xf32>
    %30 = arith.addf %27, %29 : vector<8x384xf32>
    %c0_9 = arith.constant 0 : index
    %c0_10 = arith.constant 0 : index
    %31 = vector.load %arg4[%c0_9, %c0_10] : memref<8x384xf32, #tpu.memory_space<vmem>>, vector<8x384xf32>
    tpu.vector_store %arg4[%c0_9, %c0_10], %30 {strides = array<i32>} : memref<8x384xf32, #tpu.memory_space<vmem>>, vector<8x384xf32>,
    %c0_11 = arith.constant 0 : index
    %c0_12 = arith.constant 0 : index
    %32 = vector.load %arg5[%c0_11, %c0_12] : memref<8x384xf32, #tpu.memory_space<vmem>>, vector<8x384xf32>
    %33 = vector.shape_cast %26 : vector<16x384xf32> to vector<2x8x384xf32>
    %cst_13 = arith.constant dense<0.000000e+00> : vector<8x384xf32>
    %34 = vector.multi_reduction <add>, %33, %cst_13 [0] : vector<2x8x384xf32> to vector<8x384xf32>
    %35 = arith.addf %32, %34 : vector<8x384xf32>
    %c0_14 = arith.constant 0 : index
    %c0_15 = arith.constant 0 : index
    %36 = vector.load %arg5[%c0_14, %c0_15] : memref<8x384xf32, #tpu.memory_space<vmem>>, vector<8x384xf32>
    tpu.vector_store %arg5[%c0_14, %c0_15], %35 {strides = array<i32>} : memref<8x384xf32, #tpu.memory_space<vmem>>, vector<8x384xf32>,
    return
  }
  func.func @transform_0(%arg0: i32, %arg1: i32) -> (i32, i32) {
    %c0_i32 = arith.constant 0 : i32
    %c0_i32_0 = arith.constant 0 : i32
    return %arg0, %c0_i32 : i32, i32
  }
  func.func @transform_1(%arg0: i32, %arg1: i32) -> (i32, i32, i32) {
    %c0_i32 = arith.constant 0 : i32
    %c0_i32_0 = arith.constant 0 : i32
    %c0_i32_1 = arith.constant 0 : i32
    %c0_i32_2 = arith.constant 0 : i32
    return %c0_i32, %c0_i32_0, %c0_i32_1 : i32, i32, i32
  }
  func.func @transform_2(%arg0: i32, %arg1: i32) -> (i32, i32) {
    %c0_i32 = arith.constant 0 : i32
    %c0_i32_0 = arith.constant 0 : i32
    return %arg0, %c0_i32 : i32, i32
  }
  func.func @transform_3(%arg0: i32, %arg1: i32) -> (i32, i32) {
    %c0_i32 = arith.constant 0 : i32
    %c0_i32_0 = arith.constant 0 : i32
    return %arg0, %c0_i32 : i32, i32
  }
}

module attributes {stable_mosaic.version = 11 : i64} {
  func.func @_spec_l1_kernel(%arg0: i32, %arg1: i32, %arg2: memref<80x512xbf16, #tpu.memory_space<vmem>>, %arg3: memref<1x512x768xbf16, #tpu.memory_space<vmem>>, %arg4: memref<8x384xf32, #tpu.memory_space<vmem>>, %arg5: memref<8x384xf32, #tpu.memory_space<vmem>>) attributes {dimension_semantics = [#tpu.dimension_semantics<parallel>, #tpu.dimension_semantics<arbitrary>], iteration_bounds = array<i64: 2, 1>, scalar_prefetch = 0 : i64, scratch_operands = 0 : i64, tpu.core_type = #tpu.core_type<tc>, window_params = [{transform_indices = @transform_0, window_bounds = array<i64: 80, 512>}, {pipeline_mode = #tpu.pipeline_mode<synchronous>, transform_indices = @transform_1, window_bounds = array<i64: 1, 512, 768>}, {transform_indices = @transform_2, window_bounds = array<i64: 8, 384>}, {transform_indices = @transform_3, window_bounds = array<i64: 8, 384>}]} {
    %c0_i32 = arith.constant 0 : i32
    %0 = arith.cmpi eq, %arg1, %c0_i32 : i32
    %1 = arith.extui %0 : i1 to i32
    %c0_i32_0 = arith.constant 0 : i32
    %2 = arith.cmpi ne, %1, %c0_i32_0 : i32
    scf.if %2 {
      %cst_17 = arith.constant 0.000000e+00 : f32
      %36 = vector.broadcast %cst_17 : f32 to vector<8x384xf32>
      %c0_18 = arith.constant 0 : index
      %c0_19 = arith.constant 0 : index
      %37 = vector.load %arg4[%c0_18, %c0_19] : memref<8x384xf32, #tpu.memory_space<vmem>>, vector<8x384xf32>
      tpu.vector_store %arg4[%c0_18, %c0_19], %36 {strides = array<i32>} : memref<8x384xf32, #tpu.memory_space<vmem>>, vector<8x384xf32>,
      %cst_20 = arith.constant 0.000000e+00 : f32
      %38 = vector.broadcast %cst_20 : f32 to vector<8x384xf32>
      %c0_21 = arith.constant 0 : index
      %c0_22 = arith.constant 0 : index
      %39 = vector.load %arg5[%c0_21, %c0_22] : memref<8x384xf32, #tpu.memory_space<vmem>>, vector<8x384xf32>
      tpu.vector_store %arg5[%c0_21, %c0_22], %38 {strides = array<i32>} : memref<8x384xf32, #tpu.memory_space<vmem>>, vector<8x384xf32>,
    } else {
    }
    %c0 = arith.constant 0 : index
    %c0_1 = arith.constant 0 : index
    %3 = vector.load %arg2[%c0, %c0_1] : memref<80x512xbf16, #tpu.memory_space<vmem>>, vector<80x512xbf16>
    %c0_2 = arith.constant 0 : index
    %c0_3 = arith.constant 0 : index
    %c0_4 = arith.constant 0 : index
    %4 = vector.load %arg3[%c0_2, %c0_3, %c0_4] : memref<1x512x768xbf16, #tpu.memory_space<vmem>>, vector<1x512x768xbf16>
    %5 = vector.shape_cast %4 : vector<1x512x768xbf16> to vector<512x768xbf16>
    %cst = arith.constant dense<0.000000e+00> : vector<80x768xf32>
    %6 = tpu.matmul %3, %5, %cst {dimension_numbers = #tpu.dot_dimension_numbers<[1], [0], [0], [1], [0, 0, 1, 1], [], []>} : vector<80x512xbf16>, vector<512x768xbf16>, vector<80x768xf32> -> vector<80x768xf32>
    %7 = vector.extract_strided_slice %6 {offsets = [0, 0], sizes = [40, 384], strides = [1, 1]} : vector<80x768xf32> to vector<40x384xf32>
    %8 = vector.extract_strided_slice %6 {offsets = [0, 384], sizes = [40, 384], strides = [1, 1]} : vector<80x768xf32> to vector<40x384xf32>
    %9 = vector.extract_strided_slice %6 {offsets = [40, 0], sizes = [40, 384], strides = [1, 1]} : vector<80x768xf32> to vector<40x384xf32>
    %10 = vector.extract_strided_slice %6 {offsets = [40, 384], sizes = [40, 384], strides = [1, 1]} : vector<80x768xf32> to vector<40x384xf32>
    %11 = arith.mulf %7, %7 : vector<40x384xf32>
    %12 = arith.mulf %8, %8 : vector<40x384xf32>
    %13 = arith.addf %11, %12 : vector<40x384xf32>
    %14 = arith.mulf %9, %9 : vector<40x384xf32>
    %15 = arith.mulf %10, %10 : vector<40x384xf32>
    %16 = arith.addf %14, %15 : vector<40x384xf32>
    %17 = arith.subf %13, %16 : vector<40x384xf32>
    %18 = math.absf %17 : vector<40x384xf32>
    %cst_5 = arith.constant 1.000000e-10 : f32
    %19 = vector.broadcast %cst_5 : f32 to vector<40x384xf32>
    %20 = arith.addf %13, %19 : vector<40x384xf32>
    %cst_6 = arith.constant 1.000000e-10 : f32
    %21 = vector.broadcast %cst_6 : f32 to vector<40x384xf32>
    %22 = arith.addf %16, %21 : vector<40x384xf32>
    %23 = arith.divf %20, %22 : vector<40x384xf32>
    %24 = math.log %23 : vector<40x384xf32>
    %25 = math.absf %24 : vector<40x384xf32>
    %c0_7 = arith.constant 0 : index
    %c0_8 = arith.constant 0 : index
    %26 = vector.load %arg4[%c0_7, %c0_8] : memref<8x384xf32, #tpu.memory_space<vmem>>, vector<8x384xf32>
    %27 = vector.shape_cast %18 : vector<40x384xf32> to vector<5x8x384xf32>
    %cst_9 = arith.constant dense<0.000000e+00> : vector<8x384xf32>
    %28 = vector.multi_reduction <add>, %27, %cst_9 [0] : vector<5x8x384xf32> to vector<8x384xf32>
    %29 = arith.addf %26, %28 : vector<8x384xf32>
    %c0_10 = arith.constant 0 : index
    %c0_11 = arith.constant 0 : index
    %30 = vector.load %arg4[%c0_10, %c0_11] : memref<8x384xf32, #tpu.memory_space<vmem>>, vector<8x384xf32>
    tpu.vector_store %arg4[%c0_10, %c0_11], %29 {strides = array<i32>} : memref<8x384xf32, #tpu.memory_space<vmem>>, vector<8x384xf32>,
    %c0_12 = arith.constant 0 : index
    %c0_13 = arith.constant 0 : index
    %31 = vector.load %arg5[%c0_12, %c0_13] : memref<8x384xf32, #tpu.memory_space<vmem>>, vector<8x384xf32>
    %32 = vector.shape_cast %25 : vector<40x384xf32> to vector<5x8x384xf32>
    %cst_14 = arith.constant dense<0.000000e+00> : vector<8x384xf32>
    %33 = vector.multi_reduction <add>, %32, %cst_14 [0] : vector<5x8x384xf32> to vector<8x384xf32>
    %34 = arith.addf %31, %33 : vector<8x384xf32>
    %c0_15 = arith.constant 0 : index
    %c0_16 = arith.constant 0 : index
    %35 = vector.load %arg5[%c0_15, %c0_16] : memref<8x384xf32, #tpu.memory_space<vmem>>, vector<8x384xf32>
    tpu.vector_store %arg5[%c0_15, %c0_16], %34 {strides = array<i32>} : memref<8x384xf32, #tpu.memory_space<vmem>>, vector<8x384xf32>,
    return
  }
  func.func @transform_0(%arg0: i32, %arg1: i32) -> (i32, i32) {
    %c0_i32 = arith.constant 0 : i32
    %c0_i32_0 = arith.constant 0 : i32
    return %arg0, %c0_i32 : i32, i32
  }
  func.func @transform_1(%arg0: i32, %arg1: i32) -> (i32, i32, i32) {
    %c0_i32 = arith.constant 0 : i32
    %c0_i32_0 = arith.constant 0 : i32
    %c0_i32_1 = arith.constant 0 : i32
    %c0_i32_2 = arith.constant 0 : i32
    return %c0_i32, %c0_i32_0, %c0_i32_1 : i32, i32, i32
  }
  func.func @transform_2(%arg0: i32, %arg1: i32) -> (i32, i32) {
    %c0_i32 = arith.constant 0 : i32
    %c0_i32_0 = arith.constant 0 : i32
    return %arg0, %c0_i32 : i32, i32
  }
  func.func @transform_3(%arg0: i32, %arg1: i32) -> (i32, i32) {
    %c0_i32 = arith.constant 0 : i32
    %c0_i32_0 = arith.constant 0 : i32
    return %arg0, %c0_i32 : i32, i32
  }
}

module attributes {stable_mosaic.version = 11 : i64} {
  func.func @_spec_l1_kernel(%arg0: i32, %arg1: i32, %arg2: memref<144x256xbf16, #tpu.memory_space<vmem>>, %arg3: memref<1x256x512xbf16, #tpu.memory_space<vmem>>, %arg4: memref<8x256xf32, #tpu.memory_space<vmem>>, %arg5: memref<8x256xf32, #tpu.memory_space<vmem>>) attributes {dimension_semantics = [#tpu.dimension_semantics<parallel>, #tpu.dimension_semantics<arbitrary>], iteration_bounds = array<i64: 2, 1>, scalar_prefetch = 0 : i64, scratch_operands = 0 : i64, tpu.core_type = #tpu.core_type<tc>, window_params = [{transform_indices = @transform_0, window_bounds = array<i64: 144, 256>}, {pipeline_mode = #tpu.pipeline_mode<synchronous>, transform_indices = @transform_1, window_bounds = array<i64: 1, 256, 512>}, {transform_indices = @transform_2, window_bounds = array<i64: 8, 256>}, {transform_indices = @transform_3, window_bounds = array<i64: 8, 256>}]} {
    %c0_i32 = arith.constant 0 : i32
    %0 = arith.cmpi eq, %arg1, %c0_i32 : i32
    %1 = arith.extui %0 : i1 to i32
    %c0_i32_0 = arith.constant 0 : i32
    %2 = arith.cmpi ne, %1, %c0_i32_0 : i32
    scf.if %2 {
      %cst_17 = arith.constant 0.000000e+00 : f32
      %36 = vector.broadcast %cst_17 : f32 to vector<8x256xf32>
      %c0_18 = arith.constant 0 : index
      %c0_19 = arith.constant 0 : index
      %37 = vector.load %arg4[%c0_18, %c0_19] : memref<8x256xf32, #tpu.memory_space<vmem>>, vector<8x256xf32>
      tpu.vector_store %arg4[%c0_18, %c0_19], %36 {strides = array<i32>} : memref<8x256xf32, #tpu.memory_space<vmem>>, vector<8x256xf32>,
      %cst_20 = arith.constant 0.000000e+00 : f32
      %38 = vector.broadcast %cst_20 : f32 to vector<8x256xf32>
      %c0_21 = arith.constant 0 : index
      %c0_22 = arith.constant 0 : index
      %39 = vector.load %arg5[%c0_21, %c0_22] : memref<8x256xf32, #tpu.memory_space<vmem>>, vector<8x256xf32>
      tpu.vector_store %arg5[%c0_21, %c0_22], %38 {strides = array<i32>} : memref<8x256xf32, #tpu.memory_space<vmem>>, vector<8x256xf32>,
    } else {
    }
    %c0 = arith.constant 0 : index
    %c0_1 = arith.constant 0 : index
    %3 = vector.load %arg2[%c0, %c0_1] : memref<144x256xbf16, #tpu.memory_space<vmem>>, vector<144x256xbf16>
    %c0_2 = arith.constant 0 : index
    %c0_3 = arith.constant 0 : index
    %c0_4 = arith.constant 0 : index
    %4 = vector.load %arg3[%c0_2, %c0_3, %c0_4] : memref<1x256x512xbf16, #tpu.memory_space<vmem>>, vector<1x256x512xbf16>
    %5 = vector.shape_cast %4 : vector<1x256x512xbf16> to vector<256x512xbf16>
    %cst = arith.constant dense<0.000000e+00> : vector<144x512xf32>
    %6 = tpu.matmul %3, %5, %cst {dimension_numbers = #tpu.dot_dimension_numbers<[1], [0], [0], [1], [0, 0, 1, 1], [], []>} : vector<144x256xbf16>, vector<256x512xbf16>, vector<144x512xf32> -> vector<144x512xf32>
    %7 = vector.extract_strided_slice %6 {offsets = [0, 0], sizes = [72, 256], strides = [1, 1]} : vector<144x512xf32> to vector<72x256xf32>
    %8 = vector.extract_strided_slice %6 {offsets = [0, 256], sizes = [72, 256], strides = [1, 1]} : vector<144x512xf32> to vector<72x256xf32>
    %9 = vector.extract_strided_slice %6 {offsets = [72, 0], sizes = [72, 256], strides = [1, 1]} : vector<144x512xf32> to vector<72x256xf32>
    %10 = vector.extract_strided_slice %6 {offsets = [72, 256], sizes = [72, 256], strides = [1, 1]} : vector<144x512xf32> to vector<72x256xf32>
    %11 = arith.mulf %7, %7 : vector<72x256xf32>
    %12 = arith.mulf %8, %8 : vector<72x256xf32>
    %13 = arith.addf %11, %12 : vector<72x256xf32>
    %14 = arith.mulf %9, %9 : vector<72x256xf32>
    %15 = arith.mulf %10, %10 : vector<72x256xf32>
    %16 = arith.addf %14, %15 : vector<72x256xf32>
    %17 = arith.subf %13, %16 : vector<72x256xf32>
    %18 = math.absf %17 : vector<72x256xf32>
    %cst_5 = arith.constant 1.000000e-10 : f32
    %19 = vector.broadcast %cst_5 : f32 to vector<72x256xf32>
    %20 = arith.addf %13, %19 : vector<72x256xf32>
    %cst_6 = arith.constant 1.000000e-10 : f32
    %21 = vector.broadcast %cst_6 : f32 to vector<72x256xf32>
    %22 = arith.addf %16, %21 : vector<72x256xf32>
    %23 = arith.divf %20, %22 : vector<72x256xf32>
    %24 = math.log %23 : vector<72x256xf32>
    %25 = math.absf %24 : vector<72x256xf32>
    %c0_7 = arith.constant 0 : index
    %c0_8 = arith.constant 0 : index
    %26 = vector.load %arg4[%c0_7, %c0_8] : memref<8x256xf32, #tpu.memory_space<vmem>>, vector<8x256xf32>
    %27 = vector.shape_cast %18 : vector<72x256xf32> to vector<9x8x256xf32>
    %cst_9 = arith.constant dense<0.000000e+00> : vector<8x256xf32>
    %28 = vector.multi_reduction <add>, %27, %cst_9 [0] : vector<9x8x256xf32> to vector<8x256xf32>
    %29 = arith.addf %26, %28 : vector<8x256xf32>
    %c0_10 = arith.constant 0 : index
    %c0_11 = arith.constant 0 : index
    %30 = vector.load %arg4[%c0_10, %c0_11] : memref<8x256xf32, #tpu.memory_space<vmem>>, vector<8x256xf32>
    tpu.vector_store %arg4[%c0_10, %c0_11], %29 {strides = array<i32>} : memref<8x256xf32, #tpu.memory_space<vmem>>, vector<8x256xf32>,
    %c0_12 = arith.constant 0 : index
    %c0_13 = arith.constant 0 : index
    %31 = vector.load %arg5[%c0_12, %c0_13] : memref<8x256xf32, #tpu.memory_space<vmem>>, vector<8x256xf32>
    %32 = vector.shape_cast %25 : vector<72x256xf32> to vector<9x8x256xf32>
    %cst_14 = arith.constant dense<0.000000e+00> : vector<8x256xf32>
    %33 = vector.multi_reduction <add>, %32, %cst_14 [0] : vector<9x8x256xf32> to vector<8x256xf32>
    %34 = arith.addf %31, %33 : vector<8x256xf32>
    %c0_15 = arith.constant 0 : index
    %c0_16 = arith.constant 0 : index
    %35 = vector.load %arg5[%c0_15, %c0_16] : memref<8x256xf32, #tpu.memory_space<vmem>>, vector<8x256xf32>
    tpu.vector_store %arg5[%c0_15, %c0_16], %34 {strides = array<i32>} : memref<8x256xf32, #tpu.memory_space<vmem>>, vector<8x256xf32>,
    return
  }
  func.func @transform_0(%arg0: i32, %arg1: i32) -> (i32, i32) {
    %c0_i32 = arith.constant 0 : i32
    %c0_i32_0 = arith.constant 0 : i32
    return %arg0, %c0_i32 : i32, i32
  }
  func.func @transform_1(%arg0: i32, %arg1: i32) -> (i32, i32, i32) {
    %c0_i32 = arith.constant 0 : i32
    %c0_i32_0 = arith.constant 0 : i32
    %c0_i32_1 = arith.constant 0 : i32
    %c0_i32_2 = arith.constant 0 : i32
    return %c0_i32, %c0_i32_0, %c0_i32_1 : i32, i32, i32
  }
  func.func @transform_2(%arg0: i32, %arg1: i32) -> (i32, i32) {
    %c0_i32 = arith.constant 0 : i32
    %c0_i32_0 = arith.constant 0 : i32
    return %arg0, %c0_i32 : i32, i32
  }
  func.func @transform_3(%arg0: i32, %arg1: i32) -> (i32, i32) {
    %c0_i32 = arith.constant 0 : i32
    %c0_i32_0 = arith.constant 0 : i32
    return %arg0, %c0_i32 : i32, i32
  }
}

module attributes {stable_mosaic.version = 11 : i64} {
  func.func @_spec_l1_kernel(%arg0: i32, %arg1: i32, %arg2: memref<272x128xbf16, #tpu.memory_space<vmem>>, %arg3: memref<1x128x256xbf16, #tpu.memory_space<vmem>>, %arg4: memref<8x128xf32, #tpu.memory_space<vmem>>, %arg5: memref<8x128xf32, #tpu.memory_space<vmem>>) attributes {dimension_semantics = [#tpu.dimension_semantics<parallel>, #tpu.dimension_semantics<arbitrary>], iteration_bounds = array<i64: 2, 1>, scalar_prefetch = 0 : i64, scratch_operands = 0 : i64, tpu.core_type = #tpu.core_type<tc>, window_params = [{transform_indices = @transform_0, window_bounds = array<i64: 272, 128>}, {pipeline_mode = #tpu.pipeline_mode<synchronous>, transform_indices = @transform_1, window_bounds = array<i64: 1, 128, 256>}, {transform_indices = @transform_2, window_bounds = array<i64: 8, 128>}, {transform_indices = @transform_3, window_bounds = array<i64: 8, 128>}]} {
    %c0_i32 = arith.constant 0 : i32
    %0 = arith.cmpi eq, %arg1, %c0_i32 : i32
    %1 = arith.extui %0 : i1 to i32
    %c0_i32_0 = arith.constant 0 : i32
    %2 = arith.cmpi ne, %1, %c0_i32_0 : i32
    scf.if %2 {
      %cst_17 = arith.constant 0.000000e+00 : f32
      %36 = vector.broadcast %cst_17 : f32 to vector<8x128xf32>
      %c0_18 = arith.constant 0 : index
      %c0_19 = arith.constant 0 : index
      %37 = vector.load %arg4[%c0_18, %c0_19] : memref<8x128xf32, #tpu.memory_space<vmem>>, vector<8x128xf32>
      tpu.vector_store %arg4[%c0_18, %c0_19], %36 {strides = array<i32>} : memref<8x128xf32, #tpu.memory_space<vmem>>, vector<8x128xf32>,
      %cst_20 = arith.constant 0.000000e+00 : f32
      %38 = vector.broadcast %cst_20 : f32 to vector<8x128xf32>
      %c0_21 = arith.constant 0 : index
      %c0_22 = arith.constant 0 : index
      %39 = vector.load %arg5[%c0_21, %c0_22] : memref<8x128xf32, #tpu.memory_space<vmem>>, vector<8x128xf32>
      tpu.vector_store %arg5[%c0_21, %c0_22], %38 {strides = array<i32>} : memref<8x128xf32, #tpu.memory_space<vmem>>, vector<8x128xf32>,
    } else {
    }
    %c0 = arith.constant 0 : index
    %c0_1 = arith.constant 0 : index
    %3 = vector.load %arg2[%c0, %c0_1] : memref<272x128xbf16, #tpu.memory_space<vmem>>, vector<272x128xbf16>
    %c0_2 = arith.constant 0 : index
    %c0_3 = arith.constant 0 : index
    %c0_4 = arith.constant 0 : index
    %4 = vector.load %arg3[%c0_2, %c0_3, %c0_4] : memref<1x128x256xbf16, #tpu.memory_space<vmem>>, vector<1x128x256xbf16>
    %5 = vector.shape_cast %4 : vector<1x128x256xbf16> to vector<128x256xbf16>
    %cst = arith.constant dense<0.000000e+00> : vector<272x256xf32>
    %6 = tpu.matmul %3, %5, %cst {dimension_numbers = #tpu.dot_dimension_numbers<[1], [0], [0], [1], [0, 0, 1, 1], [], []>} : vector<272x128xbf16>, vector<128x256xbf16>, vector<272x256xf32> -> vector<272x256xf32>
    %7 = vector.extract_strided_slice %6 {offsets = [0, 0], sizes = [136, 128], strides = [1, 1]} : vector<272x256xf32> to vector<136x128xf32>
    %8 = vector.extract_strided_slice %6 {offsets = [0, 128], sizes = [136, 128], strides = [1, 1]} : vector<272x256xf32> to vector<136x128xf32>
    %9 = vector.extract_strided_slice %6 {offsets = [136, 0], sizes = [136, 128], strides = [1, 1]} : vector<272x256xf32> to vector<136x128xf32>
    %10 = vector.extract_strided_slice %6 {offsets = [136, 128], sizes = [136, 128], strides = [1, 1]} : vector<272x256xf32> to vector<136x128xf32>
    %11 = arith.mulf %7, %7 : vector<136x128xf32>
    %12 = arith.mulf %8, %8 : vector<136x128xf32>
    %13 = arith.addf %11, %12 : vector<136x128xf32>
    %14 = arith.mulf %9, %9 : vector<136x128xf32>
    %15 = arith.mulf %10, %10 : vector<136x128xf32>
    %16 = arith.addf %14, %15 : vector<136x128xf32>
    %17 = arith.subf %13, %16 : vector<136x128xf32>
    %18 = math.absf %17 : vector<136x128xf32>
    %cst_5 = arith.constant 1.000000e-10 : f32
    %19 = vector.broadcast %cst_5 : f32 to vector<136x128xf32>
    %20 = arith.addf %13, %19 : vector<136x128xf32>
    %cst_6 = arith.constant 1.000000e-10 : f32
    %21 = vector.broadcast %cst_6 : f32 to vector<136x128xf32>
    %22 = arith.addf %16, %21 : vector<136x128xf32>
    %23 = arith.divf %20, %22 : vector<136x128xf32>
    %24 = math.log %23 : vector<136x128xf32>
    %25 = math.absf %24 : vector<136x128xf32>
    %c0_7 = arith.constant 0 : index
    %c0_8 = arith.constant 0 : index
    %26 = vector.load %arg4[%c0_7, %c0_8] : memref<8x128xf32, #tpu.memory_space<vmem>>, vector<8x128xf32>
    %27 = vector.shape_cast %18 : vector<136x128xf32> to vector<17x8x128xf32>
    %cst_9 = arith.constant dense<0.000000e+00> : vector<8x128xf32>
    %28 = vector.multi_reduction <add>, %27, %cst_9 [0] : vector<17x8x128xf32> to vector<8x128xf32>
    %29 = arith.addf %26, %28 : vector<8x128xf32>
    %c0_10 = arith.constant 0 : index
    %c0_11 = arith.constant 0 : index
    %30 = vector.load %arg4[%c0_10, %c0_11] : memref<8x128xf32, #tpu.memory_space<vmem>>, vector<8x128xf32>
    tpu.vector_store %arg4[%c0_10, %c0_11], %29 {strides = array<i32>} : memref<8x128xf32, #tpu.memory_space<vmem>>, vector<8x128xf32>,
    %c0_12 = arith.constant 0 : index
    %c0_13 = arith.constant 0 : index
    %31 = vector.load %arg5[%c0_12, %c0_13] : memref<8x128xf32, #tpu.memory_space<vmem>>, vector<8x128xf32>
    %32 = vector.shape_cast %25 : vector<136x128xf32> to vector<17x8x128xf32>
    %cst_14 = arith.constant dense<0.000000e+00> : vector<8x128xf32>
    %33 = vector.multi_reduction <add>, %32, %cst_14 [0] : vector<17x8x128xf32> to vector<8x128xf32>
    %34 = arith.addf %31, %33 : vector<8x128xf32>
    %c0_15 = arith.constant 0 : index
    %c0_16 = arith.constant 0 : index
    %35 = vector.load %arg5[%c0_15, %c0_16] : memref<8x128xf32, #tpu.memory_space<vmem>>, vector<8x128xf32>
    tpu.vector_store %arg5[%c0_15, %c0_16], %34 {strides = array<i32>} : memref<8x128xf32, #tpu.memory_space<vmem>>, vector<8x128xf32>,
    return
  }
  func.func @transform_0(%arg0: i32, %arg1: i32) -> (i32, i32) {
    %c0_i32 = arith.constant 0 : i32
    %c0_i32_0 = arith.constant 0 : i32
    return %arg0, %c0_i32 : i32, i32
  }
  func.func @transform_1(%arg0: i32, %arg1: i32) -> (i32, i32, i32) {
    %c0_i32 = arith.constant 0 : i32
    %c0_i32_0 = arith.constant 0 : i32
    %c0_i32_1 = arith.constant 0 : i32
    %c0_i32_2 = arith.constant 0 : i32
    return %c0_i32, %c0_i32_0, %c0_i32_1 : i32, i32, i32
  }
  func.func @transform_2(%arg0: i32, %arg1: i32) -> (i32, i32) {
    %c0_i32 = arith.constant 0 : i32
    %c0_i32_0 = arith.constant 0 : i32
    return %arg0, %c0_i32 : i32, i32
  }
  func.func @transform_3(%arg0: i32, %arg1: i32) -> (i32, i32) {
    %c0_i32 = arith.constant 0 : i32
    %c0_i32_0 = arith.constant 0 : i32
    return %arg0, %c0_i32 : i32, i32
  }
}

module attributes {stable_mosaic.version = 11 : i64} {
  func.func @_spec_l1_kernel(%arg0: i32, %arg1: i32, %arg2: memref<528x64xbf16, #tpu.memory_space<vmem>>, %arg3: memref<1x64x256xbf16, #tpu.memory_space<vmem>>, %arg4: memref<8x128xf32, #tpu.memory_space<vmem>>, %arg5: memref<8x128xf32, #tpu.memory_space<vmem>>) attributes {dimension_semantics = [#tpu.dimension_semantics<parallel>, #tpu.dimension_semantics<arbitrary>], iteration_bounds = array<i64: 2, 1>, scalar_prefetch = 0 : i64, scratch_operands = 0 : i64, tpu.core_type = #tpu.core_type<tc>, window_params = [{transform_indices = @transform_0, window_bounds = array<i64: 528, 64>}, {pipeline_mode = #tpu.pipeline_mode<synchronous>, transform_indices = @transform_1, window_bounds = array<i64: 1, 64, 256>}, {transform_indices = @transform_2, window_bounds = array<i64: 8, 128>}, {transform_indices = @transform_3, window_bounds = array<i64: 8, 128>}]} {
    %c0_i32 = arith.constant 0 : i32
    %0 = arith.cmpi eq, %arg1, %c0_i32 : i32
    %1 = arith.extui %0 : i1 to i32
    %c0_i32_0 = arith.constant 0 : i32
    %2 = arith.cmpi ne, %1, %c0_i32_0 : i32
    scf.if %2 {
      %cst_17 = arith.constant 0.000000e+00 : f32
      %36 = vector.broadcast %cst_17 : f32 to vector<8x128xf32>
      %c0_18 = arith.constant 0 : index
      %c0_19 = arith.constant 0 : index
      %37 = vector.load %arg4[%c0_18, %c0_19] : memref<8x128xf32, #tpu.memory_space<vmem>>, vector<8x128xf32>
      tpu.vector_store %arg4[%c0_18, %c0_19], %36 {strides = array<i32>} : memref<8x128xf32, #tpu.memory_space<vmem>>, vector<8x128xf32>,
      %cst_20 = arith.constant 0.000000e+00 : f32
      %38 = vector.broadcast %cst_20 : f32 to vector<8x128xf32>
      %c0_21 = arith.constant 0 : index
      %c0_22 = arith.constant 0 : index
      %39 = vector.load %arg5[%c0_21, %c0_22] : memref<8x128xf32, #tpu.memory_space<vmem>>, vector<8x128xf32>
      tpu.vector_store %arg5[%c0_21, %c0_22], %38 {strides = array<i32>} : memref<8x128xf32, #tpu.memory_space<vmem>>, vector<8x128xf32>,
    } else {
    }
    %c0 = arith.constant 0 : index
    %c0_1 = arith.constant 0 : index
    %3 = vector.load %arg2[%c0, %c0_1] : memref<528x64xbf16, #tpu.memory_space<vmem>>, vector<528x64xbf16>
    %c0_2 = arith.constant 0 : index
    %c0_3 = arith.constant 0 : index
    %c0_4 = arith.constant 0 : index
    %4 = vector.load %arg3[%c0_2, %c0_3, %c0_4] : memref<1x64x256xbf16, #tpu.memory_space<vmem>>, vector<1x64x256xbf16>
    %5 = vector.shape_cast %4 : vector<1x64x256xbf16> to vector<64x256xbf16>
    %cst = arith.constant dense<0.000000e+00> : vector<528x256xf32>
    %6 = tpu.matmul %3, %5, %cst {dimension_numbers = #tpu.dot_dimension_numbers<[1], [0], [0], [1], [0, 0, 1, 1], [], []>} : vector<528x64xbf16>, vector<64x256xbf16>, vector<528x256xf32> -> vector<528x256xf32>
    %7 = vector.extract_strided_slice %6 {offsets = [0, 0], sizes = [264, 128], strides = [1, 1]} : vector<528x256xf32> to vector<264x128xf32>
    %8 = vector.extract_strided_slice %6 {offsets = [0, 128], sizes = [264, 128], strides = [1, 1]} : vector<528x256xf32> to vector<264x128xf32>
    %9 = vector.extract_strided_slice %6 {offsets = [264, 0], sizes = [264, 128], strides = [1, 1]} : vector<528x256xf32> to vector<264x128xf32>
    %10 = vector.extract_strided_slice %6 {offsets = [264, 128], sizes = [264, 128], strides = [1, 1]} : vector<528x256xf32> to vector<264x128xf32>
    %11 = arith.mulf %7, %7 : vector<264x128xf32>
    %12 = arith.mulf %8, %8 : vector<264x128xf32>
    %13 = arith.addf %11, %12 : vector<264x128xf32>
    %14 = arith.mulf %9, %9 : vector<264x128xf32>
    %15 = arith.mulf %10, %10 : vector<264x128xf32>
    %16 = arith.addf %14, %15 : vector<264x128xf32>
    %17 = arith.subf %13, %16 : vector<264x128xf32>
    %18 = math.absf %17 : vector<264x128xf32>
    %cst_5 = arith.constant 1.000000e-10 : f32
    %19 = vector.broadcast %cst_5 : f32 to vector<264x128xf32>
    %20 = arith.addf %13, %19 : vector<264x128xf32>
    %cst_6 = arith.constant 1.000000e-10 : f32
    %21 = vector.broadcast %cst_6 : f32 to vector<264x128xf32>
    %22 = arith.addf %16, %21 : vector<264x128xf32>
    %23 = arith.divf %20, %22 : vector<264x128xf32>
    %24 = math.log %23 : vector<264x128xf32>
    %25 = math.absf %24 : vector<264x128xf32>
    %c0_7 = arith.constant 0 : index
    %c0_8 = arith.constant 0 : index
    %26 = vector.load %arg4[%c0_7, %c0_8] : memref<8x128xf32, #tpu.memory_space<vmem>>, vector<8x128xf32>
    %27 = vector.shape_cast %18 : vector<264x128xf32> to vector<33x8x128xf32>
    %cst_9 = arith.constant dense<0.000000e+00> : vector<8x128xf32>
    %28 = vector.multi_reduction <add>, %27, %cst_9 [0] : vector<33x8x128xf32> to vector<8x128xf32>
    %29 = arith.addf %26, %28 : vector<8x128xf32>
    %c0_10 = arith.constant 0 : index
    %c0_11 = arith.constant 0 : index
    %30 = vector.load %arg4[%c0_10, %c0_11] : memref<8x128xf32, #tpu.memory_space<vmem>>, vector<8x128xf32>
    tpu.vector_store %arg4[%c0_10, %c0_11], %29 {strides = array<i32>} : memref<8x128xf32, #tpu.memory_space<vmem>>, vector<8x128xf32>,
    %c0_12 = arith.constant 0 : index
    %c0_13 = arith.constant 0 : index
    %31 = vector.load %arg5[%c0_12, %c0_13] : memref<8x128xf32, #tpu.memory_space<vmem>>, vector<8x128xf32>
    %32 = vector.shape_cast %25 : vector<264x128xf32> to vector<33x8x128xf32>
    %cst_14 = arith.constant dense<0.000000e+00> : vector<8x128xf32>
    %33 = vector.multi_reduction <add>, %32, %cst_14 [0] : vector<33x8x128xf32> to vector<8x128xf32>
    %34 = arith.addf %31, %33 : vector<8x128xf32>
    %c0_15 = arith.constant 0 : index
    %c0_16 = arith.constant 0 : index
    %35 = vector.load %arg5[%c0_15, %c0_16] : memref<8x128xf32, #tpu.memory_space<vmem>>, vector<8x128xf32>
    tpu.vector_store %arg5[%c0_15, %c0_16], %34 {strides = array<i32>} : memref<8x128xf32, #tpu.memory_space<vmem>>, vector<8x128xf32>,
    return
  }
  func.func @transform_0(%arg0: i32, %arg1: i32) -> (i32, i32) {
    %c0_i32 = arith.constant 0 : i32
    %c0_i32_0 = arith.constant 0 : i32
    return %arg0, %c0_i32 : i32, i32
  }
  func.func @transform_1(%arg0: i32, %arg1: i32) -> (i32, i32, i32) {
    %c0_i32 = arith.constant 0 : i32
    %c0_i32_0 = arith.constant 0 : i32
    %c0_i32_1 = arith.constant 0 : i32
    %c0_i32_2 = arith.constant 0 : i32
    return %c0_i32, %c0_i32_0, %c0_i32_1 : i32, i32, i32
  }
  func.func @transform_2(%arg0: i32, %arg1: i32) -> (i32, i32) {
    %c0_i32 = arith.constant 0 : i32
    %c0_i32_0 = arith.constant 0 : i32
    return %arg0, %c0_i32 : i32, i32
  }
  func.func @transform_3(%arg0: i32, %arg1: i32) -> (i32, i32) {
    %c0_i32 = arith.constant 0 : i32
    %c0_i32_0 = arith.constant 0 : i32
    return %arg0, %c0_i32 : i32, i32
  }
}

</mosaic_0001>

<llo_original>
// kernel: multi_scale_spectral_loss.6
$region0: #{multi_scale_spectral_loss.6}
  #allocation0 [shape = 'u32[]', space=smem, size = 0x4, offset = 0x4, fixed_abs, tag = 'smem constant byte address 0x4 - core index']
  #allocation1 [shape = 'u32[144,128]{1,0:T(1,128)}', space=vmem, size = 0x12000, scoped, tag = 'internal scratch']
  %s0 = inlined_call_operand.vmem [shape: bf16[160,512], index: 0, kind: input, shape index: {}]
  %s1 = inlined_call_operand.vmem [shape: bf16[1,512,768], index: 1, kind: input, shape index: {}]
  %s2 = inlined_call_operand.vmem [shape: f32[16,384], index: 2, kind: output, shape index: {0}]
  %s3 = inlined_call_operand.vmem [shape: f32[16,384], index: 3, kind: output, shape index: {1}]
  %4 = xla_tuple %s2, %s3
  %s5 = sld [smem:[#allocation0]]
  $region53: #{multi_scale_spectral_loss.6} parent=0
    _
  %s7 = ssub.s32 1, %s5
  %s8 = scalar_select 0, %s7, %s5
  loop: start=0, step=1, limit=4
  $region2: #{multi_scale_spectral_loss.6} parent=0 // loop_pre_header
    _
  $region3: #{multi_scale_spectral_loss.6} parent=0 // loop_header
    %s10 = sphi 0, %s14
    %p11 = scmp.ge.s32.totalorder %s10, 4
    %s17 = sphi 0, %s29
    %s18 = sphi 0, %s25
    %s19 = sphi 0, %s17
    %s20 = sphi 0, %s18
    %s21 = sphi 0, %s19
    %s22 = sphi 0, %s20
    %s32 = sphi 0, %s34
    %s35 = sphi 0, %s32
    %s36 = sphi 0, %s35
    %s52 = sphi 0, %s36
    %s56 = sphi 0, %s56
    %s58 = sphi 0, %s56
    %s59 = sphi 0, %s58
    %s73 = sphi 0, %s59
    %s79 = sphi 0, %s81
    %s82 = sphi 0, %s79
    %s83 = sphi 0, %s82
    %s99 = sphi 0, %s83
    %s105 = sphi 0, %s107
    %s108 = sphi 0, %s105
    %s109 = sphi 0, %s108
    %s125 = sphi 0, %s109
  $region4: #{multi_scale_spectral_loss.6} parent=0 // loop_header_branch
    %13 = sbr.rel (%p11) target = $region8
  $region5: #{multi_scale_spectral_loss.6} parent=0 // loop_body
    %s15 = ssub.s32 %s10, 1
    %s16 = ssub.s32 %s10, 2
    %s23 = sadd.s32 1, %s18
    %p24 = scmp.ge.s32.totalorder %s23, 1
    %s25 = scalar_select %p24, 0, %s23
    %s26 = sadd.s32 1, %s17
    %s27 = scalar_select %p24, %s26, %s17
    %p28 = scmp.ge.s32.totalorder %s27, 2
    %s29 = scalar_select %p28, 0, %s27
    %s30 = ssub.s32 %s17, %s29
    %p31 = scmp.eq.s32.totalorder %s30, 0
    %s33 = sadd.s32 %s32, 1
    %s34 = scalar_select %p31, %s32, %s33
    %p37 = pneg %p31
    %p38 = scmp.eq.s32.totalorder %s10, 1
    %p39 = por %p37, %p38
    %p40 = scmp.ne.s32.totalorder %s32, %s35
    %p41 = scmp.eq.s32.totalorder %s10, 0
    %p42 = por %p40, %p41
    %p43 = scmp.ne.s32.totalorder %s32, %s35
    %p44 = scmp.eq.s32.totalorder %s15, 1
    %p45 = por %p43, %p44
    %p46 = scmp.ne.s32.totalorder %s35, %s36
    %p47 = scmp.eq.s32.totalorder %s15, 0
    %p48 = por %p46, %p47
    %p49 = scmp.ne.s32.totalorder %s35, %s36
    %p50 = scmp.eq.s32.totalorder %s16, 1
    %p51 = por %p49, %p50
    %p53 = scmp.ne.s32.totalorder %s36, %s52
    %p54 = scmp.eq.s32.totalorder %s16, 0
    %p55 = por %p53, %p54
    %s57 = sadd.s32 %s56, 1
    %p60 = scmp.eq.s32.totalorder %s10, 1
    %p61 = scmp.ne.s32.totalorder %s56, %s58
    %p62 = scmp.eq.s32.totalorder %s10, 0
    %p63 = por %p61, %p62
    %p64 = scmp.ne.s32.totalorder %s56, %s58
    %p65 = scmp.eq.s32.totalorder %s15, 1
    %p66 = por %p64, %p65
    %p67 = scmp.ne.s32.totalorder %s58, %s59
    %p68 = scmp.eq.s32.totalorder %s15, 0
    %p69 = por %p67, %p68
    %p70 = scmp.ne.s32.totalorder %s58, %s59
    %p71 = scmp.eq.s32.totalorder %s16, 1
    %p72 = por %p70, %p71
    %p74 = scmp.ne.s32.totalorder %s59, %s73
    %p75 = scmp.eq.s32.totalorder %s16, 0
    %p76 = por %p74, %p75
    %s77 = ssub.s32 %s17, %s29
    %p78 = scmp.eq.s32.totalorder %s77, 0
    %s80 = sadd.s32 %s79, 1
    %s81 = scalar_select %p78, %s79, %s80
    %p84 = pneg %p78
    %p85 = scmp.eq.s32.totalorder %s10, 1
    %p86 = por %p84, %p85
    %p87 = scmp.ne.s32.totalorder %s79, %s82
    %p88 = scmp.eq.s32.totalorder %s10, 0
    %p89 = por %p87, %p88
    %p90 = scmp.ne.s32.totalorder %s79, %s82
    %p91 = scmp.eq.s32.totalorder %s15, 1
    %p92 = por %p90, %p91
    %p93 = scmp.ne.s32.totalorder %s82, %s83
    %p94 = scmp.eq.s32.totalorder %s15, 0
    %p95 = por %p93, %p94
    %p96 = scmp.ne.s32.totalorder %s82, %s83
    %p97 = scmp.eq.s32.totalorder %s16, 1
    %p98 = por %p96, %p97
    %p100 = scmp.ne.s32.totalorder %s83, %s99
    %p101 = scmp.eq.s32.totalorder %s16, 0
    %p102 = por %p100, %p101
    %s103 = ssub.s32 %s17, %s29
    %p104 = scmp.eq.s32.totalorder %s103, 0
    %s106 = sadd.s32 %s105, 1
    %s107 = scalar_select %p104, %s105, %s106
    %p110 = pneg %p104
    %p111 = scmp.eq.s32.totalorder %s10, 1
    %p112 = por %p110, %p111
    %p113 = scmp.ne.s32.totalorder %s105, %s108
    %p114 = scmp.eq.s32.totalorder %s10, 0
    %p115 = por %p113, %p114
    %p116 = scmp.ne.s32.totalorder %s105, %s108
    %p117 = scmp.eq.s32.totalorder %s15, 1
    %p118 = por %p116, %p117
    %p119 = scmp.ne.s32.totalorder %s108, %s109
    %p120 = scmp.eq.s32.totalorder %s15, 0
    %p121 = por %p119, %p120
    %p122 = scmp.ne.s32.totalorder %s108, %s109
    %p123 = scmp.eq.s32.totalorder %s16, 1
    %p124 = por %p122, %p123
    %p126 = scmp.ne.s32.totalorder %s109, %s125
    %p127 = scmp.eq.s32.totalorder %s16, 0
    %p128 = por %p126, %p127
    %p129 = scmp.le.s32.totalorder 1, %s10
    %p130 = scmp.lt.s32.totalorder %s10, 3
    %p131 = pnand %p129, %p130
    %p132 = pneg %p131
    // Predicated region
    $region9: #{multi_scale_spectral_loss.6} parent=5 // pred_check
      _
    $region10: #{multi_scale_spectral_loss.6} parent=5 // pred_check_branch
      %134 = sbr.rel (%p131) target = $region12
    $region11: #{multi_scale_spectral_loss.6} parent=5 // pred_region
      %s135 = ssub.s32 %s10, 1
      // Predicated region
      $region13: #{multi_scale_spectral_loss.6} parent=11 // pred_check
        %p136 = pneg %p69
      $region14: #{multi_scale_spectral_loss.6} parent=11 // pred_check_branch
        %138 = sbr.rel (%p136) target = $region16
      $region15: #{multi_scale_spectral_loss.6} parent=11 // pred_region
        _
      $region16: #{multi_scale_spectral_loss.6} parent=11 // pred_fallthru
        _
    $region12: #{multi_scale_spectral_loss.6} parent=5 // pred_fallthru
      _
    %p139 = scmp.lt.s32.totalorder %s10, 2
    // Predicated region
    $region17: #{multi_scale_spectral_loss.6} parent=5 // pred_check
      %p140 = pneg %p139
    $region18: #{multi_scale_spectral_loss.6} parent=5 // pred_check_branch
      %142 = sbr.rel (%p140) target = $region20
    $region19: #{multi_scale_spectral_loss.6} parent=5 // pred_region
      // Predicated region
      $region21: #{multi_scale_spectral_loss.6} parent=19 // pred_check
        %p143 = pneg %p42
      $region22: #{multi_scale_spectral_loss.6} parent=19 // pred_check_branch
        %145 = sbr.rel (%p143) target = $region24
      $region23: #{multi_scale_spectral_loss.6} parent=19 // pred_region
        %s146 = smul.u32 10, %s17
        %p147 = scmp.lt.s32.totalorder %s146, 19
        %s148 = scalar_select %p147, %s146, 19
        %s149 = smul.addr %s148, 4
        %s150 = smul.addr %s149, 4
        %s151 = scalar_lea.vmem %s0, %s150
        %s152 = smul.u32 10, %s17
      $region24: #{multi_scale_spectral_loss.6} parent=19 // pred_fallthru
        _
    $region20: #{multi_scale_spectral_loss.6} parent=5 // pred_fallthru
      _
    %p153 = scmp.le.s32.totalorder 1, %s10
    %p154 = scmp.lt.s32.totalorder %s10, 3
    %p155 = pnand %p153, %p154
    %p156 = pneg %p155
    // Predicated region
    $region25: #{multi_scale_spectral_loss.6} parent=5 // pred_check
      _
    $region26: #{multi_scale_spectral_loss.6} parent=5 // pred_check_branch
      %158 = sbr.rel (%p155) target = $region28
    $region27: #{multi_scale_spectral_loss.6} parent=5 // pred_region
      %s159 = ssub.s32 %s10, 1
      %s160 = smul.u32 10, %s19
      %p161 = scmp.lt.s32.totalorder %s160, 19
      %s162 = scalar_select %p161, %s160, 19
      %s163 = smul.addr %s162, 4
      %s164 = smul.addr %s163, 4
      %s165 = scalar_lea.vmem %s0, %s164
      %p166 = pneg %p48
      %p167 = pneg %p45
      %p168 = pneg %p69
      %p169 = pneg %p66
      %p170 = pneg %p95
      %p171 = pneg %p92
      %p172 = scmp.lt.s32.totalorder %s19, 1
      %s173 = scalar_select %p172, %s19, 1
      %s174 = smul.addr %s173, 3
      %s175 = smul.addr %s174, 8
      %s176 = scalar_lea.vmem %s2, %s175
      %p177 = pneg %p121
      %p178 = pneg %p118
      %p179 = scmp.lt.s32.totalorder %s19, 1
      %s180 = scalar_select %p179, %s19, 1
      %s181 = smul.addr %s180, 3
      %s182 = smul.addr %s181, 8
      %s183 = scalar_lea.vmem %s3, %s182
      %s184 = smul.u32 10, %s19
      %p185 = scmp.lt.s32.totalorder %s184, 19
      %s186 = scalar_select %p185, %s184, 19
      %s187 = smul.addr %s186, 4
      %s188 = smul.addr %s187, 4
      %s189 = scalar_lea.vmem %s0, %s188
      %s190 = smul.u32 10, %s19
      %p191 = scmp.lt.s32.totalorder %s19, 1
      %s192 = scalar_select %p191, %s19, 1
      %s193 = smul.addr %s192, 3
      %s194 = smul.addr %s193, 8
      %s195 = scalar_lea.vmem %s2, %s194
      %p196 = scmp.lt.s32.totalorder %s19, 1
      %s197 = scalar_select %p196, %s19, 1
      %s198 = smul.addr %s197, 3
      %s199 = smul.addr %s198, 8
      %s200 = scalar_lea.vmem %s3, %s199
      %p201 = scmp.eq.s32.totalorder %s20, 0
      // Predicated region
      $region29: #{multi_scale_spectral_loss.6} parent=27 // pred_check
        %p202 = pneg %p201
      $region30: #{multi_scale_spectral_loss.6} parent=27 // pred_check_branch
        %204 = sbr.rel (%p202) target = $region32
      $region31: #{multi_scale_spectral_loss.6} parent=27 // pred_region
        %205 = vst [vmem:[%s195] sm:$0xff] 0.0
        %206 = vst [vmem:[%s195 + $0x8] sm:$0xff] 0.0
        %207 = vst [vmem:[%s195 + $0x10] sm:$0xff] 0.0
        %208 = vst [vmem:[%s200] sm:$0xff] 0.0
        %209 = vst [vmem:[%s200 + $0x8] sm:$0xff] 0.0
        %210 = vst [vmem:[%s200 + $0x10] sm:$0xff] 0.0
      $region32: #{multi_scale_spectral_loss.6} parent=27 // pred_fallthru
        _
      %v211 = vld [vmem:[%s189] sm:$0xff]
      %v212 = vld [vmem:[%s189 + $0x8] sm:$0xff]
      %v213 = vld [vmem:[%s189 + $0x10] sm:$0xff]
      %v214 = vld [vmem:[%s189 + $0x18] sm:$0xff]
      %v215 = vld [vmem:[%s189 + $0x20] sm:$0xff]
      %v216 = vld [vmem:[%s189 + $0x28] sm:$0xff]
      %v217 = vld [vmem:[%s189 + $0x30] sm:$0xff]
      %v218 = vld [vmem:[%s189 + $0x38] sm:$0xff]
      %v219 = vld [vmem:[%s189 + $0x40] sm:$0xff]
      %v220 = vld [vmem:[%s189 + $0x48] sm:$0xff]
      %v221 = vld [vmem:[%s189 + $0x50] sm:$0xff]
      %v222 = vld [vmem:[%s189 + $0x58] sm:$0xff]
      %v223 = vld [vmem:[%s189 + $0x60] sm:$0xff]
      %v224 = vld [vmem:[%s189 + $0x68] sm:$0xff]
      %v225 = vld [vmem:[%s189 + $0x70] sm:$0xff]
      %v226 = vld [vmem:[%s189 + $0x78] sm:$0xff]
      %v227 = vld [vmem:[%s189 + $0x80] sm:$0xff]
      %v228 = vld [vmem:[%s189 + $0x88] sm:$0xff]
      %v229 = vld [vmem:[%s189 + $0x90] sm:$0xff]
      %v230 = vld [vmem:[%s189 + $0x98] sm:$0xff]
      %v231 = vld [vmem:[%s1] sm:$0xff]
      %v232 = vld [vmem:[%s1 + $0x8] sm:$0xff]
      %v233 = vld [vmem:[%s1 + $0x10] sm:$0xff]
      %v234 = vld [vmem:[%s1 + $0x18] sm:$0xff]
      %v235 = vld [vmem:[%s1 + $0x20] sm:$0xff]
      %v236 = vld [vmem:[%s1 + $0x28] sm:$0xff]
      %v237 = vld [vmem:[%s1 + $0x30] sm:$0xff]
      %v238 = vld [vmem:[%s1 + $0x38] sm:$0xff]
      %v239 = vld [vmem:[%s1 + $0x40] sm:$0xff]
      %v240 = vld [vmem:[%s1 + $0x48] sm:$0xff]
      %v241 = vld [vmem:[%s1 + $0x50] sm:$0xff]
      %v242 = vld [vmem:[%s1 + $0x58] sm:$0xff]
      %v243 = vld [vmem:[%s1 + $0x60] sm:$0xff]
      %v244 = vld [vmem:[%s1 + $0x68] sm:$0xff]
      %v245 = vld [vmem:[%s1 + $0x70] sm:$0xff]
      %v246 = vld [vmem:[%s1 + $0x78] sm:$0xff]
      %v247 = vld [vmem:[%s1 + $0x80] sm:$0xff]
      %v248 = vld [vmem:[%s1 + $0x88] sm:$0xff]
      %v249 = vld [vmem:[%s1 + $0x90] sm:$0xff]
      %v250 = vld [vmem:[%s1 + $0x98] sm:$0xff]
      %v251 = vld [vmem:[%s1 + $0xa0] sm:$0xff]
      %v252 = vld [vmem:[%s1 + $0xa8] sm:$0xff]
      %v253 = vld [vmem:[%s1 + $0xb0] sm:$0xff]
      %v254 = vld [vmem:[%s1 + $0xb8] sm:$0xff]
      %v255 = vld [vmem:[%s1 + $0xc0] sm:$0xff]
      %v256 = vld [vmem:[%s1 + $0xc8] sm:$0xff]
      %v257 = vld [vmem:[%s1 + $0xd0] sm:$0xff]
      %v258 = vld [vmem:[%s1 + $0xd8] sm:$0xff]
      %v259 = vld [vmem:[%s1 + $0xe0] sm:$0xff]
      %v260 = vld [vmem:[%s1 + $0xe8] sm:$0xff]
      %v261 = vld [vmem:[%s1 + $0xf0] sm:$0xff]
      %v262 = vld [vmem:[%s1 + $0xf8] sm:$0xff]
      %v263 = vld [vmem:[%s1 + $0x100] sm:$0xff]
      %v264 = vld [vmem:[%s1 + $0x108] sm:$0xff]
      %v265 = vld [vmem:[%s1 + $0x110] sm:$0xff]
      %v266 = vld [vmem:[%s1 + $0x118] sm:$0xff]
      %v267 = vld [vmem:[%s1 + $0x120] sm:$0xff]
      %v268 = vld [vmem:[%s1 + $0x128] sm:$0xff]
      %v269 = vld [vmem:[%s1 + $0x130] sm:$0xff]
      %v270 = vld [vmem:[%s1 + $0x138] sm:$0xff]
      %v271 = vld [vmem:[%s1 + $0x140] sm:$0xff]
      %v272 = vld [vmem:[%s1 + $0x148] sm:$0xff]
      %v273 = vld [vmem:[%s1 + $0x150] sm:$0xff]
      %v274 = vld [vmem:[%s1 + $0x158] sm:$0xff]
      %v275 = vld [vmem:[%s1 + $0x160] sm:$0xff]
      %v276 = vld [vmem:[%s1 + $0x168] sm:$0xff]
      %v277 = vld [vmem:[%s1 + $0x170] sm:$0xff]
      %v278 = vld [vmem:[%s1 + $0x178] sm:$0xff]
      %v279 = vld [vmem:[%s1 + $0x180] sm:$0xff]
      %v280 = vld [vmem:[%s1 + $0x188] sm:$0xff]
      %v281 = vld [vmem:[%s1 + $0x190] sm:$0xff]
      %v282 = vld [vmem:[%s1 + $0x198] sm:$0xff]
      %v283 = vld [vmem:[%s1 + $0x1a0] sm:$0xff]
      %v284 = vld [vmem:[%s1 + $0x1a8] sm:$0xff]
      %v285 = vld [vmem:[%s1 + $0x1b0] sm:$0xff]
      %v286 = vld [vmem:[%s1 + $0x1b8] sm:$0xff]
      %v287 = vld [vmem:[%s1 + $0x1c0] sm:$0xff]
      %v288 = vld [vmem:[%s1 + $0x1c8] sm:$0xff]
      %v289 = vld [vmem:[%s1 + $0x1d0] sm:$0xff]
      %v290 = vld [vmem:[%s1 + $0x1d8] sm:$0xff]
      %v291 = vld [vmem:[%s1 + $0x1e0] sm:$0xff]
      %v292 = vld [vmem:[%s1 + $0x1e8] sm:$0xff]
      %v293 = vld [vmem:[%s1 + $0x1f0] sm:$0xff]
      %v294 = vld [vmem:[%s1 + $0x1f8] sm:$0xff]
      %v295 = vld [vmem:[%s1 + $0x200] sm:$0xff]
      %v296 = vld [vmem:[%s1 + $0x208] sm:$0xff]
      %v297 = vld [vmem:[%s1 + $0x210] sm:$0xff]
      %v298 = vld [vmem:[%s1 + $0x218] sm:$0xff]
      %v299 = vld [vmem:[%s1 + $0x220] sm:$0xff]
      %v300 = vld [vmem:[%s1 + $0x228] sm:$0xff]
      %v301 = vld [vmem:[%s1 + $0x230] sm:$0xff]
      %v302 = vld [vmem:[%s1 + $0x238] sm:$0xff]
      %v303 = vld [vmem:[%s1 + $0x240] sm:$0xff]
      %v304 = vld [vmem:[%s1 + $0x248] sm:$0xff]
      %v305 = vld [vmem:[%s1 + $0x250] sm:$0xff]
      %v306 = vld [vmem:[%s1 + $0x258] sm:$0xff]
      %v307 = vld [vmem:[%s1 + $0x260] sm:$0xff]
      %v308 = vld [vmem:[%s1 + $0x268] sm:$0xff]
      %v309 = vld [vmem:[%s1 + $0x270] sm:$0xff]
      %v310 = vld [vmem:[%s1 + $0x278] sm:$0xff]
      %v311 = vld [vmem:[%s1 + $0x280] sm:$0xff]
      %v312 = vld [vmem:[%s1 + $0x288] sm:$0xff]
      %v313 = vld [vmem:[%s1 + $0x290] sm:$0xff]
      %v314 = vld [vmem:[%s1 + $0x298] sm:$0xff]
      %v315 = vld [vmem:[%s1 + $0x2a0] sm:$0xff]
      %v316 = vld [vmem:[%s1 + $0x2a8] sm:$0xff]
      %v317 = vld [vmem:[%s1 + $0x2b0] sm:$0xff]
      %v318 = vld [vmem:[%s1 + $0x2b8] sm:$0xff]
      %v319 = vld [vmem:[%s1 + $0x2c0] sm:$0xff]
      %v320 = vld [vmem:[%s1 + $0x2c8] sm:$0xff]
      %v321 = vld [vmem:[%s1 + $0x2d0] sm:$0xff]
      %v322 = vld [vmem:[%s1 + $0x2d8] sm:$0xff]
      %v323 = vld [vmem:[%s1 + $0x2e0] sm:$0xff]
      %v324 = vld [vmem:[%s1 + $0x2e8] sm:$0xff]
      %v325 = vld [vmem:[%s1 + $0x2f0] sm:$0xff]
      %v326 = vld [vmem:[%s1 + $0x2f8] sm:$0xff]
      %v327 = vld [vmem:[%s1 + $0x300] sm:$0xff]
      %v328 = vld [vmem:[%s1 + $0x308] sm:$0xff]
      %v329 = vld [vmem:[%s1 + $0x310] sm:$0xff]
      %v330 = vld [vmem:[%s1 + $0x318] sm:$0xff]
      %v331 = vld [vmem:[%s1 + $0x320] sm:$0xff]
      %v332 = vld [vmem:[%s1 + $0x328] sm:$0xff]
      %v333 = vld [vmem:[%s1 + $0x330] sm:$0xff]
      %v334 = vld [vmem:[%s1 + $0x338] sm:$0xff]
      %v335 = vld [vmem:[%s1 + $0x340] sm:$0xff]
      %v336 = vld [vmem:[%s1 + $0x348] sm:$0xff]
      %v337 = vld [vmem:[%s1 + $0x350] sm:$0xff]
      %v338 = vld [vmem:[%s1 + $0x358] sm:$0xff]
      %v339 = vld [vmem:[%s1 + $0x360] sm:$0xff]
      %v340 = vld [vmem:[%s1 + $0x368] sm:$0xff]
      %v341 = vld [vmem:[%s1 + $0x370] sm:$0xff]
      %v342 = vld [vmem:[%s1 + $0x378] sm:$0xff]
      %v343 = vld [vmem:[%s1 + $0x380] sm:$0xff]
      %v344 = vld [vmem:[%s1 + $0x388] sm:$0xff]
      %v345 = vld [vmem:[%s1 + $0x390] sm:$0xff]
      %v346 = vld [vmem:[%s1 + $0x398] sm:$0xff]
      %v347 = vld [vmem:[%s1 + $0x3a0] sm:$0xff]
      %v348 = vld [vmem:[%s1 + $0x3a8] sm:$0xff]
      %v349 = vld [vmem:[%s1 + $0x3b0] sm:$0xff]
      %v350 = vld [vmem:[%s1 + $0x3b8] sm:$0xff]
      %v351 = vld [vmem:[%s1 + $0x3c0] sm:$0xff]
      %v352 = vld [vmem:[%s1 + $0x3c8] sm:$0xff]
      %v353 = vld [vmem:[%s1 + $0x3d0] sm:$0xff]
      %v354 = vld [vmem:[%s1 + $0x3d8] sm:$0xff]
      %v355 = vld [vmem:[%s1 + $0x3e0] sm:$0xff]
      %v356 = vld [vmem:[%s1 + $0x3e8] sm:$0xff]
      %v357 = vld [vmem:[%s1 + $0x3f0] sm:$0xff]
      %v358 = vld [vmem:[%s1 + $0x3f8] sm:$0xff]
      %v359 = vld [vmem:[%s1 + $0x400] sm:$0xff]
      %v360 = vld [vmem:[%s1 + $0x408] sm:$0xff]
      %v361 = vld [vmem:[%s1 + $0x410] sm:$0xff]
      %v362 = vld [vmem:[%s1 + $0x418] sm:$0xff]
      %v363 = vld [vmem:[%s1 + $0x420] sm:$0xff]
      %v364 = vld [vmem:[%s1 + $0x428] sm:$0xff]
      %v365 = vld [vmem:[%s1 + $0x430] sm:$0xff]
      %v366 = vld [vmem:[%s1 + $0x438] sm:$0xff]
      %v367 = vld [vmem:[%s1 + $0x440] sm:$0xff]
      %v368 = vld [vmem:[%s1 + $0x448] sm:$0xff]
      %v369 = vld [vmem:[%s1 + $0x450] sm:$0xff]
      %v370 = vld [vmem:[%s1 + $0x458] sm:$0xff]
      %v371 = vld [vmem:[%s1 + $0x460] sm:$0xff]
      %v372 = vld [vmem:[%s1 + $0x468] sm:$0xff]
      %v373 = vld [vmem:[%s1 + $0x470] sm:$0xff]
      %v374 = vld [vmem:[%s1 + $0x478] sm:$0xff]
      %v375 = vld [vmem:[%s1 + $0x480] sm:$0xff]
      %v376 = vld [vmem:[%s1 + $0x488] sm:$0xff]
      %v377 = vld [vmem:[%s1 + $0x490] sm:$0xff]
      %v378 = vld [vmem:[%s1 + $0x498] sm:$0xff]
      %v379 = vld [vmem:[%s1 + $0x4a0] sm:$0xff]
      %v380 = vld [vmem:[%s1 + $0x4a8] sm:$0xff]
      %v381 = vld [vmem:[%s1 + $0x4b0] sm:$0xff]
      %v382 = vld [vmem:[%s1 + $0x4b8] sm:$0xff]
      %v383 = vld [vmem:[%s1 + $0x4c0] sm:$0xff]
      %v384 = vld [vmem:[%s1 + $0x4c8] sm:$0xff]
      %v385 = vld [vmem:[%s1 + $0x4d0] sm:$0xff]
      %v386 = vld [vmem:[%s1 + $0x4d8] sm:$0xff]
      %v387 = vld [vmem:[%s1 + $0x4e0] sm:$0xff]
      %v388 = vld [vmem:[%s1 + $0x4e8] sm:$0xff]
      %v389 = vld [vmem:[%s1 + $0x4f0] sm:$0xff]
      %v390 = vld [vmem:[%s1 + $0x4f8] sm:$0xff]
      %v391 = vld [vmem:[%s1 + $0x500] sm:$0xff]
      %v392 = vld [vmem:[%s1 + $0x508] sm:$0xff]
      %v393 = vld [vmem:[%s1 + $0x510] sm:$0xff]
      %v394 = vld [vmem:[%s1 + $0x518] sm:$0xff]
      %v395 = vld [vmem:[%s1 + $0x520] sm:$0xff]
      %v396 = vld [vmem:[%s1 + $0x528] sm:$0xff]
      %v397 = vld [vmem:[%s1 + $0x530] sm:$0xff]
      %v398 = vld [vmem:[%s1 + $0x538] sm:$0xff]
      %v399 = vld [vmem:[%s1 + $0x540] sm:$0xff]
      %v400 = vld [vmem:[%s1 + $0x548] sm:$0xff]
      %v401 = vld [vmem:[%s1 + $0x550] sm:$0xff]
      %v402 = vld [vmem:[%s1 + $0x558] sm:$0xff]
      %v403 = vld [vmem:[%s1 + $0x560] sm:$0xff]
      %v404 = vld [vmem:[%s1 + $0x568] sm:$0xff]
      %v405 = vld [vmem:[%s1 + $0x570] sm:$0xff]
      %v406 = vld [vmem:[%s1 + $0x578] sm:$0xff]
      %v407 = vld [vmem:[%s1 + $0x580] sm:$0xff]
      %v408 = vld [vmem:[%s1 + $0x588] sm:$0xff]
      %v409 = vld [vmem:[%s1 + $0x590] sm:$0xff]
      %v410 = vld [vmem:[%s1 + $0x598] sm:$0xff]
      %v411 = vld [vmem:[%s1 + $0x5a0] sm:$0xff]
      %v412 = vld [vmem:[%s1 + $0x5a8] sm:$0xff]
      %v413 = vld [vmem:[%s1 + $0x5b0] sm:$0xff]
      %v414 = vld [vmem:[%s1 + $0x5b8] sm:$0xff]
      %v415 = vld [vmem:[%s1 + $0x5c0] sm:$0xff]
      %v416 = vld [vmem:[%s1 + $0x5c8] sm:$0xff]
      %v417 = vld [vmem:[%s1 + $0x5d0] sm:$0xff]
      %v418 = vld [vmem:[%s1 + $0x5d8] sm:$0xff]
      %v419 = vld [vmem:[%s1 + $0x5e0] sm:$0xff]
      %v420 = vld [vmem:[%s1 + $0x5e8] sm:$0xff]
      %v421 = vld [vmem:[%s1 + $0x5f0] sm:$0xff]
      %v422 = vld [vmem:[%s1 + $0x5f8] sm:$0xff]
      %v443 = vunpack.c.l.b16 %v211
      %v444 = vunpack.c.h.b16 %v211
      %v445 = vunpack.c.l.b16 %v212
      %v446 = vunpack.c.h.b16 %v212
      %v447 = vunpack.c.l.b16 %v213
      %v448 = vunpack.c.h.b16 %v213
      %v449 = vunpack.c.l.b16 %v214
      %v450 = vunpack.c.h.b16 %v214
      %v451 = vunpack.c.l.b16 %v215
      %v452 = vunpack.c.h.b16 %v215
      %v453 = vunpack.c.l.b16 %v216
      %v454 = vunpack.c.h.b16 %v216
      %v455 = vunpack.c.l.b16 %v217
      %v456 = vunpack.c.h.b16 %v217
      %v457 = vunpack.c.l.b16 %v218
      %v458 = vunpack.c.h.b16 %v218
      %v459 = vunpack.c.l.b16 %v219
      %v460 = vunpack.c.h.b16 %v219
      %v461 = vunpack.c.l.b16 %v220
      %v462 = vunpack.c.h.b16 %v220
      %v463 = vunpack.c.l.b16 %v221
      %v464 = vunpack.c.h.b16 %v221
      %v465 = vunpack.c.l.b16 %v222
      %v466 = vunpack.c.h.b16 %v222
      %v467 = vunpack.c.l.b16 %v223
      %v468 = vunpack.c.h.b16 %v223
      %v469 = vunpack.c.l.b16 %v224
      %v470 = vunpack.c.h.b16 %v224
      %v471 = vunpack.c.l.b16 %v225
      %v472 = vunpack.c.h.b16 %v225
      %v473 = vunpack.c.l.b16 %v226
      %v474 = vunpack.c.h.b16 %v226
      %v475 = vunpack.c.l.b16 %v227
      %v476 = vunpack.c.h.b16 %v227
      %v477 = vunpack.c.l.b16 %v228
      %v478 = vunpack.c.h.b16 %v228
      %v479 = vunpack.c.l.b16 %v229
      %v480 = vunpack.c.h.b16 %v229
      %v481 = vunpack.c.l.b16 %v230
      %v482 = vunpack.c.h.b16 %v230
      %v483 = vpack.c.b16 %v447, %v443
      %v484 = vpack.c.b16 %v448, %v444
      %v485 = vpack.c.b16 %v449, %v445
      %v486 = vpack.c.b16 %v450, %v446
      %v487 = vpack.c.b16 %v455, %v451
      %v488 = vpack.c.b16 %v456, %v452
      %v489 = vpack.c.b16 %v457, %v453
      %v490 = vpack.c.b16 %v458, %v454
      %v491 = vpack.c.b16 %v463, %v459
      %v492 = vpack.c.b16 %v464, %v460
      %v493 = vpack.c.b16 %v465, %v461
      %v494 = vpack.c.b16 %v466, %v462
      %v495 = vpack.c.b16 %v471, %v467
      %v496 = vpack.c.b16 %v472, %v468
      %v497 = vpack.c.b16 %v473, %v469
      %v498 = vpack.c.b16 %v474, %v470
      %v499 = vpack.c.b16 %v479, %v475
      %v500 = vpack.c.b16 %v480, %v476
      %v501 = vpack.c.b16 %v481, %v477
      %v502 = vpack.c.b16 %v482, %v478
      %v715 = vunpack.c.l.b16 %v231
      %v716 = vunpack.c.h.b16 %v231
      %v717 = vunpack.c.l.b16 %v232
      %v718 = vunpack.c.h.b16 %v232
      %v719 = vunpack.c.l.b16 %v233
      %v720 = vunpack.c.h.b16 %v233
      %v721 = vunpack.c.l.b16 %v234
      %v722 = vunpack.c.h.b16 %v234
      %v723 = vunpack.c.l.b16 %v235
      %v724 = vunpack.c.h.b16 %v235
      %v725 = vunpack.c.l.b16 %v236
      %v726 = vunpack.c.h.b16 %v236
      %v727 = vunpack.c.l.b16 %v237
      %v728 = vunpack.c.h.b16 %v237
      %v729 = vunpack.c.l.b16 %v238
      %v730 = vunpack.c.h.b16 %v238
      %v731 = vunpack.c.l.b16 %v239
      %v732 = vunpack.c.h.b16 %v239
      %v733 = vunpack.c.l.b16 %v240
      %v734 = vunpack.c.h.b16 %v240
      %v735 = vunpack.c.l.b16 %v241
      %v736 = vunpack.c.h.b16 %v241
      %v737 = vunpack.c.l.b16 %v242
      %v738 = vunpack.c.h.b16 %v242
      %v739 = vunpack.c.l.b16 %v243
      %v740 = vunpack.c.h.b16 %v243
      %v741 = vunpack.c.l.b16 %v244
      %v742 = vunpack.c.h.b16 %v244
      %v743 = vunpack.c.l.b16 %v245
      %v744 = vunpack.c.h.b16 %v245
      %v745 = vunpack.c.l.b16 %v246
      %v746 = vunpack.c.h.b16 %v246
      %v747 = vunpack.c.l.b16 %v247
      %v748 = vunpack.c.h.b16 %v247
      %v749 = vunpack.c.l.b16 %v248
      %v750 = vunpack.c.h.b16 %v248
      %v751 = vunpack.c.l.b16 %v249
      %v752 = vunpack.c.h.b16 %v249
      %v753 = vunpack.c.l.b16 %v250
      %v754 = vunpack.c.h.b16 %v250
      %v755 = vunpack.c.l.b16 %v251
      %v756 = vunpack.c.h.b16 %v251
      %v757 = vunpack.c.l.b16 %v252
      %v758 = vunpack.c.h.b16 %v252
      %v759 = vunpack.c.l.b16 %v253
      %v760 = vunpack.c.h.b16 %v253
      %v761 = vunpack.c.l.b16 %v254
      %v762 = vunpack.c.h.b16 %v254
      %v763 = vunpack.c.l.b16 %v255
      %v764 = vunpack.c.h.b16 %v255
      %v765 = vunpack.c.l.b16 %v256
      %v766 = vunpack.c.h.b16 %v256
      %v767 = vunpack.c.l.b16 %v257
      %v768 = vunpack.c.h.b16 %v257
      %v769 = vunpack.c.l.b16 %v258
      %v770 = vunpack.c.h.b16 %v258
      %v771 = vunpack.c.l.b16 %v259
      %v772 = vunpack.c.h.b16 %v259
      %v773 = vunpack.c.l.b16 %v260
      %v774 = vunpack.c.h.b16 %v260
      %v775 = vunpack.c.l.b16 %v261
      %v776 = vunpack.c.h.b16 %v261
      %v777 = vunpack.c.l.b16 %v262
      %v778 = vunpack.c.h.b16 %v262
      %v779 = vunpack.c.l.b16 %v263
      %v780 = vunpack.c.h.b16 %v263
      %v781 = vunpack.c.l.b16 %v264
      %v782 = vunpack.c.h.b16 %v264
      %v783 = vunpack.c.l.b16 %v265
      %v784 = vunpack.c.h.b16 %v265
      %v785 = vunpack.c.l.b16 %v266
      %v786 = vunpack.c.h.b16 %v266
      %v787 = vunpack.c.l.b16 %v267
      %v788 = vunpack.c.h.b16 %v267
      %v789 = vunpack.c.l.b16 %v268
      %v790 = vunpack.c.h.b16 %v268
      %v791 = vunpack.c.l.b16 %v269
      %v792 = vunpack.c.h.b16 %v269
      %v793 = vunpack.c.l.b16 %v270
      %v794 = vunpack.c.h.b16 %v270
      %v795 = vunpack.c.l.b16 %v271
      %v796 = vunpack.c.h.b16 %v271
      %v797 = vunpack.c.l.b16 %v272
      %v798 = vunpack.c.h.b16 %v272
      %v799 = vunpack.c.l.b16 %v273
      %v800 = vunpack.c.h.b16 %v273
      %v801 = vunpack.c.l.b16 %v274
      %v802 = vunpack.c.h.b16 %v274
      %v803 = vunpack.c.l.b16 %v275
      %v804 = vunpack.c.h.b16 %v275
      %v805 = vunpack.c.l.b16 %v276
      %v806 = vunpack.c.h.b16 %v276
      %v807 = vunpack.c.l.b16 %v277
      %v808 = vunpack.c.h.b16 %v277
      %v809 = vunpack.c.l.b16 %v278
      %v810 = vunpack.c.h.b16 %v278
      %v811 = vunpack.c.l.b16 %v279
      %v812 = vunpack.c.h.b16 %v279
      %v813 = vunpack.c.l.b16 %v280
      %v814 = vunpack.c.h.b16 %v280
      %v815 = vunpack.c.l.b16 %v281
      %v816 = vunpack.c.h.b16 %v281
      %v817 = vunpack.c.l.b16 %v282
      %v818 = vunpack.c.h.b16 %v282
      %v819 = vunpack.c.l.b16 %v283
      %v820 = vunpack.c.h.b16 %v283
      %v821 = vunpack.c.l.b16 %v284
      %v822 = vunpack.c.h.b16 %v284
      %v823 = vunpack.c.l.b16 %v285
      %v824 = vunpack.c.h.b16 %v285
      %v825 = vunpack.c.l.b16 %v286
      %v826 = vunpack.c.h.b16 %v286
      %v827 = vunpack.c.l.b16 %v287
      %v828 = vunpack.c.h.b16 %v287
      %v829 = vunpack.c.l.b16 %v288
      %v830 = vunpack.c.h.b16 %v288
      %v831 = vunpack.c.l.b16 %v289
      %v832 = vunpack.c.h.b16 %v289
      %v833 = vunpack.c.l.b16 %v290
      %v834 = vunpack.c.h.b16 %v290
      %v835 = vunpack.c.l.b16 %v291
      %v836 = vunpack.c.h.b16 %v291
      %v837 = vunpack.c.l.b16 %v292
      %v838 = vunpack.c.h.b16 %v292
      %v839 = vunpack.c.l.b16 %v293
      %v840 = vunpack.c.h.b16 %v293
      %v841 = vunpack.c.l.b16 %v294
      %v842 = vunpack.c.h.b16 %v294
      %v843 = vunpack.c.l.b16 %v295
      %v844 = vunpack.c.h.b16 %v295
      %v845 = vunpack.c.l.b16 %v296
      %v846 = vunpack.c.h.b16 %v296
      %v847 = vunpack.c.l.b16 %v297
      %v848 = vunpack.c.h.b16 %v297
      %v849 = vunpack.c.l.b16 %v298
      %v850 = vunpack.c.h.b16 %v298
      %v851 = vunpack.c.l.b16 %v299
      %v852 = vunpack.c.h.b16 %v299
      %v853 = vunpack.c.l.b16 %v300
      %v854 = vunpack.c.h.b16 %v300
      %v855 = vunpack.c.l.b16 %v301
      %v856 = vunpack.c.h.b16 %v301
      %v857 = vunpack.c.l.b16 %v302
      %v858 = vunpack.c.h.b16 %v302
      %v859 = vunpack.c.l.b16 %v303
      %v860 = vunpack.c.h.b16 %v303
      %v861 = vunpack.c.l.b16 %v304
      %v862 = vunpack.c.h.b16 %v304
      %v863 = vunpack.c.l.b16 %v305
      %v864 = vunpack.c.h.b16 %v305
      %v865 = vunpack.c.l.b16 %v306
      %v866 = vunpack.c.h.b16 %v306
      %v867 = vunpack.c.l.b16 %v307
      %v868 = vunpack.c.h.b16 %v307
      %v869 = vunpack.c.l.b16 %v308
      %v870 = vunpack.c.h.b16 %v308
      %v871 = vunpack.c.l.b16 %v309
      %v872 = vunpack.c.h.b16 %v309
      %v873 = vunpack.c.l.b16 %v310
      %v874 = vunpack.c.h.b16 %v310
      %v875 = vunpack.c.l.b16 %v311
      %v876 = vunpack.c.h.b16 %v311
      %v877 = vunpack.c.l.b16 %v312
      %v878 = vunpack.c.h.b16 %v312
      %v879 = vunpack.c.l.b16 %v313
      %v880 = vunpack.c.h.b16 %v313
      %v881 = vunpack.c.l.b16 %v314
      %v882 = vunpack.c.h.b16 %v314
      %v883 = vunpack.c.l.b16 %v315
      %v884 = vunpack.c.h.b16 %v315
      %v885 = vunpack.c.l.b16 %v316
      %v886 = vunpack.c.h.b16 %v316
      %v887 = vunpack.c.l.b16 %v317
      %v888 = vunpack.c.h.b16 %v317
      %v889 = vunpack.c.l.b16 %v318
      %v890 = vunpack.c.h.b16 %v318
      %v891 = vunpack.c.l.b16 %v319
      %v892 = vunpack.c.h.b16 %v319
      %v893 = vunpack.c.l.b16 %v320
      %v894 = vunpack.c.h.b16 %v320
      %v895 = vunpack.c.l.b16 %v321
      %v896 = vunpack.c.h.b16 %v321
      %v897 = vunpack.c.l.b16 %v322
      %v898 = vunpack.c.h.b16 %v322
      %v899 = vunpack.c.l.b16 %v323
      %v900 = vunpack.c.h.b16 %v323
      %v901 = vunpack.c.l.b16 %v324
      %v902 = vunpack.c.h.b16 %v324
      %v903 = vunpack.c.l.b16 %v325
      %v904 = vunpack.c.h.b16 %v325
      %v905 = vunpack.c.l.b16 %v326
      %v906 = vunpack.c.h.b16 %v326
      %v907 = vunpack.c.l.b16 %v327
      %v908 = vunpack.c.h.b16 %v327
      %v909 = vunpack.c.l.b16 %v328
      %v910 = vunpack.c.h.b16 %v328
      %v911 = vunpack.c.l.b16 %v329
      %v912 = vunpack.c.h.b16 %v329
      %v913 = vunpack.c.l.b16 %v330
      %v914 = vunpack.c.h.b16 %v330
      %v915 = vunpack.c.l.b16 %v331
      %v916 = vunpack.c.h.b16 %v331
      %v917 = vunpack.c.l.b16 %v332
      %v918 = vunpack.c.h.b16 %v332
      %v919 = vunpack.c.l.b16 %v333
      %v920 = vunpack.c.h.b16 %v333
      %v921 = vunpack.c.l.b16 %v334
      %v922 = vunpack.c.h.b16 %v334
      %v923 = vunpack.c.l.b16 %v335
      %v924 = vunpack.c.h.b16 %v335
      %v925 = vunpack.c.l.b16 %v336
      %v926 = vunpack.c.h.b16 %v336
      %v927 = vunpack.c.l.b16 %v337
      %v928 = vunpack.c.h.b16 %v337
      %v929 = vunpack.c.l.b16 %v338
      %v930 = vunpack.c.h.b16 %v338
      %v931 = vunpack.c.l.b16 %v339
      %v932 = vunpack.c.h.b16 %v339
      %v933 = vunpack.c.l.b16 %v340
      %v934 = vunpack.c.h.b16 %v340
      %v935 = vunpack.c.l.b16 %v341
      %v936 = vunpack.c.h.b16 %v341
      %v937 = vunpack.c.l.b16 %v342
      %v938 = vunpack.c.h.b16 %v342
      %v939 = vunpack.c.l.b16 %v343
      %v940 = vunpack.c.h.b16 %v343
      %v941 = vunpack.c.l.b16 %v344
      %v942 = vunpack.c.h.b16 %v344
      %v943 = vunpack.c.l.b16 %v345
      %v944 = vunpack.c.h.b16 %v345
      %v945 = vunpack.c.l.b16 %v346
      %v946 = vunpack.c.h.b16 %v346
      %v947 = vunpack.c.l.b16 %v347
      %v948 = vunpack.c.h.b16 %v347
      %v949 = vunpack.c.l.b16 %v348
      %v950 = vunpack.c.h.b16 %v348
      %v951 = vunpack.c.l.b16 %v349
      %v952 = vunpack.c.h.b16 %v349
      %v953 = vunpack.c.l.b16 %v350
      %v954 = vunpack.c.h.b16 %v350
      %v955 = vunpack.c.l.b16 %v351
      %v956 = vunpack.c.h.b16 %v351
      %v957 = vunpack.c.l.b16 %v352
      %v958 = vunpack.c.h.b16 %v352
      %v959 = vunpack.c.l.b16 %v353
      %v960 = vunpack.c.h.b16 %v353
      %v961 = vunpack.c.l.b16 %v354
      %v962 = vunpack.c.h.b16 %v354
      %v963 = vunpack.c.l.b16 %v355
      %v964 = vunpack.c.h.b16 %v355
      %v965 = vunpack.c.l.b16 %v356
      %v966 = vunpack.c.h.b16 %v356
      %v967 = vunpack.c.l.b16 %v357
      %v968 = vunpack.c.h.b16 %v357
      %v969 = vunpack.c.l.b16 %v358
      %v970 = vunpack.c.h.b16 %v358
      %v971 = vunpack.c.l.b16 %v359
      %v972 = vunpack.c.h.b16 %v359
      %v973 = vunpack.c.l.b16 %v360
      %v974 = vunpack.c.h.b16 %v360
      %v975 = vunpack.c.l.b16 %v361
      %v976 = vunpack.c.h.b16 %v361
      %v977 = vunpack.c.l.b16 %v362
      %v978 = vunpack.c.h.b16 %v362
      %v979 = vunpack.c.l.b16 %v363
      %v980 = vunpack.c.h.b16 %v363
      %v981 = vunpack.c.l.b16 %v364
      %v982 = vunpack.c.h.b16 %v364
      %v983 = vunpack.c.l.b16 %v365
      %v984 = vunpack.c.h.b16 %v365
      %v985 = vunpack.c.l.b16 %v366
      %v986 = vunpack.c.h.b16 %v366
      %v987 = vunpack.c.l.b16 %v367
      %v988 = vunpack.c.h.b16 %v367
      %v989 = vunpack.c.l.b16 %v368
      %v990 = vunpack.c.h.b16 %v368
      %v991 = vunpack.c.l.b16 %v369
      %v992 = vunpack.c.h.b16 %v369
      %v993 = vunpack.c.l.b16 %v370
      %v994 = vunpack.c.h.b16 %v370
      %v995 = vunpack.c.l.b16 %v371
      %v996 = vunpack.c.h.b16 %v371
      %v997 = vunpack.c.l.b16 %v372
      %v998 = vunpack.c.h.b16 %v372
      %v999 = vunpack.c.l.b16 %v373
      %v1000 = vunpack.c.h.b16 %v373
      %v1001 = vunpack.c.l.b16 %v374
      %v1002 = vunpack.c.h.b16 %v374
      %v1003 = vunpack.c.l.b16 %v375
      %v1004 = vunpack.c.h.b16 %v375
      %v1005 = vunpack.c.l.b16 %v376
      %v1006 = vunpack.c.h.b16 %v376
      %v1007 = vunpack.c.l.b16 %v377
      %v1008 = vunpack.c.h.b16 %v377
      %v1009 = vunpack.c.l.b16 %v378
      %v1010 = vunpack.c.h.b16 %v378
      %v1011 = vunpack.c.l.b16 %v379
      %v1012 = vunpack.c.h.b16 %v379
      %v1013 = vunpack.c.l.b16 %v380
      %v1014 = vunpack.c.h.b16 %v380
      %v1015 = vunpack.c.l.b16 %v381
      %v1016 = vunpack.c.h.b16 %v381
      %v1017 = vunpack.c.l.b16 %v382
      %v1018 = vunpack.c.h.b16 %v382
      %v1019 = vunpack.c.l.b16 %v383
      %v1020 = vunpack.c.h.b16 %v383
      %v1021 = vunpack.c.l.b16 %v384
      %v1022 = vunpack.c.h.b16 %v384
      %v1023 = vunpack.c.l.b16 %v385
      %v1024 = vunpack.c.h.b16 %v385
      %v1025 = vunpack.c.l.b16 %v386
      %v1026 = vunpack.c.h.b16 %v386
      %v1027 = vunpack.c.l.b16 %v387
      %v1028 = vunpack.c.h.b16 %v387
      %v1029 = vunpack.c.l.b16 %v388
      %v1030 = vunpack.c.h.b16 %v388
      %v1031 = vunpack.c.l.b16 %v389
      %v1032 = vunpack.c.h.b16 %v389
      %v1033 = vunpack.c.l.b16 %v390
      %v1034 = vunpack.c.h.b16 %v390
      %v1035 = vunpack.c.l.b16 %v391
      %v1036 = vunpack.c.h.b16 %v391
      %v1037 = vunpack.c.l.b16 %v392
      %v1038 = vunpack.c.h.b16 %v392
      %v1039 = vunpack.c.l.b16 %v393
      %v1040 = vunpack.c.h.b16 %v393
      %v1041 = vunpack.c.l.b16 %v394
      %v1042 = vunpack.c.h.b16 %v394
      %v1043 = vunpack.c.l.b16 %v395
      %v1044 = vunpack.c.h.b16 %v395
      %v1045 = vunpack.c.l.b16 %v396
      %v1046 = vunpack.c.h.b16 %v396
      %v1047 = vunpack.c.l.b16 %v397
      %v1048 = vunpack.c.h.b16 %v397
      %v1049 = vunpack.c.l.b16 %v398
      %v1050 = vunpack.c.h.b16 %v398
      %v1051 = vunpack.c.l.b16 %v399
      %v1052 = vunpack.c.h.b16 %v399
      %v1053 = vunpack.c.l.b16 %v400
      %v1054 = vunpack.c.h.b16 %v400
      %v1055 = vunpack.c.l.b16 %v401
      %v1056 = vunpack.c.h.b16 %v401
      %v1057 = vunpack.c.l.b16 %v402
      %v1058 = vunpack.c.h.b16 %v402
      %v1059 = vunpack.c.l.b16 %v403
      %v1060 = vunpack.c.h.b16 %v403
      %v1061 = vunpack.c.l.b16 %v404
      %v1062 = vunpack.c.h.b16 %v404
      %v1063 = vunpack.c.l.b16 %v405
      %v1064 = vunpack.c.h.b16 %v405
      %v1065 = vunpack.c.l.b16 %v406
      %v1066 = vunpack.c.h.b16 %v406
      %v1067 = vunpack.c.l.b16 %v407
      %v1068 = vunpack.c.h.b16 %v407
      %v1069 = vunpack.c.l.b16 %v408
      %v1070 = vunpack.c.h.b16 %v408
      %v1071 = vunpack.c.l.b16 %v409
      %v1072 = vunpack.c.h.b16 %v409
      %v1073 = vunpack.c.l.b16 %v410
      %v1074 = vunpack.c.h.b16 %v410
      %v1075 = vunpack.c.l.b16 %v411
      %v1076 = vunpack.c.h.b16 %v411
      %v1077 = vunpack.c.l.b16 %v412
      %v1078 = vunpack.c.h.b16 %v412
      %v1079 = vunpack.c.l.b16 %v413
      %v1080 = vunpack.c.h.b16 %v413
      %v1081 = vunpack.c.l.b16 %v414
      %v1082 = vunpack.c.h.b16 %v414
      %v1083 = vunpack.c.l.b16 %v415
      %v1084 = vunpack.c.h.b16 %v415
      %v1085 = vunpack.c.l.b16 %v416
      %v1086 = vunpack.c.h.b16 %v416
      %v1087 = vunpack.c.l.b16 %v417
      %v1088 = vunpack.c.h.b16 %v417
      %v1089 = vunpack.c.l.b16 %v418
      %v1090 = vunpack.c.h.b16 %v418
      %v1091 = vunpack.c.l.b16 %v419
      %v1092 = vunpack.c.h.b16 %v419
      %v1093 = vunpack.c.l.b16 %v420
      %v1094 = vunpack.c.h.b16 %v420
      %v1095 = vunpack.c.l.b16 %v421
      %v1096 = vunpack.c.h.b16 %v421
      %v1097 = vunpack.c.l.b16 %v422
      %v1098 = vunpack.c.h.b16 %v422
      %v1099 = vpack.c.b16 %v721, %v715
      %v1100 = vpack.c.b16 %v722, %v716
      %v1101 = vpack.c.b16 %v723, %v717
      %v1102 = vpack.c.b16 %v724, %v718
      %v1103 = vpack.c.b16 %v725, %v719
      %v1104 = vpack.c.b16 %v726, %v720
      %v1105 = vpack.c.b16 %v733, %v727
      %v1106 = vpack.c.b16 %v734, %v728
      %v1107 = vpack.c.b16 %v735, %v729
      %v1108 = vpack.c.b16 %v736, %v730
      %v1109 = vpack.c.b16 %v737, %v731
      %v1110 = vpack.c.b16 %v738, %v732
      %v1111 = vpack.c.b16 %v745, %v739
      %v1112 = vpack.c.b16 %v746, %v740
      %v1113 = vpack.c.b16 %v747, %v741
      %v1114 = vpack.c.b16 %v748, %v742
      %v1115 = vpack.c.b16 %v749, %v743
      %v1116 = vpack.c.b16 %v750, %v744
      %v1117 = vpack.c.b16 %v757, %v751
      %v1118 = vpack.c.b16 %v758, %v752
      %v1119 = vpack.c.b16 %v759, %v753
      %v1120 = vpack.c.b16 %v760, %v754
      %v1121 = vpack.c.b16 %v761, %v755
      %v1122 = vpack.c.b16 %v762, %v756
      %v1123 = vpack.c.b16 %v769, %v763
      %v1124 = vpack.c.b16 %v770, %v764
      %v1125 = vpack.c.b16 %v771, %v765
      %v1126 = vpack.c.b16 %v772, %v766
      %v1127 = vpack.c.b16 %v773, %v767
      %v1128 = vpack.c.b16 %v774, %v768
      %v1129 = vpack.c.b16 %v781, %v775
      %v1130 = vpack.c.b16 %v782, %v776
      %v1131 = vpack.c.b16 %v783, %v777
      %v1132 = vpack.c.b16 %v784, %v778
      %v1133 = vpack.c.b16 %v785, %v779
      %v1134 = vpack.c.b16 %v786, %v780
      %v1135 = vpack.c.b16 %v793, %v787
      %v1136 = vpack.c.b16 %v794, %v788
      %v1137 = vpack.c.b16 %v795, %v789
      %v1138 = vpack.c.b16 %v796, %v790
      %v1139 = vpack.c.b16 %v797, %v791
      %v1140 = vpack.c.b16 %v798, %v792
      %v1141 = vpack.c.b16 %v805, %v799
      %v1142 = vpack.c.b16 %v806, %v800
      %v1143 = vpack.c.b16 %v807, %v801
      %v1144 = vpack.c.b16 %v808, %v802
      %v1145 = vpack.c.b16 %v809, %v803
      %v1146 = vpack.c.b16 %v810, %v804
      %v1147 = vpack.c.b16 %v817, %v811
      %v1148 = vpack.c.b16 %v818, %v812
      %v1149 = vpack.c.b16 %v819, %v813
      %v1150 = vpack.c.b16 %v820, %v814
      %v1151 = vpack.c.b16 %v821, %v815
      %v1152 = vpack.c.b16 %v822, %v816
      %v1153 = vpack.c.b16 %v829, %v823
      %v1154 = vpack.c.b16 %v830, %v824
      %v1155 = vpack.c.b16 %v831, %v825
      %v1156 = vpack.c.b16 %v832, %v826
      %v1157 = vpack.c.b16 %v833, %v827
      %v1158 = vpack.c.b16 %v834, %v828
      %v1159 = vpack.c.b16 %v841, %v835
      %v1160 = vpack.c.b16 %v842, %v836
      %v1161 = vpack.c.b16 %v843, %v837
      %v1162 = vpack.c.b16 %v844, %v838
      %v1163 = vpack.c.b16 %v845, %v839
      %v1164 = vpack.c.b16 %v846, %v840
      %v1165 = vpack.c.b16 %v853, %v847
      %v1166 = vpack.c.b16 %v854, %v848
      %v1167 = vpack.c.b16 %v855, %v849
      %v1168 = vpack.c.b16 %v856, %v850
      %v1169 = vpack.c.b16 %v857, %v851
      %v1170 = vpack.c.b16 %v858, %v852
      %v1171 = vpack.c.b16 %v865, %v859
      %v1172 = vpack.c.b16 %v866, %v860
      %v1173 = vpack.c.b16 %v867, %v861
      %v1174 = vpack.c.b16 %v868, %v862
      %v1175 = vpack.c.b16 %v869, %v863
      %v1176 = vpack.c.b16 %v870, %v864
      %v1177 = vpack.c.b16 %v877, %v871
      %v1178 = vpack.c.b16 %v878, %v872
      %v1179 = vpack.c.b16 %v879, %v873
      %v1180 = vpack.c.b16 %v880, %v874
      %v1181 = vpack.c.b16 %v881, %v875
      %v1182 = vpack.c.b16 %v882, %v876
      %v1183 = vpack.c.b16 %v889, %v883
      %v1184 = vpack.c.b16 %v890, %v884
      %v1185 = vpack.c.b16 %v891, %v885
      %v1186 = vpack.c.b16 %v892, %v886
      %v1187 = vpack.c.b16 %v893, %v887
      %v1188 = vpack.c.b16 %v894, %v888
      %v1189 = vpack.c.b16 %v901, %v895
      %v1190 = vpack.c.b16 %v902, %v896
      %v1191 = vpack.c.b16 %v903, %v897
      %v1192 = vpack.c.b16 %v904, %v898
      %v1193 = vpack.c.b16 %v905, %v899
      %v1194 = vpack.c.b16 %v906, %v900
      %v1195 = vpack.c.b16 %v913, %v907
      %v1196 = vpack.c.b16 %v914, %v908
      %v1197 = vpack.c.b16 %v915, %v909
      %v1198 = vpack.c.b16 %v916, %v910
      %v1199 = vpack.c.b16 %v917, %v911
      %v1200 = vpack.c.b16 %v918, %v912
      %v1201 = vpack.c.b16 %v925, %v919
      %v1202 = vpack.c.b16 %v926, %v920
      %v1203 = vpack.c.b16 %v927, %v921
      %v1204 = vpack.c.b16 %v928, %v922
      %v1205 = vpack.c.b16 %v929, %v923
      %v1206 = vpack.c.b16 %v930, %v924
      %v1207 = vpack.c.b16 %v937, %v931
      %v1208 = vpack.c.b16 %v938, %v932
      %v1209 = vpack.c.b16 %v939, %v933
      %v1210 = vpack.c.b16 %v940, %v934
      %v1211 = vpack.c.b16 %v941, %v935
      %v1212 = vpack.c.b16 %v942, %v936
      %v1213 = vpack.c.b16 %v949, %v943
      %v1214 = vpack.c.b16 %v950, %v944
      %v1215 = vpack.c.b16 %v951, %v945
      %v1216 = vpack.c.b16 %v952, %v946
      %v1217 = vpack.c.b16 %v953, %v947
      %v1218 = vpack.c.b16 %v954, %v948
      %v1219 = vpack.c.b16 %v961, %v955
      %v1220 = vpack.c.b16 %v962, %v956
      %v1221 = vpack.c.b16 %v963, %v957
      %v1222 = vpack.c.b16 %v964, %v958
      %v1223 = vpack.c.b16 %v965, %v959
      %v1224 = vpack.c.b16 %v966, %v960
      %v1225 = vpack.c.b16 %v973, %v967
      %v1226 = vpack.c.b16 %v974, %v968
      %v1227 = vpack.c.b16 %v975, %v969
      %v1228 = vpack.c.b16 %v976, %v970
      %v1229 = vpack.c.b16 %v977, %v971
      %v1230 = vpack.c.b16 %v978, %v972
      %v1231 = vpack.c.b16 %v985, %v979
      %v1232 = vpack.c.b16 %v986, %v980
      %v1233 = vpack.c.b16 %v987, %v981
      %v1234 = vpack.c.b16 %v988, %v982
      %v1235 = vpack.c.b16 %v989, %v983
      %v1236 = vpack.c.b16 %v990, %v984
      %v1237 = vpack.c.b16 %v997, %v991
      %v1238 = vpack.c.b16 %v998, %v992
      %v1239 = vpack.c.b16 %v999, %v993
      %v1240 = vpack.c.b16 %v1000, %v994
      %v1241 = vpack.c.b16 %v1001, %v995
      %v1242 = vpack.c.b16 %v1002, %v996
      %v1243 = vpack.c.b16 %v1009, %v1003
      %v1244 = vpack.c.b16 %v1010, %v1004
      %v1245 = vpack.c.b16 %v1011, %v1005
      %v1246 = vpack.c.b16 %v1012, %v1006
      %v1247 = vpack.c.b16 %v1013, %v1007
      %v1248 = vpack.c.b16 %v1014, %v1008
      %v1249 = vpack.c.b16 %v1021, %v1015
      %v1250 = vpack.c.b16 %v1022, %v1016
      %v1251 = vpack.c.b16 %v1023, %v1017
      %v1252 = vpack.c.b16 %v1024, %v1018
      %v1253 = vpack.c.b16 %v1025, %v1019
      %v1254 = vpack.c.b16 %v1026, %v1020
      %v1255 = vpack.c.b16 %v1033, %v1027
      %v1256 = vpack.c.b16 %v1034, %v1028
      %v1257 = vpack.c.b16 %v1035, %v1029
      %v1258 = vpack.c.b16 %v1036, %v1030
      %v1259 = vpack.c.b16 %v1037, %v1031
      %v1260 = vpack.c.b16 %v1038, %v1032
      %v1261 = vpack.c.b16 %v1045, %v1039
      %v1262 = vpack.c.b16 %v1046, %v1040
      %v1263 = vpack.c.b16 %v1047, %v1041
      %v1264 = vpack.c.b16 %v1048, %v1042
      %v1265 = vpack.c.b16 %v1049, %v1043
      %v1266 = vpack.c.b16 %v1050, %v1044
      %v1267 = vpack.c.b16 %v1057, %v1051
      %v1268 = vpack.c.b16 %v1058, %v1052
      %v1269 = vpack.c.b16 %v1059, %v1053
      %v1270 = vpack.c.b16 %v1060, %v1054
      %v1271 = vpack.c.b16 %v1061, %v1055
      %v1272 = vpack.c.b16 %v1062, %v1056
      %v1273 = vpack.c.b16 %v1069, %v1063
      %v1274 = vpack.c.b16 %v1070, %v1064
      %v1275 = vpack.c.b16 %v1071, %v1065
      %v1276 = vpack.c.b16 %v1072, %v1066
      %v1277 = vpack.c.b16 %v1073, %v1067
      %v1278 = vpack.c.b16 %v1074, %v1068
      %v1279 = vpack.c.b16 %v1081, %v1075
      %v1280 = vpack.c.b16 %v1082, %v1076
      %v1281 = vpack.c.b16 %v1083, %v1077
      %v1282 = vpack.c.b16 %v1084, %v1078
      %v1283 = vpack.c.b16 %v1085, %v1079
      %v1284 = vpack.c.b16 %v1086, %v1080
      %v1285 = vpack.c.b16 %v1093, %v1087
      %v1286 = vpack.c.b16 %v1094, %v1088
      %v1287 = vpack.c.b16 %v1095, %v1089
      %v1288 = vpack.c.b16 %v1096, %v1090
      %v1289 = vpack.c.b16 %v1097, %v1091
      %v1290 = vpack.c.b16 %v1098, %v1092
      %1483 = vmatprep.subr.bf16.mxu0 %v1100
      %1484 = vmatpush1.bf16.msra.mxu0 %v1099
      %1485 = vmatprep.subr.bf16.mxu0 %v1106
      %1486 = vmatpush1.bf16.msra.mxu0 %v1105
      %1487 = vmatprep.subr.bf16.mxu0 %v1112
      %1488 = vmatpush1.bf16.msra.mxu0 %v1111
      %1489 = vmatprep.subr.bf16.mxu0 %v1118
      %1490 = vmatpush1.bf16.msra.mxu0 %v1117
      %1491 = vmatprep.subr.bf16.mxu0 %v1124
      %1492 = vmatpush1.bf16.msra.mxu0 %v1123
      %1493 = vmatprep.subr.bf16.mxu0 %v1130
      %1494 = vmatpush1.bf16.msra.mxu0 %v1129
      %1495 = vmatprep.subr.bf16.mxu0 %v1136
      %1496 = vmatpush1.bf16.msra.mxu0 %v1135
      %1497 = vmatprep.subr.bf16.mxu0 %v1142
      %1498 = vmatpush1.bf16.msra.mxu0 %v1141
      %1499 = vmatprep.subr.bf16.mxu0 %v1148
      %1500 = vmatpush1.bf16.msra.mxu0 %v1147
      %1501 = vmatprep.subr.bf16.mxu0 %v1154
      %1502 = vmatpush1.bf16.msra.mxu0 %v1153
      %1503 = vmatprep.subr.bf16.mxu0 %v1160
      %1504 = vmatpush1.bf16.msra.mxu0 %v1159
      %1505 = vmatprep.subr.bf16.mxu0 %v1166
      %1506 = vmatpush1.bf16.msra.mxu0 %v1165
      %1507 = vmatprep.subr.bf16.mxu0 %v1172
      %1508 = vmatpush1.bf16.msra.mxu0 %v1171
      %1509 = vmatprep.subr.bf16.mxu0 %v1178
      %1510 = vmatpush1.bf16.msra.mxu0 %v1177
      %1511 = vmatprep.subr.bf16.mxu0 %v1184
      %1512 = vmatpush1.bf16.msra.mxu0 %v1183
      %1513 = vmatprep.subr.bf16.mxu0 %v1190
      %1514 = vmatpush1.bf16.msra.mxu0 %v1189
      %1515 = vmatprep.mubr.bf16.mxu0 %v484
      %1516 = vmatmul.mubr.bf16.gmra.mrb[0].mxu0 %v483
      %v1517 = vpop.f32.mrb[0].mxu0
      %v1518 = vadd.f32 0.0, %v1517
      %v1519 = vpop.f32.mrb[0].mxu0
      %v1520 = vadd.f32 0.0, %v1519
      %v1521 = vpop.f32.mrb[0].mxu0
      %v1522 = vadd.f32 0.0, %v1521
      %v1523 = vpop.f32.mrb[0].mxu0
      %v1524 = vadd.f32 0.0, %v1523
      %1525 = vmatprep.mubr.bf16.mxu0 %v488
      %1526 = vmatmul.mubr.bf16.gmra.mrb[0].mxu0 %v487
      %v1527 = vpop.f32.mrb[0].mxu0
      %v1528 = vadd.f32 0.0, %v1527
      %v1529 = vpop.f32.mrb[0].mxu0
      %v1530 = vadd.f32 0.0, %v1529
      %v1531 = vpop.f32.mrb[0].mxu0
      %v1532 = vadd.f32 0.0, %v1531
      %v1533 = vpop.f32.mrb[0].mxu0
      %v1534 = vadd.f32 0.0, %v1533
      %1535 = vmatprep.mubr.bf16.mxu0 %v492
      %1536 = vmatmul.mubr.bf16.gmra.mrb[0].mxu0 %v491
      %v1537 = vpop.f32.mrb[0].mxu0
      %v1538 = vadd.f32 0.0, %v1537
      %v1539 = vpop.f32.mrb[0].mxu0
      %v1540 = vadd.f32 0.0, %v1539
      %v1541 = vpop.f32.mrb[0].mxu0
      %v1542 = vadd.f32 0.0, %v1541
      %v1543 = vpop.f32.mrb[0].mxu0
      %v1544 = vadd.f32 0.0, %v1543
      %1545 = vmatprep.mubr.bf16.mxu0 %v496
      %1546 = vmatmul.mubr.bf16.gmra.mrb[0].mxu0 %v495
      %v1547 = vpop.f32.mrb[0].mxu0
      %v1548 = vadd.f32 0.0, %v1547
      %v1549 = vpop.f32.mrb[0].mxu0
      %v1550 = vadd.f32 0.0, %v1549
      %v1551 = vpop.f32.mrb[0].mxu0
      %v1552 = vadd.f32 0.0, %v1551
      %v1553 = vpop.f32.mrb[0].mxu0
      %v1554 = vadd.f32 0.0, %v1553
      %1555 = vmatprep.mubr.bf16.mxu0 %v500
      %1556 = vmatmul.mubr.bf16.gmra.mrb[0].mxu0 %v499
      %v1557 = vpop.f32.mrb[0].mxu0
      %v1558 = vadd.f32 0.0, %v1557
      %v1559 = vpop.f32.mrb[0].mxu0
      %v1560 = vadd.f32 0.0, %v1559
      %v1561 = vpop.f32.mrb[0].mxu0
      %v1562 = vadd.f32 0.0, %v1561
      %v1563 = vpop.f32.mrb[0].mxu0
      %v1564 = vadd.f32 0.0, %v1563
      %1565 = vdwg.mxu0
      %1566 = vmatprep.subr.bf16.mxu0 %v1196
      %1567 = vmatpush1.bf16.msra.mxu0 %v1195
      %1568 = vmatprep.subr.bf16.mxu0 %v1202
      %1569 = vmatpush1.bf16.msra.mxu0 %v1201
      %1570 = vmatprep.subr.bf16.mxu0 %v1208
      %1571 = vmatpush1.bf16.msra.mxu0 %v1207
      %1572 = vmatprep.subr.bf16.mxu0 %v1214
      %1573 = vmatpush1.bf16.msra.mxu0 %v1213
      %1574 = vmatprep.subr.bf16.mxu0 %v1220
      %1575 = vmatpush1.bf16.msra.mxu0 %v1219
      %1576 = vmatprep.subr.bf16.mxu0 %v1226
      %1577 = vmatpush1.bf16.msra.mxu0 %v1225
      %1578 = vmatprep.subr.bf16.mxu0 %v1232
      %1579 = vmatpush1.bf16.msra.mxu0 %v1231
      %1580 = vmatprep.subr.bf16.mxu0 %v1238
      %1581 = vmatpush1.bf16.msra.mxu0 %v1237
      %1582 = vmatprep.subr.bf16.mxu0 %v1244
      %1583 = vmatpush1.bf16.msra.mxu0 %v1243
      %1584 = vmatprep.subr.bf16.mxu0 %v1250
      %1585 = vmatpush1.bf16.msra.mxu0 %v1249
      %1586 = vmatprep.subr.bf16.mxu0 %v1256
      %1587 = vmatpush1.bf16.msra.mxu0 %v1255
      %1588 = vmatprep.subr.bf16.mxu0 %v1262
      %1589 = vmatpush1.bf16.msra.mxu0 %v1261
      %1590 = vmatprep.subr.bf16.mxu0 %v1268
      %1591 = vmatpush1.bf16.msra.mxu0 %v1267
      %1592 = vmatprep.subr.bf16.mxu0 %v1274
      %1593 = vmatpush1.bf16.msra.mxu0 %v1273
      %1594 = vmatprep.subr.bf16.mxu0 %v1280
      %1595 = vmatpush1.bf16.msra.mxu0 %v1279
      %1596 = vmatprep.subr.bf16.mxu0 %v1286
      %1597 = vmatpush1.bf16.msra.mxu0 %v1285
      %1598 = vmatprep.mubr.bf16.mxu0 %v486
      %1599 = vmatmul.mubr.bf16.gmra.mrb[0].mxu0 %v485
      %v1600 = vpop.f32.mrb[0].mxu0
      %v1601 = vadd.f32 %v1518, %v1600
      %v1602 = vpop.f32.mrb[0].mxu0
      %v1603 = vadd.f32 %v1520, %v1602
      %v1604 = vpop.f32.mrb[0].mxu0
      %v1605 = vadd.f32 %v1522, %v1604
      %v1606 = vpop.f32.mrb[0].mxu0
      %v1607 = vadd.f32 %v1524, %v1606
      %1608 = vmatprep.mubr.bf16.mxu0 %v490
      %1609 = vmatmul.mubr.bf16.gmra.mrb[0].mxu0 %v489
      %v1610 = vpop.f32.mrb[0].mxu0
      %v1611 = vadd.f32 %v1528, %v1610
      %v1612 = vpop.f32.mrb[0].mxu0
      %v1613 = vadd.f32 %v1530, %v1612
      %v1614 = vpop.f32.mrb[0].mxu0
      %v1615 = vadd.f32 %v1532, %v1614
      %v1616 = vpop.f32.mrb[0].mxu0
      %v1617 = vadd.f32 %v1534, %v1616
      %1618 = vmatprep.mubr.bf16.mxu0 %v494
      %1619 = vmatmul.mubr.bf16.gmra.mrb[0].mxu0 %v493
      %v1620 = vpop.f32.mrb[0].mxu0
      %v1621 = vadd.f32 %v1538, %v1620
      %v1622 = vpop.f32.mrb[0].mxu0
      %v1623 = vadd.f32 %v1540, %v1622
      %v1624 = vpop.f32.mrb[0].mxu0
      %v1625 = vadd.f32 %v1542, %v1624
      %v1626 = vpop.f32.mrb[0].mxu0
      %v1627 = vadd.f32 %v1544, %v1626
      %1628 = vmatprep.mubr.bf16.mxu0 %v498
      %1629 = vmatmul.mubr.bf16.gmra.mrb[0].mxu0 %v497
      %v1630 = vpop.f32.mrb[0].mxu0
      %v1631 = vadd.f32 %v1548, %v1630
      %v1632 = vpop.f32.mrb[0].mxu0
      %v1633 = vadd.f32 %v1550, %v1632
      %v1634 = vpop.f32.mrb[0].mxu0
      %v1635 = vadd.f32 %v1552, %v1634
      %v1636 = vpop.f32.mrb[0].mxu0
      %v1637 = vadd.f32 %v1554, %v1636
      %1638 = vmatprep.mubr.bf16.mxu0 %v502
      %1639 = vmatmul.mubr.bf16.gmra.mrb[0].mxu0 %v501
      %v1640 = vpop.f32.mrb[0].mxu0
      %v1641 = vadd.f32 %v1558, %v1640
      %v1642 = vpop.f32.mrb[0].mxu0
      %v1643 = vadd.f32 %v1560, %v1642
      %v1644 = vpop.f32.mrb[0].mxu0
      %v1645 = vadd.f32 %v1562, %v1644
      %v1646 = vpop.f32.mrb[0].mxu0
      %v1647 = vadd.f32 %v1564, %v1646
      %1648 = vdwg.mxu0
      %1649 = vmatprep.subr.bf16.mxu0 %v1102
      %1650 = vmatpush1.bf16.msra.mxu0 %v1101
      %1651 = vmatprep.subr.bf16.mxu0 %v1108
      %1652 = vmatpush1.bf16.msra.mxu0 %v1107
      %1653 = vmatprep.subr.bf16.mxu0 %v1114
      %1654 = vmatpush1.bf16.msra.mxu0 %v1113
      %1655 = vmatprep.subr.bf16.mxu0 %v1120
      %1656 = vmatpush1.bf16.msra.mxu0 %v1119
      %1657 = vmatprep.subr.bf16.mxu0 %v1126
      %1658 = vmatpush1.bf16.msra.mxu0 %v1125
      %1659 = vmatprep.subr.bf16.mxu0 %v1132
      %1660 = vmatpush1.bf16.msra.mxu0 %v1131
      %1661 = vmatprep.subr.bf16.mxu0 %v1138
      %1662 = vmatpush1.bf16.msra.mxu0 %v1137
      %1663 = vmatprep.subr.bf16.mxu0 %v1144
      %1664 = vmatpush1.bf16.msra.mxu0 %v1143
      %1665 = vmatprep.subr.bf16.mxu0 %v1150
      %1666 = vmatpush1.bf16.msra.mxu0 %v1149
      %1667 = vmatprep.subr.bf16.mxu0 %v1156
      %1668 = vmatpush1.bf16.msra.mxu0 %v1155
      %1669 = vmatprep.subr.bf16.mxu0 %v1162
      %1670 = vmatpush1.bf16.msra.mxu0 %v1161
      %1671 = vmatprep.subr.bf16.mxu0 %v1168
      %1672 = vmatpush1.bf16.msra.mxu0 %v1167
      %1673 = vmatprep.subr.bf16.mxu0 %v1174
      %1674 = vmatpush1.bf16.msra.mxu0 %v1173
      %1675 = vmatprep.subr.bf16.mxu0 %v1180
      %1676 = vmatpush1.bf16.msra.mxu0 %v1179
      %1677 = vmatprep.subr.bf16.mxu0 %v1186
      %1678 = vmatpush1.bf16.msra.mxu0 %v1185
      %1679 = vmatprep.subr.bf16.mxu0 %v1192
      %1680 = vmatpush1.bf16.msra.mxu0 %v1191
      %1681 = vmatprep.mubr.bf16.mxu0 %v484
      %1682 = vmatmul.mubr.bf16.gmra.mrb[0].mxu0 %v483
      %v1683 = vpop.f32.mrb[0].mxu0
      %v1684 = vadd.f32 0.0, %v1683
      %v1685 = vpop.f32.mrb[0].mxu0
      %v1686 = vadd.f32 0.0, %v1685
      %v1687 = vpop.f32.mrb[0].mxu0
      %v1688 = vadd.f32 0.0, %v1687
      %v1689 = vpop.f32.mrb[0].mxu0
      %v1690 = vadd.f32 0.0, %v1689
      %1691 = vmatprep.mubr.bf16.mxu0 %v488
      %1692 = vmatmul.mubr.bf16.gmra.mrb[0].mxu0 %v487
      %v1693 = vpop.f32.mrb[0].mxu0
      %v1694 = vadd.f32 0.0, %v1693
      %v1695 = vpop.f32.mrb[0].mxu0
      %v1696 = vadd.f32 0.0, %v1695
      %v1697 = vpop.f32.mrb[0].mxu0
      %v1698 = vadd.f32 0.0, %v1697
      %v1699 = vpop.f32.mrb[0].mxu0
      %v1700 = vadd.f32 0.0, %v1699
      %1701 = vmatprep.mubr.bf16.mxu0 %v492
      %1702 = vmatmul.mubr.bf16.gmra.mrb[0].mxu0 %v491
      %v1703 = vpop.f32.mrb[0].mxu0
      %v1704 = vadd.f32 0.0, %v1703
      %v1705 = vpop.f32.mrb[0].mxu0
      %v1706 = vadd.f32 0.0, %v1705
      %v1707 = vpop.f32.mrb[0].mxu0
      %v1708 = vadd.f32 0.0, %v1707
      %v1709 = vpop.f32.mrb[0].mxu0
      %v1710 = vadd.f32 0.0, %v1709
      %1711 = vmatprep.mubr.bf16.mxu0 %v496
      %1712 = vmatmul.mubr.bf16.gmra.mrb[0].mxu0 %v495
      %v1713 = vpop.f32.mrb[0].mxu0
      %v1714 = vadd.f32 0.0, %v1713
      %v1715 = vpop.f32.mrb[0].mxu0
      %v1716 = vadd.f32 0.0, %v1715
      %v1717 = vpop.f32.mrb[0].mxu0
      %v1718 = vadd.f32 0.0, %v1717
      %v1719 = vpop.f32.mrb[0].mxu0
      %v1720 = vadd.f32 0.0, %v1719
      %1721 = vmatprep.mubr.bf16.mxu0 %v500
      %1722 = vmatmul.mubr.bf16.gmra.mrb[0].mxu0 %v499
      %v1723 = vpop.f32.mrb[0].mxu0
      %v1724 = vadd.f32 0.0, %v1723
      %v1725 = vpop.f32.mrb[0].mxu0
      %v1726 = vadd.f32 0.0, %v1725
      %v1727 = vpop.f32.mrb[0].mxu0
      %v1728 = vadd.f32 0.0, %v1727
      %v1729 = vpop.f32.mrb[0].mxu0
      %v1730 = vadd.f32 0.0, %v1729
      %1731 = vdwg.mxu0
      %1732 = vmatprep.subr.bf16.mxu0 %v1198
      %1733 = vmatpush1.bf16.msra.mxu0 %v1197
      %1734 = vmatprep.subr.bf16.mxu0 %v1204
      %1735 = vmatpush1.bf16.msra.mxu0 %v1203
      %1736 = vmatprep.subr.bf16.mxu0 %v1210
      %1737 = vmatpush1.bf16.msra.mxu0 %v1209
      %1738 = vmatprep.subr.bf16.mxu0 %v1216
      %1739 = vmatpush1.bf16.msra.mxu0 %v1215
      %1740 = vmatprep.subr.bf16.mxu0 %v1222
      %1741 = vmatpush1.bf16.msra.mxu0 %v1221
      %1742 = vmatprep.subr.bf16.mxu0 %v1228
      %1743 = vmatpush1.bf16.msra.mxu0 %v1227
      %1744 = vmatprep.subr.bf16.mxu0 %v1234
      %1745 = vmatpush1.bf16.msra.mxu0 %v1233
      %1746 = vmatprep.subr.bf16.mxu0 %v1240
      %1747 = vmatpush1.bf16.msra.mxu0 %v1239
      %1748 = vmatprep.subr.bf16.mxu0 %v1246
      %1749 = vmatpush1.bf16.msra.mxu0 %v1245
      %1750 = vmatprep.subr.bf16.mxu0 %v1252
      %1751 = vmatpush1.bf16.msra.mxu0 %v1251
      %1752 = vmatprep.subr.bf16.mxu0 %v1258
      %1753 = vmatpush1.bf16.msra.mxu0 %v1257
      %1754 = vmatprep.subr.bf16.mxu0 %v1264
      %1755 = vmatpush1.bf16.msra.mxu0 %v1263
      %1756 = vmatprep.subr.bf16.mxu0 %v1270
      %1757 = vmatpush1.bf16.msra.mxu0 %v1269
      %1758 = vmatprep.subr.bf16.mxu0 %v1276
      %1759 = vmatpush1.bf16.msra.mxu0 %v1275
      %1760 = vmatprep.subr.bf16.mxu0 %v1282
      %1761 = vmatpush1.bf16.msra.mxu0 %v1281
      %1762 = vmatprep.subr.bf16.mxu0 %v1288
      %1763 = vmatpush1.bf16.msra.mxu0 %v1287
      %1764 = vmatprep.mubr.bf16.mxu0 %v486
      %1765 = vmatmul.mubr.bf16.gmra.mrb[0].mxu0 %v485
      %v1766 = vpop.f32.mrb[0].mxu0
      %v1767 = vadd.f32 %v1684, %v1766
      %v1768 = vpop.f32.mrb[0].mxu0
      %v1769 = vadd.f32 %v1686, %v1768
      %v1770 = vpop.f32.mrb[0].mxu0
      %v1771 = vadd.f32 %v1688, %v1770
      %v1772 = vpop.f32.mrb[0].mxu0
      %v1773 = vadd.f32 %v1690, %v1772
      %1774 = vmatprep.mubr.bf16.mxu0 %v490
      %1775 = vmatmul.mubr.bf16.gmra.mrb[0].mxu0 %v489
      %v1776 = vpop.f32.mrb[0].mxu0
      %v1777 = vadd.f32 %v1694, %v1776
      %v1778 = vpop.f32.mrb[0].mxu0
      %v1779 = vadd.f32 %v1696, %v1778
      %v1780 = vpop.f32.mrb[0].mxu0
      %v1781 = vadd.f32 %v1698, %v1780
      %v1782 = vpop.f32.mrb[0].mxu0
      %v1783 = vadd.f32 %v1700, %v1782
      %1784 = vmatprep.mubr.bf16.mxu0 %v494
      %1785 = vmatmul.mubr.bf16.gmra.mrb[0].mxu0 %v493
      %v1786 = vpop.f32.mrb[0].mxu0
      %v1787 = vadd.f32 %v1704, %v1786
      %v1788 = vpop.f32.mrb[0].mxu0
      %v1789 = vadd.f32 %v1706, %v1788
      %v1790 = vpop.f32.mrb[0].mxu0
      %v1791 = vadd.f32 %v1708, %v1790
      %v1792 = vpop.f32.mrb[0].mxu0
      %v1793 = vadd.f32 %v1710, %v1792
      %1794 = vmatprep.mubr.bf16.mxu0 %v498
      %1795 = vmatmul.mubr.bf16.gmra.mrb[0].mxu0 %v497
      %v1796 = vpop.f32.mrb[0].mxu0
      %v1797 = vadd.f32 %v1714, %v1796
      %v1798 = vpop.f32.mrb[0].mxu0
      %v1799 = vadd.f32 %v1716, %v1798
      %v1800 = vpop.f32.mrb[0].mxu0
      %v1801 = vadd.f32 %v1718, %v1800
      %v1802 = vpop.f32.mrb[0].mxu0
      %v1803 = vadd.f32 %v1720, %v1802
      %1804 = vmatprep.mubr.bf16.mxu0 %v502
      %1805 = vmatmul.mubr.bf16.gmra.mrb[0].mxu0 %v501
      %v1806 = vpop.f32.mrb[0].mxu0
      %v1807 = vadd.f32 %v1724, %v1806
      %v1808 = vpop.f32.mrb[0].mxu0
      %v1809 = vadd.f32 %v1726, %v1808
      %v1810 = vpop.f32.mrb[0].mxu0
      %v1811 = vadd.f32 %v1728, %v1810
      %v1812 = vpop.f32.mrb[0].mxu0
      %v1813 = vadd.f32 %v1730, %v1812
      %1814 = vdwg.mxu0
      %1815 = vmatprep.subr.bf16.mxu0 %v1104
      %1816 = vmatpush1.bf16.msra.mxu0 %v1103
      %1817 = vmatprep.subr.bf16.mxu0 %v1110
      %1818 = vmatpush1.bf16.msra.mxu0 %v1109
      %1819 = vmatprep.subr.bf16.mxu0 %v1116
      %1820 = vmatpush1.bf16.msra.mxu0 %v1115
      %1821 = vmatprep.subr.bf16.mxu0 %v1122
      %1822 = vmatpush1.bf16.msra.mxu0 %v1121
      %1823 = vmatprep.subr.bf16.mxu0 %v1128
      %1824 = vmatpush1.bf16.msra.mxu0 %v1127
      %1825 = vmatprep.subr.bf16.mxu0 %v1134
      %1826 = vmatpush1.bf16.msra.mxu0 %v1133
      %1827 = vmatprep.subr.bf16.mxu0 %v1140
      %1828 = vmatpush1.bf16.msra.mxu0 %v1139
      %1829 = vmatprep.subr.bf16.mxu0 %v1146
      %1830 = vmatpush1.bf16.msra.mxu0 %v1145
      %1831 = vmatprep.subr.bf16.mxu0 %v1152
      %1832 = vmatpush1.bf16.msra.mxu0 %v1151
      %1833 = vmatprep.subr.bf16.mxu0 %v1158
      %1834 = vmatpush1.bf16.msra.mxu0 %v1157
      %1835 = vmatprep.subr.bf16.mxu0 %v1164
      %1836 = vmatpush1.bf16.msra.mxu0 %v1163
      %1837 = vmatprep.subr.bf16.mxu0 %v1170
      %1838 = vmatpush1.bf16.msra.mxu0 %v1169
      %1839 = vmatprep.subr.bf16.mxu0 %v1176
      %1840 = vmatpush1.bf16.msra.mxu0 %v1175
      %1841 = vmatprep.subr.bf16.mxu0 %v1182
      %1842 = vmatpush1.bf16.msra.mxu0 %v1181
      %1843 = vmatprep.subr.bf16.mxu0 %v1188
      %1844 = vmatpush1.bf16.msra.mxu0 %v1187
      %1845 = vmatprep.subr.bf16.mxu0 %v1194
      %1846 = vmatpush1.bf16.msra.mxu0 %v1193
      %1847 = vmatprep.mubr.bf16.mxu0 %v484
      %1848 = vmatmul.mubr.bf16.gmra.mrb[0].mxu0 %v483
      %v1849 = vpop.f32.mrb[0].mxu0
      %v1850 = vadd.f32 0.0, %v1849
      %v1851 = vpop.f32.mrb[0].mxu0
      %v1852 = vadd.f32 0.0, %v1851
      %v1853 = vpop.f32.mrb[0].mxu0
      %v1854 = vadd.f32 0.0, %v1853
      %v1855 = vpop.f32.mrb[0].mxu0
      %v1856 = vadd.f32 0.0, %v1855
      %1857 = vmatprep.mubr.bf16.mxu0 %v488
      %1858 = vmatmul.mubr.bf16.gmra.mrb[0].mxu0 %v487
      %v1859 = vpop.f32.mrb[0].mxu0
      %v1860 = vadd.f32 0.0, %v1859
      %v1861 = vpop.f32.mrb[0].mxu0
      %v1862 = vadd.f32 0.0, %v1861
      %v1863 = vpop.f32.mrb[0].mxu0
      %v1864 = vadd.f32 0.0, %v1863
      %v1865 = vpop.f32.mrb[0].mxu0
      %v1866 = vadd.f32 0.0, %v1865
      %1867 = vmatprep.mubr.bf16.mxu0 %v492
      %1868 = vmatmul.mubr.bf16.gmra.mrb[0].mxu0 %v491
      %v1869 = vpop.f32.mrb[0].mxu0
      %v1870 = vadd.f32 0.0, %v1869
      %v1871 = vpop.f32.mrb[0].mxu0
      %v1872 = vadd.f32 0.0, %v1871
      %v1873 = vpop.f32.mrb[0].mxu0
      %v1874 = vadd.f32 0.0, %v1873
      %v1875 = vpop.f32.mrb[0].mxu0
      %v1876 = vadd.f32 0.0, %v1875
      %1877 = vmatprep.mubr.bf16.mxu0 %v496
      %1878 = vmatmul.mubr.bf16.gmra.mrb[0].mxu0 %v495
      %v1879 = vpop.f32.mrb[0].mxu0
      %v1880 = vadd.f32 0.0, %v1879
      %v1881 = vpop.f32.mrb[0].mxu0
      %v1882 = vadd.f32 0.0, %v1881
      %v1883 = vpop.f32.mrb[0].mxu0
      %v1884 = vadd.f32 0.0, %v1883
      %v1885 = vpop.f32.mrb[0].mxu0
      %v1886 = vadd.f32 0.0, %v1885
      %1887 = vmatprep.mubr.bf16.mxu0 %v500
      %1888 = vmatmul.mubr.bf16.gmra.mrb[0].mxu0 %v499
      %v1889 = vpop.f32.mrb[0].mxu0
      %v1890 = vadd.f32 0.0, %v1889
      %v1891 = vpop.f32.mrb[0].mxu0
      %v1892 = vadd.f32 0.0, %v1891
      %v1893 = vpop.f32.mrb[0].mxu0
      %v1894 = vadd.f32 0.0, %v1893
      %v1895 = vpop.f32.mrb[0].mxu0
      %v1896 = vadd.f32 0.0, %v1895
      %1897 = vdwg.mxu0
      %1898 = vmatprep.subr.bf16.mxu0 %v1200
      %1899 = vmatpush1.bf16.msra.mxu0 %v1199
      %1900 = vmatprep.subr.bf16.mxu0 %v1206
      %1901 = vmatpush1.bf16.msra.mxu0 %v1205
      %1902 = vmatprep.subr.bf16.mxu0 %v1212
      %1903 = vmatpush1.bf16.msra.mxu0 %v1211
      %1904 = vmatprep.subr.bf16.mxu0 %v1218
      %1905 = vmatpush1.bf16.msra.mxu0 %v1217
      %1906 = vmatprep.subr.bf16.mxu0 %v1224
      %1907 = vmatpush1.bf16.msra.mxu0 %v1223
      %1908 = vmatprep.subr.bf16.mxu0 %v1230
      %1909 = vmatpush1.bf16.msra.mxu0 %v1229
      %1910 = vmatprep.subr.bf16.mxu0 %v1236
      %1911 = vmatpush1.bf16.msra.mxu0 %v1235
      %1912 = vmatprep.subr.bf16.mxu0 %v1242
      %1913 = vmatpush1.bf16.msra.mxu0 %v1241
      %1914 = vmatprep.subr.bf16.mxu0 %v1248
      %1915 = vmatpush1.bf16.msra.mxu0 %v1247
      %1916 = vmatprep.subr.bf16.mxu0 %v1254
      %1917 = vmatpush1.bf16.msra.mxu0 %v1253
      %1918 = vmatprep.subr.bf16.mxu0 %v1260
      %1919 = vmatpush1.bf16.msra.mxu0 %v1259
      %1920 = vmatprep.subr.bf16.mxu0 %v1266
      %1921 = vmatpush1.bf16.msra.mxu0 %v1265
      %1922 = vmatprep.subr.bf16.mxu0 %v1272
      %1923 = vmatpush1.bf16.msra.mxu0 %v1271
      %1924 = vmatprep.subr.bf16.mxu0 %v1278
      %1925 = vmatpush1.bf16.msra.mxu0 %v1277
      %1926 = vmatprep.subr.bf16.mxu0 %v1284
      %1927 = vmatpush1.bf16.msra.mxu0 %v1283
      %1928 = vmatprep.subr.bf16.mxu0 %v1290
      %1929 = vmatpush1.bf16.msra.mxu0 %v1289
      %1930 = vmatprep.mubr.bf16.mxu0 %v486
      %1931 = vmatmul.mubr.bf16.gmra.mrb[0].mxu0 %v485
      %v1932 = vpop.f32.mrb[0].mxu0
      %v1933 = vadd.f32 %v1850, %v1932
      %v1934 = vpop.f32.mrb[0].mxu0
      %v1935 = vadd.f32 %v1852, %v1934
      %v1936 = vpop.f32.mrb[0].mxu0
      %v1937 = vadd.f32 %v1854, %v1936
      %v1938 = vpop.f32.mrb[0].mxu0
      %v1939 = vadd.f32 %v1856, %v1938
      %1940 = vmatprep.mubr.bf16.mxu0 %v490
      %1941 = vmatmul.mubr.bf16.gmra.mrb[0].mxu0 %v489
      %v1942 = vpop.f32.mrb[0].mxu0
      %v1943 = vadd.f32 %v1860, %v1942
      %v1944 = vpop.f32.mrb[0].mxu0
      %v1945 = vadd.f32 %v1862, %v1944
      %v1946 = vpop.f32.mrb[0].mxu0
      %v1947 = vadd.f32 %v1864, %v1946
      %v1948 = vpop.f32.mrb[0].mxu0
      %v1949 = vadd.f32 %v1866, %v1948
      %1950 = vmatprep.mubr.bf16.mxu0 %v494
      %1951 = vmatmul.mubr.bf16.gmra.mrb[0].mxu0 %v493
      %v1952 = vpop.f32.mrb[0].mxu0
      %v1953 = vadd.f32 %v1870, %v1952
      %v1954 = vpop.f32.mrb[0].mxu0
      %v1955 = vadd.f32 %v1872, %v1954
      %v1956 = vpop.f32.mrb[0].mxu0
      %v1957 = vadd.f32 %v1874, %v1956
      %v1958 = vpop.f32.mrb[0].mxu0
      %v1959 = vadd.f32 %v1876, %v1958
      %1960 = vmatprep.mubr.bf16.mxu0 %v498
      %1961 = vmatmul.mubr.bf16.gmra.mrb[0].mxu0 %v497
      %v1962 = vpop.f32.mrb[0].mxu0
      %v1963 = vadd.f32 %v1880, %v1962
      %v1964 = vpop.f32.mrb[0].mxu0
      %v1965 = vadd.f32 %v1882, %v1964
      %v1966 = vpop.f32.mrb[0].mxu0
      %v1967 = vadd.f32 %v1884, %v1966
      %v1968 = vpop.f32.mrb[0].mxu0
      %v1969 = vadd.f32 %v1886, %v1968
      %1970 = vmatprep.mubr.bf16.mxu0 %v502
      %1971 = vmatmul.mubr.bf16.gmra.mrb[0].mxu0 %v501
      %v1972 = vpop.f32.mrb[0].mxu0
      %v1973 = vadd.f32 %v1890, %v1972
      %v1974 = vpop.f32.mrb[0].mxu0
      %v1975 = vadd.f32 %v1892, %v1974
      %v1976 = vpop.f32.mrb[0].mxu0
      %v1977 = vadd.f32 %v1894, %v1976
      %v1978 = vpop.f32.mrb[0].mxu0
      %v1979 = vadd.f32 %v1896, %v1978
      %1980 = vdwg.mxu0
      %v1981 = vmul.f32 %v1601, %v1601
      %v1982 = vmul.f32 %v1603, %v1603
      %v1983 = vmul.f32 %v1767, %v1767
      %v1984 = vmul.f32 %v1605, %v1605
      %v1985 = vmul.f32 %v1607, %v1607
      %v1986 = vmul.f32 %v1771, %v1771
      %v1987 = vmul.f32 %v1611, %v1611
      %v1988 = vmul.f32 %v1613, %v1613
      %v1989 = vmul.f32 %v1777, %v1777
      %v1990 = vmul.f32 %v1615, %v1615
      %v1991 = vmul.f32 %v1617, %v1617
      %v1992 = vmul.f32 %v1781, %v1781
      %v1993 = vmul.f32 %v1621, %v1621
      %v1994 = vmul.f32 %v1623, %v1623
      %v1995 = vmul.f32 %v1787, %v1787
      %v1996 = vmul.f32 %v1769, %v1769
      %v1997 = vmul.f32 %v1933, %v1933
      %v1998 = vmul.f32 %v1935, %v1935
      %v1999 = vmul.f32 %v1773, %v1773
      %v2000 = vmul.f32 %v1937, %v1937
      %v2001 = vmul.f32 %v1939, %v1939
      %v2002 = vmul.f32 %v1779, %v1779
      %v2003 = vmul.f32 %v1943, %v1943
      %v2004 = vmul.f32 %v1945, %v1945
      %v2005 = vmul.f32 %v1783, %v1783
      %v2006 = vmul.f32 %v1947, %v1947
      %v2007 = vmul.f32 %v1949, %v1949
      %v2008 = vmul.f32 %v1789, %v1789
      %v2009 = vmul.f32 %v1953, %v1953
      %v2010 = vmul.f32 %v1955, %v1955
      %v2011 = vadd.f32 %v1981, %v1996
      %v2012 = vadd.f32 %v1982, %v1997
      %v2013 = vadd.f32 %v1983, %v1998
      %v2014 = vadd.f32 %v1984, %v1999
      %v2015 = vadd.f32 %v1985, %v2000
      %v2016 = vadd.f32 %v1986, %v2001
      %v2017 = vadd.f32 %v1987, %v2002
      %v2018 = vadd.f32 %v1988, %v2003
      %v2019 = vadd.f32 %v1989, %v2004
      %v2020 = vadd.f32 %v1990, %v2005
      %v2021 = vadd.f32 %v1991, %v2006
      %v2022 = vadd.f32 %v1992, %v2007
      %v2023 = vadd.f32 %v1993, %v2008
      %v2024 = vadd.f32 %v1994, %v2009
      %v2025 = vadd.f32 %v1995, %v2010
      %v2026 = vmul.f32 %v1625, %v1625
      %v2027 = vmul.f32 %v1627, %v1627
      %v2028 = vmul.f32 %v1791, %v1791
      %v2029 = vmul.f32 %v1631, %v1631
      %v2030 = vmul.f32 %v1633, %v1633
      %v2031 = vmul.f32 %v1797, %v1797
      %v2032 = vmul.f32 %v1635, %v1635
      %v2033 = vmul.f32 %v1637, %v1637
      %v2034 = vmul.f32 %v1801, %v1801
      %v2035 = vmul.f32 %v1641, %v1641
      %v2036 = vmul.f32 %v1643, %v1643
      %v2037 = vmul.f32 %v1807, %v1807
      %v2038 = vmul.f32 %v1645, %v1645
      %v2039 = vmul.f32 %v1647, %v1647
      %v2040 = vmul.f32 %v1811, %v1811
      %v2041 = vmul.f32 %v1793, %v1793
      %v2042 = vmul.f32 %v1957, %v1957
      %v2043 = vmul.f32 %v1959, %v1959
      %v2044 = vmul.f32 %v1799, %v1799
      %v2045 = vmul.f32 %v1963, %v1963
      %v2046 = vmul.f32 %v1965, %v1965
      %v2047 = vmul.f32 %v1803, %v1803
      %v2048 = vmul.f32 %v1967, %v1967
      %v2049 = vmul.f32 %v1969, %v1969
      %v2050 = vmul.f32 %v1809, %v1809
      %v2051 = vmul.f32 %v1973, %v1973
      %v2052 = vmul.f32 %v1975, %v1975
      %v2053 = vmul.f32 %v1813, %v1813
      %v2054 = vmul.f32 %v1977, %v1977
      %v2055 = vmul.f32 %v1979, %v1979
      %v2056 = vadd.f32 %v2026, %v2041
      %v2057 = vadd.f32 %v2027, %v2042
      %v2058 = vadd.f32 %v2028, %v2043
      %v2059 = vadd.f32 %v2029, %v2044
      %v2060 = vadd.f32 %v2030, %v2045
      %v2061 = vadd.f32 %v2031, %v2046
      %v2062 = vadd.f32 %v2032, %v2047
      %v2063 = vadd.f32 %v2033, %v2048
      %v2064 = vadd.f32 %v2034, %v2049
      %v2065 = vadd.f32 %v2035, %v2050
      %v2066 = vadd.f32 %v2036, %v2051
      %v2067 = vadd.f32 %v2037, %v2052
      %v2068 = vadd.f32 %v2038, %v2053
      %v2069 = vadd.f32 %v2039, %v2054
      %v2070 = vadd.f32 %v2040, %v2055
      %v2071 = vsub.f32 %v2011, %v2056
      %v2072 = vsub.f32 %v2012, %v2057
      %v2073 = vsub.f32 %v2013, %v2058
      %v2074 = vsub.f32 %v2014, %v2059
      %v2075 = vsub.f32 %v2015, %v2060
      %v2076 = vsub.f32 %v2016, %v2061
      %v2077 = vsub.f32 %v2017, %v2062
      %v2078 = vsub.f32 %v2018, %v2063
      %v2079 = vsub.f32 %v2019, %v2064
      %v2080 = vsub.f32 %v2020, %v2065
      %v2081 = vsub.f32 %v2021, %v2066
      %v2082 = vsub.f32 %v2022, %v2067
      %v2083 = vsub.f32 %v2023, %v2068
      %v2084 = vsub.f32 %v2024, %v2069
      %v2085 = vsub.f32 %v2025, %v2070
      %v2086 = vand.u32 2147483647, %v2071
      %v2087 = vand.u32 2147483647, %v2072
      %v2088 = vand.u32 2147483647, %v2073
      %v2089 = vand.u32 2147483647, %v2074
      %v2090 = vand.u32 2147483647, %v2075
      %v2091 = vand.u32 2147483647, %v2076
      %v2092 = vand.u32 2147483647, %v2077
      %v2093 = vand.u32 2147483647, %v2078
      %v2094 = vand.u32 2147483647, %v2079
      %v2095 = vand.u32 2147483647, %v2080
      %v2096 = vand.u32 2147483647, %v2081
      %v2097 = vand.u32 2147483647, %v2082
      %v2098 = vand.u32 2147483647, %v2083
      %v2099 = vand.u32 2147483647, %v2084
      %v2100 = vand.u32 2147483647, %v2085
      %v2101 = vadd.f32 %v2011, 1e-10
      %v2102 = vadd.f32 %v2012, 1e-10
      %v2103 = vadd.f32 %v2013, 1e-10
      %v2104 = vadd.f32 %v2014, 1e-10
      %v2105 = vadd.f32 %v2015, 1e-10
      %v2106 = vadd.f32 %v2016, 1e-10
      %v2107 = vadd.f32 %v2017, 1e-10
      %v2108 = vadd.f32 %v2018, 1e-10
      %v2109 = vadd.f32 %v2019, 1e-10
      %v2110 = vadd.f32 %v2020, 1e-10
      %v2111 = vadd.f32 %v2021, 1e-10
      %v2112 = vadd.f32 %v2022, 1e-10
      %v2113 = vadd.f32 %v2023, 1e-10
      %v2114 = vadd.f32 %v2024, 1e-10
      %v2115 = vadd.f32 %v2025, 1e-10
      %v2116 = vadd.f32 %v2056, 1e-10
      %v2117 = vadd.f32 %v2057, 1e-10
      %v2118 = vadd.f32 %v2058, 1e-10
      %v2119 = vadd.f32 %v2059, 1e-10
      %v2120 = vadd.f32 %v2060, 1e-10
      %v2121 = vadd.f32 %v2061, 1e-10
      %v2122 = vadd.f32 %v2062, 1e-10
      %v2123 = vadd.f32 %v2063, 1e-10
      %v2124 = vadd.f32 %v2064, 1e-10
      %v2125 = vadd.f32 %v2065, 1e-10
      %v2126 = vadd.f32 %v2066, 1e-10
      %v2127 = vadd.f32 %v2067, 1e-10
      %v2128 = vadd.f32 %v2068, 1e-10
      %v2129 = vadd.f32 %v2069, 1e-10
      %v2130 = vadd.f32 %v2070, 1e-10
      %v2131 = vrcp.pop %v2116
      %v2132 = vmul.f32 %v2101, %v2131
      %v2133 = vrcp.pop %v2117
      %v2134 = vmul.f32 %v2102, %v2133
      %v2135 = vrcp.pop %v2118
      %v2136 = vmul.f32 %v2103, %v2135
      %v2137 = vrcp.pop %v2119
      %v2138 = vmul.f32 %v2104, %v2137
      %v2139 = vrcp.pop %v2120
      %v2140 = vmul.f32 %v2105, %v2139
      %v2141 = vrcp.pop %v2121
      %v2142 = vmul.f32 %v2106, %v2141
      %v2143 = vrcp.pop %v2122
      %v2144 = vmul.f32 %v2107, %v2143
      %v2145 = vrcp.pop %v2123
      %v2146 = vmul.f32 %v2108, %v2145
      %v2147 = vrcp.pop %v2124
      %v2148 = vmul.f32 %v2109, %v2147
      %v2149 = vrcp.pop %v2125
      %v2150 = vmul.f32 %v2110, %v2149
      %v2151 = vrcp.pop %v2126
      %v2152 = vmul.f32 %v2111, %v2151
      %v2153 = vrcp.pop %v2127
      %v2154 = vmul.f32 %v2112, %v2153
      %v2155 = vrcp.pop %v2128
      %v2156 = vmul.f32 %v2113, %v2155
      %v2157 = vrcp.pop %v2129
      %v2158 = vmul.f32 %v2114, %v2157
      %v2159 = vrcp.pop %v2130
      %v2160 = vmul.f32 %v2115, %v2159
      %v2161 = vlog2.pop %v2132
      %v2162 = vmul.f32 %v2161, 0.6931472
      %v2163 = vlog2.pop %v2134
      %v2164 = vmul.f32 %v2163, 0.6931472
      %v2165 = vlog2.pop %v2136
      %v2166 = vmul.f32 %v2165, 0.6931472
      %v2167 = vlog2.pop %v2138
      %v2168 = vmul.f32 %v2167, 0.6931472
      %v2169 = vlog2.pop %v2140
      %v2170 = vmul.f32 %v2169, 0.6931472
      %v2171 = vlog2.pop %v2142
      %v2172 = vmul.f32 %v2171, 0.6931472
      %v2173 = vlog2.pop %v2144
      %v2174 = vmul.f32 %v2173, 0.6931472
      %v2175 = vlog2.pop %v2146
      %v2176 = vmul.f32 %v2175, 0.6931472
      %v2177 = vlog2.pop %v2148
      %v2178 = vmul.f32 %v2177, 0.6931472
      %v2179 = vlog2.pop %v2150
      %v2180 = vmul.f32 %v2179, 0.6931472
      %v2181 = vlog2.pop %v2152
      %v2182 = vmul.f32 %v2181, 0.6931472
      %v2183 = vlog2.pop %v2154
      %v2184 = vmul.f32 %v2183, 0.6931472
      %v2185 = vlog2.pop %v2156
      %v2186 = vmul.f32 %v2185, 0.6931472
      %v2187 = vlog2.pop %v2158
      %v2188 = vmul.f32 %v2187, 0.6931472
      %v2189 = vlog2.pop %v2160
      %v2190 = vmul.f32 %v2189, 0.6931472
      %v2191 = vand.u32 2147483647, %v2162
      %v2192 = vand.u32 2147483647, %v2164
      %v2193 = vand.u32 2147483647, %v2166
      %v2194 = vand.u32 2147483647, %v2168
      %v2195 = vand.u32 2147483647, %v2170
      %v2196 = vand.u32 2147483647, %v2172
      %v2197 = vand.u32 2147483647, %v2174
      %v2198 = vand.u32 2147483647, %v2176
      %v2199 = vand.u32 2147483647, %v2178
      %v2200 = vand.u32 2147483647, %v2180
      %v2201 = vand.u32 2147483647, %v2182
      %v2202 = vand.u32 2147483647, %v2184
      %v2203 = vand.u32 2147483647, %v2186
      %v2204 = vand.u32 2147483647, %v2188
      %v2205 = vand.u32 2147483647, %v2190
      %v2206 = vld [vmem:[%s195] sm:$0xff]
      %v2207 = vld [vmem:[%s195 + $0x8] sm:$0xff]
      %v2208 = vld [vmem:[%s195 + $0x10] sm:$0xff]
      %v2209 = vadd.f32 %v2086, %v2089
      %v2210 = vadd.f32 %v2209, %v2092
      %v2211 = vadd.f32 %v2210, %v2095
      %v2212 = vadd.f32 %v2211, %v2098
      %v2213 = vadd.f32 %v2087, %v2090
      %v2214 = vadd.f32 %v2213, %v2093
      %v2215 = vadd.f32 %v2214, %v2096
      %v2216 = vadd.f32 %v2215, %v2099
      %v2217 = vadd.f32 %v2088, %v2091
      %v2218 = vadd.f32 %v2217, %v2094
      %v2219 = vadd.f32 %v2218, %v2097
      %v2220 = vadd.f32 %v2219, %v2100
      %v2221 = vadd.f32 %v2206, %v2212
      %v2222 = vadd.f32 %v2207, %v2216
      %v2223 = vadd.f32 %v2208, %v2220
      %2224 = vst [vmem:[%s195] sm:$0xff] %v2221
      %2225 = vst [vmem:[%s195 + $0x8] sm:$0xff] %v2222
      %2226 = vst [vmem:[%s195 + $0x10] sm:$0xff] %v2223
      %v2227 = vld [vmem:[%s200] sm:$0xff]
      %v2228 = vld [vmem:[%s200 + $0x8] sm:$0xff]
      %v2229 = vld [vmem:[%s200 + $0x10] sm:$0xff]
      %v2230 = vadd.f32 %v2191, %v2194
      %v2231 = vadd.f32 %v2230, %v2197
      %v2232 = vadd.f32 %v2231, %v2200
      %v2233 = vadd.f32 %v2232, %v2203
      %v2234 = vadd.f32 %v2192, %v2195
      %v2235 = vadd.f32 %v2234, %v2198
      %v2236 = vadd.f32 %v2235, %v2201
      %v2237 = vadd.f32 %v2236, %v2204
      %v2238 = vadd.f32 %v2193, %v2196
      %v2239 = vadd.f32 %v2238, %v2199
      %v2240 = vadd.f32 %v2239, %v2202
      %v2241 = vadd.f32 %v2240, %v2205
      %v2242 = vadd.f32 %v2227, %v2233
      %v2243 = vadd.f32 %v2228, %v2237
      %v2244 = vadd.f32 %v2229, %v2241
      %2245 = vst [vmem:[%s200] sm:$0xff] %v2242
      %2246 = vst [vmem:[%s200 + $0x8] sm:$0xff] %v2243
      %2247 = vst [vmem:[%s200 + $0x10] sm:$0xff] %v2244
      %p2248 = scmp.lt.s32.totalorder %s19, 1
      %s2249 = scalar_select %p2248, %s19, 1
      %s2250 = smul.addr %s2249, 3
      %s2251 = smul.addr %s2250, 8
      %s2252 = scalar_lea.vmem %s2, %s2251
      %p2253 = scmp.lt.s32.totalorder %s19, 1
      %s2254 = scalar_select %p2253, %s19, 1
      %s2255 = smul.addr %s2254, 3
      %s2256 = smul.addr %s2255, 8
      %s2257 = scalar_lea.vmem %s3, %s2256
      // Predicated region
      $region33: #{multi_scale_spectral_loss.6} parent=27 // pred_check
        %p2258 = pneg %p92
      $region34: #{multi_scale_spectral_loss.6} parent=27 // pred_check_branch
        %2260 = sbr.rel (%p2258) target = $region36
      $region35: #{multi_scale_spectral_loss.6} parent=27 // pred_region
        _
      $region36: #{multi_scale_spectral_loss.6} parent=27 // pred_fallthru
        _
      // Predicated region
      $region37: #{multi_scale_spectral_loss.6} parent=27 // pred_check
        %p2261 = pneg %p118
      $region38: #{multi_scale_spectral_loss.6} parent=27 // pred_check_branch
        %2263 = sbr.rel (%p2261) target = $region40
      $region39: #{multi_scale_spectral_loss.6} parent=27 // pred_region
        _
      $region40: #{multi_scale_spectral_loss.6} parent=27 // pred_fallthru
        _
    $region28: #{multi_scale_spectral_loss.6} parent=5 // pred_fallthru
      _
    %p2264 = scmp.le.s32.totalorder 2, %s10
    // Predicated region
    $region41: #{multi_scale_spectral_loss.6} parent=5 // pred_check
      %p2265 = pneg %p2264
    $region42: #{multi_scale_spectral_loss.6} parent=5 // pred_check_branch
      %2267 = sbr.rel (%p2265) target = $region44
    $region43: #{multi_scale_spectral_loss.6} parent=5 // pred_region
      %s2268 = ssub.s32 %s10, 2
      // Predicated region
      $region45: #{multi_scale_spectral_loss.6} parent=43 // pred_check
        %p2269 = pneg %p98
      $region46: #{multi_scale_spectral_loss.6} parent=43 // pred_check_branch
        %2271 = sbr.rel (%p2269) target = $region48
      $region47: #{multi_scale_spectral_loss.6} parent=43 // pred_region
        %p2272 = scmp.lt.s32.totalorder %s21, 1
        %s2273 = scalar_select %p2272, %s21, 1
        %s2274 = smul.addr %s2273, 3
        %s2275 = smul.addr %s2274, 8
        %s2276 = scalar_lea.vmem %s2, %s2275
      $region48: #{multi_scale_spectral_loss.6} parent=43 // pred_fallthru
        _
      // Predicated region
      $region49: #{multi_scale_spectral_loss.6} parent=43 // pred_check
        %p2277 = pneg %p124
      $region50: #{multi_scale_spectral_loss.6} parent=43 // pred_check_branch
        %2279 = sbr.rel (%p2277) target = $region52
      $region51: #{multi_scale_spectral_loss.6} parent=43 // pred_region
        %p2280 = scmp.lt.s32.totalorder %s21, 1
        %s2281 = scalar_select %p2280, %s21, 1
        %s2282 = smul.addr %s2281, 3
        %s2283 = smul.addr %s2282, 8
        %s2284 = scalar_lea.vmem %s3, %s2283
      $region52: #{multi_scale_spectral_loss.6} parent=43 // pred_fallthru
        _
    $region44: #{multi_scale_spectral_loss.6} parent=5 // pred_fallthru
      _
  $region6: #{multi_scale_spectral_loss.6} parent=0 // loop_footer
    %s14 = sadd.s32 1, %s10
  $region7: #{multi_scale_spectral_loss.6} parent=0 // loop_footer_branch
    %9 = sbr.rel target = $region3
  $region8: #{multi_scale_spectral_loss.6} parent=0 // loop_exit
    _

// kernel: multi_scale_spectral_loss.5
$region0: #{multi_scale_spectral_loss.5}
  #allocation0 [shape = 'u32[]', space=smem, size = 0x4, offset = 0x4, fixed_abs, tag = 'smem constant byte address 0x4 - core index']
  #allocation1 [shape = 'u32[144,128]{1,0:T(1,128)}', space=vmem, size = 0x12000, scoped, tag = 'internal scratch']
  %s0 = inlined_call_operand.vmem [shape: bf16[64,2048], index: 0, kind: input, shape index: {}]
  %s1 = inlined_call_operand.vmem [shape: bf16[3,2048,768], index: 1, kind: input, shape index: {}]
  %s2 = inlined_call_operand.vmem [shape: f32[16,384], index: 2, kind: output, shape index: {0}]
  %s3 = inlined_call_operand.vmem [shape: f32[16,384], index: 3, kind: output, shape index: {1}]
  %4 = xla_tuple %s2, %s3
  %s5 = sld [smem:[#allocation0]]
  $region53: #{multi_scale_spectral_loss.5} parent=0
    _
  %s7 = ssub.s32 1, %s5
  %s8 = scalar_select 0, %s7, %s5
  loop: start=0, step=1, limit=8
  $region2: #{multi_scale_spectral_loss.5} parent=0 // loop_pre_header
    _
  $region3: #{multi_scale_spectral_loss.5} parent=0 // loop_header
    %s10 = sphi 0, %s14
    %p11 = scmp.ge.s32.totalorder %s10, 8
    %s17 = sphi 0, %s29
    %s18 = sphi 0, %s25
    %s19 = sphi 0, %s17
    %s20 = sphi 0, %s18
    %s21 = sphi 0, %s19
    %s22 = sphi 0, %s20
    %s32 = sphi 0, %s34
    %s35 = sphi 0, %s32
    %s36 = sphi 0, %s35
    %s52 = sphi 0, %s36
    %s56 = sphi 0, %s56
    %s58 = sphi 0, %s56
    %s59 = sphi 0, %s58
    %s73 = sphi 0, %s59
    %s79 = sphi 0, %s81
    %s82 = sphi 0, %s79
    %s83 = sphi 0, %s82
    %s99 = sphi 0, %s83
    %s105 = sphi 0, %s107
    %s108 = sphi 0, %s105
    %s109 = sphi 0, %s108
    %s125 = sphi 0, %s109
  $region4: #{multi_scale_spectral_loss.5} parent=0 // loop_header_branch
    %13 = sbr.rel (%p11) target = $region8
  $region5: #{multi_scale_spectral_loss.5} parent=0 // loop_body
    %s15 = ssub.s32 %s10, 1
    %s16 = ssub.s32 %s10, 2
    %s23 = sadd.s32 1, %s18
    %p24 = scmp.ge.s32.totalorder %s23, 3
    %s25 = scalar_select %p24, 0, %s23
    %s26 = sadd.s32 1, %s17
    %s27 = scalar_select %p24, %s26, %s17
    %p28 = scmp.ge.s32.totalorder %s27, 2
    %s29 = scalar_select %p28, 0, %s27
    %s30 = ssub.s32 %s17, %s29
    %p31 = scmp.eq.s32.totalorder %s30, 0
    %s33 = sadd.s32 %s32, 1
    %s34 = scalar_select %p31, %s32, %s33
    %p37 = pneg %p31
    %p38 = scmp.eq.s32.totalorder %s10, 5
    %p39 = por %p37, %p38
    %p40 = scmp.ne.s32.totalorder %s32, %s35
    %p41 = scmp.eq.s32.totalorder %s10, 0
    %p42 = por %p40, %p41
    %p43 = scmp.ne.s32.totalorder %s32, %s35
    %p44 = scmp.eq.s32.totalorder %s15, 5
    %p45 = por %p43, %p44
    %p46 = scmp.ne.s32.totalorder %s35, %s36
    %p47 = scmp.eq.s32.totalorder %s15, 0
    %p48 = por %p46, %p47
    %p49 = scmp.ne.s32.totalorder %s35, %s36
    %p50 = scmp.eq.s32.totalorder %s16, 5
    %p51 = por %p49, %p50
    %p53 = scmp.ne.s32.totalorder %s36, %s52
    %p54 = scmp.eq.s32.totalorder %s16, 0
    %p55 = por %p53, %p54
    %s57 = sadd.s32 %s56, 1
    %p60 = scmp.eq.s32.totalorder %s10, 5
    %p61 = scmp.ne.s32.totalorder %s56, %s58
    %p62 = scmp.eq.s32.totalorder %s10, 0
    %p63 = por %p61, %p62
    %p64 = scmp.ne.s32.totalorder %s56, %s58
    %p65 = scmp.eq.s32.totalorder %s15, 5
    %p66 = por %p64, %p65
    %p67 = scmp.ne.s32.totalorder %s58, %s59
    %p68 = scmp.eq.s32.totalorder %s15, 0
    %p69 = por %p67, %p68
    %p70 = scmp.ne.s32.totalorder %s58, %s59
    %p71 = scmp.eq.s32.totalorder %s16, 5
    %p72 = por %p70, %p71
    %p74 = scmp.ne.s32.totalorder %s59, %s73
    %p75 = scmp.eq.s32.totalorder %s16, 0
    %p76 = por %p74, %p75
    %s77 = ssub.s32 %s17, %s29
    %p78 = scmp.eq.s32.totalorder %s77, 0
    %s80 = sadd.s32 %s79, 1
    %s81 = scalar_select %p78, %s79, %s80
    %p84 = pneg %p78
    %p85 = scmp.eq.s32.totalorder %s10, 5
    %p86 = por %p84, %p85
    %p87 = scmp.ne.s32.totalorder %s79, %s82
    %p88 = scmp.eq.s32.totalorder %s10, 0
    %p89 = por %p87, %p88
    %p90 = scmp.ne.s32.totalorder %s79, %s82
    %p91 = scmp.eq.s32.totalorder %s15, 5
    %p92 = por %p90, %p91
    %p93 = scmp.ne.s32.totalorder %s82, %s83
    %p94 = scmp.eq.s32.totalorder %s15, 0
    %p95 = por %p93, %p94
    %p96 = scmp.ne.s32.totalorder %s82, %s83
    %p97 = scmp.eq.s32.totalorder %s16, 5
    %p98 = por %p96, %p97
    %p100 = scmp.ne.s32.totalorder %s83, %s99
    %p101 = scmp.eq.s32.totalorder %s16, 0
    %p102 = por %p100, %p101
    %s103 = ssub.s32 %s17, %s29
    %p104 = scmp.eq.s32.totalorder %s103, 0
    %s106 = sadd.s32 %s105, 1
    %s107 = scalar_select %p104, %s105, %s106
    %p110 = pneg %p104
    %p111 = scmp.eq.s32.totalorder %s10, 5
    %p112 = por %p110, %p111
    %p113 = scmp.ne.s32.totalorder %s105, %s108
    %p114 = scmp.eq.s32.totalorder %s10, 0
    %p115 = por %p113, %p114
    %p116 = scmp.ne.s32.totalorder %s105, %s108
    %p117 = scmp.eq.s32.totalorder %s15, 5
    %p118 = por %p116, %p117
    %p119 = scmp.ne.s32.totalorder %s108, %s109
    %p120 = scmp.eq.s32.totalorder %s15, 0
    %p121 = por %p119, %p120
    %p122 = scmp.ne.s32.totalorder %s108, %s109
    %p123 = scmp.eq.s32.totalorder %s16, 5
    %p124 = por %p122, %p123
    %p126 = scmp.ne.s32.totalorder %s109, %s125
    %p127 = scmp.eq.s32.totalorder %s16, 0
    %p128 = por %p126, %p127
    %p129 = scmp.le.s32.totalorder 1, %s10
    %p130 = scmp.lt.s32.totalorder %s10, 7
    %p131 = pnand %p129, %p130
    %p132 = pneg %p131
    // Predicated region
    $region9: #{multi_scale_spectral_loss.5} parent=5 // pred_check
      _
    $region10: #{multi_scale_spectral_loss.5} parent=5 // pred_check_branch
      %134 = sbr.rel (%p131) target = $region12
    $region11: #{multi_scale_spectral_loss.5} parent=5 // pred_region
      %s135 = ssub.s32 %s10, 1
      // Predicated region
      $region13: #{multi_scale_spectral_loss.5} parent=11 // pred_check
        %p136 = pneg %p69
      $region14: #{multi_scale_spectral_loss.5} parent=11 // pred_check_branch
        %138 = sbr.rel (%p136) target = $region16
      $region15: #{multi_scale_spectral_loss.5} parent=11 // pred_region
        _
      $region16: #{multi_scale_spectral_loss.5} parent=11 // pred_fallthru
        _
    $region12: #{multi_scale_spectral_loss.5} parent=5 // pred_fallthru
      _
    %p139 = scmp.lt.s32.totalorder %s10, 6
    // Predicated region
    $region17: #{multi_scale_spectral_loss.5} parent=5 // pred_check
      %p140 = pneg %p139
    $region18: #{multi_scale_spectral_loss.5} parent=5 // pred_check_branch
      %142 = sbr.rel (%p140) target = $region20
    $region19: #{multi_scale_spectral_loss.5} parent=5 // pred_region
      // Predicated region
      $region21: #{multi_scale_spectral_loss.5} parent=19 // pred_check
        %p143 = pneg %p42
      $region22: #{multi_scale_spectral_loss.5} parent=19 // pred_check_branch
        %145 = sbr.rel (%p143) target = $region24
      $region23: #{multi_scale_spectral_loss.5} parent=19 // pred_region
        %s146 = smul.u32 4, %s17
        %p147 = scmp.lt.s32.totalorder %s146, 7
        %s148 = scalar_select %p147, %s146, 7
        %s149 = smul.addr %s148, 16
        %s150 = smul.addr %s149, 4
        %s151 = scalar_lea.vmem %s0, %s150
        %s152 = smul.u32 4, %s17
      $region24: #{multi_scale_spectral_loss.5} parent=19 // pred_fallthru
        _
    $region20: #{multi_scale_spectral_loss.5} parent=5 // pred_fallthru
      _
    %p153 = scmp.le.s32.totalorder 1, %s10
    %p154 = scmp.lt.s32.totalorder %s10, 7
    %p155 = pnand %p153, %p154
    %p156 = pneg %p155
    // Predicated region
    $region25: #{multi_scale_spectral_loss.5} parent=5 // pred_check
      _
    $region26: #{multi_scale_spectral_loss.5} parent=5 // pred_check_branch
      %158 = sbr.rel (%p155) target = $region28
    $region27: #{multi_scale_spectral_loss.5} parent=5 // pred_region
      %s159 = ssub.s32 %s10, 1
      %s160 = smul.u32 4, %s19
      %p161 = scmp.lt.s32.totalorder %s160, 7
      %s162 = scalar_select %p161, %s160, 7
      %s163 = smul.addr %s162, 16
      %s164 = smul.addr %s163, 4
      %s165 = scalar_lea.vmem %s0, %s164
      %p166 = pneg %p48
      %p167 = pneg %p45
      %p168 = pneg %p69
      %p169 = pneg %p66
      %p170 = pneg %p95
      %p171 = pneg %p92
      %p172 = scmp.lt.s32.totalorder %s19, 1
      %s173 = scalar_select %p172, %s19, 1
      %s174 = smul.addr %s173, 3
      %s175 = smul.addr %s174, 8
      %s176 = scalar_lea.vmem %s2, %s175
      %p177 = pneg %p121
      %p178 = pneg %p118
      %p179 = scmp.lt.s32.totalorder %s19, 1
      %s180 = scalar_select %p179, %s19, 1
      %s181 = smul.addr %s180, 3
      %s182 = smul.addr %s181, 8
      %s183 = scalar_lea.vmem %s3, %s182
      %s184 = smul.u32 4, %s19
      %p185 = scmp.lt.s32.totalorder %s184, 7
      %s186 = scalar_select %p185, %s184, 7
      %s187 = smul.addr %s186, 16
      %s188 = smul.addr %s187, 4
      %s189 = scalar_lea.vmem %s0, %s188
      %s190 = smul.u32 4, %s19
      %p191 = scmp.lt.s32.totalorder %s19, 1
      %s192 = scalar_select %p191, %s19, 1
      %s193 = smul.addr %s192, 3
      %s194 = smul.addr %s193, 8
      %s195 = scalar_lea.vmem %s2, %s194
      %p196 = scmp.lt.s32.totalorder %s19, 1
      %s197 = scalar_select %p196, %s19, 1
      %s198 = smul.addr %s197, 3
      %s199 = smul.addr %s198, 8
      %s200 = scalar_lea.vmem %s3, %s199
      %p201 = scmp.eq.s32.totalorder %s20, 0
      // Predicated region
      $region29: #{multi_scale_spectral_loss.5} parent=27 // pred_check
        %p202 = pneg %p201
      $region30: #{multi_scale_spectral_loss.5} parent=27 // pred_check_branch
        %204 = sbr.rel (%p202) target = $region32
      $region31: #{multi_scale_spectral_loss.5} parent=27 // pred_region
        %205 = vst [vmem:[%s195] sm:$0xff] 0.0
        %206 = vst [vmem:[%s195 + $0x8] sm:$0xff] 0.0
        %207 = vst [vmem:[%s195 + $0x10] sm:$0xff] 0.0
        %208 = vst [vmem:[%s200] sm:$0xff] 0.0
        %209 = vst [vmem:[%s200 + $0x8] sm:$0xff] 0.0
        %210 = vst [vmem:[%s200 + $0x10] sm:$0xff] 0.0
      $region32: #{multi_scale_spectral_loss.5} parent=27 // pred_fallthru
        _
      %v211 = vld [vmem:[%s189] sm:$0xff]
      %v212 = vld [vmem:[%s189 + $0x8] sm:$0xff]
      %v213 = vld [vmem:[%s189 + $0x10] sm:$0xff]
      %v214 = vld [vmem:[%s189 + $0x18] sm:$0xff]
      %v215 = vld [vmem:[%s189 + $0x20] sm:$0xff]
      %v216 = vld [vmem:[%s189 + $0x28] sm:$0xff]
      %v217 = vld [vmem:[%s189 + $0x30] sm:$0xff]
      %v218 = vld [vmem:[%s189 + $0x38] sm:$0xff]
      %v219 = vld [vmem:[%s189 + $0x40] sm:$0xff]
      %v220 = vld [vmem:[%s189 + $0x48] sm:$0xff]
      %v221 = vld [vmem:[%s189 + $0x50] sm:$0xff]
      %v222 = vld [vmem:[%s189 + $0x58] sm:$0xff]
      %v223 = vld [vmem:[%s189 + $0x60] sm:$0xff]
      %v224 = vld [vmem:[%s189 + $0x68] sm:$0xff]
      %v225 = vld [vmem:[%s189 + $0x70] sm:$0xff]
      %v226 = vld [vmem:[%s189 + $0x78] sm:$0xff]
      %v227 = vld [vmem:[%s189 + $0x80] sm:$0xff]
      %v228 = vld [vmem:[%s189 + $0x88] sm:$0xff]
      %v229 = vld [vmem:[%s189 + $0x90] sm:$0xff]
      %v230 = vld [vmem:[%s189 + $0x98] sm:$0xff]
      %v231 = vld [vmem:[%s189 + $0xa0] sm:$0xff]
      %v232 = vld [vmem:[%s189 + $0xa8] sm:$0xff]
      %v233 = vld [vmem:[%s189 + $0xb0] sm:$0xff]
      %v234 = vld [vmem:[%s189 + $0xb8] sm:$0xff]
      %v235 = vld [vmem:[%s189 + $0xc0] sm:$0xff]
      %v236 = vld [vmem:[%s189 + $0xc8] sm:$0xff]
      %v237 = vld [vmem:[%s189 + $0xd0] sm:$0xff]
      %v238 = vld [vmem:[%s189 + $0xd8] sm:$0xff]
      %v239 = vld [vmem:[%s189 + $0xe0] sm:$0xff]
      %v240 = vld [vmem:[%s189 + $0xe8] sm:$0xff]
      %v241 = vld [vmem:[%s189 + $0xf0] sm:$0xff]
      %v242 = vld [vmem:[%s189 + $0xf8] sm:$0xff]
      %s243 = smul.u32 %s20, 1536
      %s244 = smul.addr %s243, 4
      %s245 = scalar_lea.vmem %s1, %s244
      %v246 = vld [vmem:[%s245] sm:$0xff]
      %v247 = vld [vmem:[%s245 + $0x8] sm:$0xff]
      %v248 = vld [vmem:[%s245 + $0x10] sm:$0xff]
      %v249 = vld [vmem:[%s245 + $0x18] sm:$0xff]
      %v250 = vld [vmem:[%s245 + $0x20] sm:$0xff]
      %v251 = vld [vmem:[%s245 + $0x28] sm:$0xff]
      %v252 = vld [vmem:[%s245 + $0x30] sm:$0xff]
      %v253 = vld [vmem:[%s245 + $0x38] sm:$0xff]
      %v254 = vld [vmem:[%s245 + $0x40] sm:$0xff]
      %v255 = vld [vmem:[%s245 + $0x48] sm:$0xff]
      %v256 = vld [vmem:[%s245 + $0x50] sm:$0xff]
      %v257 = vld [vmem:[%s245 + $0x58] sm:$0xff]
      %v258 = vld [vmem:[%s245 + $0x60] sm:$0xff]
      %v259 = vld [vmem:[%s245 + $0x68] sm:$0xff]
      %v260 = vld [vmem:[%s245 + $0x70] sm:$0xff]
      %v261 = vld [vmem:[%s245 + $0x78] sm:$0xff]
      %v262 = vld [vmem:[%s245 + $0x80] sm:$0xff]
      %v263 = vld [vmem:[%s245 + $0x88] sm:$0xff]
      %v264 = vld [vmem:[%s245 + $0x90] sm:$0xff]
      %v265 = vld [vmem:[%s245 + $0x98] sm:$0xff]
      %v266 = vld [vmem:[%s245 + $0xa0] sm:$0xff]
      %v267 = vld [vmem:[%s245 + $0xa8] sm:$0xff]
      %v268 = vld [vmem:[%s245 + $0xb0] sm:$0xff]
      %v269 = vld [vmem:[%s245 + $0xb8] sm:$0xff]
      %v270 = vld [vmem:[%s245 + $0xc0] sm:$0xff]
      %v271 = vld [vmem:[%s245 + $0xc8] sm:$0xff]
      %v272 = vld [vmem:[%s245 + $0xd0] sm:$0xff]
      %v273 = vld [vmem:[%s245 + $0xd8] sm:$0xff]
      %v274 = vld [vmem:[%s245 + $0xe0] sm:$0xff]
      %v275 = vld [vmem:[%s245 + $0xe8] sm:$0xff]
      %v276 = vld [vmem:[%s245 + $0xf0] sm:$0xff]
      %v277 = vld [vmem:[%s245 + $0xf8] sm:$0xff]
      %v278 = vld [vmem:[%s245 + $0x100] sm:$0xff]
      %v279 = vld [vmem:[%s245 + $0x108] sm:$0xff]
      %v280 = vld [vmem:[%s245 + $0x110] sm:$0xff]
      %v281 = vld [vmem:[%s245 + $0x118] sm:$0xff]
      %v282 = vld [vmem:[%s245 + $0x120] sm:$0xff]
      %v283 = vld [vmem:[%s245 + $0x128] sm:$0xff]
      %v284 = vld [vmem:[%s245 + $0x130] sm:$0xff]
      %v285 = vld [vmem:[%s245 + $0x138] sm:$0xff]
      %v286 = vld [vmem:[%s245 + $0x140] sm:$0xff]
      %v287 = vld [vmem:[%s245 + $0x148] sm:$0xff]
      %v288 = vld [vmem:[%s245 + $0x150] sm:$0xff]
      %v289 = vld [vmem:[%s245 + $0x158] sm:$0xff]
      %v290 = vld [vmem:[%s245 + $0x160] sm:$0xff]
      %v291 = vld [vmem:[%s245 + $0x168] sm:$0xff]
      %v292 = vld [vmem:[%s245 + $0x170] sm:$0xff]
      %v293 = vld [vmem:[%s245 + $0x178] sm:$0xff]
      %v294 = vld [vmem:[%s245 + $0x180] sm:$0xff]
      %v295 = vld [vmem:[%s245 + $0x188] sm:$0xff]
      %v296 = vld [vmem:[%s245 + $0x190] sm:$0xff]
      %v297 = vld [vmem:[%s245 + $0x198] sm:$0xff]
      %v298 = vld [vmem:[%s245 + $0x1a0] sm:$0xff]
      %v299 = vld [vmem:[%s245 + $0x1a8] sm:$0xff]
      %v300 = vld [vmem:[%s245 + $0x1b0] sm:$0xff]
      %v301 = vld [vmem:[%s245 + $0x1b8] sm:$0xff]
      %v302 = vld [vmem:[%s245 + $0x1c0] sm:$0xff]
      %v303 = vld [vmem:[%s245 + $0x1c8] sm:$0xff]
      %v304 = vld [vmem:[%s245 + $0x1d0] sm:$0xff]
      %v305 = vld [vmem:[%s245 + $0x1d8] sm:$0xff]
      %v306 = vld [vmem:[%s245 + $0x1e0] sm:$0xff]
      %v307 = vld [vmem:[%s245 + $0x1e8] sm:$0xff]
      %v308 = vld [vmem:[%s245 + $0x1f0] sm:$0xff]
      %v309 = vld [vmem:[%s245 + $0x1f8] sm:$0xff]
      %v310 = vld [vmem:[%s245 + $0x200] sm:$0xff]
      %v311 = vld [vmem:[%s245 + $0x208] sm:$0xff]
      %v312 = vld [vmem:[%s245 + $0x210] sm:$0xff]
      %v313 = vld [vmem:[%s245 + $0x218] sm:$0xff]
      %v314 = vld [vmem:[%s245 + $0x220] sm:$0xff]
      %v315 = vld [vmem:[%s245 + $0x228] sm:$0xff]
      %v316 = vld [vmem:[%s245 + $0x230] sm:$0xff]
      %v317 = vld [vmem:[%s245 + $0x238] sm:$0xff]
      %v318 = vld [vmem:[%s245 + $0x240] sm:$0xff]
      %v319 = vld [vmem:[%s245 + $0x248] sm:$0xff]
      %v320 = vld [vmem:[%s245 + $0x250] sm:$0xff]
      %v321 = vld [vmem:[%s245 + $0x258] sm:$0xff]
      %v322 = vld [vmem:[%s245 + $0x260] sm:$0xff]
      %v323 = vld [vmem:[%s245 + $0x268] sm:$0xff]
      %v324 = vld [vmem:[%s245 + $0x270] sm:$0xff]
      %v325 = vld [vmem:[%s245 + $0x278] sm:$0xff]
      %v326 = vld [vmem:[%s245 + $0x280] sm:$0xff]
      %v327 = vld [vmem:[%s245 + $0x288] sm:$0xff]
      %v328 = vld [vmem:[%s245 + $0x290] sm:$0xff]
      %v329 = vld [vmem:[%s245 + $0x298] sm:$0xff]
      %v330 = vld [vmem:[%s245 + $0x2a0] sm:$0xff]
      %v331 = vld [vmem:[%s245 + $0x2a8] sm:$0xff]
      %v332 = vld [vmem:[%s245 + $0x2b0] sm:$0xff]
      %v333 = vld [vmem:[%s245 + $0x2b8] sm:$0xff]
      %v334 = vld [vmem:[%s245 + $0x2c0] sm:$0xff]
      %v335 = vld [vmem:[%s245 + $0x2c8] sm:$0xff]
      %v336 = vld [vmem:[%s245 + $0x2d0] sm:$0xff]
      %v337 = vld [vmem:[%s245 + $0x2d8] sm:$0xff]
      %v338 = vld [vmem:[%s245 + $0x2e0] sm:$0xff]
      %v339 = vld [vmem:[%s245 + $0x2e8] sm:$0xff]
      %v340 = vld [vmem:[%s245 + $0x2f0] sm:$0xff]
      %v341 = vld [vmem:[%s245 + $0x2f8] sm:$0xff]
      %v342 = vld [vmem:[%s245 + $0x300] sm:$0xff]
      %v343 = vld [vmem:[%s245 + $0x308] sm:$0xff]
      %v344 = vld [vmem:[%s245 + $0x310] sm:$0xff]
      %v345 = vld [vmem:[%s245 + $0x318] sm:$0xff]
      %v346 = vld [vmem:[%s245 + $0x320] sm:$0xff]
      %v347 = vld [vmem:[%s245 + $0x328] sm:$0xff]
      %v348 = vld [vmem:[%s245 + $0x330] sm:$0xff]
      %v349 = vld [vmem:[%s245 + $0x338] sm:$0xff]
      %v350 = vld [vmem:[%s245 + $0x340] sm:$0xff]
      %v351 = vld [vmem:[%s245 + $0x348] sm:$0xff]
      %v352 = vld [vmem:[%s245 + $0x350] sm:$0xff]
      %v353 = vld [vmem:[%s245 + $0x358] sm:$0xff]
      %v354 = vld [vmem:[%s245 + $0x360] sm:$0xff]
      %v355 = vld [vmem:[%s245 + $0x368] sm:$0xff]
      %v356 = vld [vmem:[%s245 + $0x370] sm:$0xff]
      %v357 = vld [vmem:[%s245 + $0x378] sm:$0xff]
      %v358 = vld [vmem:[%s245 + $0x380] sm:$0xff]
      %v359 = vld [vmem:[%s245 + $0x388] sm:$0xff]
      %v360 = vld [vmem:[%s245 + $0x390] sm:$0xff]
      %v361 = vld [vmem:[%s245 + $0x398] sm:$0xff]
      %v362 = vld [vmem:[%s245 + $0x3a0] sm:$0xff]
      %v363 = vld [vmem:[%s245 + $0x3a8] sm:$0xff]
      %v364 = vld [vmem:[%s245 + $0x3b0] sm:$0xff]
      %v365 = vld [vmem:[%s245 + $0x3b8] sm:$0xff]
      %v366 = vld [vmem:[%s245 + $0x3c0] sm:$0xff]
      %v367 = vld [vmem:[%s245 + $0x3c8] sm:$0xff]
      %v368 = vld [vmem:[%s245 + $0x3d0] sm:$0xff]
      %v369 = vld [vmem:[%s245 + $0x3d8] sm:$0xff]
      %v370 = vld [vmem:[%s245 + $0x3e0] sm:$0xff]
      %v371 = vld [vmem:[%s245 + $0x3e8] sm:$0xff]
      %v372 = vld [vmem:[%s245 + $0x3f0] sm:$0xff]
      %v373 = vld [vmem:[%s245 + $0x3f8] sm:$0xff]
      %v374 = vld [vmem:[%s245 + $0x400] sm:$0xff]
      %v375 = vld [vmem:[%s245 + $0x408] sm:$0xff]
      %v376 = vld [vmem:[%s245 + $0x410] sm:$0xff]
      %v377 = vld [vmem:[%s245 + $0x418] sm:$0xff]
      %v378 = vld [vmem:[%s245 + $0x420] sm:$0xff]
      %v379 = vld [vmem:[%s245 + $0x428] sm:$0xff]
      %v380 = vld [vmem:[%s245 + $0x430] sm:$0xff]
      %v381 = vld [vmem:[%s245 + $0x438] sm:$0xff]
      %v382 = vld [vmem:[%s245 + $0x440] sm:$0xff]
      %v383 = vld [vmem:[%s245 + $0x448] sm:$0xff]
      %v384 = vld [vmem:[%s245 + $0x450] sm:$0xff]
      %v385 = vld [vmem:[%s245 + $0x458] sm:$0xff]
      %v386 = vld [vmem:[%s245 + $0x460] sm:$0xff]
      %v387 = vld [vmem:[%s245 + $0x468] sm:$0xff]
      %v388 = vld [vmem:[%s245 + $0x470] sm:$0xff]
      %v389 = vld [vmem:[%s245 + $0x478] sm:$0xff]
      %v390 = vld [vmem:[%s245 + $0x480] sm:$0xff]
      %v391 = vld [vmem:[%s245 + $0x488] sm:$0xff]
      %v392 = vld [vmem:[%s245 + $0x490] sm:$0xff]
      %v393 = vld [vmem:[%s245 + $0x498] sm:$0xff]
      %v394 = vld [vmem:[%s245 + $0x4a0] sm:$0xff]
      %v395 = vld [vmem:[%s245 + $0x4a8] sm:$0xff]
      %v396 = vld [vmem:[%s245 + $0x4b0] sm:$0xff]
      %v397 = vld [vmem:[%s245 + $0x4b8] sm:$0xff]
      %v398 = vld [vmem:[%s245 + $0x4c0] sm:$0xff]
      %v399 = vld [vmem:[%s245 + $0x4c8] sm:$0xff]
      %v400 = vld [vmem:[%s245 + $0x4d0] sm:$0xff]
      %v401 = vld [vmem:[%s245 + $0x4d8] sm:$0xff]
      %v402 = vld [vmem:[%s245 + $0x4e0] sm:$0xff]
      %v403 = vld [vmem:[%s245 + $0x4e8] sm:$0xff]
      %v404 = vld [vmem:[%s245 + $0x4f0] sm:$0xff]
      %v405 = vld [vmem:[%s245 + $0x4f8] sm:$0xff]
      %v406 = vld [vmem:[%s245 + $0x500] sm:$0xff]
      %v407 = vld [vmem:[%s245 + $0x508] sm:$0xff]
      %v408 = vld [vmem:[%s245 + $0x510] sm:$0xff]
      %v409 = vld [vmem:[%s245 + $0x518] sm:$0xff]
      %v410 = vld [vmem:[%s245 + $0x520] sm:$0xff]
      %v411 = vld [vmem:[%s245 + $0x528] sm:$0xff]
      %v412 = vld [vmem:[%s245 + $0x530] sm:$0xff]
      %v413 = vld [vmem:[%s245 + $0x538] sm:$0xff]
      %v414 = vld [vmem:[%s245 + $0x540] sm:$0xff]
      %v415 = vld [vmem:[%s245 + $0x548] sm:$0xff]
      %v416 = vld [vmem:[%s245 + $0x550] sm:$0xff]
      %v417 = vld [vmem:[%s245 + $0x558] sm:$0xff]
      %v418 = vld [vmem:[%s245 + $0x560] sm:$0xff]
      %v419 = vld [vmem:[%s245 + $0x568] sm:$0xff]
      %v420 = vld [vmem:[%s245 + $0x570] sm:$0xff]
      %v421 = vld [vmem:[%s245 + $0x578] sm:$0xff]
      %v422 = vld [vmem:[%s245 + $0x580] sm:$0xff]
      %v423 = vld [vmem:[%s245 + $0x588] sm:$0xff]
      %v424 = vld [vmem:[%s245 + $0x590] sm:$0xff]
      %v425 = vld [vmem:[%s245 + $0x598] sm:$0xff]
      %v426 = vld [vmem:[%s245 + $0x5a0] sm:$0xff]
      %v427 = vld [vmem:[%s245 + $0x5a8] sm:$0xff]
      %v428 = vld [vmem:[%s245 + $0x5b0] sm:$0xff]
      %v429 = vld [vmem:[%s245 + $0x5b8] sm:$0xff]
      %v430 = vld [vmem:[%s245 + $0x5c0] sm:$0xff]
      %v431 = vld [vmem:[%s245 + $0x5c8] sm:$0xff]
      %v432 = vld [vmem:[%s245 + $0x5d0] sm:$0xff]
      %v433 = vld [vmem:[%s245 + $0x5d8] sm:$0xff]
      %v434 = vld [vmem:[%s245 + $0x5e0] sm:$0xff]
      %v435 = vld [vmem:[%s245 + $0x5e8] sm:$0xff]
      %v436 = vld [vmem:[%s245 + $0x5f0] sm:$0xff]
      %v437 = vld [vmem:[%s245 + $0x5f8] sm:$0xff]
      %v438 = vld [vmem:[%s245 + $0x600] sm:$0xff]
      %v439 = vld [vmem:[%s245 + $0x608] sm:$0xff]
      %v440 = vld [vmem:[%s245 + $0x610] sm:$0xff]
      %v441 = vld [vmem:[%s245 + $0x618] sm:$0xff]
      %v442 = vld [vmem:[%s245 + $0x620] sm:$0xff]
      %v443 = vld [vmem:[%s245 + $0x628] sm:$0xff]
      %v444 = vld [vmem:[%s245 + $0x630] sm:$0xff]
      %v445 = vld [vmem:[%s245 + $0x638] sm:$0xff]
      %v446 = vld [vmem:[%s245 + $0x640] sm:$0xff]
      %v447 = vld [vmem:[%s245 + $0x648] sm:$0xff]
      %v448 = vld [vmem:[%s245 + $0x650] sm:$0xff]
      %v449 = vld [vmem:[%s245 + $0x658] sm:$0xff]
      %v450 = vld [vmem:[%s245 + $0x660] sm:$0xff]
      %v451 = vld [vmem:[%s245 + $0x668] sm:$0xff]
      %v452 = vld [vmem:[%s245 + $0x670] sm:$0xff]
      %v453 = vld [vmem:[%s245 + $0x678] sm:$0xff]
      %v454 = vld [vmem:[%s245 + $0x680] sm:$0xff]
      %v455 = vld [vmem:[%s245 + $0x688] sm:$0xff]
      %v456 = vld [vmem:[%s245 + $0x690] sm:$0xff]
      %v457 = vld [vmem:[%s245 + $0x698] sm:$0xff]
      %v458 = vld [vmem:[%s245 + $0x6a0] sm:$0xff]
      %v459 = vld [vmem:[%s245 + $0x6a8] sm:$0xff]
      %v460 = vld [vmem:[%s245 + $0x6b0] sm:$0xff]
      %v461 = vld [vmem:[%s245 + $0x6b8] sm:$0xff]
      %v462 = vld [vmem:[%s245 + $0x6c0] sm:$0xff]
      %v463 = vld [vmem:[%s245 + $0x6c8] sm:$0xff]
      %v464 = vld [vmem:[%s245 + $0x6d0] sm:$0xff]
      %v465 = vld [vmem:[%s245 + $0x6d8] sm:$0xff]
      %v466 = vld [vmem:[%s245 + $0x6e0] sm:$0xff]
      %v467 = vld [vmem:[%s245 + $0x6e8] sm:$0xff]
      %v468 = vld [vmem:[%s245 + $0x6f0] sm:$0xff]
      %v469 = vld [vmem:[%s245 + $0x6f8] sm:$0xff]
      %v470 = vld [vmem:[%s245 + $0x700] sm:$0xff]
      %v471 = vld [vmem:[%s245 + $0x708] sm:$0xff]
      %v472 = vld [vmem:[%s245 + $0x710] sm:$0xff]
      %v473 = vld [vmem:[%s245 + $0x718] sm:$0xff]
      %v474 = vld [vmem:[%s245 + $0x720] sm:$0xff]
      %v475 = vld [vmem:[%s245 + $0x728] sm:$0xff]
      %v476 = vld [vmem:[%s245 + $0x730] sm:$0xff]
      %v477 = vld [vmem:[%s245 + $0x738] sm:$0xff]
      %v478 = vld [vmem:[%s245 + $0x740] sm:$0xff]
      %v479 = vld [vmem:[%s245 + $0x748] sm:$0xff]
      %v480 = vld [vmem:[%s245 + $0x750] sm:$0xff]
      %v481 = vld [vmem:[%s245 + $0x758] sm:$0xff]
      %v482 = vld [vmem:[%s245 + $0x760] sm:$0xff]
      %v483 = vld [vmem:[%s245 + $0x768] sm:$0xff]
      %v484 = vld [vmem:[%s245 + $0x770] sm:$0xff]
      %v485 = vld [vmem:[%s245 + $0x778] sm:$0xff]
      %v486 = vld [vmem:[%s245 + $0x780] sm:$0xff]
      %v487 = vld [vmem:[%s245 + $0x788] sm:$0xff]
      %v488 = vld [vmem:[%s245 + $0x790] sm:$0xff]
      %v489 = vld [vmem:[%s245 + $0x798] sm:$0xff]
      %v490 = vld [vmem:[%s245 + $0x7a0] sm:$0xff]
      %v491 = vld [vmem:[%s245 + $0x7a8] sm:$0xff]
      %v492 = vld [vmem:[%s245 + $0x7b0] sm:$0xff]
      %v493 = vld [vmem:[%s245 + $0x7b8] sm:$0xff]
      %v494 = vld [vmem:[%s245 + $0x7c0] sm:$0xff]
      %v495 = vld [vmem:[%s245 + $0x7c8] sm:$0xff]
      %v496 = vld [vmem:[%s245 + $0x7d0] sm:$0xff]
      %v497 = vld [vmem:[%s245 + $0x7d8] sm:$0xff]
      %v498 = vld [vmem:[%s245 + $0x7e0] sm:$0xff]
      %v499 = vld [vmem:[%s245 + $0x7e8] sm:$0xff]
      %v500 = vld [vmem:[%s245 + $0x7f0] sm:$0xff]
      %v501 = vld [vmem:[%s245 + $0x7f8] sm:$0xff]
      %v502 = vld [vmem:[%s245 + $0x800] sm:$0xff]
      %v503 = vld [vmem:[%s245 + $0x808] sm:$0xff]
      %v504 = vld [vmem:[%s245 + $0x810] sm:$0xff]
      %v505 = vld [vmem:[%s245 + $0x818] sm:$0xff]
      %v506 = vld [vmem:[%s245 + $0x820] sm:$0xff]
      %v507 = vld [vmem:[%s245 + $0x828] sm:$0xff]
      %v508 = vld [vmem:[%s245 + $0x830] sm:$0xff]
      %v509 = vld [vmem:[%s245 + $0x838] sm:$0xff]
      %v510 = vld [vmem:[%s245 + $0x840] sm:$0xff]
      %v511 = vld [vmem:[%s245 + $0x848] sm:$0xff]
      %v512 = vld [vmem:[%s245 + $0x850] sm:$0xff]
      %v513 = vld [vmem:[%s245 + $0x858] sm:$0xff]
      %v514 = vld [vmem:[%s245 + $0x860] sm:$0xff]
      %v515 = vld [vmem:[%s245 + $0x868] sm:$0xff]
      %v516 = vld [vmem:[%s245 + $0x870] sm:$0xff]
      %v517 = vld [vmem:[%s245 + $0x878] sm:$0xff]
      %v518 = vld [vmem:[%s245 + $0x880] sm:$0xff]
      %v519 = vld [vmem:[%s245 + $0x888] sm:$0xff]
      %v520 = vld [vmem:[%s245 + $0x890] sm:$0xff]
      %v521 = vld [vmem:[%s245 + $0x898] sm:$0xff]
      %v522 = vld [vmem:[%s245 + $0x8a0] sm:$0xff]
      %v523 = vld [vmem:[%s245 + $0x8a8] sm:$0xff]
      %v524 = vld [vmem:[%s245 + $0x8b0] sm:$0xff]
      %v525 = vld [vmem:[%s245 + $0x8b8] sm:$0xff]
      %v526 = vld [vmem:[%s245 + $0x8c0] sm:$0xff]
      %v527 = vld [vmem:[%s245 + $0x8c8] sm:$0xff]
      %v528 = vld [vmem:[%s245 + $0x8d0] sm:$0xff]
      %v529 = vld [vmem:[%s245 + $0x8d8] sm:$0xff]
      %v530 = vld [vmem:[%s245 + $0x8e0] sm:$0xff]
      %v531 = vld [vmem:[%s245 + $0x8e8] sm:$0xff]
      %v532 = vld [vmem:[%s245 + $0x8f0] sm:$0xff]
      %v533 = vld [vmem:[%s245 + $0x8f8] sm:$0xff]
      %v534 = vld [vmem:[%s245 + $0x900] sm:$0xff]
      %v535 = vld [vmem:[%s245 + $0x908] sm:$0xff]
      %v536 = vld [vmem:[%s245 + $0x910] sm:$0xff]
      %v537 = vld [vmem:[%s245 + $0x918] sm:$0xff]
      %v538 = vld [vmem:[%s245 + $0x920] sm:$0xff]
      %v539 = vld [vmem:[%s245 + $0x928] sm:$0xff]
      %v540 = vld [vmem:[%s245 + $0x930] sm:$0xff]
      %v541 = vld [vmem:[%s245 + $0x938] sm:$0xff]
      %v542 = vld [vmem:[%s245 + $0x940] sm:$0xff]
      %v543 = vld [vmem:[%s245 + $0x948] sm:$0xff]
      %v544 = vld [vmem:[%s245 + $0x950] sm:$0xff]
      %v545 = vld [vmem:[%s245 + $0x958] sm:$0xff]
      %v546 = vld [vmem:[%s245 + $0x960] sm:$0xff]
      %v547 = vld [vmem:[%s245 + $0x968] sm:$0xff]
      %v548 = vld [vmem:[%s245 + $0x970] sm:$0xff]
      %v549 = vld [vmem:[%s245 + $0x978] sm:$0xff]
      %v550 = vld [vmem:[%s245 + $0x980] sm:$0xff]
      %v551 = vld [vmem:[%s245 + $0x988] sm:$0xff]
      %v552 = vld [vmem:[%s245 + $0x990] sm:$0xff]
      %v553 = vld [vmem:[%s245 + $0x998] sm:$0xff]
      %v554 = vld [vmem:[%s245 + $0x9a0] sm:$0xff]
      %v555 = vld [vmem:[%s245 + $0x9a8] sm:$0xff]
      %v556 = vld [vmem:[%s245 + $0x9b0] sm:$0xff]
      %v557 = vld [vmem:[%s245 + $0x9b8] sm:$0xff]
      %v558 = vld [vmem:[%s245 + $0x9c0] sm:$0xff]
      %v559 = vld [vmem:[%s245 + $0x9c8] sm:$0xff]
      %v560 = vld [vmem:[%s245 + $0x9d0] sm:$0xff]
      %v561 = vld [vmem:[%s245 + $0x9d8] sm:$0xff]
      %v562 = vld [vmem:[%s245 + $0x9e0] sm:$0xff]
      %v563 = vld [vmem:[%s245 + $0x9e8] sm:$0xff]
      %v564 = vld [vmem:[%s245 + $0x9f0] sm:$0xff]
      %v565 = vld [vmem:[%s245 + $0x9f8] sm:$0xff]
      %v566 = vld [vmem:[%s245 + $0xa00] sm:$0xff]
      %v567 = vld [vmem:[%s245 + $0xa08] sm:$0xff]
      %v568 = vld [vmem:[%s245 + $0xa10] sm:$0xff]
      %v569 = vld [vmem:[%s245 + $0xa18] sm:$0xff]
      %v570 = vld [vmem:[%s245 + $0xa20] sm:$0xff]
      %v571 = vld [vmem:[%s245 + $0xa28] sm:$0xff]
      %v572 = vld [vmem:[%s245 + $0xa30] sm:$0xff]
      %v573 = vld [vmem:[%s245 + $0xa38] sm:$0xff]
      %v574 = vld [vmem:[%s245 + $0xa40] sm:$0xff]
      %v575 = vld [vmem:[%s245 + $0xa48] sm:$0xff]
      %v576 = vld [vmem:[%s245 + $0xa50] sm:$0xff]
      %v577 = vld [vmem:[%s245 + $0xa58] sm:$0xff]
      %v578 = vld [vmem:[%s245 + $0xa60] sm:$0xff]
      %v579 = vld [vmem:[%s245 + $0xa68] sm:$0xff]
      %v580 = vld [vmem:[%s245 + $0xa70] sm:$0xff]
      %v581 = vld [vmem:[%s245 + $0xa78] sm:$0xff]
      %v582 = vld [vmem:[%s245 + $0xa80] sm:$0xff]
      %v583 = vld [vmem:[%s245 + $0xa88] sm:$0xff]
      %v584 = vld [vmem:[%s245 + $0xa90] sm:$0xff]
      %v585 = vld [vmem:[%s245 + $0xa98] sm:$0xff]
      %v586 = vld [vmem:[%s245 + $0xaa0] sm:$0xff]
      %v587 = vld [vmem:[%s245 + $0xaa8] sm:$0xff]
      %v588 = vld [vmem:[%s245 + $0xab0] sm:$0xff]
      %v589 = vld [vmem:[%s245 + $0xab8] sm:$0xff]
      %v590 = vld [vmem:[%s245 + $0xac0] sm:$0xff]
      %v591 = vld [vmem:[%s245 + $0xac8] sm:$0xff]
      %v592 = vld [vmem:[%s245 + $0xad0] sm:$0xff]
      %v593 = vld [vmem:[%s245 + $0xad8] sm:$0xff]
      %v594 = vld [vmem:[%s245 + $0xae0] sm:$0xff]
      %v595 = vld [vmem:[%s245 + $0xae8] sm:$0xff]
      %v596 = vld [vmem:[%s245 + $0xaf0] sm:$0xff]
      %v597 = vld [vmem:[%s245 + $0xaf8] sm:$0xff]
      %v598 = vld [vmem:[%s245 + $0xb00] sm:$0xff]
      %v599 = vld [vmem:[%s245 + $0xb08] sm:$0xff]
      %v600 = vld [vmem:[%s245 + $0xb10] sm:$0xff]
      %v601 = vld [vmem:[%s245 + $0xb18] sm:$0xff]
      %v602 = vld [vmem:[%s245 + $0xb20] sm:$0xff]
      %v603 = vld [vmem:[%s245 + $0xb28] sm:$0xff]
      %v604 = vld [vmem:[%s245 + $0xb30] sm:$0xff]
      %v605 = vld [vmem:[%s245 + $0xb38] sm:$0xff]
      %v606 = vld [vmem:[%s245 + $0xb40] sm:$0xff]
      %v607 = vld [vmem:[%s245 + $0xb48] sm:$0xff]
      %v608 = vld [vmem:[%s245 + $0xb50] sm:$0xff]
      %v609 = vld [vmem:[%s245 + $0xb58] sm:$0xff]
      %v610 = vld [vmem:[%s245 + $0xb60] sm:$0xff]
      %v611 = vld [vmem:[%s245 + $0xb68] sm:$0xff]
      %v612 = vld [vmem:[%s245 + $0xb70] sm:$0xff]
      %v613 = vld [vmem:[%s245 + $0xb78] sm:$0xff]
      %v614 = vld [vmem:[%s245 + $0xb80] sm:$0xff]
      %v615 = vld [vmem:[%s245 + $0xb88] sm:$0xff]
      %v616 = vld [vmem:[%s245 + $0xb90] sm:$0xff]
      %v617 = vld [vmem:[%s245 + $0xb98] sm:$0xff]
      %v618 = vld [vmem:[%s245 + $0xba0] sm:$0xff]
      %v619 = vld [vmem:[%s245 + $0xba8] sm:$0xff]
      %v620 = vld [vmem:[%s245 + $0xbb0] sm:$0xff]
      %v621 = vld [vmem:[%s245 + $0xbb8] sm:$0xff]
      %v622 = vld [vmem:[%s245 + $0xbc0] sm:$0xff]
      %v623 = vld [vmem:[%s245 + $0xbc8] sm:$0xff]
      %v624 = vld [vmem:[%s245 + $0xbd0] sm:$0xff]
      %v625 = vld [vmem:[%s245 + $0xbd8] sm:$0xff]
      %v626 = vld [vmem:[%s245 + $0xbe0] sm:$0xff]
      %v627 = vld [vmem:[%s245 + $0xbe8] sm:$0xff]
      %v628 = vld [vmem:[%s245 + $0xbf0] sm:$0xff]
      %v629 = vld [vmem:[%s245 + $0xbf8] sm:$0xff]
      %v630 = vld [vmem:[%s245 + $0xc00] sm:$0xff]
      %v631 = vld [vmem:[%s245 + $0xc08] sm:$0xff]
      %v632 = vld [vmem:[%s245 + $0xc10] sm:$0xff]
      %v633 = vld [vmem:[%s245 + $0xc18] sm:$0xff]
      %v634 = vld [vmem:[%s245 + $0xc20] sm:$0xff]
      %v635 = vld [vmem:[%s245 + $0xc28] sm:$0xff]
      %v636 = vld [vmem:[%s245 + $0xc30] sm:$0xff]
      %v637 = vld [vmem:[%s245 + $0xc38] sm:$0xff]
      %v638 = vld [vmem:[%s245 + $0xc40] sm:$0xff]
      %v639 = vld [vmem:[%s245 + $0xc48] sm:$0xff]
      %v640 = vld [vmem:[%s245 + $0xc50] sm:$0xff]
      %v641 = vld [vmem:[%s245 + $0xc58] sm:$0xff]
      %v642 = vld [vmem:[%s245 + $0xc60] sm:$0xff]
      %v643 = vld [vmem:[%s245 + $0xc68] sm:$0xff]
      %v644 = vld [vmem:[%s245 + $0xc70] sm:$0xff]
      %v645 = vld [vmem:[%s245 + $0xc78] sm:$0xff]
      %v646 = vld [vmem:[%s245 + $0xc80] sm:$0xff]
      %v647 = vld [vmem:[%s245 + $0xc88] sm:$0xff]
      %v648 = vld [vmem:[%s245 + $0xc90] sm:$0xff]
      %v649 = vld [vmem:[%s245 + $0xc98] sm:$0xff]
      %v650 = vld [vmem:[%s245 + $0xca0] sm:$0xff]
      %v651 = vld [vmem:[%s245 + $0xca8] sm:$0xff]
      %v652 = vld [vmem:[%s245 + $0xcb0] sm:$0xff]
      %v653 = vld [vmem:[%s245 + $0xcb8] sm:$0xff]
      %v654 = vld [vmem:[%s245 + $0xcc0] sm:$0xff]
      %v655 = vld [vmem:[%s245 + $0xcc8] sm:$0xff]
      %v656 = vld [vmem:[%s245 + $0xcd0] sm:$0xff]
      %v657 = vld [vmem:[%s245 + $0xcd8] sm:$0xff]
      %v658 = vld [vmem:[%s245 + $0xce0] sm:$0xff]
      %v659 = vld [vmem:[%s245 + $0xce8] sm:$0xff]
      %v660 = vld [vmem:[%s245 + $0xcf0] sm:$0xff]
      %v661 = vld [vmem:[%s245 + $0xcf8] sm:$0xff]
      %v662 = vld [vmem:[%s245 + $0xd00] sm:$0xff]
      %v663 = vld [vmem:[%s245 + $0xd08] sm:$0xff]
      %v664 = vld [vmem:[%s245 + $0xd10] sm:$0xff]
      %v665 = vld [vmem:[%s245 + $0xd18] sm:$0xff]
      %v666 = vld [vmem:[%s245 + $0xd20] sm:$0xff]
      %v667 = vld [vmem:[%s245 + $0xd28] sm:$0xff]
      %v668 = vld [vmem:[%s245 + $0xd30] sm:$0xff]
      %v669 = vld [vmem:[%s245 + $0xd38] sm:$0xff]
      %v670 = vld [vmem:[%s245 + $0xd40] sm:$0xff]
      %v671 = vld [vmem:[%s245 + $0xd48] sm:$0xff]
      %v672 = vld [vmem:[%s245 + $0xd50] sm:$0xff]
      %v673 = vld [vmem:[%s245 + $0xd58] sm:$0xff]
      %v674 = vld [vmem:[%s245 + $0xd60] sm:$0xff]
      %v675 = vld [vmem:[%s245 + $0xd68] sm:$0xff]
      %v676 = vld [vmem:[%s245 + $0xd70] sm:$0xff]
      %v677 = vld [vmem:[%s245 + $0xd78] sm:$0xff]
      %v678 = vld [vmem:[%s245 + $0xd80] sm:$0xff]
      %v679 = vld [vmem:[%s245 + $0xd88] sm:$0xff]
      %v680 = vld [vmem:[%s245 + $0xd90] sm:$0xff]
      %v681 = vld [vmem:[%s245 + $0xd98] sm:$0xff]
      %v682 = vld [vmem:[%s245 + $0xda0] sm:$0xff]
      %v683 = vld [vmem:[%s245 + $0xda8] sm:$0xff]
      %v684 = vld [vmem:[%s245 + $0xdb0] sm:$0xff]
      %v685 = vld [vmem:[%s245 + $0xdb8] sm:$0xff]
      %v686 = vld [vmem:[%s245 + $0xdc0] sm:$0xff]
      %v687 = vld [vmem:[%s245 + $0xdc8] sm:$0xff]
      %v688 = vld [vmem:[%s245 + $0xdd0] sm:$0xff]
      %v689 = vld [vmem:[%s245 + $0xdd8] sm:$0xff]
      %v690 = vld [vmem:[%s245 + $0xde0] sm:$0xff]
      %v691 = vld [vmem:[%s245 + $0xde8] sm:$0xff]
      %v692 = vld [vmem:[%s245 + $0xdf0] sm:$0xff]
      %v693 = vld [vmem:[%s245 + $0xdf8] sm:$0xff]
      %v694 = vld [vmem:[%s245 + $0xe00] sm:$0xff]
      %v695 = vld [vmem:[%s245 + $0xe08] sm:$0xff]
      %v696 = vld [vmem:[%s245 + $0xe10] sm:$0xff]
      %v697 = vld [vmem:[%s245 + $0xe18] sm:$0xff]
      %v698 = vld [vmem:[%s245 + $0xe20] sm:$0xff]
      %v699 = vld [vmem:[%s245 + $0xe28] sm:$0xff]
      %v700 = vld [vmem:[%s245 + $0xe30] sm:$0xff]
      %v701 = vld [vmem:[%s245 + $0xe38] sm:$0xff]
      %v702 = vld [vmem:[%s245 + $0xe40] sm:$0xff]
      %v703 = vld [vmem:[%s245 + $0xe48] sm:$0xff]
      %v704 = vld [vmem:[%s245 + $0xe50] sm:$0xff]
      %v705 = vld [vmem:[%s245 + $0xe58] sm:$0xff]
      %v706 = vld [vmem:[%s245 + $0xe60] sm:$0xff]
      %v707 = vld [vmem:[%s245 + $0xe68] sm:$0xff]
      %v708 = vld [vmem:[%s245 + $0xe70] sm:$0xff]
      %v709 = vld [vmem:[%s245 + $0xe78] sm:$0xff]
      %v710 = vld [vmem:[%s245 + $0xe80] sm:$0xff]
      %v711 = vld [vmem:[%s245 + $0xe88] sm:$0xff]
      %v712 = vld [vmem:[%s245 + $0xe90] sm:$0xff]
      %v713 = vld [vmem:[%s245 + $0xe98] sm:$0xff]
      %v714 = vld [vmem:[%s245 + $0xea0] sm:$0xff]
      %v715 = vld [vmem:[%s245 + $0xea8] sm:$0xff]
      %v716 = vld [vmem:[%s245 + $0xeb0] sm:$0xff]
      %v717 = vld [vmem:[%s245 + $0xeb8] sm:$0xff]
      %v718 = vld [vmem:[%s245 + $0xec0] sm:$0xff]
      %v719 = vld [vmem:[%s245 + $0xec8] sm:$0xff]
      %v720 = vld [vmem:[%s245 + $0xed0] sm:$0xff]
      %v721 = vld [vmem:[%s245 + $0xed8] sm:$0xff]
      %v722 = vld [vmem:[%s245 + $0xee0] sm:$0xff]
      %v723 = vld [vmem:[%s245 + $0xee8] sm:$0xff]
      %v724 = vld [vmem:[%s245 + $0xef0] sm:$0xff]
      %v725 = vld [vmem:[%s245 + $0xef8] sm:$0xff]
      %v726 = vld [vmem:[%s245 + $0xf00] sm:$0xff]
      %v727 = vld [vmem:[%s245 + $0xf08] sm:$0xff]
      %v728 = vld [vmem:[%s245 + $0xf10] sm:$0xff]
      %v729 = vld [vmem:[%s245 + $0xf18] sm:$0xff]
      %v730 = vld [vmem:[%s245 + $0xf20] sm:$0xff]
      %v731 = vld [vmem:[%s245 + $0xf28] sm:$0xff]
      %v732 = vld [vmem:[%s245 + $0xf30] sm:$0xff]
      %v733 = vld [vmem:[%s245 + $0xf38] sm:$0xff]
      %v734 = vld [vmem:[%s245 + $0xf40] sm:$0xff]
      %v735 = vld [vmem:[%s245 + $0xf48] sm:$0xff]
      %v736 = vld [vmem:[%s245 + $0xf50] sm:$0xff]
      %v737 = vld [vmem:[%s245 + $0xf58] sm:$0xff]
      %v738 = vld [vmem:[%s245 + $0xf60] sm:$0xff]
      %v739 = vld [vmem:[%s245 + $0xf68] sm:$0xff]
      %v740 = vld [vmem:[%s245 + $0xf70] sm:$0xff]
      %v741 = vld [vmem:[%s245 + $0xf78] sm:$0xff]
      %v742 = vld [vmem:[%s245 + $0xf80] sm:$0xff]
      %v743 = vld [vmem:[%s245 + $0xf88] sm:$0xff]
      %v744 = vld [vmem:[%s245 + $0xf90] sm:$0xff]
      %v745 = vld [vmem:[%s245 + $0xf98] sm:$0xff]
      %v746 = vld [vmem:[%s245 + $0xfa0] sm:$0xff]
      %v747 = vld [vmem:[%s245 + $0xfa8] sm:$0xff]
      %v748 = vld [vmem:[%s245 + $0xfb0] sm:$0xff]
      %v749 = vld [vmem:[%s245 + $0xfb8] sm:$0xff]
      %v750 = vld [vmem:[%s245 + $0xfc0] sm:$0xff]
      %v751 = vld [vmem:[%s245 + $0xfc8] sm:$0xff]
      %v752 = vld [vmem:[%s245 + $0xfd0] sm:$0xff]
      %v753 = vld [vmem:[%s245 + $0xfd8] sm:$0xff]
      %v754 = vld [vmem:[%s245 + $0xfe0] sm:$0xff]
      %v755 = vld [vmem:[%s245 + $0xfe8] sm:$0xff]
      %v756 = vld [vmem:[%s245 + $0xff0] sm:$0xff]
      %v757 = vld [vmem:[%s245 + $0xff8] sm:$0xff]
      %v758 = vld [vmem:[%s245 + $0x1000] sm:$0xff]
      %v759 = vld [vmem:[%s245 + $0x1008] sm:$0xff]
      %v760 = vld [vmem:[%s245 + $0x1010] sm:$0xff]
      %v761 = vld [vmem:[%s245 + $0x1018] sm:$0xff]
      %v762 = vld [vmem:[%s245 + $0x1020] sm:$0xff]
      %v763 = vld [vmem:[%s245 + $0x1028] sm:$0xff]
      %v764 = vld [vmem:[%s245 + $0x1030] sm:$0xff]
      %v765 = vld [vmem:[%s245 + $0x1038] sm:$0xff]
      %v766 = vld [vmem:[%s245 + $0x1040] sm:$0xff]
      %v767 = vld [vmem:[%s245 + $0x1048] sm:$0xff]
      %v768 = vld [vmem:[%s245 + $0x1050] sm:$0xff]
      %v769 = vld [vmem:[%s245 + $0x1058] sm:$0xff]
      %v770 = vld [vmem:[%s245 + $0x1060] sm:$0xff]
      %v771 = vld [vmem:[%s245 + $0x1068] sm:$0xff]
      %v772 = vld [vmem:[%s245 + $0x1070] sm:$0xff]
      %v773 = vld [vmem:[%s245 + $0x1078] sm:$0xff]
      %v774 = vld [vmem:[%s245 + $0x1080] sm:$0xff]
      %v775 = vld [vmem:[%s245 + $0x1088] sm:$0xff]
      %v776 = vld [vmem:[%s245 + $0x1090] sm:$0xff]
      %v777 = vld [vmem:[%s245 + $0x1098] sm:$0xff]
      %v778 = vld [vmem:[%s245 + $0x10a0] sm:$0xff]
      %v779 = vld [vmem:[%s245 + $0x10a8] sm:$0xff]
      %v780 = vld [vmem:[%s245 + $0x10b0] sm:$0xff]
      %v781 = vld [vmem:[%s245 + $0x10b8] sm:$0xff]
      %v782 = vld [vmem:[%s245 + $0x10c0] sm:$0xff]
      %v783 = vld [vmem:[%s245 + $0x10c8] sm:$0xff]
      %v784 = vld [vmem:[%s245 + $0x10d0] sm:$0xff]
      %v785 = vld [vmem:[%s245 + $0x10d8] sm:$0xff]
      %v786 = vld [vmem:[%s245 + $0x10e0] sm:$0xff]
      %v787 = vld [vmem:[%s245 + $0x10e8] sm:$0xff]
      %v788 = vld [vmem:[%s245 + $0x10f0] sm:$0xff]
      %v789 = vld [vmem:[%s245 + $0x10f8] sm:$0xff]
      %v790 = vld [vmem:[%s245 + $0x1100] sm:$0xff]
      %v791 = vld [vmem:[%s245 + $0x1108] sm:$0xff]
      %v792 = vld [vmem:[%s245 + $0x1110] sm:$0xff]
      %v793 = vld [vmem:[%s245 + $0x1118] sm:$0xff]
      %v794 = vld [vmem:[%s245 + $0x1120] sm:$0xff]
      %v795 = vld [vmem:[%s245 + $0x1128] sm:$0xff]
      %v796 = vld [vmem:[%s245 + $0x1130] sm:$0xff]
      %v797 = vld [vmem:[%s245 + $0x1138] sm:$0xff]
      %v798 = vld [vmem:[%s245 + $0x1140] sm:$0xff]
      %v799 = vld [vmem:[%s245 + $0x1148] sm:$0xff]
      %v800 = vld [vmem:[%s245 + $0x1150] sm:$0xff]
      %v801 = vld [vmem:[%s245 + $0x1158] sm:$0xff]
      %v802 = vld [vmem:[%s245 + $0x1160] sm:$0xff]
      %v803 = vld [vmem:[%s245 + $0x1168] sm:$0xff]
      %v804 = vld [vmem:[%s245 + $0x1170] sm:$0xff]
      %v805 = vld [vmem:[%s245 + $0x1178] sm:$0xff]
      %v806 = vld [vmem:[%s245 + $0x1180] sm:$0xff]
      %v807 = vld [vmem:[%s245 + $0x1188] sm:$0xff]
      %v808 = vld [vmem:[%s245 + $0x1190] sm:$0xff]
      %v809 = vld [vmem:[%s245 + $0x1198] sm:$0xff]
      %v810 = vld [vmem:[%s245 + $0x11a0] sm:$0xff]
      %v811 = vld [vmem:[%s245 + $0x11a8] sm:$0xff]
      %v812 = vld [vmem:[%s245 + $0x11b0] sm:$0xff]
      %v813 = vld [vmem:[%s245 + $0x11b8] sm:$0xff]
      %v814 = vld [vmem:[%s245 + $0x11c0] sm:$0xff]
      %v815 = vld [vmem:[%s245 + $0x11c8] sm:$0xff]
      %v816 = vld [vmem:[%s245 + $0x11d0] sm:$0xff]
      %v817 = vld [vmem:[%s245 + $0x11d8] sm:$0xff]
      %v818 = vld [vmem:[%s245 + $0x11e0] sm:$0xff]
      %v819 = vld [vmem:[%s245 + $0x11e8] sm:$0xff]
      %v820 = vld [vmem:[%s245 + $0x11f0] sm:$0xff]
      %v821 = vld [vmem:[%s245 + $0x11f8] sm:$0xff]
      %v822 = vld [vmem:[%s245 + $0x1200] sm:$0xff]
      %v823 = vld [vmem:[%s245 + $0x1208] sm:$0xff]
      %v824 = vld [vmem:[%s245 + $0x1210] sm:$0xff]
      %v825 = vld [vmem:[%s245 + $0x1218] sm:$0xff]
      %v826 = vld [vmem:[%s245 + $0x1220] sm:$0xff]
      %v827 = vld [vmem:[%s245 + $0x1228] sm:$0xff]
      %v828 = vld [vmem:[%s245 + $0x1230] sm:$0xff]
      %v829 = vld [vmem:[%s245 + $0x1238] sm:$0xff]
      %v830 = vld [vmem:[%s245 + $0x1240] sm:$0xff]
      %v831 = vld [vmem:[%s245 + $0x1248] sm:$0xff]
      %v832 = vld [vmem:[%s245 + $0x1250] sm:$0xff]
      %v833 = vld [vmem:[%s245 + $0x1258] sm:$0xff]
      %v834 = vld [vmem:[%s245 + $0x1260] sm:$0xff]
      %v835 = vld [vmem:[%s245 + $0x1268] sm:$0xff]
      %v836 = vld [vmem:[%s245 + $0x1270] sm:$0xff]
      %v837 = vld [vmem:[%s245 + $0x1278] sm:$0xff]
      %v838 = vld [vmem:[%s245 + $0x1280] sm:$0xff]
      %v839 = vld [vmem:[%s245 + $0x1288] sm:$0xff]
      %v840 = vld [vmem:[%s245 + $0x1290] sm:$0xff]
      %v841 = vld [vmem:[%s245 + $0x1298] sm:$0xff]
      %v842 = vld [vmem:[%s245 + $0x12a0] sm:$0xff]
      %v843 = vld [vmem:[%s245 + $0x12a8] sm:$0xff]
      %v844 = vld [vmem:[%s245 + $0x12b0] sm:$0xff]
      %v845 = vld [vmem:[%s245 + $0x12b8] sm:$0xff]
      %v846 = vld [vmem:[%s245 + $0x12c0] sm:$0xff]
      %v847 = vld [vmem:[%s245 + $0x12c8] sm:$0xff]
      %v848 = vld [vmem:[%s245 + $0x12d0] sm:$0xff]
      %v849 = vld [vmem:[%s245 + $0x12d8] sm:$0xff]
      %v850 = vld [vmem:[%s245 + $0x12e0] sm:$0xff]
      %v851 = vld [vmem:[%s245 + $0x12e8] sm:$0xff]
      %v852 = vld [vmem:[%s245 + $0x12f0] sm:$0xff]
      %v853 = vld [vmem:[%s245 + $0x12f8] sm:$0xff]
      %v854 = vld [vmem:[%s245 + $0x1300] sm:$0xff]
      %v855 = vld [vmem:[%s245 + $0x1308] sm:$0xff]
      %v856 = vld [vmem:[%s245 + $0x1310] sm:$0xff]
      %v857 = vld [vmem:[%s245 + $0x1318] sm:$0xff]
      %v858 = vld [vmem:[%s245 + $0x1320] sm:$0xff]
      %v859 = vld [vmem:[%s245 + $0x1328] sm:$0xff]
      %v860 = vld [vmem:[%s245 + $0x1330] sm:$0xff]
      %v861 = vld [vmem:[%s245 + $0x1338] sm:$0xff]
      %v862 = vld [vmem:[%s245 + $0x1340] sm:$0xff]
      %v863 = vld [vmem:[%s245 + $0x1348] sm:$0xff]
      %v864 = vld [vmem:[%s245 + $0x1350] sm:$0xff]
      %v865 = vld [vmem:[%s245 + $0x1358] sm:$0xff]
      %v866 = vld [vmem:[%s245 + $0x1360] sm:$0xff]
      %v867 = vld [vmem:[%s245 + $0x1368] sm:$0xff]
      %v868 = vld [vmem:[%s245 + $0x1370] sm:$0xff]
      %v869 = vld [vmem:[%s245 + $0x1378] sm:$0xff]
      %v870 = vld [vmem:[%s245 + $0x1380] sm:$0xff]
      %v871 = vld [vmem:[%s245 + $0x1388] sm:$0xff]
      %v872 = vld [vmem:[%s245 + $0x1390] sm:$0xff]
      %v873 = vld [vmem:[%s245 + $0x1398] sm:$0xff]
      %v874 = vld [vmem:[%s245 + $0x13a0] sm:$0xff]
      %v875 = vld [vmem:[%s245 + $0x13a8] sm:$0xff]
      %v876 = vld [vmem:[%s245 + $0x13b0] sm:$0xff]
      %v877 = vld [vmem:[%s245 + $0x13b8] sm:$0xff]
      %v878 = vld [vmem:[%s245 + $0x13c0] sm:$0xff]
      %v879 = vld [vmem:[%s245 + $0x13c8] sm:$0xff]
      %v880 = vld [vmem:[%s245 + $0x13d0] sm:$0xff]
      %v881 = vld [vmem:[%s245 + $0x13d8] sm:$0xff]
      %v882 = vld [vmem:[%s245 + $0x13e0] sm:$0xff]
      %v883 = vld [vmem:[%s245 + $0x13e8] sm:$0xff]
      %v884 = vld [vmem:[%s245 + $0x13f0] sm:$0xff]
      %v885 = vld [vmem:[%s245 + $0x13f8] sm:$0xff]
      %v886 = vld [vmem:[%s245 + $0x1400] sm:$0xff]
      %v887 = vld [vmem:[%s245 + $0x1408] sm:$0xff]
      %v888 = vld [vmem:[%s245 + $0x1410] sm:$0xff]
      %v889 = vld [vmem:[%s245 + $0x1418] sm:$0xff]
      %v890 = vld [vmem:[%s245 + $0x1420] sm:$0xff]
      %v891 = vld [vmem:[%s245 + $0x1428] sm:$0xff]
      %v892 = vld [vmem:[%s245 + $0x1430] sm:$0xff]
      %v893 = vld [vmem:[%s245 + $0x1438] sm:$0xff]
      %v894 = vld [vmem:[%s245 + $0x1440] sm:$0xff]
      %v895 = vld [vmem:[%s245 + $0x1448] sm:$0xff]
      %v896 = vld [vmem:[%s245 + $0x1450] sm:$0xff]
      %v897 = vld [vmem:[%s245 + $0x1458] sm:$0xff]
      %v898 = vld [vmem:[%s245 + $0x1460] sm:$0xff]
      %v899 = vld [vmem:[%s245 + $0x1468] sm:$0xff]
      %v900 = vld [vmem:[%s245 + $0x1470] sm:$0xff]
      %v901 = vld [vmem:[%s245 + $0x1478] sm:$0xff]
      %v902 = vld [vmem:[%s245 + $0x1480] sm:$0xff]
      %v903 = vld [vmem:[%s245 + $0x1488] sm:$0xff]
      %v904 = vld [vmem:[%s245 + $0x1490] sm:$0xff]
      %v905 = vld [vmem:[%s245 + $0x1498] sm:$0xff]
      %v906 = vld [vmem:[%s245 + $0x14a0] sm:$0xff]
      %v907 = vld [vmem:[%s245 + $0x14a8] sm:$0xff]
      %v908 = vld [vmem:[%s245 + $0x14b0] sm:$0xff]
      %v909 = vld [vmem:[%s245 + $0x14b8] sm:$0xff]
      %v910 = vld [vmem:[%s245 + $0x14c0] sm:$0xff]
      %v911 = vld [vmem:[%s245 + $0x14c8] sm:$0xff]
      %v912 = vld [vmem:[%s245 + $0x14d0] sm:$0xff]
      %v913 = vld [vmem:[%s245 + $0x14d8] sm:$0xff]
      %v914 = vld [vmem:[%s245 + $0x14e0] sm:$0xff]
      %v915 = vld [vmem:[%s245 + $0x14e8] sm:$0xff]
      %v916 = vld [vmem:[%s245 + $0x14f0] sm:$0xff]
      %v917 = vld [vmem:[%s245 + $0x14f8] sm:$0xff]
      %v918 = vld [vmem:[%s245 + $0x1500] sm:$0xff]
      %v919 = vld [vmem:[%s245 + $0x1508] sm:$0xff]
      %v920 = vld [vmem:[%s245 + $0x1510] sm:$0xff]
      %v921 = vld [vmem:[%s245 + $0x1518] sm:$0xff]
      %v922 = vld [vmem:[%s245 + $0x1520] sm:$0xff]
      %v923 = vld [vmem:[%s245 + $0x1528] sm:$0xff]
      %v924 = vld [vmem:[%s245 + $0x1530] sm:$0xff]
      %v925 = vld [vmem:[%s245 + $0x1538] sm:$0xff]
      %v926 = vld [vmem:[%s245 + $0x1540] sm:$0xff]
      %v927 = vld [vmem:[%s245 + $0x1548] sm:$0xff]
      %v928 = vld [vmem:[%s245 + $0x1550] sm:$0xff]
      %v929 = vld [vmem:[%s245 + $0x1558] sm:$0xff]
      %v930 = vld [vmem:[%s245 + $0x1560] sm:$0xff]
      %v931 = vld [vmem:[%s245 + $0x1568] sm:$0xff]
      %v932 = vld [vmem:[%s245 + $0x1570] sm:$0xff]
      %v933 = vld [vmem:[%s245 + $0x1578] sm:$0xff]
      %v934 = vld [vmem:[%s245 + $0x1580] sm:$0xff]
      %v935 = vld [vmem:[%s245 + $0x1588] sm:$0xff]
      %v936 = vld [vmem:[%s245 + $0x1590] sm:$0xff]
      %v937 = vld [vmem:[%s245 + $0x1598] sm:$0xff]
      %v938 = vld [vmem:[%s245 + $0x15a0] sm:$0xff]
      %v939 = vld [vmem:[%s245 + $0x15a8] sm:$0xff]
      %v940 = vld [vmem:[%s245 + $0x15b0] sm:$0xff]
      %v941 = vld [vmem:[%s245 + $0x15b8] sm:$0xff]
      %v942 = vld [vmem:[%s245 + $0x15c0] sm:$0xff]
      %v943 = vld [vmem:[%s245 + $0x15c8] sm:$0xff]
      %v944 = vld [vmem:[%s245 + $0x15d0] sm:$0xff]
      %v945 = vld [vmem:[%s245 + $0x15d8] sm:$0xff]
      %v946 = vld [vmem:[%s245 + $0x15e0] sm:$0xff]
      %v947 = vld [vmem:[%s245 + $0x15e8] sm:$0xff]
      %v948 = vld [vmem:[%s245 + $0x15f0] sm:$0xff]
      %v949 = vld [vmem:[%s245 + $0x15f8] sm:$0xff]
      %v950 = vld [vmem:[%s245 + $0x1600] sm:$0xff]
      %v951 = vld [vmem:[%s245 + $0x1608] sm:$0xff]
      %v952 = vld [vmem:[%s245 + $0x1610] sm:$0xff]
      %v953 = vld [vmem:[%s245 + $0x1618] sm:$0xff]
      %v954 = vld [vmem:[%s245 + $0x1620] sm:$0xff]
      %v955 = vld [vmem:[%s245 + $0x1628] sm:$0xff]
      %v956 = vld [vmem:[%s245 + $0x1630] sm:$0xff]
      %v957 = vld [vmem:[%s245 + $0x1638] sm:$0xff]
      %v958 = vld [vmem:[%s245 + $0x1640] sm:$0xff]
      %v959 = vld [vmem:[%s245 + $0x1648] sm:$0xff]
      %v960 = vld [vmem:[%s245 + $0x1650] sm:$0xff]
      %v961 = vld [vmem:[%s245 + $0x1658] sm:$0xff]
      %v962 = vld [vmem:[%s245 + $0x1660] sm:$0xff]
      %v963 = vld [vmem:[%s245 + $0x1668] sm:$0xff]
      %v964 = vld [vmem:[%s245 + $0x1670] sm:$0xff]
      %v965 = vld [vmem:[%s245 + $0x1678] sm:$0xff]
      %v966 = vld [vmem:[%s245 + $0x1680] sm:$0xff]
      %v967 = vld [vmem:[%s245 + $0x1688] sm:$0xff]
      %v968 = vld [vmem:[%s245 + $0x1690] sm:$0xff]
      %v969 = vld [vmem:[%s245 + $0x1698] sm:$0xff]
      %v970 = vld [vmem:[%s245 + $0x16a0] sm:$0xff]
      %v971 = vld [vmem:[%s245 + $0x16a8] sm:$0xff]
      %v972 = vld [vmem:[%s245 + $0x16b0] sm:$0xff]
      %v973 = vld [vmem:[%s245 + $0x16b8] sm:$0xff]
      %v974 = vld [vmem:[%s245 + $0x16c0] sm:$0xff]
      %v975 = vld [vmem:[%s245 + $0x16c8] sm:$0xff]
      %v976 = vld [vmem:[%s245 + $0x16d0] sm:$0xff]
      %v977 = vld [vmem:[%s245 + $0x16d8] sm:$0xff]
      %v978 = vld [vmem:[%s245 + $0x16e0] sm:$0xff]
      %v979 = vld [vmem:[%s245 + $0x16e8] sm:$0xff]
      %v980 = vld [vmem:[%s245 + $0x16f0] sm:$0xff]
      %v981 = vld [vmem:[%s245 + $0x16f8] sm:$0xff]
      %v982 = vld [vmem:[%s245 + $0x1700] sm:$0xff]
      %v983 = vld [vmem:[%s245 + $0x1708] sm:$0xff]
      %v984 = vld [vmem:[%s245 + $0x1710] sm:$0xff]
      %v985 = vld [vmem:[%s245 + $0x1718] sm:$0xff]
      %v986 = vld [vmem:[%s245 + $0x1720] sm:$0xff]
      %v987 = vld [vmem:[%s245 + $0x1728] sm:$0xff]
      %v988 = vld [vmem:[%s245 + $0x1730] sm:$0xff]
      %v989 = vld [vmem:[%s245 + $0x1738] sm:$0xff]
      %v990 = vld [vmem:[%s245 + $0x1740] sm:$0xff]
      %v991 = vld [vmem:[%s245 + $0x1748] sm:$0xff]
      %v992 = vld [vmem:[%s245 + $0x1750] sm:$0xff]
      %v993 = vld [vmem:[%s245 + $0x1758] sm:$0xff]
      %v994 = vld [vmem:[%s245 + $0x1760] sm:$0xff]
      %v995 = vld [vmem:[%s245 + $0x1768] sm:$0xff]
      %v996 = vld [vmem:[%s245 + $0x1770] sm:$0xff]
      %v997 = vld [vmem:[%s245 + $0x1778] sm:$0xff]
      %v998 = vld [vmem:[%s245 + $0x1780] sm:$0xff]
      %v999 = vld [vmem:[%s245 + $0x1788] sm:$0xff]
      %v1000 = vld [vmem:[%s245 + $0x1790] sm:$0xff]
      %v1001 = vld [vmem:[%s245 + $0x1798] sm:$0xff]
      %v1002 = vld [vmem:[%s245 + $0x17a0] sm:$0xff]
      %v1003 = vld [vmem:[%s245 + $0x17a8] sm:$0xff]
      %v1004 = vld [vmem:[%s245 + $0x17b0] sm:$0xff]
      %v1005 = vld [vmem:[%s245 + $0x17b8] sm:$0xff]
      %v1006 = vld [vmem:[%s245 + $0x17c0] sm:$0xff]
      %v1007 = vld [vmem:[%s245 + $0x17c8] sm:$0xff]
      %v1008 = vld [vmem:[%s245 + $0x17d0] sm:$0xff]
      %v1009 = vld [vmem:[%s245 + $0x17d8] sm:$0xff]
      %v1010 = vld [vmem:[%s245 + $0x17e0] sm:$0xff]
      %v1011 = vld [vmem:[%s245 + $0x17e8] sm:$0xff]
      %v1012 = vld [vmem:[%s245 + $0x17f0] sm:$0xff]
      %v1013 = vld [vmem:[%s245 + $0x17f8] sm:$0xff]
      %v1046 = vunpack.c.l.b16 %v211
      %v1047 = vunpack.c.h.b16 %v211
      %v1048 = vunpack.c.l.b16 %v212
      %v1049 = vunpack.c.h.b16 %v212
      %v1050 = vunpack.c.l.b16 %v213
      %v1051 = vunpack.c.h.b16 %v213
      %v1052 = vunpack.c.l.b16 %v214
      %v1053 = vunpack.c.h.b16 %v214
      %v1054 = vunpack.c.l.b16 %v215
      %v1055 = vunpack.c.h.b16 %v215
      %v1056 = vunpack.c.l.b16 %v216
      %v1057 = vunpack.c.h.b16 %v216
      %v1058 = vunpack.c.l.b16 %v217
      %v1059 = vunpack.c.h.b16 %v217
      %v1060 = vunpack.c.l.b16 %v218
      %v1061 = vunpack.c.h.b16 %v218
      %v1062 = vunpack.c.l.b16 %v219
      %v1063 = vunpack.c.h.b16 %v219
      %v1064 = vunpack.c.l.b16 %v220
      %v1065 = vunpack.c.h.b16 %v220
      %v1066 = vunpack.c.l.b16 %v221
      %v1067 = vunpack.c.h.b16 %v221
      %v1068 = vunpack.c.l.b16 %v222
      %v1069 = vunpack.c.h.b16 %v222
      %v1070 = vunpack.c.l.b16 %v223
      %v1071 = vunpack.c.h.b16 %v223
      %v1072 = vunpack.c.l.b16 %v224
      %v1073 = vunpack.c.h.b16 %v224
      %v1074 = vunpack.c.l.b16 %v225
      %v1075 = vunpack.c.h.b16 %v225
      %v1076 = vunpack.c.l.b16 %v226
      %v1077 = vunpack.c.h.b16 %v226
      %v1078 = vunpack.c.l.b16 %v227
      %v1079 = vunpack.c.h.b16 %v227
      %v1080 = vunpack.c.l.b16 %v228
      %v1081 = vunpack.c.h.b16 %v228
      %v1082 = vunpack.c.l.b16 %v229
      %v1083 = vunpack.c.h.b16 %v229
      %v1084 = vunpack.c.l.b16 %v230
      %v1085 = vunpack.c.h.b16 %v230
      %v1086 = vunpack.c.l.b16 %v231
      %v1087 = vunpack.c.h.b16 %v231
      %v1088 = vunpack.c.l.b16 %v232
      %v1089 = vunpack.c.h.b16 %v232
      %v1090 = vunpack.c.l.b16 %v233
      %v1091 = vunpack.c.h.b16 %v233
      %v1092 = vunpack.c.l.b16 %v234
      %v1093 = vunpack.c.h.b16 %v234
      %v1094 = vunpack.c.l.b16 %v235
      %v1095 = vunpack.c.h.b16 %v235
      %v1096 = vunpack.c.l.b16 %v236
      %v1097 = vunpack.c.h.b16 %v236
      %v1098 = vunpack.c.l.b16 %v237
      %v1099 = vunpack.c.h.b16 %v237
      %v1100 = vunpack.c.l.b16 %v238
      %v1101 = vunpack.c.h.b16 %v238
      %v1102 = vunpack.c.l.b16 %v239
      %v1103 = vunpack.c.h.b16 %v239
      %v1104 = vunpack.c.l.b16 %v240
      %v1105 = vunpack.c.h.b16 %v240
      %v1106 = vunpack.c.l.b16 %v241
      %v1107 = vunpack.c.h.b16 %v241
      %v1108 = vunpack.c.l.b16 %v242
      %v1109 = vunpack.c.h.b16 %v242
      %v1110 = vpack.c.b16 %v1062, %v1046
      %v1111 = vpack.c.b16 %v1063, %v1047
      %v1112 = vpack.c.b16 %v1064, %v1048
      %v1113 = vpack.c.b16 %v1065, %v1049
      %v1114 = vpack.c.b16 %v1066, %v1050
      %v1115 = vpack.c.b16 %v1067, %v1051
      %v1116 = vpack.c.b16 %v1068, %v1052
      %v1117 = vpack.c.b16 %v1069, %v1053
      %v1118 = vpack.c.b16 %v1070, %v1054
      %v1119 = vpack.c.b16 %v1071, %v1055
      %v1120 = vpack.c.b16 %v1072, %v1056
      %v1121 = vpack.c.b16 %v1073, %v1057
      %v1122 = vpack.c.b16 %v1074, %v1058
      %v1123 = vpack.c.b16 %v1075, %v1059
      %v1124 = vpack.c.b16 %v1076, %v1060
      %v1125 = vpack.c.b16 %v1077, %v1061
      %v1126 = vpack.c.b16 %v1094, %v1078
      %v1127 = vpack.c.b16 %v1095, %v1079
      %v1128 = vpack.c.b16 %v1096, %v1080
      %v1129 = vpack.c.b16 %v1097, %v1081
      %v1130 = vpack.c.b16 %v1098, %v1082
      %v1131 = vpack.c.b16 %v1099, %v1083
      %v1132 = vpack.c.b16 %v1100, %v1084
      %v1133 = vpack.c.b16 %v1101, %v1085
      %v1134 = vpack.c.b16 %v1102, %v1086
      %v1135 = vpack.c.b16 %v1103, %v1087
      %v1136 = vpack.c.b16 %v1104, %v1088
      %v1137 = vpack.c.b16 %v1105, %v1089
      %v1138 = vpack.c.b16 %v1106, %v1090
      %v1139 = vpack.c.b16 %v1107, %v1091
      %v1140 = vpack.c.b16 %v1108, %v1092
      %v1141 = vpack.c.b16 %v1109, %v1093
      %v1942 = vunpack.c.l.b16 %v246
      %v1943 = vunpack.c.h.b16 %v246
      %v1944 = vunpack.c.l.b16 %v247
      %v1945 = vunpack.c.h.b16 %v247
      %v1946 = vunpack.c.l.b16 %v248
      %v1947 = vunpack.c.h.b16 %v248
      %v1948 = vunpack.c.l.b16 %v249
      %v1949 = vunpack.c.h.b16 %v249
      %v1950 = vunpack.c.l.b16 %v250
      %v1951 = vunpack.c.h.b16 %v250
      %v1952 = vunpack.c.l.b16 %v251
      %v1953 = vunpack.c.h.b16 %v251
      %v1954 = vunpack.c.l.b16 %v252
      %v1955 = vunpack.c.h.b16 %v252
      %v1956 = vunpack.c.l.b16 %v253
      %v1957 = vunpack.c.h.b16 %v253
      %v1958 = vunpack.c.l.b16 %v254
      %v1959 = vunpack.c.h.b16 %v254
      %v1960 = vunpack.c.l.b16 %v255
      %v1961 = vunpack.c.h.b16 %v255
      %v1962 = vunpack.c.l.b16 %v256
      %v1963 = vunpack.c.h.b16 %v256
      %v1964 = vunpack.c.l.b16 %v257
      %v1965 = vunpack.c.h.b16 %v257
      %v1966 = vunpack.c.l.b16 %v258
      %v1967 = vunpack.c.h.b16 %v258
      %v1968 = vunpack.c.l.b16 %v259
      %v1969 = vunpack.c.h.b16 %v259
      %v1970 = vunpack.c.l.b16 %v260
      %v1971 = vunpack.c.h.b16 %v260
      %v1972 = vunpack.c.l.b16 %v261
      %v1973 = vunpack.c.h.b16 %v261
      %v1974 = vunpack.c.l.b16 %v262
      %v1975 = vunpack.c.h.b16 %v262
      %v1976 = vunpack.c.l.b16 %v263
      %v1977 = vunpack.c.h.b16 %v263
      %v1978 = vunpack.c.l.b16 %v264
      %v1979 = vunpack.c.h.b16 %v264
      %v1980 = vunpack.c.l.b16 %v265
      %v1981 = vunpack.c.h.b16 %v265
      %v1982 = vunpack.c.l.b16 %v266
      %v1983 = vunpack.c.h.b16 %v266
      %v1984 = vunpack.c.l.b16 %v267
      %v1985 = vunpack.c.h.b16 %v267
      %v1986 = vunpack.c.l.b16 %v268
      %v1987 = vunpack.c.h.b16 %v268
      %v1988 = vunpack.c.l.b16 %v269
      %v1989 = vunpack.c.h.b16 %v269
      %v1990 = vunpack.c.l.b16 %v270
      %v1991 = vunpack.c.h.b16 %v270
      %v1992 = vunpack.c.l.b16 %v271
      %v1993 = vunpack.c.h.b16 %v271
      %v1994 = vunpack.c.l.b16 %v272
      %v1995 = vunpack.c.h.b16 %v272
      %v1996 = vunpack.c.l.b16 %v273
      %v1997 = vunpack.c.h.b16 %v273
      %v1998 = vunpack.c.l.b16 %v274
      %v1999 = vunpack.c.h.b16 %v274
      %v2000 = vunpack.c.l.b16 %v275
      %v2001 = vunpack.c.h.b16 %v275
      %v2002 = vunpack.c.l.b16 %v276
      %v2003 = vunpack.c.h.b16 %v276
      %v2004 = vunpack.c.l.b16 %v277
      %v2005 = vunpack.c.h.b16 %v277
      %v2006 = vunpack.c.l.b16 %v278
      %v2007 = vunpack.c.h.b16 %v278
      %v2008 = vunpack.c.l.b16 %v279
      %v2009 = vunpack.c.h.b16 %v279
      %v2010 = vunpack.c.l.b16 %v280
      %v2011 = vunpack.c.h.b16 %v280
      %v2012 = vunpack.c.l.b16 %v281
      %v2013 = vunpack.c.h.b16 %v281
      %v2014 = vunpack.c.l.b16 %v282
      %v2015 = vunpack.c.h.b16 %v282
      %v2016 = vunpack.c.l.b16 %v283
      %v2017 = vunpack.c.h.b16 %v283
      %v2018 = vunpack.c.l.b16 %v284
      %v2019 = vunpack.c.h.b16 %v284
      %v2020 = vunpack.c.l.b16 %v285
      %v2021 = vunpack.c.h.b16 %v285
      %v2022 = vunpack.c.l.b16 %v286
      %v2023 = vunpack.c.h.b16 %v286
      %v2024 = vunpack.c.l.b16 %v287
      %v2025 = vunpack.c.h.b16 %v287
      %v2026 = vunpack.c.l.b16 %v288
      %v2027 = vunpack.c.h.b16 %v288
      %v2028 = vunpack.c.l.b16 %v289
      %v2029 = vunpack.c.h.b16 %v289
      %v2030 = vunpack.c.l.b16 %v290
      %v2031 = vunpack.c.h.b16 %v290
      %v2032 = vunpack.c.l.b16 %v291
      %v2033 = vunpack.c.h.b16 %v291
      %v2034 = vunpack.c.l.b16 %v292
      %v2035 = vunpack.c.h.b16 %v292
      %v2036 = vunpack.c.l.b16 %v293
      %v2037 = vunpack.c.h.b16 %v293
      %v2038 = vunpack.c.l.b16 %v294
      %v2039 = vunpack.c.h.b16 %v294
      %v2040 = vunpack.c.l.b16 %v295
      %v2041 = vunpack.c.h.b16 %v295
      %v2042 = vunpack.c.l.b16 %v296
      %v2043 = vunpack.c.h.b16 %v296
      %v2044 = vunpack.c.l.b16 %v297
      %v2045 = vunpack.c.h.b16 %v297
      %v2046 = vunpack.c.l.b16 %v298
      %v2047 = vunpack.c.h.b16 %v298
      %v2048 = vunpack.c.l.b16 %v299
      %v2049 = vunpack.c.h.b16 %v299
      %v2050 = vunpack.c.l.b16 %v300
      %v2051 = vunpack.c.h.b16 %v300
      %v2052 = vunpack.c.l.b16 %v301
      %v2053 = vunpack.c.h.b16 %v301
      %v2054 = vunpack.c.l.b16 %v302
      %v2055 = vunpack.c.h.b16 %v302
      %v2056 = vunpack.c.l.b16 %v303
      %v2057 = vunpack.c.h.b16 %v303
      %v2058 = vunpack.c.l.b16 %v304
      %v2059 = vunpack.c.h.b16 %v304
      %v2060 = vunpack.c.l.b16 %v305
      %v2061 = vunpack.c.h.b16 %v305
      %v2062 = vunpack.c.l.b16 %v306
      %v2063 = vunpack.c.h.b16 %v306
      %v2064 = vunpack.c.l.b16 %v307
      %v2065 = vunpack.c.h.b16 %v307
      %v2066 = vunpack.c.l.b16 %v308
      %v2067 = vunpack.c.h.b16 %v308
      %v2068 = vunpack.c.l.b16 %v309
      %v2069 = vunpack.c.h.b16 %v309
      %v2070 = vunpack.c.l.b16 %v310
      %v2071 = vunpack.c.h.b16 %v310
      %v2072 = vunpack.c.l.b16 %v311
      %v2073 = vunpack.c.h.b16 %v311
      %v2074 = vunpack.c.l.b16 %v312
      %v2075 = vunpack.c.h.b16 %v312
      %v2076 = vunpack.c.l.b16 %v313
      %v2077 = vunpack.c.h.b16 %v313
      %v2078 = vunpack.c.l.b16 %v314
      %v2079 = vunpack.c.h.b16 %v314
      %v2080 = vunpack.c.l.b16 %v315
      %v2081 = vunpack.c.h.b16 %v315
      %v2082 = vunpack.c.l.b16 %v316
      %v2083 = vunpack.c.h.b16 %v316
      %v2084 = vunpack.c.l.b16 %v317
      %v2085 = vunpack.c.h.b16 %v317
      %v2086 = vunpack.c.l.b16 %v318
      %v2087 = vunpack.c.h.b16 %v318
      %v2088 = vunpack.c.l.b16 %v319
      %v2089 = vunpack.c.h.b16 %v319
      %v2090 = vunpack.c.l.b16 %v320
      %v2091 = vunpack.c.h.b16 %v320
      %v2092 = vunpack.c.l.b16 %v321
      %v2093 = vunpack.c.h.b16 %v321
      %v2094 = vunpack.c.l.b16 %v322
      %v2095 = vunpack.c.h.b16 %v322
      %v2096 = vunpack.c.l.b16 %v323
      %v2097 = vunpack.c.h.b16 %v323
      %v2098 = vunpack.c.l.b16 %v324
      %v2099 = vunpack.c.h.b16 %v324
      %v2100 = vunpack.c.l.b16 %v325
      %v2101 = vunpack.c.h.b16 %v325
      %v2102 = vunpack.c.l.b16 %v326
      %v2103 = vunpack.c.h.b16 %v326
      %v2104 = vunpack.c.l.b16 %v327
      %v2105 = vunpack.c.h.b16 %v327
      %v2106 = vunpack.c.l.b16 %v328
      %v2107 = vunpack.c.h.b16 %v328
      %v2108 = vunpack.c.l.b16 %v329
      %v2109 = vunpack.c.h.b16 %v329
      %v2110 = vunpack.c.l.b16 %v330
      %v2111 = vunpack.c.h.b16 %v330
      %v2112 = vunpack.c.l.b16 %v331
      %v2113 = vunpack.c.h.b16 %v331
      %v2114 = vunpack.c.l.b16 %v332
      %v2115 = vunpack.c.h.b16 %v332
      %v2116 = vunpack.c.l.b16 %v333
      %v2117 = vunpack.c.h.b16 %v333
      %v2118 = vunpack.c.l.b16 %v334
      %v2119 = vunpack.c.h.b16 %v334
      %v2120 = vunpack.c.l.b16 %v335
      %v2121 = vunpack.c.h.b16 %v335
      %v2122 = vunpack.c.l.b16 %v336
      %v2123 = vunpack.c.h.b16 %v336
      %v2124 = vunpack.c.l.b16 %v337
      %v2125 = vunpack.c.h.b16 %v337
      %v2126 = vunpack.c.l.b16 %v338
      %v2127 = vunpack.c.h.b16 %v338
      %v2128 = vunpack.c.l.b16 %v339
      %v2129 = vunpack.c.h.b16 %v339
      %v2130 = vunpack.c.l.b16 %v340
      %v2131 = vunpack.c.h.b16 %v340
      %v2132 = vunpack.c.l.b16 %v341
      %v2133 = vunpack.c.h.b16 %v341
      %v2134 = vunpack.c.l.b16 %v342
      %v2135 = vunpack.c.h.b16 %v342
      %v2136 = vunpack.c.l.b16 %v343
      %v2137 = vunpack.c.h.b16 %v343
      %v2138 = vunpack.c.l.b16 %v344
      %v2139 = vunpack.c.h.b16 %v344
      %v2140 = vunpack.c.l.b16 %v345
      %v2141 = vunpack.c.h.b16 %v345
      %v2142 = vunpack.c.l.b16 %v346
      %v2143 = vunpack.c.h.b16 %v346
      %v2144 = vunpack.c.l.b16 %v347
      %v2145 = vunpack.c.h.b16 %v347
      %v2146 = vunpack.c.l.b16 %v348
      %v2147 = vunpack.c.h.b16 %v348
      %v2148 = vunpack.c.l.b16 %v349
      %v2149 = vunpack.c.h.b16 %v349
      %v2150 = vunpack.c.l.b16 %v350
      %v2151 = vunpack.c.h.b16 %v350
      %v2152 = vunpack.c.l.b16 %v351
      %v2153 = vunpack.c.h.b16 %v351
      %v2154 = vunpack.c.l.b16 %v352
      %v2155 = vunpack.c.h.b16 %v352
      %v2156 = vunpack.c.l.b16 %v353
      %v2157 = vunpack.c.h.b16 %v353
      %v2158 = vunpack.c.l.b16 %v354
      %v2159 = vunpack.c.h.b16 %v354
      %v2160 = vunpack.c.l.b16 %v355
      %v2161 = vunpack.c.h.b16 %v355
      %v2162 = vunpack.c.l.b16 %v356
      %v2163 = vunpack.c.h.b16 %v356
      %v2164 = vunpack.c.l.b16 %v357
      %v2165 = vunpack.c.h.b16 %v357
      %v2166 = vunpack.c.l.b16 %v358
      %v2167 = vunpack.c.h.b16 %v358
      %v2168 = vunpack.c.l.b16 %v359
      %v2169 = vunpack.c.h.b16 %v359
      %v2170 = vunpack.c.l.b16 %v360
      %v2171 = vunpack.c.h.b16 %v360
      %v2172 = vunpack.c.l.b16 %v361
      %v2173 = vunpack.c.h.b16 %v361
      %v2174 = vunpack.c.l.b16 %v362
      %v2175 = vunpack.c.h.b16 %v362
      %v2176 = vunpack.c.l.b16 %v363
      %v2177 = vunpack.c.h.b16 %v363
      %v2178 = vunpack.c.l.b16 %v364
      %v2179 = vunpack.c.h.b16 %v364
      %v2180 = vunpack.c.l.b16 %v365
      %v2181 = vunpack.c.h.b16 %v365
      %v2182 = vunpack.c.l.b16 %v366
      %v2183 = vunpack.c.h.b16 %v366
      %v2184 = vunpack.c.l.b16 %v367
      %v2185 = vunpack.c.h.b16 %v367
      %v2186 = vunpack.c.l.b16 %v368
      %v2187 = vunpack.c.h.b16 %v368
      %v2188 = vunpack.c.l.b16 %v369
      %v2189 = vunpack.c.h.b16 %v369
      %v2190 = vunpack.c.l.b16 %v370
      %v2191 = vunpack.c.h.b16 %v370
      %v2192 = vunpack.c.l.b16 %v371
      %v2193 = vunpack.c.h.b16 %v371
      %v2194 = vunpack.c.l.b16 %v372
      %v2195 = vunpack.c.h.b16 %v372
      %v2196 = vunpack.c.l.b16 %v373
      %v2197 = vunpack.c.h.b16 %v373
      %v2198 = vunpack.c.l.b16 %v374
      %v2199 = vunpack.c.h.b16 %v374
      %v2200 = vunpack.c.l.b16 %v375
      %v2201 = vunpack.c.h.b16 %v375
      %v2202 = vunpack.c.l.b16 %v376
      %v2203 = vunpack.c.h.b16 %v376
      %v2204 = vunpack.c.l.b16 %v377
      %v2205 = vunpack.c.h.b16 %v377
      %v2206 = vunpack.c.l.b16 %v378
      %v2207 = vunpack.c.h.b16 %v378
      %v2208 = vunpack.c.l.b16 %v379
      %v2209 = vunpack.c.h.b16 %v379
      %v2210 = vunpack.c.l.b16 %v380
      %v2211 = vunpack.c.h.b16 %v380
      %v2212 = vunpack.c.l.b16 %v381
      %v2213 = vunpack.c.h.b16 %v381
      %v2214 = vunpack.c.l.b16 %v382
      %v2215 = vunpack.c.h.b16 %v382
      %v2216 = vunpack.c.l.b16 %v383
      %v2217 = vunpack.c.h.b16 %v383
      %v2218 = vunpack.c.l.b16 %v384
      %v2219 = vunpack.c.h.b16 %v384
      %v2220 = vunpack.c.l.b16 %v385
      %v2221 = vunpack.c.h.b16 %v385
      %v2222 = vunpack.c.l.b16 %v386
      %v2223 = vunpack.c.h.b16 %v386
      %v2224 = vunpack.c.l.b16 %v387
      %v2225 = vunpack.c.h.b16 %v387
      %v2226 = vunpack.c.l.b16 %v388
      %v2227 = vunpack.c.h.b16 %v388
      %v2228 = vunpack.c.l.b16 %v389
      %v2229 = vunpack.c.h.b16 %v389
      %v2230 = vunpack.c.l.b16 %v390
      %v2231 = vunpack.c.h.b16 %v390
      %v2232 = vunpack.c.l.b16 %v391
      %v2233 = vunpack.c.h.b16 %v391
      %v2234 = vunpack.c.l.b16 %v392
      %v2235 = vunpack.c.h.b16 %v392
      %v2236 = vunpack.c.l.b16 %v393
      %v2237 = vunpack.c.h.b16 %v393
      %v2238 = vunpack.c.l.b16 %v394
      %v2239 = vunpack.c.h.b16 %v394
      %v2240 = vunpack.c.l.b16 %v395
      %v2241 = vunpack.c.h.b16 %v395
      %v2242 = vunpack.c.l.b16 %v396
      %v2243 = vunpack.c.h.b16 %v396
      %v2244 = vunpack.c.l.b16 %v397
      %v2245 = vunpack.c.h.b16 %v397
      %v2246 = vunpack.c.l.b16 %v398
      %v2247 = vunpack.c.h.b16 %v398
      %v2248 = vunpack.c.l.b16 %v399
      %v2249 = vunpack.c.h.b16 %v399
      %v2250 = vunpack.c.l.b16 %v400
      %v2251 = vunpack.c.h.b16 %v400
      %v2252 = vunpack.c.l.b16 %v401
      %v2253 = vunpack.c.h.b16 %v401
      %v2254 = vunpack.c.l.b16 %v402
      %v2255 = vunpack.c.h.b16 %v402
      %v2256 = vunpack.c.l.b16 %v403
      %v2257 = vunpack.c.h.b16 %v403
      %v2258 = vunpack.c.l.b16 %v404
      %v2259 = vunpack.c.h.b16 %v404
      %v2260 = vunpack.c.l.b16 %v405
      %v2261 = vunpack.c.h.b16 %v405
      %v2262 = vunpack.c.l.b16 %v406
      %v2263 = vunpack.c.h.b16 %v406
      %v2264 = vunpack.c.l.b16 %v407
      %v2265 = vunpack.c.h.b16 %v407
      %v2266 = vunpack.c.l.b16 %v408
      %v2267 = vunpack.c.h.b16 %v408
      %v2268 = vunpack.c.l.b16 %v409
      %v2269 = vunpack.c.h.b16 %v409
      %v2270 = vunpack.c.l.b16 %v410
      %v2271 = vunpack.c.h.b16 %v410
      %v2272 = vunpack.c.l.b16 %v411
      %v2273 = vunpack.c.h.b16 %v411
      %v2274 = vunpack.c.l.b16 %v412
      %v2275 = vunpack.c.h.b16 %v412
      %v2276 = vunpack.c.l.b16 %v413
      %v2277 = vunpack.c.h.b16 %v413
      %v2278 = vunpack.c.l.b16 %v414
      %v2279 = vunpack.c.h.b16 %v414
      %v2280 = vunpack.c.l.b16 %v415
      %v2281 = vunpack.c.h.b16 %v415
      %v2282 = vunpack.c.l.b16 %v416
      %v2283 = vunpack.c.h.b16 %v416
      %v2284 = vunpack.c.l.b16 %v417
      %v2285 = vunpack.c.h.b16 %v417
      %v2286 = vunpack.c.l.b16 %v418
      %v2287 = vunpack.c.h.b16 %v418
      %v2288 = vunpack.c.l.b16 %v419
      %v2289 = vunpack.c.h.b16 %v419
      %v2290 = vunpack.c.l.b16 %v420
      %v2291 = vunpack.c.h.b16 %v420
      %v2292 = vunpack.c.l.b16 %v421
      %v2293 = vunpack.c.h.b16 %v421
      %v2294 = vunpack.c.l.b16 %v422
      %v2295 = vunpack.c.h.b16 %v422
      %v2296 = vunpack.c.l.b16 %v423
      %v2297 = vunpack.c.h.b16 %v423
      %v2298 = vunpack.c.l.b16 %v424
      %v2299 = vunpack.c.h.b16 %v424
      %v2300 = vunpack.c.l.b16 %v425
      %v2301 = vunpack.c.h.b16 %v425
      %v2302 = vunpack.c.l.b16 %v426
      %v2303 = vunpack.c.h.b16 %v426
      %v2304 = vunpack.c.l.b16 %v427
      %v2305 = vunpack.c.h.b16 %v427
      %v2306 = vunpack.c.l.b16 %v428
      %v2307 = vunpack.c.h.b16 %v428
      %v2308 = vunpack.c.l.b16 %v429
      %v2309 = vunpack.c.h.b16 %v429
      %v2310 = vunpack.c.l.b16 %v430
      %v2311 = vunpack.c.h.b16 %v430
      %v2312 = vunpack.c.l.b16 %v431
      %v2313 = vunpack.c.h.b16 %v431
      %v2314 = vunpack.c.l.b16 %v432
      %v2315 = vunpack.c.h.b16 %v432
      %v2316 = vunpack.c.l.b16 %v433
      %v2317 = vunpack.c.h.b16 %v433
      %v2318 = vunpack.c.l.b16 %v434
      %v2319 = vunpack.c.h.b16 %v434
      %v2320 = vunpack.c.l.b16 %v435
      %v2321 = vunpack.c.h.b16 %v435
      %v2322 = vunpack.c.l.b16 %v436
      %v2323 = vunpack.c.h.b16 %v436
      %v2324 = vunpack.c.l.b16 %v437
      %v2325 = vunpack.c.h.b16 %v437
      %v2326 = vunpack.c.l.b16 %v438
      %v2327 = vunpack.c.h.b16 %v438
      %v2328 = vunpack.c.l.b16 %v439
      %v2329 = vunpack.c.h.b16 %v439
      %v2330 = vunpack.c.l.b16 %v440
      %v2331 = vunpack.c.h.b16 %v440
      %v2332 = vunpack.c.l.b16 %v441
      %v2333 = vunpack.c.h.b16 %v441
      %v2334 = vunpack.c.l.b16 %v442
      %v2335 = vunpack.c.h.b16 %v442
      %v2336 = vunpack.c.l.b16 %v443
      %v2337 = vunpack.c.h.b16 %v443
      %v2338 = vunpack.c.l.b16 %v444
      %v2339 = vunpack.c.h.b16 %v444
      %v2340 = vunpack.c.l.b16 %v445
      %v2341 = vunpack.c.h.b16 %v445
      %v2342 = vunpack.c.l.b16 %v446
      %v2343 = vunpack.c.h.b16 %v446
      %v2344 = vunpack.c.l.b16 %v447
      %v2345 = vunpack.c.h.b16 %v447
      %v2346 = vunpack.c.l.b16 %v448
      %v2347 = vunpack.c.h.b16 %v448
      %v2348 = vunpack.c.l.b16 %v449
      %v2349 = vunpack.c.h.b16 %v449
      %v2350 = vunpack.c.l.b16 %v450
      %v2351 = vunpack.c.h.b16 %v450
      %v2352 = vunpack.c.l.b16 %v451
      %v2353 = vunpack.c.h.b16 %v451
      %v2354 = vunpack.c.l.b16 %v452
      %v2355 = vunpack.c.h.b16 %v452
      %v2356 = vunpack.c.l.b16 %v453
      %v2357 = vunpack.c.h.b16 %v453
      %v2358 = vunpack.c.l.b16 %v454
      %v2359 = vunpack.c.h.b16 %v454
      %v2360 = vunpack.c.l.b16 %v455
      %v2361 = vunpack.c.h.b16 %v455
      %v2362 = vunpack.c.l.b16 %v456
      %v2363 = vunpack.c.h.b16 %v456
      %v2364 = vunpack.c.l.b16 %v457
      %v2365 = vunpack.c.h.b16 %v457
      %v2366 = vunpack.c.l.b16 %v458
      %v2367 = vunpack.c.h.b16 %v458
      %v2368 = vunpack.c.l.b16 %v459
      %v2369 = vunpack.c.h.b16 %v459
      %v2370 = vunpack.c.l.b16 %v460
      %v2371 = vunpack.c.h.b16 %v460
      %v2372 = vunpack.c.l.b16 %v461
      %v2373 = vunpack.c.h.b16 %v461
      %v2374 = vunpack.c.l.b16 %v462
      %v2375 = vunpack.c.h.b16 %v462
      %v2376 = vunpack.c.l.b16 %v463
      %v2377 = vunpack.c.h.b16 %v463
      %v2378 = vunpack.c.l.b16 %v464
      %v2379 = vunpack.c.h.b16 %v464
      %v2380 = vunpack.c.l.b16 %v465
      %v2381 = vunpack.c.h.b16 %v465
      %v2382 = vunpack.c.l.b16 %v466
      %v2383 = vunpack.c.h.b16 %v466
      %v2384 = vunpack.c.l.b16 %v467
      %v2385 = vunpack.c.h.b16 %v467
      %v2386 = vunpack.c.l.b16 %v468
      %v2387 = vunpack.c.h.b16 %v468
      %v2388 = vunpack.c.l.b16 %v469
      %v2389 = vunpack.c.h.b16 %v469
      %v2390 = vunpack.c.l.b16 %v470
      %v2391 = vunpack.c.h.b16 %v470
      %v2392 = vunpack.c.l.b16 %v471
      %v2393 = vunpack.c.h.b16 %v471
      %v2394 = vunpack.c.l.b16 %v472
      %v2395 = vunpack.c.h.b16 %v472
      %v2396 = vunpack.c.l.b16 %v473
      %v2397 = vunpack.c.h.b16 %v473
      %v2398 = vunpack.c.l.b16 %v474
      %v2399 = vunpack.c.h.b16 %v474
      %v2400 = vunpack.c.l.b16 %v475
      %v2401 = vunpack.c.h.b16 %v475
      %v2402 = vunpack.c.l.b16 %v476
      %v2403 = vunpack.c.h.b16 %v476
      %v2404 = vunpack.c.l.b16 %v477
      %v2405 = vunpack.c.h.b16 %v477
      %v2406 = vunpack.c.l.b16 %v478
      %v2407 = vunpack.c.h.b16 %v478
      %v2408 = vunpack.c.l.b16 %v479
      %v2409 = vunpack.c.h.b16 %v479
      %v2410 = vunpack.c.l.b16 %v480
      %v2411 = vunpack.c.h.b16 %v480
      %v2412 = vunpack.c.l.b16 %v481
      %v2413 = vunpack.c.h.b16 %v481
      %v2414 = vunpack.c.l.b16 %v482
      %v2415 = vunpack.c.h.b16 %v482
      %v2416 = vunpack.c.l.b16 %v483
      %v2417 = vunpack.c.h.b16 %v483
      %v2418 = vunpack.c.l.b16 %v484
      %v2419 = vunpack.c.h.b16 %v484
      %v2420 = vunpack.c.l.b16 %v485
      %v2421 = vunpack.c.h.b16 %v485
      %v2422 = vunpack.c.l.b16 %v486
      %v2423 = vunpack.c.h.b16 %v486
      %v2424 = vunpack.c.l.b16 %v487
      %v2425 = vunpack.c.h.b16 %v487
      %v2426 = vunpack.c.l.b16 %v488
      %v2427 = vunpack.c.h.b16 %v488
      %v2428 = vunpack.c.l.b16 %v489
      %v2429 = vunpack.c.h.b16 %v489
      %v2430 = vunpack.c.l.b16 %v490
      %v2431 = vunpack.c.h.b16 %v490
      %v2432 = vunpack.c.l.b16 %v491
      %v2433 = vunpack.c.h.b16 %v491
      %v2434 = vunpack.c.l.b16 %v492
      %v2435 = vunpack.c.h.b16 %v492
      %v2436 = vunpack.c.l.b16 %v493
      %v2437 = vunpack.c.h.b16 %v493
      %v2438 = vunpack.c.l.b16 %v494
      %v2439 = vunpack.c.h.b16 %v494
      %v2440 = vunpack.c.l.b16 %v495
      %v2441 = vunpack.c.h.b16 %v495
      %v2442 = vunpack.c.l.b16 %v496
      %v2443 = vunpack.c.h.b16 %v496
      %v2444 = vunpack.c.l.b16 %v497
      %v2445 = vunpack.c.h.b16 %v497
      %v2446 = vunpack.c.l.b16 %v498
      %v2447 = vunpack.c.h.b16 %v498
      %v2448 = vunpack.c.l.b16 %v499
      %v2449 = vunpack.c.h.b16 %v499
      %v2450 = vunpack.c.l.b16 %v500
      %v2451 = vunpack.c.h.b16 %v500
      %v2452 = vunpack.c.l.b16 %v501
      %v2453 = vunpack.c.h.b16 %v501
      %v2454 = vunpack.c.l.b16 %v502
      %v2455 = vunpack.c.h.b16 %v502
      %v2456 = vunpack.c.l.b16 %v503
      %v2457 = vunpack.c.h.b16 %v503
      %v2458 = vunpack.c.l.b16 %v504
      %v2459 = vunpack.c.h.b16 %v504
      %v2460 = vunpack.c.l.b16 %v505
      %v2461 = vunpack.c.h.b16 %v505
      %v2462 = vunpack.c.l.b16 %v506
      %v2463 = vunpack.c.h.b16 %v506
      %v2464 = vunpack.c.l.b16 %v507
      %v2465 = vunpack.c.h.b16 %v507
      %v2466 = vunpack.c.l.b16 %v508
      %v2467 = vunpack.c.h.b16 %v508
      %v2468 = vunpack.c.l.b16 %v509
      %v2469 = vunpack.c.h.b16 %v509
      %v2470 = vunpack.c.l.b16 %v510
      %v2471 = vunpack.c.h.b16 %v510
      %v2472 = vunpack.c.l.b16 %v511
      %v2473 = vunpack.c.h.b16 %v511
      %v2474 = vunpack.c.l.b16 %v512
      %v2475 = vunpack.c.h.b16 %v512
      %v2476 = vunpack.c.l.b16 %v513
      %v2477 = vunpack.c.h.b16 %v513
      %v2478 = vunpack.c.l.b16 %v514
      %v2479 = vunpack.c.h.b16 %v514
      %v2480 = vunpack.c.l.b16 %v515
      %v2481 = vunpack.c.h.b16 %v515
      %v2482 = vunpack.c.l.b16 %v516
      %v2483 = vunpack.c.h.b16 %v516
      %v2484 = vunpack.c.l.b16 %v517
      %v2485 = vunpack.c.h.b16 %v517
      %v2486 = vunpack.c.l.b16 %v518
      %v2487 = vunpack.c.h.b16 %v518
      %v2488 = vunpack.c.l.b16 %v519
      %v2489 = vunpack.c.h.b16 %v519
      %v2490 = vunpack.c.l.b16 %v520
      %v2491 = vunpack.c.h.b16 %v520
      %v2492 = vunpack.c.l.b16 %v521
      %v2493 = vunpack.c.h.b16 %v521
      %v2494 = vunpack.c.l.b16 %v522
      %v2495 = vunpack.c.h.b16 %v522
      %v2496 = vunpack.c.l.b16 %v523
      %v2497 = vunpack.c.h.b16 %v523
      %v2498 = vunpack.c.l.b16 %v524
      %v2499 = vunpack.c.h.b16 %v524
      %v2500 = vunpack.c.l.b16 %v525
      %v2501 = vunpack.c.h.b16 %v525
      %v2502 = vunpack.c.l.b16 %v526
      %v2503 = vunpack.c.h.b16 %v526
      %v2504 = vunpack.c.l.b16 %v527
      %v2505 = vunpack.c.h.b16 %v527
      %v2506 = vunpack.c.l.b16 %v528
      %v2507 = vunpack.c.h.b16 %v528
      %v2508 = vunpack.c.l.b16 %v529
      %v2509 = vunpack.c.h.b16 %v529
      %v2510 = vunpack.c.l.b16 %v530
      %v2511 = vunpack.c.h.b16 %v530
      %v2512 = vunpack.c.l.b16 %v531
      %v2513 = vunpack.c.h.b16 %v531
      %v2514 = vunpack.c.l.b16 %v532
      %v2515 = vunpack.c.h.b16 %v532
      %v2516 = vunpack.c.l.b16 %v533
      %v2517 = vunpack.c.h.b16 %v533
      %v2518 = vunpack.c.l.b16 %v534
      %v2519 = vunpack.c.h.b16 %v534
      %v2520 = vunpack.c.l.b16 %v535
      %v2521 = vunpack.c.h.b16 %v535
      %v2522 = vunpack.c.l.b16 %v536
      %v2523 = vunpack.c.h.b16 %v536
      %v2524 = vunpack.c.l.b16 %v537
      %v2525 = vunpack.c.h.b16 %v537
      %v2526 = vunpack.c.l.b16 %v538
      %v2527 = vunpack.c.h.b16 %v538
      %v2528 = vunpack.c.l.b16 %v539
      %v2529 = vunpack.c.h.b16 %v539
      %v2530 = vunpack.c.l.b16 %v540
      %v2531 = vunpack.c.h.b16 %v540
      %v2532 = vunpack.c.l.b16 %v541
      %v2533 = vunpack.c.h.b16 %v541
      %v2534 = vunpack.c.l.b16 %v542
      %v2535 = vunpack.c.h.b16 %v542
      %v2536 = vunpack.c.l.b16 %v543
      %v2537 = vunpack.c.h.b16 %v543
      %v2538 = vunpack.c.l.b16 %v544
      %v2539 = vunpack.c.h.b16 %v544
      %v2540 = vunpack.c.l.b16 %v545
      %v2541 = vunpack.c.h.b16 %v545
      %v2542 = vunpack.c.l.b16 %v546
      %v2543 = vunpack.c.h.b16 %v546
      %v2544 = vunpack.c.l.b16 %v547
      %v2545 = vunpack.c.h.b16 %v547
      %v2546 = vunpack.c.l.b16 %v548
      %v2547 = vunpack.c.h.b16 %v548
      %v2548 = vunpack.c.l.b16 %v549
      %v2549 = vunpack.c.h.b16 %v549
      %v2550 = vunpack.c.l.b16 %v550
      %v2551 = vunpack.c.h.b16 %v550
      %v2552 = vunpack.c.l.b16 %v551
      %v2553 = vunpack.c.h.b16 %v551
      %v2554 = vunpack.c.l.b16 %v552
      %v2555 = vunpack.c.h.b16 %v552
      %v2556 = vunpack.c.l.b16 %v553
      %v2557 = vunpack.c.h.b16 %v553
      %v2558 = vunpack.c.l.b16 %v554
      %v2559 = vunpack.c.h.b16 %v554
      %v2560 = vunpack.c.l.b16 %v555
      %v2561 = vunpack.c.h.b16 %v555
      %v2562 = vunpack.c.l.b16 %v556
      %v2563 = vunpack.c.h.b16 %v556
      %v2564 = vunpack.c.l.b16 %v557
      %v2565 = vunpack.c.h.b16 %v557
      %v2566 = vunpack.c.l.b16 %v558
      %v2567 = vunpack.c.h.b16 %v558
      %v2568 = vunpack.c.l.b16 %v559
      %v2569 = vunpack.c.h.b16 %v559
      %v2570 = vunpack.c.l.b16 %v560
      %v2571 = vunpack.c.h.b16 %v560
      %v2572 = vunpack.c.l.b16 %v561
      %v2573 = vunpack.c.h.b16 %v561
      %v2574 = vunpack.c.l.b16 %v562
      %v2575 = vunpack.c.h.b16 %v562
      %v2576 = vunpack.c.l.b16 %v563
      %v2577 = vunpack.c.h.b16 %v563
      %v2578 = vunpack.c.l.b16 %v564
      %v2579 = vunpack.c.h.b16 %v564
      %v2580 = vunpack.c.l.b16 %v565
      %v2581 = vunpack.c.h.b16 %v565
      %v2582 = vunpack.c.l.b16 %v566
      %v2583 = vunpack.c.h.b16 %v566
      %v2584 = vunpack.c.l.b16 %v567
      %v2585 = vunpack.c.h.b16 %v567
      %v2586 = vunpack.c.l.b16 %v568
      %v2587 = vunpack.c.h.b16 %v568
      %v2588 = vunpack.c.l.b16 %v569
      %v2589 = vunpack.c.h.b16 %v569
      %v2590 = vunpack.c.l.b16 %v570
      %v2591 = vunpack.c.h.b16 %v570
      %v2592 = vunpack.c.l.b16 %v571
      %v2593 = vunpack.c.h.b16 %v571
      %v2594 = vunpack.c.l.b16 %v572
      %v2595 = vunpack.c.h.b16 %v572
      %v2596 = vunpack.c.l.b16 %v573
      %v2597 = vunpack.c.h.b16 %v573
      %v2598 = vunpack.c.l.b16 %v574
      %v2599 = vunpack.c.h.b16 %v574
      %v2600 = vunpack.c.l.b16 %v575
      %v2601 = vunpack.c.h.b16 %v575
      %v2602 = vunpack.c.l.b16 %v576
      %v2603 = vunpack.c.h.b16 %v576
      %v2604 = vunpack.c.l.b16 %v577
      %v2605 = vunpack.c.h.b16 %v577
      %v2606 = vunpack.c.l.b16 %v578
      %v2607 = vunpack.c.h.b16 %v578
      %v2608 = vunpack.c.l.b16 %v579
      %v2609 = vunpack.c.h.b16 %v579
      %v2610 = vunpack.c.l.b16 %v580
      %v2611 = vunpack.c.h.b16 %v580
      %v2612 = vunpack.c.l.b16 %v581
      %v2613 = vunpack.c.h.b16 %v581
      %v2614 = vunpack.c.l.b16 %v582
      %v2615 = vunpack.c.h.b16 %v582
      %v2616 = vunpack.c.l.b16 %v583
      %v2617 = vunpack.c.h.b16 %v583
      %v2618 = vunpack.c.l.b16 %v584
      %v2619 = vunpack.c.h.b16 %v584
      %v2620 = vunpack.c.l.b16 %v585
      %v2621 = vunpack.c.h.b16 %v585
      %v2622 = vunpack.c.l.b16 %v586
      %v2623 = vunpack.c.h.b16 %v586
      %v2624 = vunpack.c.l.b16 %v587
      %v2625 = vunpack.c.h.b16 %v587
      %v2626 = vunpack.c.l.b16 %v588
      %v2627 = vunpack.c.h.b16 %v588
      %v2628 = vunpack.c.l.b16 %v589
      %v2629 = vunpack.c.h.b16 %v589
      %v2630 = vunpack.c.l.b16 %v590
      %v2631 = vunpack.c.h.b16 %v590
      %v2632 = vunpack.c.l.b16 %v591
      %v2633 = vunpack.c.h.b16 %v591
      %v2634 = vunpack.c.l.b16 %v592
      %v2635 = vunpack.c.h.b16 %v592
      %v2636 = vunpack.c.l.b16 %v593
      %v2637 = vunpack.c.h.b16 %v593
      %v2638 = vunpack.c.l.b16 %v594
      %v2639 = vunpack.c.h.b16 %v594
      %v2640 = vunpack.c.l.b16 %v595
      %v2641 = vunpack.c.h.b16 %v595
      %v2642 = vunpack.c.l.b16 %v596
      %v2643 = vunpack.c.h.b16 %v596
      %v2644 = vunpack.c.l.b16 %v597
      %v2645 = vunpack.c.h.b16 %v597
      %v2646 = vunpack.c.l.b16 %v598
      %v2647 = vunpack.c.h.b16 %v598
      %v2648 = vunpack.c.l.b16 %v599
      %v2649 = vunpack.c.h.b16 %v599
      %v2650 = vunpack.c.l.b16 %v600
      %v2651 = vunpack.c.h.b16 %v600
      %v2652 = vunpack.c.l.b16 %v601
      %v2653 = vunpack.c.h.b16 %v601
      %v2654 = vunpack.c.l.b16 %v602
      %v2655 = vunpack.c.h.b16 %v602
      %v2656 = vunpack.c.l.b16 %v603
      %v2657 = vunpack.c.h.b16 %v603
      %v2658 = vunpack.c.l.b16 %v604
      %v2659 = vunpack.c.h.b16 %v604
      %v2660 = vunpack.c.l.b16 %v605
      %v2661 = vunpack.c.h.b16 %v605
      %v2662 = vunpack.c.l.b16 %v606
      %v2663 = vunpack.c.h.b16 %v606
      %v2664 = vunpack.c.l.b16 %v607
      %v2665 = vunpack.c.h.b16 %v607
      %v2666 = vunpack.c.l.b16 %v608
      %v2667 = vunpack.c.h.b16 %v608
      %v2668 = vunpack.c.l.b16 %v609
      %v2669 = vunpack.c.h.b16 %v609
      %v2670 = vunpack.c.l.b16 %v610
      %v2671 = vunpack.c.h.b16 %v610
      %v2672 = vunpack.c.l.b16 %v611
      %v2673 = vunpack.c.h.b16 %v611
      %v2674 = vunpack.c.l.b16 %v612
      %v2675 = vunpack.c.h.b16 %v612
      %v2676 = vunpack.c.l.b16 %v613
      %v2677 = vunpack.c.h.b16 %v613
      %v2678 = vunpack.c.l.b16 %v614
      %v2679 = vunpack.c.h.b16 %v614
      %v2680 = vunpack.c.l.b16 %v615
      %v2681 = vunpack.c.h.b16 %v615
      %v2682 = vunpack.c.l.b16 %v616
      %v2683 = vunpack.c.h.b16 %v616
      %v2684 = vunpack.c.l.b16 %v617
      %v2685 = vunpack.c.h.b16 %v617
      %v2686 = vunpack.c.l.b16 %v618
      %v2687 = vunpack.c.h.b16 %v618
      %v2688 = vunpack.c.l.b16 %v619
      %v2689 = vunpack.c.h.b16 %v619
      %v2690 = vunpack.c.l.b16 %v620
      %v2691 = vunpack.c.h.b16 %v620
      %v2692 = vunpack.c.l.b16 %v621
      %v2693 = vunpack.c.h.b16 %v621
      %v2694 = vunpack.c.l.b16 %v622
      %v2695 = vunpack.c.h.b16 %v622
      %v2696 = vunpack.c.l.b16 %v623
      %v2697 = vunpack.c.h.b16 %v623
      %v2698 = vunpack.c.l.b16 %v624
      %v2699 = vunpack.c.h.b16 %v624
      %v2700 = vunpack.c.l.b16 %v625
      %v2701 = vunpack.c.h.b16 %v625
      %v2702 = vunpack.c.l.b16 %v626
      %v2703 = vunpack.c.h.b16 %v626
      %v2704 = vunpack.c.l.b16 %v627
      %v2705 = vunpack.c.h.b16 %v627
      %v2706 = vunpack.c.l.b16 %v628
      %v2707 = vunpack.c.h.b16 %v628
      %v2708 = vunpack.c.l.b16 %v629
      %v2709 = vunpack.c.h.b16 %v629
      %v2710 = vunpack.c.l.b16 %v630
      %v2711 = vunpack.c.h.b16 %v630
      %v2712 = vunpack.c.l.b16 %v631
      %v2713 = vunpack.c.h.b16 %v631
      %v2714 = vunpack.c.l.b16 %v632
      %v2715 = vunpack.c.h.b16 %v632
      %v2716 = vunpack.c.l.b16 %v633
      %v2717 = vunpack.c.h.b16 %v633
      %v2718 = vunpack.c.l.b16 %v634
      %v2719 = vunpack.c.h.b16 %v634
      %v2720 = vunpack.c.l.b16 %v635
      %v2721 = vunpack.c.h.b16 %v635
      %v2722 = vunpack.c.l.b16 %v636
      %v2723 = vunpack.c.h.b16 %v636
      %v2724 = vunpack.c.l.b16 %v637
      %v2725 = vunpack.c.h.b16 %v637
      %v2726 = vunpack.c.l.b16 %v638
      %v2727 = vunpack.c.h.b16 %v638
      %v2728 = vunpack.c.l.b16 %v639
      %v2729 = vunpack.c.h.b16 %v639
      %v2730 = vunpack.c.l.b16 %v640
      %v2731 = vunpack.c.h.b16 %v640
      %v2732 = vunpack.c.l.b16 %v641
      %v2733 = vunpack.c.h.b16 %v641
      %v2734 = vunpack.c.l.b16 %v642
      %v2735 = vunpack.c.h.b16 %v642
      %v2736 = vunpack.c.l.b16 %v643
      %v2737 = vunpack.c.h.b16 %v643
      %v2738 = vunpack.c.l.b16 %v644
      %v2739 = vunpack.c.h.b16 %v644
      %v2740 = vunpack.c.l.b16 %v645
      %v2741 = vunpack.c.h.b16 %v645
      %v2742 = vunpack.c.l.b16 %v646
      %v2743 = vunpack.c.h.b16 %v646
      %v2744 = vunpack.c.l.b16 %v647
      %v2745 = vunpack.c.h.b16 %v647
      %v2746 = vunpack.c.l.b16 %v648
      %v2747 = vunpack.c.h.b16 %v648
      %v2748 = vunpack.c.l.b16 %v649
      %v2749 = vunpack.c.h.b16 %v649
      %v2750 = vunpack.c.l.b16 %v650
      %v2751 = vunpack.c.h.b16 %v650
      %v2752 = vunpack.c.l.b16 %v651
      %v2753 = vunpack.c.h.b16 %v651
      %v2754 = vunpack.c.l.b16 %v652
      %v2755 = vunpack.c.h.b16 %v652
      %v2756 = vunpack.c.l.b16 %v653
      %v2757 = vunpack.c.h.b16 %v653
      %v2758 = vunpack.c.l.b16 %v654
      %v2759 = vunpack.c.h.b16 %v654
      %v2760 = vunpack.c.l.b16 %v655
      %v2761 = vunpack.c.h.b16 %v655
      %v2762 = vunpack.c.l.b16 %v656
      %v2763 = vunpack.c.h.b16 %v656
      %v2764 = vunpack.c.l.b16 %v657
      %v2765 = vunpack.c.h.b16 %v657
      %v2766 = vunpack.c.l.b16 %v658
      %v2767 = vunpack.c.h.b16 %v658
      %v2768 = vunpack.c.l.b16 %v659
      %v2769 = vunpack.c.h.b16 %v659
      %v2770 = vunpack.c.l.b16 %v660
      %v2771 = vunpack.c.h.b16 %v660
      %v2772 = vunpack.c.l.b16 %v661
      %v2773 = vunpack.c.h.b16 %v661
      %v2774 = vunpack.c.l.b16 %v662
      %v2775 = vunpack.c.h.b16 %v662
      %v2776 = vunpack.c.l.b16 %v663
      %v2777 = vunpack.c.h.b16 %v663
      %v2778 = vunpack.c.l.b16 %v664
      %v2779 = vunpack.c.h.b16 %v664
      %v2780 = vunpack.c.l.b16 %v665
      %v2781 = vunpack.c.h.b16 %v665
      %v2782 = vunpack.c.l.b16 %v666
      %v2783 = vunpack.c.h.b16 %v666
      %v2784 = vunpack.c.l.b16 %v667
      %v2785 = vunpack.c.h.b16 %v667
      %v2786 = vunpack.c.l.b16 %v668
      %v2787 = vunpack.c.h.b16 %v668
      %v2788 = vunpack.c.l.b16 %v669
      %v2789 = vunpack.c.h.b16 %v669
      %v2790 = vunpack.c.l.b16 %v670
      %v2791 = vunpack.c.h.b16 %v670
      %v2792 = vunpack.c.l.b16 %v671
      %v2793 = vunpack.c.h.b16 %v671
      %v2794 = vunpack.c.l.b16 %v672
      %v2795 = vunpack.c.h.b16 %v672
      %v2796 = vunpack.c.l.b16 %v673
      %v2797 = vunpack.c.h.b16 %v673
      %v2798 = vunpack.c.l.b16 %v674
      %v2799 = vunpack.c.h.b16 %v674
      %v2800 = vunpack.c.l.b16 %v675
      %v2801 = vunpack.c.h.b16 %v675
      %v2802 = vunpack.c.l.b16 %v676
      %v2803 = vunpack.c.h.b16 %v676
      %v2804 = vunpack.c.l.b16 %v677
      %v2805 = vunpack.c.h.b16 %v677
      %v2806 = vunpack.c.l.b16 %v678
      %v2807 = vunpack.c.h.b16 %v678
      %v2808 = vunpack.c.l.b16 %v679
      %v2809 = vunpack.c.h.b16 %v679
      %v2810 = vunpack.c.l.b16 %v680
      %v2811 = vunpack.c.h.b16 %v680
      %v2812 = vunpack.c.l.b16 %v681
      %v2813 = vunpack.c.h.b16 %v681
      %v2814 = vunpack.c.l.b16 %v682
      %v2815 = vunpack.c.h.b16 %v682
      %v2816 = vunpack.c.l.b16 %v683
      %v2817 = vunpack.c.h.b16 %v683
      %v2818 = vunpack.c.l.b16 %v684
      %v2819 = vunpack.c.h.b16 %v684
      %v2820 = vunpack.c.l.b16 %v685
      %v2821 = vunpack.c.h.b16 %v685
      %v2822 = vunpack.c.l.b16 %v686
      %v2823 = vunpack.c.h.b16 %v686
      %v2824 = vunpack.c.l.b16 %v687
      %v2825 = vunpack.c.h.b16 %v687
      %v2826 = vunpack.c.l.b16 %v688
      %v2827 = vunpack.c.h.b16 %v688
      %v2828 = vunpack.c.l.b16 %v689
      %v2829 = vunpack.c.h.b16 %v689
      %v2830 = vunpack.c.l.b16 %v690
      %v2831 = vunpack.c.h.b16 %v690
      %v2832 = vunpack.c.l.b16 %v691
      %v2833 = vunpack.c.h.b16 %v691
      %v2834 = vunpack.c.l.b16 %v692
      %v2835 = vunpack.c.h.b16 %v692
      %v2836 = vunpack.c.l.b16 %v693
      %v2837 = vunpack.c.h.b16 %v693
      %v2838 = vunpack.c.l.b16 %v694
      %v2839 = vunpack.c.h.b16 %v694
      %v2840 = vunpack.c.l.b16 %v695
      %v2841 = vunpack.c.h.b16 %v695
      %v2842 = vunpack.c.l.b16 %v696
      %v2843 = vunpack.c.h.b16 %v696
      %v2844 = vunpack.c.l.b16 %v697
      %v2845 = vunpack.c.h.b16 %v697
      %v2846 = vunpack.c.l.b16 %v698
      %v2847 = vunpack.c.h.b16 %v698
      %v2848 = vunpack.c.l.b16 %v699
      %v2849 = vunpack.c.h.b16 %v699
      %v2850 = vunpack.c.l.b16 %v700
      %v2851 = vunpack.c.h.b16 %v700
      %v2852 = vunpack.c.l.b16 %v701
      %v2853 = vunpack.c.h.b16 %v701
      %v2854 = vunpack.c.l.b16 %v702
      %v2855 = vunpack.c.h.b16 %v702
      %v2856 = vunpack.c.l.b16 %v703
      %v2857 = vunpack.c.h.b16 %v703
      %v2858 = vunpack.c.l.b16 %v704
      %v2859 = vunpack.c.h.b16 %v704
      %v2860 = vunpack.c.l.b16 %v705
      %v2861 = vunpack.c.h.b16 %v705
      %v2862 = vunpack.c.l.b16 %v706
      %v2863 = vunpack.c.h.b16 %v706
      %v2864 = vunpack.c.l.b16 %v707
      %v2865 = vunpack.c.h.b16 %v707
      %v2866 = vunpack.c.l.b16 %v708
      %v2867 = vunpack.c.h.b16 %v708
      %v2868 = vunpack.c.l.b16 %v709
      %v2869 = vunpack.c.h.b16 %v709
      %v2870 = vunpack.c.l.b16 %v710
      %v2871 = vunpack.c.h.b16 %v710
      %v2872 = vunpack.c.l.b16 %v711
      %v2873 = vunpack.c.h.b16 %v711
      %v2874 = vunpack.c.l.b16 %v712
      %v2875 = vunpack.c.h.b16 %v712
      %v2876 = vunpack.c.l.b16 %v713
      %v2877 = vunpack.c.h.b16 %v713
      %v2878 = vunpack.c.l.b16 %v714
      %v2879 = vunpack.c.h.b16 %v714
      %v2880 = vunpack.c.l.b16 %v715
      %v2881 = vunpack.c.h.b16 %v715
      %v2882 = vunpack.c.l.b16 %v716
      %v2883 = vunpack.c.h.b16 %v716
      %v2884 = vunpack.c.l.b16 %v717
      %v2885 = vunpack.c.h.b16 %v717
      %v2886 = vunpack.c.l.b16 %v718
      %v2887 = vunpack.c.h.b16 %v718
      %v2888 = vunpack.c.l.b16 %v719
      %v2889 = vunpack.c.h.b16 %v719
      %v2890 = vunpack.c.l.b16 %v720
      %v2891 = vunpack.c.h.b16 %v720
      %v2892 = vunpack.c.l.b16 %v721
      %v2893 = vunpack.c.h.b16 %v721
      %v2894 = vunpack.c.l.b16 %v722
      %v2895 = vunpack.c.h.b16 %v722
      %v2896 = vunpack.c.l.b16 %v723
      %v2897 = vunpack.c.h.b16 %v723
      %v2898 = vunpack.c.l.b16 %v724
      %v2899 = vunpack.c.h.b16 %v724
      %v2900 = vunpack.c.l.b16 %v725
      %v2901 = vunpack.c.h.b16 %v725
      %v2902 = vunpack.c.l.b16 %v726
      %v2903 = vunpack.c.h.b16 %v726
      %v2904 = vunpack.c.l.b16 %v727
      %v2905 = vunpack.c.h.b16 %v727
      %v2906 = vunpack.c.l.b16 %v728
      %v2907 = vunpack.c.h.b16 %v728
      %v2908 = vunpack.c.l.b16 %v729
      %v2909 = vunpack.c.h.b16 %v729
      %v2910 = vunpack.c.l.b16 %v730
      %v2911 = vunpack.c.h.b16 %v730
      %v2912 = vunpack.c.l.b16 %v731
      %v2913 = vunpack.c.h.b16 %v731
      %v2914 = vunpack.c.l.b16 %v732
      %v2915 = vunpack.c.h.b16 %v732
      %v2916 = vunpack.c.l.b16 %v733
      %v2917 = vunpack.c.h.b16 %v733
      %v2918 = vunpack.c.l.b16 %v734
      %v2919 = vunpack.c.h.b16 %v734
      %v2920 = vunpack.c.l.b16 %v735
      %v2921 = vunpack.c.h.b16 %v735
      %v2922 = vunpack.c.l.b16 %v736
      %v2923 = vunpack.c.h.b16 %v736
      %v2924 = vunpack.c.l.b16 %v737
      %v2925 = vunpack.c.h.b16 %v737
      %v2926 = vunpack.c.l.b16 %v738
      %v2927 = vunpack.c.h.b16 %v738
      %v2928 = vunpack.c.l.b16 %v739
      %v2929 = vunpack.c.h.b16 %v739
      %v2930 = vunpack.c.l.b16 %v740
      %v2931 = vunpack.c.h.b16 %v740
      %v2932 = vunpack.c.l.b16 %v741
      %v2933 = vunpack.c.h.b16 %v741
      %v2934 = vunpack.c.l.b16 %v742
      %v2935 = vunpack.c.h.b16 %v742
      %v2936 = vunpack.c.l.b16 %v743
      %v2937 = vunpack.c.h.b16 %v743
      %v2938 = vunpack.c.l.b16 %v744
      %v2939 = vunpack.c.h.b16 %v744
      %v2940 = vunpack.c.l.b16 %v745
      %v2941 = vunpack.c.h.b16 %v745
      %v2942 = vunpack.c.l.b16 %v746
      %v2943 = vunpack.c.h.b16 %v746
      %v2944 = vunpack.c.l.b16 %v747
      %v2945 = vunpack.c.h.b16 %v747
      %v2946 = vunpack.c.l.b16 %v748
      %v2947 = vunpack.c.h.b16 %v748
      %v2948 = vunpack.c.l.b16 %v749
      %v2949 = vunpack.c.h.b16 %v749
      %v2950 = vunpack.c.l.b16 %v750
      %v2951 = vunpack.c.h.b16 %v750
      %v2952 = vunpack.c.l.b16 %v751
      %v2953 = vunpack.c.h.b16 %v751
      %v2954 = vunpack.c.l.b16 %v752
      %v2955 = vunpack.c.h.b16 %v752
      %v2956 = vunpack.c.l.b16 %v753
      %v2957 = vunpack.c.h.b16 %v753
      %v2958 = vunpack.c.l.b16 %v754
      %v2959 = vunpack.c.h.b16 %v754
      %v2960 = vunpack.c.l.b16 %v755
      %v2961 = vunpack.c.h.b16 %v755
      %v2962 = vunpack.c.l.b16 %v756
      %v2963 = vunpack.c.h.b16 %v756
      %v2964 = vunpack.c.l.b16 %v757
      %v2965 = vunpack.c.h.b16 %v757
      %v2966 = vunpack.c.l.b16 %v758
      %v2967 = vunpack.c.h.b16 %v758
      %v2968 = vunpack.c.l.b16 %v759
      %v2969 = vunpack.c.h.b16 %v759
      %v2970 = vunpack.c.l.b16 %v760
      %v2971 = vunpack.c.h.b16 %v760
      %v2972 = vunpack.c.l.b16 %v761
      %v2973 = vunpack.c.h.b16 %v761
      %v2974 = vunpack.c.l.b16 %v762
      %v2975 = vunpack.c.h.b16 %v762
      %v2976 = vunpack.c.l.b16 %v763
      %v2977 = vunpack.c.h.b16 %v763
      %v2978 = vunpack.c.l.b16 %v764
      %v2979 = vunpack.c.h.b16 %v764
      %v2980 = vunpack.c.l.b16 %v765
      %v2981 = vunpack.c.h.b16 %v765
      %v2982 = vunpack.c.l.b16 %v766
      %v2983 = vunpack.c.h.b16 %v766
      %v2984 = vunpack.c.l.b16 %v767
      %v2985 = vunpack.c.h.b16 %v767
      %v2986 = vunpack.c.l.b16 %v768
      %v2987 = vunpack.c.h.b16 %v768
      %v2988 = vunpack.c.l.b16 %v769
      %v2989 = vunpack.c.h.b16 %v769
      %v2990 = vunpack.c.l.b16 %v770
      %v2991 = vunpack.c.h.b16 %v770
      %v2992 = vunpack.c.l.b16 %v771
      %v2993 = vunpack.c.h.b16 %v771
      %v2994 = vunpack.c.l.b16 %v772
      %v2995 = vunpack.c.h.b16 %v772
      %v2996 = vunpack.c.l.b16 %v773
      %v2997 = vunpack.c.h.b16 %v773
      %v2998 = vunpack.c.l.b16 %v774
      %v2999 = vunpack.c.h.b16 %v774
      %v3000 = vunpack.c.l.b16 %v775
      %v3001 = vunpack.c.h.b16 %v775
      %v3002 = vunpack.c.l.b16 %v776
      %v3003 = vunpack.c.h.b16 %v776
      %v3004 = vunpack.c.l.b16 %v777
      %v3005 = vunpack.c.h.b16 %v777
      %v3006 = vunpack.c.l.b16 %v778
      %v3007 = vunpack.c.h.b16 %v778
      %v3008 = vunpack.c.l.b16 %v779
      %v3009 = vunpack.c.h.b16 %v779
      %v3010 = vunpack.c.l.b16 %v780
      %v3011 = vunpack.c.h.b16 %v780
      %v3012 = vunpack.c.l.b16 %v781
      %v3013 = vunpack.c.h.b16 %v781
      %v3014 = vunpack.c.l.b16 %v782
      %v3015 = vunpack.c.h.b16 %v782
      %v3016 = vunpack.c.l.b16 %v783
      %v3017 = vunpack.c.h.b16 %v783
      %v3018 = vunpack.c.l.b16 %v784
      %v3019 = vunpack.c.h.b16 %v784
      %v3020 = vunpack.c.l.b16 %v785
      %v3021 = vunpack.c.h.b16 %v785
      %v3022 = vunpack.c.l.b16 %v786
      %v3023 = vunpack.c.h.b16 %v786
      %v3024 = vunpack.c.l.b16 %v787
      %v3025 = vunpack.c.h.b16 %v787
      %v3026 = vunpack.c.l.b16 %v788
      %v3027 = vunpack.c.h.b16 %v788
      %v3028 = vunpack.c.l.b16 %v789
      %v3029 = vunpack.c.h.b16 %v789
      %v3030 = vunpack.c.l.b16 %v790
      %v3031 = vunpack.c.h.b16 %v790
      %v3032 = vunpack.c.l.b16 %v791
      %v3033 = vunpack.c.h.b16 %v791
      %v3034 = vunpack.c.l.b16 %v792
      %v3035 = vunpack.c.h.b16 %v792
      %v3036 = vunpack.c.l.b16 %v793
      %v3037 = vunpack.c.h.b16 %v793
      %v3038 = vunpack.c.l.b16 %v794
      %v3039 = vunpack.c.h.b16 %v794
      %v3040 = vunpack.c.l.b16 %v795
      %v3041 = vunpack.c.h.b16 %v795
      %v3042 = vunpack.c.l.b16 %v796
      %v3043 = vunpack.c.h.b16 %v796
      %v3044 = vunpack.c.l.b16 %v797
      %v3045 = vunpack.c.h.b16 %v797
      %v3046 = vunpack.c.l.b16 %v798
      %v3047 = vunpack.c.h.b16 %v798
      %v3048 = vunpack.c.l.b16 %v799
      %v3049 = vunpack.c.h.b16 %v799
      %v3050 = vunpack.c.l.b16 %v800
      %v3051 = vunpack.c.h.b16 %v800
      %v3052 = vunpack.c.l.b16 %v801
      %v3053 = vunpack.c.h.b16 %v801
      %v3054 = vunpack.c.l.b16 %v802
      %v3055 = vunpack.c.h.b16 %v802
      %v3056 = vunpack.c.l.b16 %v803
      %v3057 = vunpack.c.h.b16 %v803
      %v3058 = vunpack.c.l.b16 %v804
      %v3059 = vunpack.c.h.b16 %v804
      %v3060 = vunpack.c.l.b16 %v805
      %v3061 = vunpack.c.h.b16 %v805
      %v3062 = vunpack.c.l.b16 %v806
      %v3063 = vunpack.c.h.b16 %v806
      %v3064 = vunpack.c.l.b16 %v807
      %v3065 = vunpack.c.h.b16 %v807
      %v3066 = vunpack.c.l.b16 %v808
      %v3067 = vunpack.c.h.b16 %v808
      %v3068 = vunpack.c.l.b16 %v809
      %v3069 = vunpack.c.h.b16 %v809
      %v3070 = vunpack.c.l.b16 %v810
      %v3071 = vunpack.c.h.b16 %v810
      %v3072 = vunpack.c.l.b16 %v811
      %v3073 = vunpack.c.h.b16 %v811
      %v3074 = vunpack.c.l.b16 %v812
      %v3075 = vunpack.c.h.b16 %v812
      %v3076 = vunpack.c.l.b16 %v813
      %v3077 = vunpack.c.h.b16 %v813
      %v3078 = vunpack.c.l.b16 %v814
      %v3079 = vunpack.c.h.b16 %v814
      %v3080 = vunpack.c.l.b16 %v815
      %v3081 = vunpack.c.h.b16 %v815
      %v3082 = vunpack.c.l.b16 %v816
      %v3083 = vunpack.c.h.b16 %v816
      %v3084 = vunpack.c.l.b16 %v817
      %v3085 = vunpack.c.h.b16 %v817
      %v3086 = vunpack.c.l.b16 %v818
      %v3087 = vunpack.c.h.b16 %v818
      %v3088 = vunpack.c.l.b16 %v819
      %v3089 = vunpack.c.h.b16 %v819
      %v3090 = vunpack.c.l.b16 %v820
      %v3091 = vunpack.c.h.b16 %v820
      %v3092 = vunpack.c.l.b16 %v821
      %v3093 = vunpack.c.h.b16 %v821
      %v3094 = vunpack.c.l.b16 %v822
      %v3095 = vunpack.c.h.b16 %v822
      %v3096 = vunpack.c.l.b16 %v823
      %v3097 = vunpack.c.h.b16 %v823
      %v3098 = vunpack.c.l.b16 %v824
      %v3099 = vunpack.c.h.b16 %v824
      %v3100 = vunpack.c.l.b16 %v825
      %v3101 = vunpack.c.h.b16 %v825
      %v3102 = vunpack.c.l.b16 %v826
      %v3103 = vunpack.c.h.b16 %v826
      %v3104 = vunpack.c.l.b16 %v827
      %v3105 = vunpack.c.h.b16 %v827
      %v3106 = vunpack.c.l.b16 %v828
      %v3107 = vunpack.c.h.b16 %v828
      %v3108 = vunpack.c.l.b16 %v829
      %v3109 = vunpack.c.h.b16 %v829
      %v3110 = vunpack.c.l.b16 %v830
      %v3111 = vunpack.c.h.b16 %v830
      %v3112 = vunpack.c.l.b16 %v831
      %v3113 = vunpack.c.h.b16 %v831
      %v3114 = vunpack.c.l.b16 %v832
      %v3115 = vunpack.c.h.b16 %v832
      %v3116 = vunpack.c.l.b16 %v833
      %v3117 = vunpack.c.h.b16 %v833
      %v3118 = vunpack.c.l.b16 %v834
      %v3119 = vunpack.c.h.b16 %v834
      %v3120 = vunpack.c.l.b16 %v835
      %v3121 = vunpack.c.h.b16 %v835
      %v3122 = vunpack.c.l.b16 %v836
      %v3123 = vunpack.c.h.b16 %v836
      %v3124 = vunpack.c.l.b16 %v837
      %v3125 = vunpack.c.h.b16 %v837
      %v3126 = vunpack.c.l.b16 %v838
      %v3127 = vunpack.c.h.b16 %v838
      %v3128 = vunpack.c.l.b16 %v839
      %v3129 = vunpack.c.h.b16 %v839
      %v3130 = vunpack.c.l.b16 %v840
      %v3131 = vunpack.c.h.b16 %v840
      %v3132 = vunpack.c.l.b16 %v841
      %v3133 = vunpack.c.h.b16 %v841
      %v3134 = vunpack.c.l.b16 %v842
      %v3135 = vunpack.c.h.b16 %v842
      %v3136 = vunpack.c.l.b16 %v843
      %v3137 = vunpack.c.h.b16 %v843
      %v3138 = vunpack.c.l.b16 %v844
      %v3139 = vunpack.c.h.b16 %v844
      %v3140 = vunpack.c.l.b16 %v845
      %v3141 = vunpack.c.h.b16 %v845
      %v3142 = vunpack.c.l.b16 %v846
      %v3143 = vunpack.c.h.b16 %v846
      %v3144 = vunpack.c.l.b16 %v847
      %v3145 = vunpack.c.h.b16 %v847
      %v3146 = vunpack.c.l.b16 %v848
      %v3147 = vunpack.c.h.b16 %v848
      %v3148 = vunpack.c.l.b16 %v849
      %v3149 = vunpack.c.h.b16 %v849
      %v3150 = vunpack.c.l.b16 %v850
      %v3151 = vunpack.c.h.b16 %v850
      %v3152 = vunpack.c.l.b16 %v851
      %v3153 = vunpack.c.h.b16 %v851
      %v3154 = vunpack.c.l.b16 %v852
      %v3155 = vunpack.c.h.b16 %v852
      %v3156 = vunpack.c.l.b16 %v853
      %v3157 = vunpack.c.h.b16 %v853
      %v3158 = vunpack.c.l.b16 %v854
      %v3159 = vunpack.c.h.b16 %v854
      %v3160 = vunpack.c.l.b16 %v855
      %v3161 = vunpack.c.h.b16 %v855
      %v3162 = vunpack.c.l.b16 %v856
      %v3163 = vunpack.c.h.b16 %v856
      %v3164 = vunpack.c.l.b16 %v857
      %v3165 = vunpack.c.h.b16 %v857
      %v3166 = vunpack.c.l.b16 %v858
      %v3167 = vunpack.c.h.b16 %v858
      %v3168 = vunpack.c.l.b16 %v859
      %v3169 = vunpack.c.h.b16 %v859
      %v3170 = vunpack.c.l.b16 %v860
      %v3171 = vunpack.c.h.b16 %v860
      %v3172 = vunpack.c.l.b16 %v861
      %v3173 = vunpack.c.h.b16 %v861
      %v3174 = vunpack.c.l.b16 %v862
      %v3175 = vunpack.c.h.b16 %v862
      %v3176 = vunpack.c.l.b16 %v863
      %v3177 = vunpack.c.h.b16 %v863
      %v3178 = vunpack.c.l.b16 %v864
      %v3179 = vunpack.c.h.b16 %v864
      %v3180 = vunpack.c.l.b16 %v865
      %v3181 = vunpack.c.h.b16 %v865
      %v3182 = vunpack.c.l.b16 %v866
      %v3183 = vunpack.c.h.b16 %v866
      %v3184 = vunpack.c.l.b16 %v867
      %v3185 = vunpack.c.h.b16 %v867
      %v3186 = vunpack.c.l.b16 %v868
      %v3187 = vunpack.c.h.b16 %v868
      %v3188 = vunpack.c.l.b16 %v869
      %v3189 = vunpack.c.h.b16 %v869
      %v3190 = vunpack.c.l.b16 %v870
      %v3191 = vunpack.c.h.b16 %v870
      %v3192 = vunpack.c.l.b16 %v871
      %v3193 = vunpack.c.h.b16 %v871
      %v3194 = vunpack.c.l.b16 %v872
      %v3195 = vunpack.c.h.b16 %v872
      %v3196 = vunpack.c.l.b16 %v873
      %v3197 = vunpack.c.h.b16 %v873
      %v3198 = vunpack.c.l.b16 %v874
      %v3199 = vunpack.c.h.b16 %v874
      %v3200 = vunpack.c.l.b16 %v875
      %v3201 = vunpack.c.h.b16 %v875
      %v3202 = vunpack.c.l.b16 %v876
      %v3203 = vunpack.c.h.b16 %v876
      %v3204 = vunpack.c.l.b16 %v877
      %v3205 = vunpack.c.h.b16 %v877
      %v3206 = vunpack.c.l.b16 %v878
      %v3207 = vunpack.c.h.b16 %v878
      %v3208 = vunpack.c.l.b16 %v879
      %v3209 = vunpack.c.h.b16 %v879
      %v3210 = vunpack.c.l.b16 %v880
      %v3211 = vunpack.c.h.b16 %v880
      %v3212 = vunpack.c.l.b16 %v881
      %v3213 = vunpack.c.h.b16 %v881
      %v3214 = vunpack.c.l.b16 %v882
      %v3215 = vunpack.c.h.b16 %v882
      %v3216 = vunpack.c.l.b16 %v883
      %v3217 = vunpack.c.h.b16 %v883
      %v3218 = vunpack.c.l.b16 %v884
      %v3219 = vunpack.c.h.b16 %v884
      %v3220 = vunpack.c.l.b16 %v885
      %v3221 = vunpack.c.h.b16 %v885
      %v3222 = vunpack.c.l.b16 %v886
      %v3223 = vunpack.c.h.b16 %v886
      %v3224 = vunpack.c.l.b16 %v887
      %v3225 = vunpack.c.h.b16 %v887
      %v3226 = vunpack.c.l.b16 %v888
      %v3227 = vunpack.c.h.b16 %v888
      %v3228 = vunpack.c.l.b16 %v889
      %v3229 = vunpack.c.h.b16 %v889
      %v3230 = vunpack.c.l.b16 %v890
      %v3231 = vunpack.c.h.b16 %v890
      %v3232 = vunpack.c.l.b16 %v891
      %v3233 = vunpack.c.h.b16 %v891
      %v3234 = vunpack.c.l.b16 %v892
      %v3235 = vunpack.c.h.b16 %v892
      %v3236 = vunpack.c.l.b16 %v893
      %v3237 = vunpack.c.h.b16 %v893
      %v3238 = vunpack.c.l.b16 %v894
      %v3239 = vunpack.c.h.b16 %v894
      %v3240 = vunpack.c.l.b16 %v895
      %v3241 = vunpack.c.h.b16 %v895
      %v3242 = vunpack.c.l.b16 %v896
      %v3243 = vunpack.c.h.b16 %v896
      %v3244 = vunpack.c.l.b16 %v897
      %v3245 = vunpack.c.h.b16 %v897
      %v3246 = vunpack.c.l.b16 %v898
      %v3247 = vunpack.c.h.b16 %v898
      %v3248 = vunpack.c.l.b16 %v899
      %v3249 = vunpack.c.h.b16 %v899
      %v3250 = vunpack.c.l.b16 %v900
      %v3251 = vunpack.c.h.b16 %v900
      %v3252 = vunpack.c.l.b16 %v901
      %v3253 = vunpack.c.h.b16 %v901
      %v3254 = vunpack.c.l.b16 %v902
      %v3255 = vunpack.c.h.b16 %v902
      %v3256 = vunpack.c.l.b16 %v903
      %v3257 = vunpack.c.h.b16 %v903
      %v3258 = vunpack.c.l.b16 %v904
      %v3259 = vunpack.c.h.b16 %v904
      %v3260 = vunpack.c.l.b16 %v905
      %v3261 = vunpack.c.h.b16 %v905
      %v3262 = vunpack.c.l.b16 %v906
      %v3263 = vunpack.c.h.b16 %v906
      %v3264 = vunpack.c.l.b16 %v907
      %v3265 = vunpack.c.h.b16 %v907
      %v3266 = vunpack.c.l.b16 %v908
      %v3267 = vunpack.c.h.b16 %v908
      %v3268 = vunpack.c.l.b16 %v909
      %v3269 = vunpack.c.h.b16 %v909
      %v3270 = vunpack.c.l.b16 %v910
      %v3271 = vunpack.c.h.b16 %v910
      %v3272 = vunpack.c.l.b16 %v911
      %v3273 = vunpack.c.h.b16 %v911
      %v3274 = vunpack.c.l.b16 %v912
      %v3275 = vunpack.c.h.b16 %v912
      %v3276 = vunpack.c.l.b16 %v913
      %v3277 = vunpack.c.h.b16 %v913
      %v3278 = vunpack.c.l.b16 %v914
      %v3279 = vunpack.c.h.b16 %v914
      %v3280 = vunpack.c.l.b16 %v915
      %v3281 = vunpack.c.h.b16 %v915
      %v3282 = vunpack.c.l.b16 %v916
      %v3283 = vunpack.c.h.b16 %v916
      %v3284 = vunpack.c.l.b16 %v917
      %v3285 = vunpack.c.h.b16 %v917
      %v3286 = vunpack.c.l.b16 %v918
      %v3287 = vunpack.c.h.b16 %v918
      %v3288 = vunpack.c.l.b16 %v919
      %v3289 = vunpack.c.h.b16 %v919
      %v3290 = vunpack.c.l.b16 %v920
      %v3291 = vunpack.c.h.b16 %v920
      %v3292 = vunpack.c.l.b16 %v921
      %v3293 = vunpack.c.h.b16 %v921
      %v3294 = vunpack.c.l.b16 %v922
      %v3295 = vunpack.c.h.b16 %v922
      %v3296 = vunpack.c.l.b16 %v923
      %v3297 = vunpack.c.h.b16 %v923
      %v3298 = vunpack.c.l.b16 %v924
      %v3299 = vunpack.c.h.b16 %v924
      %v3300 = vunpack.c.l.b16 %v925
      %v3301 = vunpack.c.h.b16 %v925
      %v3302 = vunpack.c.l.b16 %v926
      %v3303 = vunpack.c.h.b16 %v926
      %v3304 = vunpack.c.l.b16 %v927
      %v3305 = vunpack.c.h.b16 %v927
      %v3306 = vunpack.c.l.b16 %v928
      %v3307 = vunpack.c.h.b16 %v928
      %v3308 = vunpack.c.l.b16 %v929
      %v3309 = vunpack.c.h.b16 %v929
      %v3310 = vunpack.c.l.b16 %v930
      %v3311 = vunpack.c.h.b16 %v930
      %v3312 = vunpack.c.l.b16 %v931
      %v3313 = vunpack.c.h.b16 %v931
      %v3314 = vunpack.c.l.b16 %v932
      %v3315 = vunpack.c.h.b16 %v932
      %v3316 = vunpack.c.l.b16 %v933
      %v3317 = vunpack.c.h.b16 %v933
      %v3318 = vunpack.c.l.b16 %v934
      %v3319 = vunpack.c.h.b16 %v934
      %v3320 = vunpack.c.l.b16 %v935
      %v3321 = vunpack.c.h.b16 %v935
      %v3322 = vunpack.c.l.b16 %v936
      %v3323 = vunpack.c.h.b16 %v936
      %v3324 = vunpack.c.l.b16 %v937
      %v3325 = vunpack.c.h.b16 %v937
      %v3326 = vunpack.c.l.b16 %v938
      %v3327 = vunpack.c.h.b16 %v938
      %v3328 = vunpack.c.l.b16 %v939
      %v3329 = vunpack.c.h.b16 %v939
      %v3330 = vunpack.c.l.b16 %v940
      %v3331 = vunpack.c.h.b16 %v940
      %v3332 = vunpack.c.l.b16 %v941
      %v3333 = vunpack.c.h.b16 %v941
      %v3334 = vunpack.c.l.b16 %v942
      %v3335 = vunpack.c.h.b16 %v942
      %v3336 = vunpack.c.l.b16 %v943
      %v3337 = vunpack.c.h.b16 %v943
      %v3338 = vunpack.c.l.b16 %v944
      %v3339 = vunpack.c.h.b16 %v944
      %v3340 = vunpack.c.l.b16 %v945
      %v3341 = vunpack.c.h.b16 %v945
      %v3342 = vunpack.c.l.b16 %v946
      %v3343 = vunpack.c.h.b16 %v946
      %v3344 = vunpack.c.l.b16 %v947
      %v3345 = vunpack.c.h.b16 %v947
      %v3346 = vunpack.c.l.b16 %v948
      %v3347 = vunpack.c.h.b16 %v948
      %v3348 = vunpack.c.l.b16 %v949
      %v3349 = vunpack.c.h.b16 %v949
      %v3350 = vunpack.c.l.b16 %v950
      %v3351 = vunpack.c.h.b16 %v950
      %v3352 = vunpack.c.l.b16 %v951
      %v3353 = vunpack.c.h.b16 %v951
      %v3354 = vunpack.c.l.b16 %v952
      %v3355 = vunpack.c.h.b16 %v952
      %v3356 = vunpack.c.l.b16 %v953
      %v3357 = vunpack.c.h.b16 %v953
      %v3358 = vunpack.c.l.b16 %v954
      %v3359 = vunpack.c.h.b16 %v954
      %v3360 = vunpack.c.l.b16 %v955
      %v3361 = vunpack.c.h.b16 %v955
      %v3362 = vunpack.c.l.b16 %v956
      %v3363 = vunpack.c.h.b16 %v956
      %v3364 = vunpack.c.l.b16 %v957
      %v3365 = vunpack.c.h.b16 %v957
      %v3366 = vunpack.c.l.b16 %v958
      %v3367 = vunpack.c.h.b16 %v958
      %v3368 = vunpack.c.l.b16 %v959
      %v3369 = vunpack.c.h.b16 %v959
      %v3370 = vunpack.c.l.b16 %v960
      %v3371 = vunpack.c.h.b16 %v960
      %v3372 = vunpack.c.l.b16 %v961
      %v3373 = vunpack.c.h.b16 %v961
      %v3374 = vunpack.c.l.b16 %v962
      %v3375 = vunpack.c.h.b16 %v962
      %v3376 = vunpack.c.l.b16 %v963
      %v3377 = vunpack.c.h.b16 %v963
      %v3378 = vunpack.c.l.b16 %v964
      %v3379 = vunpack.c.h.b16 %v964
      %v3380 = vunpack.c.l.b16 %v965
      %v3381 = vunpack.c.h.b16 %v965
      %v3382 = vunpack.c.l.b16 %v966
      %v3383 = vunpack.c.h.b16 %v966
      %v3384 = vunpack.c.l.b16 %v967
      %v3385 = vunpack.c.h.b16 %v967
      %v3386 = vunpack.c.l.b16 %v968
      %v3387 = vunpack.c.h.b16 %v968
      %v3388 = vunpack.c.l.b16 %v969
      %v3389 = vunpack.c.h.b16 %v969
      %v3390 = vunpack.c.l.b16 %v970
      %v3391 = vunpack.c.h.b16 %v970
      %v3392 = vunpack.c.l.b16 %v971
      %v3393 = vunpack.c.h.b16 %v971
      %v3394 = vunpack.c.l.b16 %v972
      %v3395 = vunpack.c.h.b16 %v972
      %v3396 = vunpack.c.l.b16 %v973
      %v3397 = vunpack.c.h.b16 %v973
      %v3398 = vunpack.c.l.b16 %v974
      %v3399 = vunpack.c.h.b16 %v974
      %v3400 = vunpack.c.l.b16 %v975
      %v3401 = vunpack.c.h.b16 %v975
      %v3402 = vunpack.c.l.b16 %v976
      %v3403 = vunpack.c.h.b16 %v976
      %v3404 = vunpack.c.l.b16 %v977
      %v3405 = vunpack.c.h.b16 %v977
      %v3406 = vunpack.c.l.b16 %v978
      %v3407 = vunpack.c.h.b16 %v978
      %v3408 = vunpack.c.l.b16 %v979
      %v3409 = vunpack.c.h.b16 %v979
      %v3410 = vunpack.c.l.b16 %v980
      %v3411 = vunpack.c.h.b16 %v980
      %v3412 = vunpack.c.l.b16 %v981
      %v3413 = vunpack.c.h.b16 %v981
      %v3414 = vunpack.c.l.b16 %v982
      %v3415 = vunpack.c.h.b16 %v982
      %v3416 = vunpack.c.l.b16 %v983
      %v3417 = vunpack.c.h.b16 %v983
      %v3418 = vunpack.c.l.b16 %v984
      %v3419 = vunpack.c.h.b16 %v984
      %v3420 = vunpack.c.l.b16 %v985
      %v3421 = vunpack.c.h.b16 %v985
      %v3422 = vunpack.c.l.b16 %v986
      %v3423 = vunpack.c.h.b16 %v986
      %v3424 = vunpack.c.l.b16 %v987
      %v3425 = vunpack.c.h.b16 %v987
      %v3426 = vunpack.c.l.b16 %v988
      %v3427 = vunpack.c.h.b16 %v988
      %v3428 = vunpack.c.l.b16 %v989
      %v3429 = vunpack.c.h.b16 %v989
      %v3430 = vunpack.c.l.b16 %v990
      %v3431 = vunpack.c.h.b16 %v990
      %v3432 = vunpack.c.l.b16 %v991
      %v3433 = vunpack.c.h.b16 %v991
      %v3434 = vunpack.c.l.b16 %v992
      %v3435 = vunpack.c.h.b16 %v992
      %v3436 = vunpack.c.l.b16 %v993
      %v3437 = vunpack.c.h.b16 %v993
      %v3438 = vunpack.c.l.b16 %v994
      %v3439 = vunpack.c.h.b16 %v994
      %v3440 = vunpack.c.l.b16 %v995
      %v3441 = vunpack.c.h.b16 %v995
      %v3442 = vunpack.c.l.b16 %v996
      %v3443 = vunpack.c.h.b16 %v996
      %v3444 = vunpack.c.l.b16 %v997
      %v3445 = vunpack.c.h.b16 %v997
      %v3446 = vunpack.c.l.b16 %v998
      %v3447 = vunpack.c.h.b16 %v998
      %v3448 = vunpack.c.l.b16 %v999
      %v3449 = vunpack.c.h.b16 %v999
      %v3450 = vunpack.c.l.b16 %v1000
      %v3451 = vunpack.c.h.b16 %v1000
      %v3452 = vunpack.c.l.b16 %v1001
      %v3453 = vunpack.c.h.b16 %v1001
      %v3454 = vunpack.c.l.b16 %v1002
      %v3455 = vunpack.c.h.b16 %v1002
      %v3456 = vunpack.c.l.b16 %v1003
      %v3457 = vunpack.c.h.b16 %v1003
      %v3458 = vunpack.c.l.b16 %v1004
      %v3459 = vunpack.c.h.b16 %v1004
      %v3460 = vunpack.c.l.b16 %v1005
      %v3461 = vunpack.c.h.b16 %v1005
      %v3462 = vunpack.c.l.b16 %v1006
      %v3463 = vunpack.c.h.b16 %v1006
      %v3464 = vunpack.c.l.b16 %v1007
      %v3465 = vunpack.c.h.b16 %v1007
      %v3466 = vunpack.c.l.b16 %v1008
      %v3467 = vunpack.c.h.b16 %v1008
      %v3468 = vunpack.c.l.b16 %v1009
      %v3469 = vunpack.c.h.b16 %v1009
      %v3470 = vunpack.c.l.b16 %v1010
      %v3471 = vunpack.c.h.b16 %v1010
      %v3472 = vunpack.c.l.b16 %v1011
      %v3473 = vunpack.c.h.b16 %v1011
      %v3474 = vunpack.c.l.b16 %v1012
      %v3475 = vunpack.c.h.b16 %v1012
      %v3476 = vunpack.c.l.b16 %v1013
      %v3477 = vunpack.c.h.b16 %v1013
      %v3478 = vpack.c.b16 %v1948, %v1942
      %v3479 = vpack.c.b16 %v1949, %v1943
      %v3480 = vpack.c.b16 %v1950, %v1944
      %v3481 = vpack.c.b16 %v1951, %v1945
      %v3482 = vpack.c.b16 %v1952, %v1946
      %v3483 = vpack.c.b16 %v1953, %v1947
      %v3484 = vpack.c.b16 %v1960, %v1954
      %v3485 = vpack.c.b16 %v1961, %v1955
      %v3486 = vpack.c.b16 %v1962, %v1956
      %v3487 = vpack.c.b16 %v1963, %v1957
      %v3488 = vpack.c.b16 %v1964, %v1958
      %v3489 = vpack.c.b16 %v1965, %v1959
      %v3490 = vpack.c.b16 %v1972, %v1966
      %v3491 = vpack.c.b16 %v1973, %v1967
      %v3492 = vpack.c.b16 %v1974, %v1968
      %v3493 = vpack.c.b16 %v1975, %v1969
      %v3494 = vpack.c.b16 %v1976, %v1970
      %v3495 = vpack.c.b16 %v1977, %v1971
      %v3496 = vpack.c.b16 %v1984, %v1978
      %v3497 = vpack.c.b16 %v1985, %v1979
      %v3498 = vpack.c.b16 %v1986, %v1980
      %v3499 = vpack.c.b16 %v1987, %v1981
      %v3500 = vpack.c.b16 %v1988, %v1982
      %v3501 = vpack.c.b16 %v1989, %v1983
      %v3502 = vpack.c.b16 %v1996, %v1990
      %v3503 = vpack.c.b16 %v1997, %v1991
      %v3504 = vpack.c.b16 %v1998, %v1992
      %v3505 = vpack.c.b16 %v1999, %v1993
      %v3506 = vpack.c.b16 %v2000, %v1994
      %v3507 = vpack.c.b16 %v2001, %v1995
      %v3508 = vpack.c.b16 %v2008, %v2002
      %v3509 = vpack.c.b16 %v2009, %v2003
      %v3510 = vpack.c.b16 %v2010, %v2004
      %v3511 = vpack.c.b16 %v2011, %v2005
      %v3512 = vpack.c.b16 %v2012, %v2006
      %v3513 = vpack.c.b16 %v2013, %v2007
      %v3514 = vpack.c.b16 %v2020, %v2014
      %v3515 = vpack.c.b16 %v2021, %v2015
      %v3516 = vpack.c.b16 %v2022, %v2016
      %v3517 = vpack.c.b16 %v2023, %v2017
      %v3518 = vpack.c.b16 %v2024, %v2018
      %v3519 = vpack.c.b16 %v2025, %v2019
      %v3520 = vpack.c.b16 %v2032, %v2026
      %v3521 = vpack.c.b16 %v2033, %v2027
      %v3522 = vpack.c.b16 %v2034, %v2028
      %v3523 = vpack.c.b16 %v2035, %v2029
      %v3524 = vpack.c.b16 %v2036, %v2030
      %v3525 = vpack.c.b16 %v2037, %v2031
      %v3526 = vpack.c.b16 %v2044, %v2038
      %v3527 = vpack.c.b16 %v2045, %v2039
      %v3528 = vpack.c.b16 %v2046, %v2040
      %v3529 = vpack.c.b16 %v2047, %v2041
      %v3530 = vpack.c.b16 %v2048, %v2042
      %v3531 = vpack.c.b16 %v2049, %v2043
      %v3532 = vpack.c.b16 %v2056, %v2050
      %v3533 = vpack.c.b16 %v2057, %v2051
      %v3534 = vpack.c.b16 %v2058, %v2052
      %v3535 = vpack.c.b16 %v2059, %v2053
      %v3536 = vpack.c.b16 %v2060, %v2054
      %v3537 = vpack.c.b16 %v2061, %v2055
      %v3538 = vpack.c.b16 %v2068, %v2062
      %v3539 = vpack.c.b16 %v2069, %v2063
      %v3540 = vpack.c.b16 %v2070, %v2064
      %v3541 = vpack.c.b16 %v2071, %v2065
      %v3542 = vpack.c.b16 %v2072, %v2066
      %v3543 = vpack.c.b16 %v2073, %v2067
      %v3544 = vpack.c.b16 %v2080, %v2074
      %v3545 = vpack.c.b16 %v2081, %v2075
      %v3546 = vpack.c.b16 %v2082, %v2076
      %v3547 = vpack.c.b16 %v2083, %v2077
      %v3548 = vpack.c.b16 %v2084, %v2078
      %v3549 = vpack.c.b16 %v2085, %v2079
      %v3550 = vpack.c.b16 %v2092, %v2086
      %v3551 = vpack.c.b16 %v2093, %v2087
      %v3552 = vpack.c.b16 %v2094, %v2088
      %v3553 = vpack.c.b16 %v2095, %v2089
      %v3554 = vpack.c.b16 %v2096, %v2090
      %v3555 = vpack.c.b16 %v2097, %v2091
      %v3556 = vpack.c.b16 %v2104, %v2098
      %v3557 = vpack.c.b16 %v2105, %v2099
      %v3558 = vpack.c.b16 %v2106, %v2100
      %v3559 = vpack.c.b16 %v2107, %v2101
      %v3560 = vpack.c.b16 %v2108, %v2102
      %v3561 = vpack.c.b16 %v2109, %v2103
      %v3562 = vpack.c.b16 %v2116, %v2110
      %v3563 = vpack.c.b16 %v2117, %v2111
      %v3564 = vpack.c.b16 %v2118, %v2112
      %v3565 = vpack.c.b16 %v2119, %v2113
      %v3566 = vpack.c.b16 %v2120, %v2114
      %v3567 = vpack.c.b16 %v2121, %v2115
      %v3568 = vpack.c.b16 %v2128, %v2122
      %v3569 = vpack.c.b16 %v2129, %v2123
      %v3570 = vpack.c.b16 %v2130, %v2124
      %v3571 = vpack.c.b16 %v2131, %v2125
      %v3572 = vpack.c.b16 %v2132, %v2126
      %v3573 = vpack.c.b16 %v2133, %v2127
      %v3574 = vpack.c.b16 %v2140, %v2134
      %v3575 = vpack.c.b16 %v2141, %v2135
      %v3576 = vpack.c.b16 %v2142, %v2136
      %v3577 = vpack.c.b16 %v2143, %v2137
      %v3578 = vpack.c.b16 %v2144, %v2138
      %v3579 = vpack.c.b16 %v2145, %v2139
      %v3580 = vpack.c.b16 %v2152, %v2146
      %v3581 = vpack.c.b16 %v2153, %v2147
      %v3582 = vpack.c.b16 %v2154, %v2148
      %v3583 = vpack.c.b16 %v2155, %v2149
      %v3584 = vpack.c.b16 %v2156, %v2150
      %v3585 = vpack.c.b16 %v2157, %v2151
      %v3586 = vpack.c.b16 %v2164, %v2158
      %v3587 = vpack.c.b16 %v2165, %v2159
      %v3588 = vpack.c.b16 %v2166, %v2160
      %v3589 = vpack.c.b16 %v2167, %v2161
      %v3590 = vpack.c.b16 %v2168, %v2162
      %v3591 = vpack.c.b16 %v2169, %v2163
      %v3592 = vpack.c.b16 %v2176, %v2170
      %v3593 = vpack.c.b16 %v2177, %v2171
      %v3594 = vpack.c.b16 %v2178, %v2172
      %v3595 = vpack.c.b16 %v2179, %v2173
      %v3596 = vpack.c.b16 %v2180, %v2174
      %v3597 = vpack.c.b16 %v2181, %v2175
      %v3598 = vpack.c.b16 %v2188, %v2182
      %v3599 = vpack.c.b16 %v2189, %v2183
      %v3600 = vpack.c.b16 %v2190, %v2184
      %v3601 = vpack.c.b16 %v2191, %v2185
      %v3602 = vpack.c.b16 %v2192, %v2186
      %v3603 = vpack.c.b16 %v2193, %v2187
      %v3604 = vpack.c.b16 %v2200, %v2194
      %v3605 = vpack.c.b16 %v2201, %v2195
      %v3606 = vpack.c.b16 %v2202, %v2196
      %v3607 = vpack.c.b16 %v2203, %v2197
      %v3608 = vpack.c.b16 %v2204, %v2198
      %v3609 = vpack.c.b16 %v2205, %v2199
      %v3610 = vpack.c.b16 %v2212, %v2206
      %v3611 = vpack.c.b16 %v2213, %v2207
      %v3612 = vpack.c.b16 %v2214, %v2208
      %v3613 = vpack.c.b16 %v2215, %v2209
      %v3614 = vpack.c.b16 %v2216, %v2210
      %v3615 = vpack.c.b16 %v2217, %v2211
      %v3616 = vpack.c.b16 %v2224, %v2218
      %v3617 = vpack.c.b16 %v2225, %v2219
      %v3618 = vpack.c.b16 %v2226, %v2220
      %v3619 = vpack.c.b16 %v2227, %v2221
      %v3620 = vpack.c.b16 %v2228, %v2222
      %v3621 = vpack.c.b16 %v2229, %v2223
      %v3622 = vpack.c.b16 %v2236, %v2230
      %v3623 = vpack.c.b16 %v2237, %v2231
      %v3624 = vpack.c.b16 %v2238, %v2232
      %v3625 = vpack.c.b16 %v2239, %v2233
      %v3626 = vpack.c.b16 %v2240, %v2234
      %v3627 = vpack.c.b16 %v2241, %v2235
      %v3628 = vpack.c.b16 %v2248, %v2242
      %v3629 = vpack.c.b16 %v2249, %v2243
      %v3630 = vpack.c.b16 %v2250, %v2244
      %v3631 = vpack.c.b16 %v2251, %v2245
      %v3632 = vpack.c.b16 %v2252, %v2246
      %v3633 = vpack.c.b16 %v2253, %v2247
      %v3634 = vpack.c.b16 %v2260, %v2254
      %v3635 = vpack.c.b16 %v2261, %v2255
      %v3636 = vpack.c.b16 %v2262, %v2256
      %v3637 = vpack.c.b16 %v2263, %v2257
      %v3638 = vpack.c.b16 %v2264, %v2258
      %v3639 = vpack.c.b16 %v2265, %v2259
      %v3640 = vpack.c.b16 %v2272, %v2266
      %v3641 = vpack.c.b16 %v2273, %v2267
      %v3642 = vpack.c.b16 %v2274, %v2268
      %v3643 = vpack.c.b16 %v2275, %v2269
      %v3644 = vpack.c.b16 %v2276, %v2270
      %v3645 = vpack.c.b16 %v2277, %v2271
      %v3646 = vpack.c.b16 %v2284, %v2278
      %v3647 = vpack.c.b16 %v2285, %v2279
      %v3648 = vpack.c.b16 %v2286, %v2280
      %v3649 = vpack.c.b16 %v2287, %v2281
      %v3650 = vpack.c.b16 %v2288, %v2282
      %v3651 = vpack.c.b16 %v2289, %v2283
      %v3652 = vpack.c.b16 %v2296, %v2290
      %v3653 = vpack.c.b16 %v2297, %v2291
      %v3654 = vpack.c.b16 %v2298, %v2292
      %v3655 = vpack.c.b16 %v2299, %v2293
      %v3656 = vpack.c.b16 %v2300, %v2294
      %v3657 = vpack.c.b16 %v2301, %v2295
      %v3658 = vpack.c.b16 %v2308, %v2302
      %v3659 = vpack.c.b16 %v2309, %v2303
      %v3660 = vpack.c.b16 %v2310, %v2304
      %v3661 = vpack.c.b16 %v2311, %v2305
      %v3662 = vpack.c.b16 %v2312, %v2306
      %v3663 = vpack.c.b16 %v2313, %v2307
      %v3664 = vpack.c.b16 %v2320, %v2314
      %v3665 = vpack.c.b16 %v2321, %v2315
      %v3666 = vpack.c.b16 %v2322, %v2316
      %v3667 = vpack.c.b16 %v2323, %v2317
      %v3668 = vpack.c.b16 %v2324, %v2318
      %v3669 = vpack.c.b16 %v2325, %v2319
      %v3670 = vpack.c.b16 %v2332, %v2326
      %v3671 = vpack.c.b16 %v2333, %v2327
      %v3672 = vpack.c.b16 %v2334, %v2328
      %v3673 = vpack.c.b16 %v2335, %v2329
      %v3674 = vpack.c.b16 %v2336, %v2330
      %v3675 = vpack.c.b16 %v2337, %v2331
      %v3676 = vpack.c.b16 %v2344, %v2338
      %v3677 = vpack.c.b16 %v2345, %v2339
      %v3678 = vpack.c.b16 %v2346, %v2340
      %v3679 = vpack.c.b16 %v2347, %v2341
      %v3680 = vpack.c.b16 %v2348, %v2342
      %v3681 = vpack.c.b16 %v2349, %v2343
      %v3682 = vpack.c.b16 %v2356, %v2350
      %v3683 = vpack.c.b16 %v2357, %v2351
      %v3684 = vpack.c.b16 %v2358, %v2352
      %v3685 = vpack.c.b16 %v2359, %v2353
      %v3686 = vpack.c.b16 %v2360, %v2354
      %v3687 = vpack.c.b16 %v2361, %v2355
      %v3688 = vpack.c.b16 %v2368, %v2362
      %v3689 = vpack.c.b16 %v2369, %v2363
      %v3690 = vpack.c.b16 %v2370, %v2364
      %v3691 = vpack.c.b16 %v2371, %v2365
      %v3692 = vpack.c.b16 %v2372, %v2366
      %v3693 = vpack.c.b16 %v2373, %v2367
      %v3694 = vpack.c.b16 %v2380, %v2374
      %v3695 = vpack.c.b16 %v2381, %v2375
      %v3696 = vpack.c.b16 %v2382, %v2376
      %v3697 = vpack.c.b16 %v2383, %v2377
      %v3698 = vpack.c.b16 %v2384, %v2378
      %v3699 = vpack.c.b16 %v2385, %v2379
      %v3700 = vpack.c.b16 %v2392, %v2386
      %v3701 = vpack.c.b16 %v2393, %v2387
      %v3702 = vpack.c.b16 %v2394, %v2388
      %v3703 = vpack.c.b16 %v2395, %v2389
      %v3704 = vpack.c.b16 %v2396, %v2390
      %v3705 = vpack.c.b16 %v2397, %v2391
      %v3706 = vpack.c.b16 %v2404, %v2398
      %v3707 = vpack.c.b16 %v2405, %v2399
      %v3708 = vpack.c.b16 %v2406, %v2400
      %v3709 = vpack.c.b16 %v2407, %v2401
      %v3710 = vpack.c.b16 %v2408, %v2402
      %v3711 = vpack.c.b16 %v2409, %v2403
      %v3712 = vpack.c.b16 %v2416, %v2410
      %v3713 = vpack.c.b16 %v2417, %v2411
      %v3714 = vpack.c.b16 %v2418, %v2412
      %v3715 = vpack.c.b16 %v2419, %v2413
      %v3716 = vpack.c.b16 %v2420, %v2414
      %v3717 = vpack.c.b16 %v2421, %v2415
      %v3718 = vpack.c.b16 %v2428, %v2422
      %v3719 = vpack.c.b16 %v2429, %v2423
      %v3720 = vpack.c.b16 %v2430, %v2424
      %v3721 = vpack.c.b16 %v2431, %v2425
      %v3722 = vpack.c.b16 %v2432, %v2426
      %v3723 = vpack.c.b16 %v2433, %v2427
      %v3724 = vpack.c.b16 %v2440, %v2434
      %v3725 = vpack.c.b16 %v2441, %v2435
      %v3726 = vpack.c.b16 %v2442, %v2436
      %v3727 = vpack.c.b16 %v2443, %v2437
      %v3728 = vpack.c.b16 %v2444, %v2438
      %v3729 = vpack.c.b16 %v2445, %v2439
      %v3730 = vpack.c.b16 %v2452, %v2446
      %v3731 = vpack.c.b16 %v2453, %v2447
      %v3732 = vpack.c.b16 %v2454, %v2448
      %v3733 = vpack.c.b16 %v2455, %v2449
      %v3734 = vpack.c.b16 %v2456, %v2450
      %v3735 = vpack.c.b16 %v2457, %v2451
      %v3736 = vpack.c.b16 %v2464, %v2458
      %v3737 = vpack.c.b16 %v2465, %v2459
      %v3738 = vpack.c.b16 %v2466, %v2460
      %v3739 = vpack.c.b16 %v2467, %v2461
      %v3740 = vpack.c.b16 %v2468, %v2462
      %v3741 = vpack.c.b16 %v2469, %v2463
      %v3742 = vpack.c.b16 %v2476, %v2470
      %v3743 = vpack.c.b16 %v2477, %v2471
      %v3744 = vpack.c.b16 %v2478, %v2472
      %v3745 = vpack.c.b16 %v2479, %v2473
      %v3746 = vpack.c.b16 %v2480, %v2474
      %v3747 = vpack.c.b16 %v2481, %v2475
      %v3748 = vpack.c.b16 %v2488, %v2482
      %v3749 = vpack.c.b16 %v2489, %v2483
      %v3750 = vpack.c.b16 %v2490, %v2484
      %v3751 = vpack.c.b16 %v2491, %v2485
      %v3752 = vpack.c.b16 %v2492, %v2486
      %v3753 = vpack.c.b16 %v2493, %v2487
      %v3754 = vpack.c.b16 %v2500, %v2494
      %v3755 = vpack.c.b16 %v2501, %v2495
      %v3756 = vpack.c.b16 %v2502, %v2496
      %v3757 = vpack.c.b16 %v2503, %v2497
      %v3758 = vpack.c.b16 %v2504, %v2498
      %v3759 = vpack.c.b16 %v2505, %v2499
      %v3760 = vpack.c.b16 %v2512, %v2506
      %v3761 = vpack.c.b16 %v2513, %v2507
      %v3762 = vpack.c.b16 %v2514, %v2508
      %v3763 = vpack.c.b16 %v2515, %v2509
      %v3764 = vpack.c.b16 %v2516, %v2510
      %v3765 = vpack.c.b16 %v2517, %v2511
      %v3766 = vpack.c.b16 %v2524, %v2518
      %v3767 = vpack.c.b16 %v2525, %v2519
      %v3768 = vpack.c.b16 %v2526, %v2520
      %v3769 = vpack.c.b16 %v2527, %v2521
      %v3770 = vpack.c.b16 %v2528, %v2522
      %v3771 = vpack.c.b16 %v2529, %v2523
      %v3772 = vpack.c.b16 %v2536, %v2530
      %v3773 = vpack.c.b16 %v2537, %v2531
      %v3774 = vpack.c.b16 %v2538, %v2532
      %v3775 = vpack.c.b16 %v2539, %v2533
      %v3776 = vpack.c.b16 %v2540, %v2534
      %v3777 = vpack.c.b16 %v2541, %v2535
      %v3778 = vpack.c.b16 %v2548, %v2542
      %v3779 = vpack.c.b16 %v2549, %v2543
      %v3780 = vpack.c.b16 %v2550, %v2544
      %v3781 = vpack.c.b16 %v2551, %v2545
      %v3782 = vpack.c.b16 %v2552, %v2546
      %v3783 = vpack.c.b16 %v2553, %v2547
      %v3784 = vpack.c.b16 %v2560, %v2554
      %v3785 = vpack.c.b16 %v2561, %v2555
      %v3786 = vpack.c.b16 %v2562, %v2556
      %v3787 = vpack.c.b16 %v2563, %v2557
      %v3788 = vpack.c.b16 %v2564, %v2558
      %v3789 = vpack.c.b16 %v2565, %v2559
      %v3790 = vpack.c.b16 %v2572, %v2566
      %v3791 = vpack.c.b16 %v2573, %v2567
      %v3792 = vpack.c.b16 %v2574, %v2568
      %v3793 = vpack.c.b16 %v2575, %v2569
      %v3794 = vpack.c.b16 %v2576, %v2570
      %v3795 = vpack.c.b16 %v2577, %v2571
      %v3796 = vpack.c.b16 %v2584, %v2578
      %v3797 = vpack.c.b16 %v2585, %v2579
      %v3798 = vpack.c.b16 %v2586, %v2580
      %v3799 = vpack.c.b16 %v2587, %v2581
      %v3800 = vpack.c.b16 %v2588, %v2582
      %v3801 = vpack.c.b16 %v2589, %v2583
      %v3802 = vpack.c.b16 %v2596, %v2590
      %v3803 = vpack.c.b16 %v2597, %v2591
      %v3804 = vpack.c.b16 %v2598, %v2592
      %v3805 = vpack.c.b16 %v2599, %v2593
      %v3806 = vpack.c.b16 %v2600, %v2594
      %v3807 = vpack.c.b16 %v2601, %v2595
      %v3808 = vpack.c.b16 %v2608, %v2602
      %v3809 = vpack.c.b16 %v2609, %v2603
      %v3810 = vpack.c.b16 %v2610, %v2604
      %v3811 = vpack.c.b16 %v2611, %v2605
      %v3812 = vpack.c.b16 %v2612, %v2606
      %v3813 = vpack.c.b16 %v2613, %v2607
      %v3814 = vpack.c.b16 %v2620, %v2614
      %v3815 = vpack.c.b16 %v2621, %v2615
      %v3816 = vpack.c.b16 %v2622, %v2616
      %v3817 = vpack.c.b16 %v2623, %v2617
      %v3818 = vpack.c.b16 %v2624, %v2618
      %v3819 = vpack.c.b16 %v2625, %v2619
      %v3820 = vpack.c.b16 %v2632, %v2626
      %v3821 = vpack.c.b16 %v2633, %v2627
      %v3822 = vpack.c.b16 %v2634, %v2628
      %v3823 = vpack.c.b16 %v2635, %v2629
      %v3824 = vpack.c.b16 %v2636, %v2630
      %v3825 = vpack.c.b16 %v2637, %v2631
      %v3826 = vpack.c.b16 %v2644, %v2638
      %v3827 = vpack.c.b16 %v2645, %v2639
      %v3828 = vpack.c.b16 %v2646, %v2640
      %v3829 = vpack.c.b16 %v2647, %v2641
      %v3830 = vpack.c.b16 %v2648, %v2642
      %v3831 = vpack.c.b16 %v2649, %v2643
      %v3832 = vpack.c.b16 %v2656, %v2650
      %v3833 = vpack.c.b16 %v2657, %v2651
      %v3834 = vpack.c.b16 %v2658, %v2652
      %v3835 = vpack.c.b16 %v2659, %v2653
      %v3836 = vpack.c.b16 %v2660, %v2654
      %v3837 = vpack.c.b16 %v2661, %v2655
      %v3838 = vpack.c.b16 %v2668, %v2662
      %v3839 = vpack.c.b16 %v2669, %v2663
      %v3840 = vpack.c.b16 %v2670, %v2664
      %v3841 = vpack.c.b16 %v2671, %v2665
      %v3842 = vpack.c.b16 %v2672, %v2666
      %v3843 = vpack.c.b16 %v2673, %v2667
      %v3844 = vpack.c.b16 %v2680, %v2674
      %v3845 = vpack.c.b16 %v2681, %v2675
      %v3846 = vpack.c.b16 %v2682, %v2676
      %v3847 = vpack.c.b16 %v2683, %v2677
      %v3848 = vpack.c.b16 %v2684, %v2678
      %v3849 = vpack.c.b16 %v2685, %v2679
      %v3850 = vpack.c.b16 %v2692, %v2686
      %v3851 = vpack.c.b16 %v2693, %v2687
      %v3852 = vpack.c.b16 %v2694, %v2688
      %v3853 = vpack.c.b16 %v2695, %v2689
      %v3854 = vpack.c.b16 %v2696, %v2690
      %v3855 = vpack.c.b16 %v2697, %v2691
      %v3856 = vpack.c.b16 %v2704, %v2698
      %v3857 = vpack.c.b16 %v2705, %v2699
      %v3858 = vpack.c.b16 %v2706, %v2700
      %v3859 = vpack.c.b16 %v2707, %v2701
      %v3860 = vpack.c.b16 %v2708, %v2702
      %v3861 = vpack.c.b16 %v2709, %v2703
      %v3862 = vpack.c.b16 %v2716, %v2710
      %v3863 = vpack.c.b16 %v2717, %v2711
      %v3864 = vpack.c.b16 %v2718, %v2712
      %v3865 = vpack.c.b16 %v2719, %v2713
      %v3866 = vpack.c.b16 %v2720, %v2714
      %v3867 = vpack.c.b16 %v2721, %v2715
      %v3868 = vpack.c.b16 %v2728, %v2722
      %v3869 = vpack.c.b16 %v2729, %v2723
      %v3870 = vpack.c.b16 %v2730, %v2724
      %v3871 = vpack.c.b16 %v2731, %v2725
      %v3872 = vpack.c.b16 %v2732, %v2726
      %v3873 = vpack.c.b16 %v2733, %v2727
      %v3874 = vpack.c.b16 %v2740, %v2734
      %v3875 = vpack.c.b16 %v2741, %v2735
      %v3876 = vpack.c.b16 %v2742, %v2736
      %v3877 = vpack.c.b16 %v2743, %v2737
      %v3878 = vpack.c.b16 %v2744, %v2738
      %v3879 = vpack.c.b16 %v2745, %v2739
      %v3880 = vpack.c.b16 %v2752, %v2746
      %v3881 = vpack.c.b16 %v2753, %v2747
      %v3882 = vpack.c.b16 %v2754, %v2748
      %v3883 = vpack.c.b16 %v2755, %v2749
      %v3884 = vpack.c.b16 %v2756, %v2750
      %v3885 = vpack.c.b16 %v2757, %v2751
      %v3886 = vpack.c.b16 %v2764, %v2758
      %v3887 = vpack.c.b16 %v2765, %v2759
      %v3888 = vpack.c.b16 %v2766, %v2760
      %v3889 = vpack.c.b16 %v2767, %v2761
      %v3890 = vpack.c.b16 %v2768, %v2762
      %v3891 = vpack.c.b16 %v2769, %v2763
      %v3892 = vpack.c.b16 %v2776, %v2770
      %v3893 = vpack.c.b16 %v2777, %v2771
      %v3894 = vpack.c.b16 %v2778, %v2772
      %v3895 = vpack.c.b16 %v2779, %v2773
      %v3896 = vpack.c.b16 %v2780, %v2774
      %v3897 = vpack.c.b16 %v2781, %v2775
      %v3898 = vpack.c.b16 %v2788, %v2782
      %v3899 = vpack.c.b16 %v2789, %v2783
      %v3900 = vpack.c.b16 %v2790, %v2784
      %v3901 = vpack.c.b16 %v2791, %v2785
      %v3902 = vpack.c.b16 %v2792, %v2786
      %v3903 = vpack.c.b16 %v2793, %v2787
      %v3904 = vpack.c.b16 %v2800, %v2794
      %v3905 = vpack.c.b16 %v2801, %v2795
      %v3906 = vpack.c.b16 %v2802, %v2796
      %v3907 = vpack.c.b16 %v2803, %v2797
      %v3908 = vpack.c.b16 %v2804, %v2798
      %v3909 = vpack.c.b16 %v2805, %v2799
      %v3910 = vpack.c.b16 %v2812, %v2806
      %v3911 = vpack.c.b16 %v2813, %v2807
      %v3912 = vpack.c.b16 %v2814, %v2808
      %v3913 = vpack.c.b16 %v2815, %v2809
      %v3914 = vpack.c.b16 %v2816, %v2810
      %v3915 = vpack.c.b16 %v2817, %v2811
      %v3916 = vpack.c.b16 %v2824, %v2818
      %v3917 = vpack.c.b16 %v2825, %v2819
      %v3918 = vpack.c.b16 %v2826, %v2820
      %v3919 = vpack.c.b16 %v2827, %v2821
      %v3920 = vpack.c.b16 %v2828, %v2822
      %v3921 = vpack.c.b16 %v2829, %v2823
      %v3922 = vpack.c.b16 %v2836, %v2830
      %v3923 = vpack.c.b16 %v2837, %v2831
      %v3924 = vpack.c.b16 %v2838, %v2832
      %v3925 = vpack.c.b16 %v2839, %v2833
      %v3926 = vpack.c.b16 %v2840, %v2834
      %v3927 = vpack.c.b16 %v2841, %v2835
      %v3928 = vpack.c.b16 %v2848, %v2842
      %v3929 = vpack.c.b16 %v2849, %v2843
      %v3930 = vpack.c.b16 %v2850, %v2844
      %v3931 = vpack.c.b16 %v2851, %v2845
      %v3932 = vpack.c.b16 %v2852, %v2846
      %v3933 = vpack.c.b16 %v2853, %v2847
      %v3934 = vpack.c.b16 %v2860, %v2854
      %v3935 = vpack.c.b16 %v2861, %v2855
      %v3936 = vpack.c.b16 %v2862, %v2856
      %v3937 = vpack.c.b16 %v2863, %v2857
      %v3938 = vpack.c.b16 %v2864, %v2858
      %v3939 = vpack.c.b16 %v2865, %v2859
      %v3940 = vpack.c.b16 %v2872, %v2866
      %v3941 = vpack.c.b16 %v2873, %v2867
      %v3942 = vpack.c.b16 %v2874, %v2868
      %v3943 = vpack.c.b16 %v2875, %v2869
      %v3944 = vpack.c.b16 %v2876, %v2870
      %v3945 = vpack.c.b16 %v2877, %v2871
      %v3946 = vpack.c.b16 %v2884, %v2878
      %v3947 = vpack.c.b16 %v2885, %v2879
      %v3948 = vpack.c.b16 %v2886, %v2880
      %v3949 = vpack.c.b16 %v2887, %v2881
      %v3950 = vpack.c.b16 %v2888, %v2882
      %v3951 = vpack.c.b16 %v2889, %v2883
      %v3952 = vpack.c.b16 %v2896, %v2890
      %v3953 = vpack.c.b16 %v2897, %v2891
      %v3954 = vpack.c.b16 %v2898, %v2892
      %v3955 = vpack.c.b16 %v2899, %v2893
      %v3956 = vpack.c.b16 %v2900, %v2894
      %v3957 = vpack.c.b16 %v2901, %v2895
      %v3958 = vpack.c.b16 %v2908, %v2902
      %v3959 = vpack.c.b16 %v2909, %v2903
      %v3960 = vpack.c.b16 %v2910, %v2904
      %v3961 = vpack.c.b16 %v2911, %v2905
      %v3962 = vpack.c.b16 %v2912, %v2906
      %v3963 = vpack.c.b16 %v2913, %v2907
      %v3964 = vpack.c.b16 %v2920, %v2914
      %v3965 = vpack.c.b16 %v2921, %v2915
      %v3966 = vpack.c.b16 %v2922, %v2916
      %v3967 = vpack.c.b16 %v2923, %v2917
      %v3968 = vpack.c.b16 %v2924, %v2918
      %v3969 = vpack.c.b16 %v2925, %v2919
      %v3970 = vpack.c.b16 %v2932, %v2926
      %v3971 = vpack.c.b16 %v2933, %v2927
      %v3972 = vpack.c.b16 %v2934, %v2928
      %v3973 = vpack.c.b16 %v2935, %v2929
      %v3974 = vpack.c.b16 %v2936, %v2930
      %v3975 = vpack.c.b16 %v2937, %v2931
      %v3976 = vpack.c.b16 %v2944, %v2938
      %v3977 = vpack.c.b16 %v2945, %v2939
      %v3978 = vpack.c.b16 %v2946, %v2940
      %v3979 = vpack.c.b16 %v2947, %v2941
      %v3980 = vpack.c.b16 %v2948, %v2942
      %v3981 = vpack.c.b16 %v2949, %v2943
      %v3982 = vpack.c.b16 %v2956, %v2950
      %v3983 = vpack.c.b16 %v2957, %v2951
      %v3984 = vpack.c.b16 %v2958, %v2952
      %v3985 = vpack.c.b16 %v2959, %v2953
      %v3986 = vpack.c.b16 %v2960, %v2954
      %v3987 = vpack.c.b16 %v2961, %v2955
      %v3988 = vpack.c.b16 %v2968, %v2962
      %v3989 = vpack.c.b16 %v2969, %v2963
      %v3990 = vpack.c.b16 %v2970, %v2964
      %v3991 = vpack.c.b16 %v2971, %v2965
      %v3992 = vpack.c.b16 %v2972, %v2966
      %v3993 = vpack.c.b16 %v2973, %v2967
      %v3994 = vpack.c.b16 %v2980, %v2974
      %v3995 = vpack.c.b16 %v2981, %v2975
      %v3996 = vpack.c.b16 %v2982, %v2976
      %v3997 = vpack.c.b16 %v2983, %v2977
      %v3998 = vpack.c.b16 %v2984, %v2978
      %v3999 = vpack.c.b16 %v2985, %v2979
      %v4000 = vpack.c.b16 %v2992, %v2986
      %v4001 = vpack.c.b16 %v2993, %v2987
      %v4002 = vpack.c.b16 %v2994, %v2988
      %v4003 = vpack.c.b16 %v2995, %v2989
      %v4004 = vpack.c.b16 %v2996, %v2990
      %v4005 = vpack.c.b16 %v2997, %v2991
      %v4006 = vpack.c.b16 %v3004, %v2998
      %v4007 = vpack.c.b16 %v3005, %v2999
      %v4008 = vpack.c.b16 %v3006, %v3000
      %v4009 = vpack.c.b16 %v3007, %v3001
      %v4010 = vpack.c.b16 %v3008, %v3002
      %v4011 = vpack.c.b16 %v3009, %v3003
      %v4012 = vpack.c.b16 %v3016, %v3010
      %v4013 = vpack.c.b16 %v3017, %v3011
      %v4014 = vpack.c.b16 %v3018, %v3012
      %v4015 = vpack.c.b16 %v3019, %v3013
      %v4016 = vpack.c.b16 %v3020, %v3014
      %v4017 = vpack.c.b16 %v3021, %v3015
      %v4018 = vpack.c.b16 %v3028, %v3022
      %v4019 = vpack.c.b16 %v3029, %v3023
      %v4020 = vpack.c.b16 %v3030, %v3024
      %v4021 = vpack.c.b16 %v3031, %v3025
      %v4022 = vpack.c.b16 %v3032, %v3026
      %v4023 = vpack.c.b16 %v3033, %v3027
      %v4024 = vpack.c.b16 %v3040, %v3034
      %v4025 = vpack.c.b16 %v3041, %v3035
      %v4026 = vpack.c.b16 %v3042, %v3036
      %v4027 = vpack.c.b16 %v3043, %v3037
      %v4028 = vpack.c.b16 %v3044, %v3038
      %v4029 = vpack.c.b16 %v3045, %v3039
      %v4030 = vpack.c.b16 %v3052, %v3046
      %v4031 = vpack.c.b16 %v3053, %v3047
      %v4032 = vpack.c.b16 %v3054, %v3048
      %v4033 = vpack.c.b16 %v3055, %v3049
      %v4034 = vpack.c.b16 %v3056, %v3050
      %v4035 = vpack.c.b16 %v3057, %v3051
      %v4036 = vpack.c.b16 %v3064, %v3058
      %v4037 = vpack.c.b16 %v3065, %v3059
      %v4038 = vpack.c.b16 %v3066, %v3060
      %v4039 = vpack.c.b16 %v3067, %v3061
      %v4040 = vpack.c.b16 %v3068, %v3062
      %v4041 = vpack.c.b16 %v3069, %v3063
      %v4042 = vpack.c.b16 %v3076, %v3070
      %v4043 = vpack.c.b16 %v3077, %v3071
      %v4044 = vpack.c.b16 %v3078, %v3072
      %v4045 = vpack.c.b16 %v3079, %v3073
      %v4046 = vpack.c.b16 %v3080, %v3074
      %v4047 = vpack.c.b16 %v3081, %v3075
      %v4048 = vpack.c.b16 %v3088, %v3082
      %v4049 = vpack.c.b16 %v3089, %v3083
      %v4050 = vpack.c.b16 %v3090, %v3084
      %v4051 = vpack.c.b16 %v3091, %v3085
      %v4052 = vpack.c.b16 %v3092, %v3086
      %v4053 = vpack.c.b16 %v3093, %v3087
      %v4054 = vpack.c.b16 %v3100, %v3094
      %v4055 = vpack.c.b16 %v3101, %v3095
      %v4056 = vpack.c.b16 %v3102, %v3096
      %v4057 = vpack.c.b16 %v3103, %v3097
      %v4058 = vpack.c.b16 %v3104, %v3098
      %v4059 = vpack.c.b16 %v3105, %v3099
      %v4060 = vpack.c.b16 %v3112, %v3106
      %v4061 = vpack.c.b16 %v3113, %v3107
      %v4062 = vpack.c.b16 %v3114, %v3108
      %v4063 = vpack.c.b16 %v3115, %v3109
      %v4064 = vpack.c.b16 %v3116, %v3110
      %v4065 = vpack.c.b16 %v3117, %v3111
      %v4066 = vpack.c.b16 %v3124, %v3118
      %v4067 = vpack.c.b16 %v3125, %v3119
      %v4068 = vpack.c.b16 %v3126, %v3120
      %v4069 = vpack.c.b16 %v3127, %v3121
      %v4070 = vpack.c.b16 %v3128, %v3122
      %v4071 = vpack.c.b16 %v3129, %v3123
      %v4072 = vpack.c.b16 %v3136, %v3130
      %v4073 = vpack.c.b16 %v3137, %v3131
      %v4074 = vpack.c.b16 %v3138, %v3132
      %v4075 = vpack.c.b16 %v3139, %v3133
      %v4076 = vpack.c.b16 %v3140, %v3134
      %v4077 = vpack.c.b16 %v3141, %v3135
      %v4078 = vpack.c.b16 %v3148, %v3142
      %v4079 = vpack.c.b16 %v3149, %v3143
      %v4080 = vpack.c.b16 %v3150, %v3144
      %v4081 = vpack.c.b16 %v3151, %v3145
      %v4082 = vpack.c.b16 %v3152, %v3146
      %v4083 = vpack.c.b16 %v3153, %v3147
      %v4084 = vpack.c.b16 %v3160, %v3154
      %v4085 = vpack.c.b16 %v3161, %v3155
      %v4086 = vpack.c.b16 %v3162, %v3156
      %v4087 = vpack.c.b16 %v3163, %v3157
      %v4088 = vpack.c.b16 %v3164, %v3158
      %v4089 = vpack.c.b16 %v3165, %v3159
      %v4090 = vpack.c.b16 %v3172, %v3166
      %v4091 = vpack.c.b16 %v3173, %v3167
      %v4092 = vpack.c.b16 %v3174, %v3168
      %v4093 = vpack.c.b16 %v3175, %v3169
      %v4094 = vpack.c.b16 %v3176, %v3170
      %v4095 = vpack.c.b16 %v3177, %v3171
      %v4096 = vpack.c.b16 %v3184, %v3178
      %v4097 = vpack.c.b16 %v3185, %v3179
      %v4098 = vpack.c.b16 %v3186, %v3180
      %v4099 = vpack.c.b16 %v3187, %v3181
      %v4100 = vpack.c.b16 %v3188, %v3182
      %v4101 = vpack.c.b16 %v3189, %v3183
      %v4102 = vpack.c.b16 %v3196, %v3190
      %v4103 = vpack.c.b16 %v3197, %v3191
      %v4104 = vpack.c.b16 %v3198, %v3192
      %v4105 = vpack.c.b16 %v3199, %v3193
      %v4106 = vpack.c.b16 %v3200, %v3194
      %v4107 = vpack.c.b16 %v3201, %v3195
      %v4108 = vpack.c.b16 %v3208, %v3202
      %v4109 = vpack.c.b16 %v3209, %v3203
      %v4110 = vpack.c.b16 %v3210, %v3204
      %v4111 = vpack.c.b16 %v3211, %v3205
      %v4112 = vpack.c.b16 %v3212, %v3206
      %v4113 = vpack.c.b16 %v3213, %v3207
      %v4114 = vpack.c.b16 %v3220, %v3214
      %v4115 = vpack.c.b16 %v3221, %v3215
      %v4116 = vpack.c.b16 %v3222, %v3216
      %v4117 = vpack.c.b16 %v3223, %v3217
      %v4118 = vpack.c.b16 %v3224, %v3218
      %v4119 = vpack.c.b16 %v3225, %v3219
      %v4120 = vpack.c.b16 %v3232, %v3226
      %v4121 = vpack.c.b16 %v3233, %v3227
      %v4122 = vpack.c.b16 %v3234, %v3228
      %v4123 = vpack.c.b16 %v3235, %v3229
      %v4124 = vpack.c.b16 %v3236, %v3230
      %v4125 = vpack.c.b16 %v3237, %v3231
      %v4126 = vpack.c.b16 %v3244, %v3238
      %v4127 = vpack.c.b16 %v3245, %v3239
      %v4128 = vpack.c.b16 %v3246, %v3240
      %v4129 = vpack.c.b16 %v3247, %v3241
      %v4130 = vpack.c.b16 %v3248, %v3242
      %v4131 = vpack.c.b16 %v3249, %v3243
      %v4132 = vpack.c.b16 %v3256, %v3250
      %v4133 = vpack.c.b16 %v3257, %v3251
      %v4134 = vpack.c.b16 %v3258, %v3252
      %v4135 = vpack.c.b16 %v3259, %v3253
      %v4136 = vpack.c.b16 %v3260, %v3254
      %v4137 = vpack.c.b16 %v3261, %v3255
      %v4138 = vpack.c.b16 %v3268, %v3262
      %v4139 = vpack.c.b16 %v3269, %v3263
      %v4140 = vpack.c.b16 %v3270, %v3264
      %v4141 = vpack.c.b16 %v3271, %v3265
      %v4142 = vpack.c.b16 %v3272, %v3266
      %v4143 = vpack.c.b16 %v3273, %v3267
      %v4144 = vpack.c.b16 %v3280, %v3274
      %v4145 = vpack.c.b16 %v3281, %v3275
      %v4146 = vpack.c.b16 %v3282, %v3276
      %v4147 = vpack.c.b16 %v3283, %v3277
      %v4148 = vpack.c.b16 %v3284, %v3278
      %v4149 = vpack.c.b16 %v3285, %v3279
      %v4150 = vpack.c.b16 %v3292, %v3286
      %v4151 = vpack.c.b16 %v3293, %v3287
      %v4152 = vpack.c.b16 %v3294, %v3288
      %v4153 = vpack.c.b16 %v3295, %v3289
      %v4154 = vpack.c.b16 %v3296, %v3290
      %v4155 = vpack.c.b16 %v3297, %v3291
      %v4156 = vpack.c.b16 %v3304, %v3298
      %v4157 = vpack.c.b16 %v3305, %v3299
      %v4158 = vpack.c.b16 %v3306, %v3300
      %v4159 = vpack.c.b16 %v3307, %v3301
      %v4160 = vpack.c.b16 %v3308, %v3302
      %v4161 = vpack.c.b16 %v3309, %v3303
      %v4162 = vpack.c.b16 %v3316, %v3310
      %v4163 = vpack.c.b16 %v3317, %v3311
      %v4164 = vpack.c.b16 %v3318, %v3312
      %v4165 = vpack.c.b16 %v3319, %v3313
      %v4166 = vpack.c.b16 %v3320, %v3314
      %v4167 = vpack.c.b16 %v3321, %v3315
      %v4168 = vpack.c.b16 %v3328, %v3322
      %v4169 = vpack.c.b16 %v3329, %v3323
      %v4170 = vpack.c.b16 %v3330, %v3324
      %v4171 = vpack.c.b16 %v3331, %v3325
      %v4172 = vpack.c.b16 %v3332, %v3326
      %v4173 = vpack.c.b16 %v3333, %v3327
      %v4174 = vpack.c.b16 %v3340, %v3334
      %v4175 = vpack.c.b16 %v3341, %v3335
      %v4176 = vpack.c.b16 %v3342, %v3336
      %v4177 = vpack.c.b16 %v3343, %v3337
      %v4178 = vpack.c.b16 %v3344, %v3338
      %v4179 = vpack.c.b16 %v3345, %v3339
      %v4180 = vpack.c.b16 %v3352, %v3346
      %v4181 = vpack.c.b16 %v3353, %v3347
      %v4182 = vpack.c.b16 %v3354, %v3348
      %v4183 = vpack.c.b16 %v3355, %v3349
      %v4184 = vpack.c.b16 %v3356, %v3350
      %v4185 = vpack.c.b16 %v3357, %v3351
      %v4186 = vpack.c.b16 %v3364, %v3358
      %v4187 = vpack.c.b16 %v3365, %v3359
      %v4188 = vpack.c.b16 %v3366, %v3360
      %v4189 = vpack.c.b16 %v3367, %v3361
      %v4190 = vpack.c.b16 %v3368, %v3362
      %v4191 = vpack.c.b16 %v3369, %v3363
      %v4192 = vpack.c.b16 %v3376, %v3370
      %v4193 = vpack.c.b16 %v3377, %v3371
      %v4194 = vpack.c.b16 %v3378, %v3372
      %v4195 = vpack.c.b16 %v3379, %v3373
      %v4196 = vpack.c.b16 %v3380, %v3374
      %v4197 = vpack.c.b16 %v3381, %v3375
      %v4198 = vpack.c.b16 %v3388, %v3382
      %v4199 = vpack.c.b16 %v3389, %v3383
      %v4200 = vpack.c.b16 %v3390, %v3384
      %v4201 = vpack.c.b16 %v3391, %v3385
      %v4202 = vpack.c.b16 %v3392, %v3386
      %v4203 = vpack.c.b16 %v3393, %v3387
      %v4204 = vpack.c.b16 %v3400, %v3394
      %v4205 = vpack.c.b16 %v3401, %v3395
      %v4206 = vpack.c.b16 %v3402, %v3396
      %v4207 = vpack.c.b16 %v3403, %v3397
      %v4208 = vpack.c.b16 %v3404, %v3398
      %v4209 = vpack.c.b16 %v3405, %v3399
      %v4210 = vpack.c.b16 %v3412, %v3406
      %v4211 = vpack.c.b16 %v3413, %v3407
      %v4212 = vpack.c.b16 %v3414, %v3408
      %v4213 = vpack.c.b16 %v3415, %v3409
      %v4214 = vpack.c.b16 %v3416, %v3410
      %v4215 = vpack.c.b16 %v3417, %v3411
      %v4216 = vpack.c.b16 %v3424, %v3418
      %v4217 = vpack.c.b16 %v3425, %v3419
      %v4218 = vpack.c.b16 %v3426, %v3420
      %v4219 = vpack.c.b16 %v3427, %v3421
      %v4220 = vpack.c.b16 %v3428, %v3422
      %v4221 = vpack.c.b16 %v3429, %v3423
      %v4222 = vpack.c.b16 %v3436, %v3430
      %v4223 = vpack.c.b16 %v3437, %v3431
      %v4224 = vpack.c.b16 %v3438, %v3432
      %v4225 = vpack.c.b16 %v3439, %v3433
      %v4226 = vpack.c.b16 %v3440, %v3434
      %v4227 = vpack.c.b16 %v3441, %v3435
      %v4228 = vpack.c.b16 %v3448, %v3442
      %v4229 = vpack.c.b16 %v3449, %v3443
      %v4230 = vpack.c.b16 %v3450, %v3444
      %v4231 = vpack.c.b16 %v3451, %v3445
      %v4232 = vpack.c.b16 %v3452, %v3446
      %v4233 = vpack.c.b16 %v3453, %v3447
      %v4234 = vpack.c.b16 %v3460, %v3454
      %v4235 = vpack.c.b16 %v3461, %v3455
      %v4236 = vpack.c.b16 %v3462, %v3456
      %v4237 = vpack.c.b16 %v3463, %v3457
      %v4238 = vpack.c.b16 %v3464, %v3458
      %v4239 = vpack.c.b16 %v3465, %v3459
      %v4240 = vpack.c.b16 %v3472, %v3466
      %v4241 = vpack.c.b16 %v3473, %v3467
      %v4242 = vpack.c.b16 %v3474, %v3468
      %v4243 = vpack.c.b16 %v3475, %v3469
      %v4244 = vpack.c.b16 %v3476, %v3470
      %v4245 = vpack.c.b16 %v3477, %v3471
      %5014 = vmatprep.subr.bf16.mxu0 %v3479
      %5015 = vmatpush1.bf16.msra.mxu0 %v3478
      %5016 = vmatprep.subr.bf16.mxu0 %v3485
      %5017 = vmatpush1.bf16.msra.mxu0 %v3484
      %5018 = vmatprep.subr.bf16.mxu0 %v3491
      %5019 = vmatpush1.bf16.msra.mxu0 %v3490
      %5020 = vmatprep.subr.bf16.mxu0 %v3497
      %5021 = vmatpush1.bf16.msra.mxu0 %v3496
      %5022 = vmatprep.subr.bf16.mxu0 %v3503
      %5023 = vmatpush1.bf16.msra.mxu0 %v3502
      %5024 = vmatprep.subr.bf16.mxu0 %v3509
      %5025 = vmatpush1.bf16.msra.mxu0 %v3508
      %5026 = vmatprep.subr.bf16.mxu0 %v3515
      %5027 = vmatpush1.bf16.msra.mxu0 %v3514
      %5028 = vmatprep.subr.bf16.mxu0 %v3521
      %5029 = vmatpush1.bf16.msra.mxu0 %v3520
      %5030 = vmatprep.subr.bf16.mxu0 %v3527
      %5031 = vmatpush1.bf16.msra.mxu0 %v3526
      %5032 = vmatprep.subr.bf16.mxu0 %v3533
      %5033 = vmatpush1.bf16.msra.mxu0 %v3532
      %5034 = vmatprep.subr.bf16.mxu0 %v3539
      %5035 = vmatpush1.bf16.msra.mxu0 %v3538
      %5036 = vmatprep.subr.bf16.mxu0 %v3545
      %5037 = vmatpush1.bf16.msra.mxu0 %v3544
      %5038 = vmatprep.subr.bf16.mxu0 %v3551
      %5039 = vmatpush1.bf16.msra.mxu0 %v3550
      %5040 = vmatprep.subr.bf16.mxu0 %v3557
      %5041 = vmatpush1.bf16.msra.mxu0 %v3556
      %5042 = vmatprep.subr.bf16.mxu0 %v3563
      %5043 = vmatpush1.bf16.msra.mxu0 %v3562
      %5044 = vmatprep.subr.bf16.mxu0 %v3569
      %5045 = vmatpush1.bf16.msra.mxu0 %v3568
      %5046 = vmatprep.mubr.bf16.mxu0 %v1111
      %5047 = vmatmul.mubr.bf16.gmra.mrb[0].mxu0 %v1110
      %v5048 = vpop.f32.mrb[0].mxu0
      %v5049 = vadd.f32 0.0, %v5048
      %v5050 = vpop.f32.mrb[0].mxu0
      %v5051 = vadd.f32 0.0, %v5050
      %v5052 = vpop.f32.mrb[0].mxu0
      %v5053 = vadd.f32 0.0, %v5052
      %v5054 = vpop.f32.mrb[0].mxu0
      %v5055 = vadd.f32 0.0, %v5054
      %5056 = vmatprep.mubr.bf16.mxu0 %v1127
      %5057 = vmatmul.mubr.bf16.gmra.mrb[0].mxu0 %v1126
      %v5058 = vpop.f32.mrb[0].mxu0
      %v5059 = vadd.f32 0.0, %v5058
      %v5060 = vpop.f32.mrb[0].mxu0
      %v5061 = vadd.f32 0.0, %v5060
      %v5062 = vpop.f32.mrb[0].mxu0
      %v5063 = vadd.f32 0.0, %v5062
      %v5064 = vpop.f32.mrb[0].mxu0
      %v5065 = vadd.f32 0.0, %v5064
      %5066 = vdwg.mxu0
      %5067 = vmatprep.subr.bf16.mxu0 %v3575
      %5068 = vmatpush1.bf16.msra.mxu0 %v3574
      %5069 = vmatprep.subr.bf16.mxu0 %v3581
      %5070 = vmatpush1.bf16.msra.mxu0 %v3580
      %5071 = vmatprep.subr.bf16.mxu0 %v3587
      %5072 = vmatpush1.bf16.msra.mxu0 %v3586
      %5073 = vmatprep.subr.bf16.mxu0 %v3593
      %5074 = vmatpush1.bf16.msra.mxu0 %v3592
      %5075 = vmatprep.subr.bf16.mxu0 %v3599
      %5076 = vmatpush1.bf16.msra.mxu0 %v3598
      %5077 = vmatprep.subr.bf16.mxu0 %v3605
      %5078 = vmatpush1.bf16.msra.mxu0 %v3604
      %5079 = vmatprep.subr.bf16.mxu0 %v3611
      %5080 = vmatpush1.bf16.msra.mxu0 %v3610
      %5081 = vmatprep.subr.bf16.mxu0 %v3617
      %5082 = vmatpush1.bf16.msra.mxu0 %v3616
      %5083 = vmatprep.subr.bf16.mxu0 %v3623
      %5084 = vmatpush1.bf16.msra.mxu0 %v3622
      %5085 = vmatprep.subr.bf16.mxu0 %v3629
      %5086 = vmatpush1.bf16.msra.mxu0 %v3628
      %5087 = vmatprep.subr.bf16.mxu0 %v3635
      %5088 = vmatpush1.bf16.msra.mxu0 %v3634
      %5089 = vmatprep.subr.bf16.mxu0 %v3641
      %5090 = vmatpush1.bf16.msra.mxu0 %v3640
      %5091 = vmatprep.subr.bf16.mxu0 %v3647
      %5092 = vmatpush1.bf16.msra.mxu0 %v3646
      %5093 = vmatprep.subr.bf16.mxu0 %v3653
      %5094 = vmatpush1.bf16.msra.mxu0 %v3652
      %5095 = vmatprep.subr.bf16.mxu0 %v3659
      %5096 = vmatpush1.bf16.msra.mxu0 %v3658
      %5097 = vmatprep.subr.bf16.mxu0 %v3665
      %5098 = vmatpush1.bf16.msra.mxu0 %v3664
      %5099 = vmatprep.mubr.bf16.mxu0 %v1113
      %5100 = vmatmul.mubr.bf16.gmra.mrb[0].mxu0 %v1112
      %v5101 = vpop.f32.mrb[0].mxu0
      %v5102 = vadd.f32 %v5049, %v5101
      %v5103 = vpop.f32.mrb[0].mxu0
      %v5104 = vadd.f32 %v5051, %v5103
      %v5105 = vpop.f32.mrb[0].mxu0
      %v5106 = vadd.f32 %v5053, %v5105
      %v5107 = vpop.f32.mrb[0].mxu0
      %v5108 = vadd.f32 %v5055, %v5107
      %5109 = vmatprep.mubr.bf16.mxu0 %v1129
      %5110 = vmatmul.mubr.bf16.gmra.mrb[0].mxu0 %v1128
      %v5111 = vpop.f32.mrb[0].mxu0
      %v5112 = vadd.f32 %v5059, %v5111
      %v5113 = vpop.f32.mrb[0].mxu0
      %v5114 = vadd.f32 %v5061, %v5113
      %v5115 = vpop.f32.mrb[0].mxu0
      %v5116 = vadd.f32 %v5063, %v5115
      %v5117 = vpop.f32.mrb[0].mxu0
      %v5118 = vadd.f32 %v5065, %v5117
      %5119 = vdwg.mxu0
      %5120 = vmatprep.subr.bf16.mxu0 %v3671
      %5121 = vmatpush1.bf16.msra.mxu0 %v3670
      %5122 = vmatprep.subr.bf16.mxu0 %v3677
      %5123 = vmatpush1.bf16.msra.mxu0 %v3676
      %5124 = vmatprep.subr.bf16.mxu0 %v3683
      %5125 = vmatpush1.bf16.msra.mxu0 %v3682
      %5126 = vmatprep.subr.bf16.mxu0 %v3689
      %5127 = vmatpush1.bf16.msra.mxu0 %v3688
      %5128 = vmatprep.subr.bf16.mxu0 %v3695
      %5129 = vmatpush1.bf16.msra.mxu0 %v3694
      %5130 = vmatprep.subr.bf16.mxu0 %v3701
      %5131 = vmatpush1.bf16.msra.mxu0 %v3700
      %5132 = vmatprep.subr.bf16.mxu0 %v3707
      %5133 = vmatpush1.bf16.msra.mxu0 %v3706
      %5134 = vmatprep.subr.bf16.mxu0 %v3713
      %5135 = vmatpush1.bf16.msra.mxu0 %v3712
      %5136 = vmatprep.subr.bf16.mxu0 %v3719
      %5137 = vmatpush1.bf16.msra.mxu0 %v3718
      %5138 = vmatprep.subr.bf16.mxu0 %v3725
      %5139 = vmatpush1.bf16.msra.mxu0 %v3724
      %5140 = vmatprep.subr.bf16.mxu0 %v3731
      %5141 = vmatpush1.bf16.msra.mxu0 %v3730
      %5142 = vmatprep.subr.bf16.mxu0 %v3737
      %5143 = vmatpush1.bf16.msra.mxu0 %v3736
      %5144 = vmatprep.subr.bf16.mxu0 %v3743
      %5145 = vmatpush1.bf16.msra.mxu0 %v3742
      %5146 = vmatprep.subr.bf16.mxu0 %v3749
      %5147 = vmatpush1.bf16.msra.mxu0 %v3748
      %5148 = vmatprep.subr.bf16.mxu0 %v3755
      %5149 = vmatpush1.bf16.msra.mxu0 %v3754
      %5150 = vmatprep.subr.bf16.mxu0 %v3761
      %5151 = vmatpush1.bf16.msra.mxu0 %v3760
      %5152 = vmatprep.mubr.bf16.mxu0 %v1115
      %5153 = vmatmul.mubr.bf16.gmra.mrb[0].mxu0 %v1114
      %v5154 = vpop.f32.mrb[0].mxu0
      %v5155 = vadd.f32 %v5102, %v5154
      %v5156 = vpop.f32.mrb[0].mxu0
      %v5157 = vadd.f32 %v5104, %v5156
      %v5158 = vpop.f32.mrb[0].mxu0
      %v5159 = vadd.f32 %v5106, %v5158
      %v5160 = vpop.f32.mrb[0].mxu0
      %v5161 = vadd.f32 %v5108, %v5160
      %5162 = vmatprep.mubr.bf16.mxu0 %v1131
      %5163 = vmatmul.mubr.bf16.gmra.mrb[0].mxu0 %v1130
      %v5164 = vpop.f32.mrb[0].mxu0
      %v5165 = vadd.f32 %v5112, %v5164
      %v5166 = vpop.f32.mrb[0].mxu0
      %v5167 = vadd.f32 %v5114, %v5166
      %v5168 = vpop.f32.mrb[0].mxu0
      %v5169 = vadd.f32 %v5116, %v5168
      %v5170 = vpop.f32.mrb[0].mxu0
      %v5171 = vadd.f32 %v5118, %v5170
      %5172 = vdwg.mxu0
      %5173 = vmatprep.subr.bf16.mxu0 %v3767
      %5174 = vmatpush1.bf16.msra.mxu0 %v3766
      %5175 = vmatprep.subr.bf16.mxu0 %v3773
      %5176 = vmatpush1.bf16.msra.mxu0 %v3772
      %5177 = vmatprep.subr.bf16.mxu0 %v3779
      %5178 = vmatpush1.bf16.msra.mxu0 %v3778
      %5179 = vmatprep.subr.bf16.mxu0 %v3785
      %5180 = vmatpush1.bf16.msra.mxu0 %v3784
      %5181 = vmatprep.subr.bf16.mxu0 %v3791
      %5182 = vmatpush1.bf16.msra.mxu0 %v3790
      %5183 = vmatprep.subr.bf16.mxu0 %v3797
      %5184 = vmatpush1.bf16.msra.mxu0 %v3796
      %5185 = vmatprep.subr.bf16.mxu0 %v3803
      %5186 = vmatpush1.bf16.msra.mxu0 %v3802
      %5187 = vmatprep.subr.bf16.mxu0 %v3809
      %5188 = vmatpush1.bf16.msra.mxu0 %v3808
      %5189 = vmatprep.subr.bf16.mxu0 %v3815
      %5190 = vmatpush1.bf16.msra.mxu0 %v3814
      %5191 = vmatprep.subr.bf16.mxu0 %v3821
      %5192 = vmatpush1.bf16.msra.mxu0 %v3820
      %5193 = vmatprep.subr.bf16.mxu0 %v3827
      %5194 = vmatpush1.bf16.msra.mxu0 %v3826
      %5195 = vmatprep.subr.bf16.mxu0 %v3833
      %5196 = vmatpush1.bf16.msra.mxu0 %v3832
      %5197 = vmatprep.subr.bf16.mxu0 %v3839
      %5198 = vmatpush1.bf16.msra.mxu0 %v3838
      %5199 = vmatprep.subr.bf16.mxu0 %v3845
      %5200 = vmatpush1.bf16.msra.mxu0 %v3844
      %5201 = vmatprep.subr.bf16.mxu0 %v3851
      %5202 = vmatpush1.bf16.msra.mxu0 %v3850
      %5203 = vmatprep.subr.bf16.mxu0 %v3857
      %5204 = vmatpush1.bf16.msra.mxu0 %v3856
      %5205 = vmatprep.mubr.bf16.mxu0 %v1117
      %5206 = vmatmul.mubr.bf16.gmra.mrb[0].mxu0 %v1116
      %v5207 = vpop.f32.mrb[0].mxu0
      %v5208 = vadd.f32 %v5155, %v5207
      %v5209 = vpop.f32.mrb[0].mxu0
      %v5210 = vadd.f32 %v5157, %v5209
      %v5211 = vpop.f32.mrb[0].mxu0
      %v5212 = vadd.f32 %v5159, %v5211
      %v5213 = vpop.f32.mrb[0].mxu0
      %v5214 = vadd.f32 %v5161, %v5213
      %5215 = vmatprep.mubr.bf16.mxu0 %v1133
      %5216 = vmatmul.mubr.bf16.gmra.mrb[0].mxu0 %v1132
      %v5217 = vpop.f32.mrb[0].mxu0
      %v5218 = vadd.f32 %v5165, %v5217
      %v5219 = vpop.f32.mrb[0].mxu0
      %v5220 = vadd.f32 %v5167, %v5219
      %v5221 = vpop.f32.mrb[0].mxu0
      %v5222 = vadd.f32 %v5169, %v5221
      %v5223 = vpop.f32.mrb[0].mxu0
      %v5224 = vadd.f32 %v5171, %v5223
      %5225 = vdwg.mxu0
      %5226 = vmatprep.subr.bf16.mxu0 %v3863
      %5227 = vmatpush1.bf16.msra.mxu0 %v3862
      %5228 = vmatprep.subr.bf16.mxu0 %v3869
      %5229 = vmatpush1.bf16.msra.mxu0 %v3868
      %5230 = vmatprep.subr.bf16.mxu0 %v3875
      %5231 = vmatpush1.bf16.msra.mxu0 %v3874
      %5232 = vmatprep.subr.bf16.mxu0 %v3881
      %5233 = vmatpush1.bf16.msra.mxu0 %v3880
      %5234 = vmatprep.subr.bf16.mxu0 %v3887
      %5235 = vmatpush1.bf16.msra.mxu0 %v3886
      %5236 = vmatprep.subr.bf16.mxu0 %v3893
      %5237 = vmatpush1.bf16.msra.mxu0 %v3892
      %5238 = vmatprep.subr.bf16.mxu0 %v3899
      %5239 = vmatpush1.bf16.msra.mxu0 %v3898
      %5240 = vmatprep.subr.bf16.mxu0 %v3905
      %5241 = vmatpush1.bf16.msra.mxu0 %v3904
      %5242 = vmatprep.subr.bf16.mxu0 %v3911
      %5243 = vmatpush1.bf16.msra.mxu0 %v3910
      %5244 = vmatprep.subr.bf16.mxu0 %v3917
      %5245 = vmatpush1.bf16.msra.mxu0 %v3916
      %5246 = vmatprep.subr.bf16.mxu0 %v3923
      %5247 = vmatpush1.bf16.msra.mxu0 %v3922
      %5248 = vmatprep.subr.bf16.mxu0 %v3929
      %5249 = vmatpush1.bf16.msra.mxu0 %v3928
      %5250 = vmatprep.subr.bf16.mxu0 %v3935
      %5251 = vmatpush1.bf16.msra.mxu0 %v3934
      %5252 = vmatprep.subr.bf16.mxu0 %v3941
      %5253 = vmatpush1.bf16.msra.mxu0 %v3940
      %5254 = vmatprep.subr.bf16.mxu0 %v3947
      %5255 = vmatpush1.bf16.msra.mxu0 %v3946
      %5256 = vmatprep.subr.bf16.mxu0 %v3953
      %5257 = vmatpush1.bf16.msra.mxu0 %v3952
      %5258 = vmatprep.mubr.bf16.mxu0 %v1119
      %5259 = vmatmul.mubr.bf16.gmra.mrb[0].mxu0 %v1118
      %v5260 = vpop.f32.mrb[0].mxu0
      %v5261 = vadd.f32 %v5208, %v5260
      %v5262 = vpop.f32.mrb[0].mxu0
      %v5263 = vadd.f32 %v5210, %v5262
      %v5264 = vpop.f32.mrb[0].mxu0
      %v5265 = vadd.f32 %v5212, %v5264
      %v5266 = vpop.f32.mrb[0].mxu0
      %v5267 = vadd.f32 %v5214, %v5266
      %5268 = vmatprep.mubr.bf16.mxu0 %v1135
      %5269 = vmatmul.mubr.bf16.gmra.mrb[0].mxu0 %v1134
      %v5270 = vpop.f32.mrb[0].mxu0
      %v5271 = vadd.f32 %v5218, %v5270
      %v5272 = vpop.f32.mrb[0].mxu0
      %v5273 = vadd.f32 %v5220, %v5272
      %v5274 = vpop.f32.mrb[0].mxu0
      %v5275 = vadd.f32 %v5222, %v5274
      %v5276 = vpop.f32.mrb[0].mxu0
      %v5277 = vadd.f32 %v5224, %v5276
      %5278 = vdwg.mxu0
      %5279 = vmatprep.subr.bf16.mxu0 %v3959
      %5280 = vmatpush1.bf16.msra.mxu0 %v3958
      %5281 = vmatprep.subr.bf16.mxu0 %v3965
      %5282 = vmatpush1.bf16.msra.mxu0 %v3964
      %5283 = vmatprep.subr.bf16.mxu0 %v3971
      %5284 = vmatpush1.bf16.msra.mxu0 %v3970
      %5285 = vmatprep.subr.bf16.mxu0 %v3977
      %5286 = vmatpush1.bf16.msra.mxu0 %v3976
      %5287 = vmatprep.subr.bf16.mxu0 %v3983
      %5288 = vmatpush1.bf16.msra.mxu0 %v3982
      %5289 = vmatprep.subr.bf16.mxu0 %v3989
      %5290 = vmatpush1.bf16.msra.mxu0 %v3988
      %5291 = vmatprep.subr.bf16.mxu0 %v3995
      %5292 = vmatpush1.bf16.msra.mxu0 %v3994
      %5293 = vmatprep.subr.bf16.mxu0 %v4001
      %5294 = vmatpush1.bf16.msra.mxu0 %v4000
      %5295 = vmatprep.subr.bf16.mxu0 %v4007
      %5296 = vmatpush1.bf16.msra.mxu0 %v4006
      %5297 = vmatprep.subr.bf16.mxu0 %v4013
      %5298 = vmatpush1.bf16.msra.mxu0 %v4012
      %5299 = vmatprep.subr.bf16.mxu0 %v4019
      %5300 = vmatpush1.bf16.msra.mxu0 %v4018
      %5301 = vmatprep.subr.bf16.mxu0 %v4025
      %5302 = vmatpush1.bf16.msra.mxu0 %v4024
      %5303 = vmatprep.subr.bf16.mxu0 %v4031
      %5304 = vmatpush1.bf16.msra.mxu0 %v4030
      %5305 = vmatprep.subr.bf16.mxu0 %v4037
      %5306 = vmatpush1.bf16.msra.mxu0 %v4036
      %5307 = vmatprep.subr.bf16.mxu0 %v4043
      %5308 = vmatpush1.bf16.msra.mxu0 %v4042
      %5309 = vmatprep.subr.bf16.mxu0 %v4049
      %5310 = vmatpush1.bf16.msra.mxu0 %v4048
      %5311 = vmatprep.mubr.bf16.mxu0 %v1121
      %5312 = vmatmul.mubr.bf16.gmra.mrb[0].mxu0 %v1120
      %v5313 = vpop.f32.mrb[0].mxu0
      %v5314 = vadd.f32 %v5261, %v5313
      %v5315 = vpop.f32.mrb[0].mxu0
      %v5316 = vadd.f32 %v5263, %v5315
      %v5317 = vpop.f32.mrb[0].mxu0
      %v5318 = vadd.f32 %v5265, %v5317
      %v5319 = vpop.f32.mrb[0].mxu0
      %v5320 = vadd.f32 %v5267, %v5319
      %5321 = vmatprep.mubr.bf16.mxu0 %v1137
      %5322 = vmatmul.mubr.bf16.gmra.mrb[0].mxu0 %v1136
      %v5323 = vpop.f32.mrb[0].mxu0
      %v5324 = vadd.f32 %v5271, %v5323
      %v5325 = vpop.f32.mrb[0].mxu0
      %v5326 = vadd.f32 %v5273, %v5325
      %v5327 = vpop.f32.mrb[0].mxu0
      %v5328 = vadd.f32 %v5275, %v5327
      %v5329 = vpop.f32.mrb[0].mxu0
      %v5330 = vadd.f32 %v5277, %v5329
      %5331 = vdwg.mxu0
      %5332 = vmatprep.subr.bf16.mxu0 %v4055
      %5333 = vmatpush1.bf16.msra.mxu0 %v4054
      %5334 = vmatprep.subr.bf16.mxu0 %v4061
      %5335 = vmatpush1.bf16.msra.mxu0 %v4060
      %5336 = vmatprep.subr.bf16.mxu0 %v4067
      %5337 = vmatpush1.bf16.msra.mxu0 %v4066
      %5338 = vmatprep.subr.bf16.mxu0 %v4073
      %5339 = vmatpush1.bf16.msra.mxu0 %v4072
      %5340 = vmatprep.subr.bf16.mxu0 %v4079
      %5341 = vmatpush1.bf16.msra.mxu0 %v4078
      %5342 = vmatprep.subr.bf16.mxu0 %v4085
      %5343 = vmatpush1.bf16.msra.mxu0 %v4084
      %5344 = vmatprep.subr.bf16.mxu0 %v4091
      %5345 = vmatpush1.bf16.msra.mxu0 %v4090
      %5346 = vmatprep.subr.bf16.mxu0 %v4097
      %5347 = vmatpush1.bf16.msra.mxu0 %v4096
      %5348 = vmatprep.subr.bf16.mxu0 %v4103
      %5349 = vmatpush1.bf16.msra.mxu0 %v4102
      %5350 = vmatprep.subr.bf16.mxu0 %v4109
      %5351 = vmatpush1.bf16.msra.mxu0 %v4108
      %5352 = vmatprep.subr.bf16.mxu0 %v4115
      %5353 = vmatpush1.bf16.msra.mxu0 %v4114
      %5354 = vmatprep.subr.bf16.mxu0 %v4121
      %5355 = vmatpush1.bf16.msra.mxu0 %v4120
      %5356 = vmatprep.subr.bf16.mxu0 %v4127
      %5357 = vmatpush1.bf16.msra.mxu0 %v4126
      %5358 = vmatprep.subr.bf16.mxu0 %v4133
      %5359 = vmatpush1.bf16.msra.mxu0 %v4132
      %5360 = vmatprep.subr.bf16.mxu0 %v4139
      %5361 = vmatpush1.bf16.msra.mxu0 %v4138
      %5362 = vmatprep.subr.bf16.mxu0 %v4145
      %5363 = vmatpush1.bf16.msra.mxu0 %v4144
      %5364 = vmatprep.mubr.bf16.mxu0 %v1123
      %5365 = vmatmul.mubr.bf16.gmra.mrb[0].mxu0 %v1122
      %v5366 = vpop.f32.mrb[0].mxu0
      %v5367 = vadd.f32 %v5314, %v5366
      %v5368 = vpop.f32.mrb[0].mxu0
      %v5369 = vadd.f32 %v5316, %v5368
      %v5370 = vpop.f32.mrb[0].mxu0
      %v5371 = vadd.f32 %v5318, %v5370
      %v5372 = vpop.f32.mrb[0].mxu0
      %v5373 = vadd.f32 %v5320, %v5372
      %5374 = vmatprep.mubr.bf16.mxu0 %v1139
      %5375 = vmatmul.mubr.bf16.gmra.mrb[0].mxu0 %v1138
      %v5376 = vpop.f32.mrb[0].mxu0
      %v5377 = vadd.f32 %v5324, %v5376
      %v5378 = vpop.f32.mrb[0].mxu0
      %v5379 = vadd.f32 %v5326, %v5378
      %v5380 = vpop.f32.mrb[0].mxu0
      %v5381 = vadd.f32 %v5328, %v5380
      %v5382 = vpop.f32.mrb[0].mxu0
      %v5383 = vadd.f32 %v5330, %v5382
      %5384 = vdwg.mxu0
      %5385 = vmatprep.subr.bf16.mxu0 %v4151
      %5386 = vmatpush1.bf16.msra.mxu0 %v4150
      %5387 = vmatprep.subr.bf16.mxu0 %v4157
      %5388 = vmatpush1.bf16.msra.mxu0 %v4156
      %5389 = vmatprep.subr.bf16.mxu0 %v4163
      %5390 = vmatpush1.bf16.msra.mxu0 %v4162
      %5391 = vmatprep.subr.bf16.mxu0 %v4169
      %5392 = vmatpush1.bf16.msra.mxu0 %v4168
      %5393 = vmatprep.subr.bf16.mxu0 %v4175
      %5394 = vmatpush1.bf16.msra.mxu0 %v4174
      %5395 = vmatprep.subr.bf16.mxu0 %v4181
      %5396 = vmatpush1.bf16.msra.mxu0 %v4180
      %5397 = vmatprep.subr.bf16.mxu0 %v4187
      %5398 = vmatpush1.bf16.msra.mxu0 %v4186
      %5399 = vmatprep.subr.bf16.mxu0 %v4193
      %5400 = vmatpush1.bf16.msra.mxu0 %v4192
      %5401 = vmatprep.subr.bf16.mxu0 %v4199
      %5402 = vmatpush1.bf16.msra.mxu0 %v4198
      %5403 = vmatprep.subr.bf16.mxu0 %v4205
      %5404 = vmatpush1.bf16.msra.mxu0 %v4204
      %5405 = vmatprep.subr.bf16.mxu0 %v4211
      %5406 = vmatpush1.bf16.msra.mxu0 %v4210
      %5407 = vmatprep.subr.bf16.mxu0 %v4217
      %5408 = vmatpush1.bf16.msra.mxu0 %v4216
      %5409 = vmatprep.subr.bf16.mxu0 %v4223
      %5410 = vmatpush1.bf16.msra.mxu0 %v4222
      %5411 = vmatprep.subr.bf16.mxu0 %v4229
      %5412 = vmatpush1.bf16.msra.mxu0 %v4228
      %5413 = vmatprep.subr.bf16.mxu0 %v4235
      %5414 = vmatpush1.bf16.msra.mxu0 %v4234
      %5415 = vmatprep.subr.bf16.mxu0 %v4241
      %5416 = vmatpush1.bf16.msra.mxu0 %v4240
      %5417 = vmatprep.mubr.bf16.mxu0 %v1125
      %5418 = vmatmul.mubr.bf16.gmra.mrb[0].mxu0 %v1124
      %v5419 = vpop.f32.mrb[0].mxu0
      %v5420 = vadd.f32 %v5367, %v5419
      %v5421 = vpop.f32.mrb[0].mxu0
      %v5422 = vadd.f32 %v5369, %v5421
      %v5423 = vpop.f32.mrb[0].mxu0
      %v5424 = vadd.f32 %v5371, %v5423
      %v5425 = vpop.f32.mrb[0].mxu0
      %v5426 = vadd.f32 %v5373, %v5425
      %5427 = vmatprep.mubr.bf16.mxu0 %v1141
      %5428 = vmatmul.mubr.bf16.gmra.mrb[0].mxu0 %v1140
      %v5429 = vpop.f32.mrb[0].mxu0
      %v5430 = vadd.f32 %v5377, %v5429
      %v5431 = vpop.f32.mrb[0].mxu0
      %v5432 = vadd.f32 %v5379, %v5431
      %v5433 = vpop.f32.mrb[0].mxu0
      %v5434 = vadd.f32 %v5381, %v5433
      %v5435 = vpop.f32.mrb[0].mxu0
      %v5436 = vadd.f32 %v5383, %v5435
      %5437 = vdwg.mxu0
      %5438 = vmatprep.subr.bf16.mxu0 %v3481
      %5439 = vmatpush1.bf16.msra.mxu0 %v3480
      %5440 = vmatprep.subr.bf16.mxu0 %v3487
      %5441 = vmatpush1.bf16.msra.mxu0 %v3486
      %5442 = vmatprep.subr.bf16.mxu0 %v3493
      %5443 = vmatpush1.bf16.msra.mxu0 %v3492
      %5444 = vmatprep.subr.bf16.mxu0 %v3499
      %5445 = vmatpush1.bf16.msra.mxu0 %v3498
      %5446 = vmatprep.subr.bf16.mxu0 %v3505
      %5447 = vmatpush1.bf16.msra.mxu0 %v3504
      %5448 = vmatprep.subr.bf16.mxu0 %v3511
      %5449 = vmatpush1.bf16.msra.mxu0 %v3510
      %5450 = vmatprep.subr.bf16.mxu0 %v3517
      %5451 = vmatpush1.bf16.msra.mxu0 %v3516
      %5452 = vmatprep.subr.bf16.mxu0 %v3523
      %5453 = vmatpush1.bf16.msra.mxu0 %v3522
      %5454 = vmatprep.subr.bf16.mxu0 %v3529
      %5455 = vmatpush1.bf16.msra.mxu0 %v3528
      %5456 = vmatprep.subr.bf16.mxu0 %v3535
      %5457 = vmatpush1.bf16.msra.mxu0 %v3534
      %5458 = vmatprep.subr.bf16.mxu0 %v3541
      %5459 = vmatpush1.bf16.msra.mxu0 %v3540
      %5460 = vmatprep.subr.bf16.mxu0 %v3547
      %5461 = vmatpush1.bf16.msra.mxu0 %v3546
      %5462 = vmatprep.subr.bf16.mxu0 %v3553
      %5463 = vmatpush1.bf16.msra.mxu0 %v3552
      %5464 = vmatprep.subr.bf16.mxu0 %v3559
      %5465 = vmatpush1.bf16.msra.mxu0 %v3558
      %5466 = vmatprep.subr.bf16.mxu0 %v3565
      %5467 = vmatpush1.bf16.msra.mxu0 %v3564
      %5468 = vmatprep.subr.bf16.mxu0 %v3571
      %5469 = vmatpush1.bf16.msra.mxu0 %v3570
      %5470 = vmatprep.mubr.bf16.mxu0 %v1111
      %5471 = vmatmul.mubr.bf16.gmra.mrb[0].mxu0 %v1110
      %v5472 = vpop.f32.mrb[0].mxu0
      %v5473 = vadd.f32 0.0, %v5472
      %v5474 = vpop.f32.mrb[0].mxu0
      %v5475 = vadd.f32 0.0, %v5474
      %v5476 = vpop.f32.mrb[0].mxu0
      %v5477 = vadd.f32 0.0, %v5476
      %v5478 = vpop.f32.mrb[0].mxu0
      %v5479 = vadd.f32 0.0, %v5478
      %5480 = vmatprep.mubr.bf16.mxu0 %v1127
      %5481 = vmatmul.mubr.bf16.gmra.mrb[0].mxu0 %v1126
      %v5482 = vpop.f32.mrb[0].mxu0
      %v5483 = vadd.f32 0.0, %v5482
      %v5484 = vpop.f32.mrb[0].mxu0
      %v5485 = vadd.f32 0.0, %v5484
      %v5486 = vpop.f32.mrb[0].mxu0
      %v5487 = vadd.f32 0.0, %v5486
      %v5488 = vpop.f32.mrb[0].mxu0
      %v5489 = vadd.f32 0.0, %v5488
      %5490 = vdwg.mxu0
      %5491 = vmatprep.subr.bf16.mxu0 %v3577
      %5492 = vmatpush1.bf16.msra.mxu0 %v3576
      %5493 = vmatprep.subr.bf16.mxu0 %v3583
      %5494 = vmatpush1.bf16.msra.mxu0 %v3582
      %5495 = vmatprep.subr.bf16.mxu0 %v3589
      %5496 = vmatpush1.bf16.msra.mxu0 %v3588
      %5497 = vmatprep.subr.bf16.mxu0 %v3595
      %5498 = vmatpush1.bf16.msra.mxu0 %v3594
      %5499 = vmatprep.subr.bf16.mxu0 %v3601
      %5500 = vmatpush1.bf16.msra.mxu0 %v3600
      %5501 = vmatprep.subr.bf16.mxu0 %v3607
      %5502 = vmatpush1.bf16.msra.mxu0 %v3606
      %5503 = vmatprep.subr.bf16.mxu0 %v3613
      %5504 = vmatpush1.bf16.msra.mxu0 %v3612
      %5505 = vmatprep.subr.bf16.mxu0 %v3619
      %5506 = vmatpush1.bf16.msra.mxu0 %v3618
      %5507 = vmatprep.subr.bf16.mxu0 %v3625
      %5508 = vmatpush1.bf16.msra.mxu0 %v3624
      %5509 = vmatprep.subr.bf16.mxu0 %v3631
      %5510 = vmatpush1.bf16.msra.mxu0 %v3630
      %5511 = vmatprep.subr.bf16.mxu0 %v3637
      %5512 = vmatpush1.bf16.msra.mxu0 %v3636
      %5513 = vmatprep.subr.bf16.mxu0 %v3643
      %5514 = vmatpush1.bf16.msra.mxu0 %v3642
      %5515 = vmatprep.subr.bf16.mxu0 %v3649
      %5516 = vmatpush1.bf16.msra.mxu0 %v3648
      %5517 = vmatprep.subr.bf16.mxu0 %v3655
      %5518 = vmatpush1.bf16.msra.mxu0 %v3654
      %5519 = vmatprep.subr.bf16.mxu0 %v3661
      %5520 = vmatpush1.bf16.msra.mxu0 %v3660
      %5521 = vmatprep.subr.bf16.mxu0 %v3667
      %5522 = vmatpush1.bf16.msra.mxu0 %v3666
      %5523 = vmatprep.mubr.bf16.mxu0 %v1113
      %5524 = vmatmul.mubr.bf16.gmra.mrb[0].mxu0 %v1112
      %v5525 = vpop.f32.mrb[0].mxu0
      %v5526 = vadd.f32 %v5473, %v5525
      %v5527 = vpop.f32.mrb[0].mxu0
      %v5528 = vadd.f32 %v5475, %v5527
      %v5529 = vpop.f32.mrb[0].mxu0
      %v5530 = vadd.f32 %v5477, %v5529
      %v5531 = vpop.f32.mrb[0].mxu0
      %v5532 = vadd.f32 %v5479, %v5531
      %5533 = vmatprep.mubr.bf16.mxu0 %v1129
      %5534 = vmatmul.mubr.bf16.gmra.mrb[0].mxu0 %v1128
      %v5535 = vpop.f32.mrb[0].mxu0
      %v5536 = vadd.f32 %v5483, %v5535
      %v5537 = vpop.f32.mrb[0].mxu0
      %v5538 = vadd.f32 %v5485, %v5537
      %v5539 = vpop.f32.mrb[0].mxu0
      %v5540 = vadd.f32 %v5487, %v5539
      %v5541 = vpop.f32.mrb[0].mxu0
      %v5542 = vadd.f32 %v5489, %v5541
      %5543 = vdwg.mxu0
      %5544 = vmatprep.subr.bf16.mxu0 %v3673
      %5545 = vmatpush1.bf16.msra.mxu0 %v3672
      %5546 = vmatprep.subr.bf16.mxu0 %v3679
      %5547 = vmatpush1.bf16.msra.mxu0 %v3678
      %5548 = vmatprep.subr.bf16.mxu0 %v3685
      %5549 = vmatpush1.bf16.msra.mxu0 %v3684
      %5550 = vmatprep.subr.bf16.mxu0 %v3691
      %5551 = vmatpush1.bf16.msra.mxu0 %v3690
      %5552 = vmatprep.subr.bf16.mxu0 %v3697
      %5553 = vmatpush1.bf16.msra.mxu0 %v3696
      %5554 = vmatprep.subr.bf16.mxu0 %v3703
      %5555 = vmatpush1.bf16.msra.mxu0 %v3702
      %5556 = vmatprep.subr.bf16.mxu0 %v3709
      %5557 = vmatpush1.bf16.msra.mxu0 %v3708
      %5558 = vmatprep.subr.bf16.mxu0 %v3715
      %5559 = vmatpush1.bf16.msra.mxu0 %v3714
      %5560 = vmatprep.subr.bf16.mxu0 %v3721
      %5561 = vmatpush1.bf16.msra.mxu0 %v3720
      %5562 = vmatprep.subr.bf16.mxu0 %v3727
      %5563 = vmatpush1.bf16.msra.mxu0 %v3726
      %5564 = vmatprep.subr.bf16.mxu0 %v3733
      %5565 = vmatpush1.bf16.msra.mxu0 %v3732
      %5566 = vmatprep.subr.bf16.mxu0 %v3739
      %5567 = vmatpush1.bf16.msra.mxu0 %v3738
      %5568 = vmatprep.subr.bf16.mxu0 %v3745
      %5569 = vmatpush1.bf16.msra.mxu0 %v3744
      %5570 = vmatprep.subr.bf16.mxu0 %v3751
      %5571 = vmatpush1.bf16.msra.mxu0 %v3750
      %5572 = vmatprep.subr.bf16.mxu0 %v3757
      %5573 = vmatpush1.bf16.msra.mxu0 %v3756
      %5574 = vmatprep.subr.bf16.mxu0 %v3763
      %5575 = vmatpush1.bf16.msra.mxu0 %v3762
      %5576 = vmatprep.mubr.bf16.mxu0 %v1115
      %5577 = vmatmul.mubr.bf16.gmra.mrb[0].mxu0 %v1114
      %v5578 = vpop.f32.mrb[0].mxu0
      %v5579 = vadd.f32 %v5526, %v5578
      %v5580 = vpop.f32.mrb[0].mxu0
      %v5581 = vadd.f32 %v5528, %v5580
      %v5582 = vpop.f32.mrb[0].mxu0
      %v5583 = vadd.f32 %v5530, %v5582
      %v5584 = vpop.f32.mrb[0].mxu0
      %v5585 = vadd.f32 %v5532, %v5584
      %5586 = vmatprep.mubr.bf16.mxu0 %v1131
      %5587 = vmatmul.mubr.bf16.gmra.mrb[0].mxu0 %v1130
      %v5588 = vpop.f32.mrb[0].mxu0
      %v5589 = vadd.f32 %v5536, %v5588
      %v5590 = vpop.f32.mrb[0].mxu0
      %v5591 = vadd.f32 %v5538, %v5590
      %v5592 = vpop.f32.mrb[0].mxu0
      %v5593 = vadd.f32 %v5540, %v5592
      %v5594 = vpop.f32.mrb[0].mxu0
      %v5595 = vadd.f32 %v5542, %v5594
      %5596 = vdwg.mxu0
      %5597 = vmatprep.subr.bf16.mxu0 %v3769
      %5598 = vmatpush1.bf16.msra.mxu0 %v3768
      %5599 = vmatprep.subr.bf16.mxu0 %v3775
      %5600 = vmatpush1.bf16.msra.mxu0 %v3774
      %5601 = vmatprep.subr.bf16.mxu0 %v3781
      %5602 = vmatpush1.bf16.msra.mxu0 %v3780
      %5603 = vmatprep.subr.bf16.mxu0 %v3787
      %5604 = vmatpush1.bf16.msra.mxu0 %v3786
      %5605 = vmatprep.subr.bf16.mxu0 %v3793
      %5606 = vmatpush1.bf16.msra.mxu0 %v3792
      %5607 = vmatprep.subr.bf16.mxu0 %v3799
      %5608 = vmatpush1.bf16.msra.mxu0 %v3798
      %5609 = vmatprep.subr.bf16.mxu0 %v3805
      %5610 = vmatpush1.bf16.msra.mxu0 %v3804
      %5611 = vmatprep.subr.bf16.mxu0 %v3811
      %5612 = vmatpush1.bf16.msra.mxu0 %v3810
      %5613 = vmatprep.subr.bf16.mxu0 %v3817
      %5614 = vmatpush1.bf16.msra.mxu0 %v3816
      %5615 = vmatprep.subr.bf16.mxu0 %v3823
      %5616 = vmatpush1.bf16.msra.mxu0 %v3822
      %5617 = vmatprep.subr.bf16.mxu0 %v3829
      %5618 = vmatpush1.bf16.msra.mxu0 %v3828
      %5619 = vmatprep.subr.bf16.mxu0 %v3835
      %5620 = vmatpush1.bf16.msra.mxu0 %v3834
      %5621 = vmatprep.subr.bf16.mxu0 %v3841
      %5622 = vmatpush1.bf16.msra.mxu0 %v3840
      %5623 = vmatprep.subr.bf16.mxu0 %v3847
      %5624 = vmatpush1.bf16.msra.mxu0 %v3846
      %5625 = vmatprep.subr.bf16.mxu0 %v3853
      %5626 = vmatpush1.bf16.msra.mxu0 %v3852
      %5627 = vmatprep.subr.bf16.mxu0 %v3859
      %5628 = vmatpush1.bf16.msra.mxu0 %v3858
      %5629 = vmatprep.mubr.bf16.mxu0 %v1117
      %5630 = vmatmul.mubr.bf16.gmra.mrb[0].mxu0 %v1116
      %v5631 = vpop.f32.mrb[0].mxu0
      %v5632 = vadd.f32 %v5579, %v5631
      %v5633 = vpop.f32.mrb[0].mxu0
      %v5634 = vadd.f32 %v5581, %v5633
      %v5635 = vpop.f32.mrb[0].mxu0
      %v5636 = vadd.f32 %v5583, %v5635
      %v5637 = vpop.f32.mrb[0].mxu0
      %v5638 = vadd.f32 %v5585, %v5637
      %5639 = vmatprep.mubr.bf16.mxu0 %v1133
      %5640 = vmatmul.mubr.bf16.gmra.mrb[0].mxu0 %v1132
      %v5641 = vpop.f32.mrb[0].mxu0
      %v5642 = vadd.f32 %v5589, %v5641
      %v5643 = vpop.f32.mrb[0].mxu0
      %v5644 = vadd.f32 %v5591, %v5643
      %v5645 = vpop.f32.mrb[0].mxu0
      %v5646 = vadd.f32 %v5593, %v5645
      %v5647 = vpop.f32.mrb[0].mxu0
      %v5648 = vadd.f32 %v5595, %v5647
      %5649 = vdwg.mxu0
      %5650 = vmatprep.subr.bf16.mxu0 %v3865
      %5651 = vmatpush1.bf16.msra.mxu0 %v3864
      %5652 = vmatprep.subr.bf16.mxu0 %v3871
      %5653 = vmatpush1.bf16.msra.mxu0 %v3870
      %5654 = vmatprep.subr.bf16.mxu0 %v3877
      %5655 = vmatpush1.bf16.msra.mxu0 %v3876
      %5656 = vmatprep.subr.bf16.mxu0 %v3883
      %5657 = vmatpush1.bf16.msra.mxu0 %v3882
      %5658 = vmatprep.subr.bf16.mxu0 %v3889
      %5659 = vmatpush1.bf16.msra.mxu0 %v3888
      %5660 = vmatprep.subr.bf16.mxu0 %v3895
      %5661 = vmatpush1.bf16.msra.mxu0 %v3894
      %5662 = vmatprep.subr.bf16.mxu0 %v3901
      %5663 = vmatpush1.bf16.msra.mxu0 %v3900
      %5664 = vmatprep.subr.bf16.mxu0 %v3907
      %5665 = vmatpush1.bf16.msra.mxu0 %v3906
      %5666 = vmatprep.subr.bf16.mxu0 %v3913
      %5667 = vmatpush1.bf16.msra.mxu0 %v3912
      %5668 = vmatprep.subr.bf16.mxu0 %v3919
      %5669 = vmatpush1.bf16.msra.mxu0 %v3918
      %5670 = vmatprep.subr.bf16.mxu0 %v3925
      %5671 = vmatpush1.bf16.msra.mxu0 %v3924
      %5672 = vmatprep.subr.bf16.mxu0 %v3931
      %5673 = vmatpush1.bf16.msra.mxu0 %v3930
      %5674 = vmatprep.subr.bf16.mxu0 %v3937
      %5675 = vmatpush1.bf16.msra.mxu0 %v3936
      %5676 = vmatprep.subr.bf16.mxu0 %v3943
      %5677 = vmatpush1.bf16.msra.mxu0 %v3942
      %5678 = vmatprep.subr.bf16.mxu0 %v3949
      %5679 = vmatpush1.bf16.msra.mxu0 %v3948
      %5680 = vmatprep.subr.bf16.mxu0 %v3955
      %5681 = vmatpush1.bf16.msra.mxu0 %v3954
      %5682 = vmatprep.mubr.bf16.mxu0 %v1119
      %5683 = vmatmul.mubr.bf16.gmra.mrb[0].mxu0 %v1118
      %v5684 = vpop.f32.mrb[0].mxu0
      %v5685 = vadd.f32 %v5632, %v5684
      %v5686 = vpop.f32.mrb[0].mxu0
      %v5687 = vadd.f32 %v5634, %v5686
      %v5688 = vpop.f32.mrb[0].mxu0
      %v5689 = vadd.f32 %v5636, %v5688
      %v5690 = vpop.f32.mrb[0].mxu0
      %v5691 = vadd.f32 %v5638, %v5690
      %5692 = vmatprep.mubr.bf16.mxu0 %v1135
      %5693 = vmatmul.mubr.bf16.gmra.mrb[0].mxu0 %v1134
      %v5694 = vpop.f32.mrb[0].mxu0
      %v5695 = vadd.f32 %v5642, %v5694
      %v5696 = vpop.f32.mrb[0].mxu0
      %v5697 = vadd.f32 %v5644, %v5696
      %v5698 = vpop.f32.mrb[0].mxu0
      %v5699 = vadd.f32 %v5646, %v5698
      %v5700 = vpop.f32.mrb[0].mxu0
      %v5701 = vadd.f32 %v5648, %v5700
      %5702 = vdwg.mxu0
      %5703 = vmatprep.subr.bf16.mxu0 %v3961
      %5704 = vmatpush1.bf16.msra.mxu0 %v3960
      %5705 = vmatprep.subr.bf16.mxu0 %v3967
      %5706 = vmatpush1.bf16.msra.mxu0 %v3966
      %5707 = vmatprep.subr.bf16.mxu0 %v3973
      %5708 = vmatpush1.bf16.msra.mxu0 %v3972
      %5709 = vmatprep.subr.bf16.mxu0 %v3979
      %5710 = vmatpush1.bf16.msra.mxu0 %v3978
      %5711 = vmatprep.subr.bf16.mxu0 %v3985
      %5712 = vmatpush1.bf16.msra.mxu0 %v3984
      %5713 = vmatprep.subr.bf16.mxu0 %v3991
      %5714 = vmatpush1.bf16.msra.mxu0 %v3990
      %5715 = vmatprep.subr.bf16.mxu0 %v3997
      %5716 = vmatpush1.bf16.msra.mxu0 %v3996
      %5717 = vmatprep.subr.bf16.mxu0 %v4003
      %5718 = vmatpush1.bf16.msra.mxu0 %v4002
      %5719 = vmatprep.subr.bf16.mxu0 %v4009
      %5720 = vmatpush1.bf16.msra.mxu0 %v4008
      %5721 = vmatprep.subr.bf16.mxu0 %v4015
      %5722 = vmatpush1.bf16.msra.mxu0 %v4014
      %5723 = vmatprep.subr.bf16.mxu0 %v4021
      %5724 = vmatpush1.bf16.msra.mxu0 %v4020
      %5725 = vmatprep.subr.bf16.mxu0 %v4027
      %5726 = vmatpush1.bf16.msra.mxu0 %v4026
      %5727 = vmatprep.subr.bf16.mxu0 %v4033
      %5728 = vmatpush1.bf16.msra.mxu0 %v4032
      %5729 = vmatprep.subr.bf16.mxu0 %v4039
      %5730 = vmatpush1.bf16.msra.mxu0 %v4038
      %5731 = vmatprep.subr.bf16.mxu0 %v4045
      %5732 = vmatpush1.bf16.msra.mxu0 %v4044
      %5733 = vmatprep.subr.bf16.mxu0 %v4051
      %5734 = vmatpush1.bf16.msra.mxu0 %v4050
      %5735 = vmatprep.mubr.bf16.mxu0 %v1121
      %5736 = vmatmul.mubr.bf16.gmra.mrb[0].mxu0 %v1120
      %v5737 = vpop.f32.mrb[0].mxu0
      %v5738 = vadd.f32 %v5685, %v5737
      %v5739 = vpop.f32.mrb[0].mxu0
      %v5740 = vadd.f32 %v5687, %v5739
      %v5741 = vpop.f32.mrb[0].mxu0
      %v5742 = vadd.f32 %v5689, %v5741
      %v5743 = vpop.f32.mrb[0].mxu0
      %v5744 = vadd.f32 %v5691, %v5743
      %5745 = vmatprep.mubr.bf16.mxu0 %v1137
      %5746 = vmatmul.mubr.bf16.gmra.mrb[0].mxu0 %v1136
      %v5747 = vpop.f32.mrb[0].mxu0
      %v5748 = vadd.f32 %v5695, %v5747
      %v5749 = vpop.f32.mrb[0].mxu0
      %v5750 = vadd.f32 %v5697, %v5749
      %v5751 = vpop.f32.mrb[0].mxu0
      %v5752 = vadd.f32 %v5699, %v5751
      %v5753 = vpop.f32.mrb[0].mxu0
      %v5754 = vadd.f32 %v5701, %v5753
      %5755 = vdwg.mxu0
      %5756 = vmatprep.subr.bf16.mxu0 %v4057
      %5757 = vmatpush1.bf16.msra.mxu0 %v4056
      %5758 = vmatprep.subr.bf16.mxu0 %v4063
      %5759 = vmatpush1.bf16.msra.mxu0 %v4062
      %5760 = vmatprep.subr.bf16.mxu0 %v4069
      %5761 = vmatpush1.bf16.msra.mxu0 %v4068
      %5762 = vmatprep.subr.bf16.mxu0 %v4075
      %5763 = vmatpush1.bf16.msra.mxu0 %v4074
      %5764 = vmatprep.subr.bf16.mxu0 %v4081
      %5765 = vmatpush1.bf16.msra.mxu0 %v4080
      %5766 = vmatprep.subr.bf16.mxu0 %v4087
      %5767 = vmatpush1.bf16.msra.mxu0 %v4086
      %5768 = vmatprep.subr.bf16.mxu0 %v4093
      %5769 = vmatpush1.bf16.msra.mxu0 %v4092
      %5770 = vmatprep.subr.bf16.mxu0 %v4099
      %5771 = vmatpush1.bf16.msra.mxu0 %v4098
      %5772 = vmatprep.subr.bf16.mxu0 %v4105
      %5773 = vmatpush1.bf16.msra.mxu0 %v4104
      %5774 = vmatprep.subr.bf16.mxu0 %v4111
      %5775 = vmatpush1.bf16.msra.mxu0 %v4110
      %5776 = vmatprep.subr.bf16.mxu0 %v4117
      %5777 = vmatpush1.bf16.msra.mxu0 %v4116
      %5778 = vmatprep.subr.bf16.mxu0 %v4123
      %5779 = vmatpush1.bf16.msra.mxu0 %v4122
      %5780 = vmatprep.subr.bf16.mxu0 %v4129
      %5781 = vmatpush1.bf16.msra.mxu0 %v4128
      %5782 = vmatprep.subr.bf16.mxu0 %v4135
      %5783 = vmatpush1.bf16.msra.mxu0 %v4134
      %5784 = vmatprep.subr.bf16.mxu0 %v4141
      %5785 = vmatpush1.bf16.msra.mxu0 %v4140
      %5786 = vmatprep.subr.bf16.mxu0 %v4147
      %5787 = vmatpush1.bf16.msra.mxu0 %v4146
      %5788 = vmatprep.mubr.bf16.mxu0 %v1123
      %5789 = vmatmul.mubr.bf16.gmra.mrb[0].mxu0 %v1122
      %v5790 = vpop.f32.mrb[0].mxu0
      %v5791 = vadd.f32 %v5738, %v5790
      %v5792 = vpop.f32.mrb[0].mxu0
      %v5793 = vadd.f32 %v5740, %v5792
      %v5794 = vpop.f32.mrb[0].mxu0
      %v5795 = vadd.f32 %v5742, %v5794
      %v5796 = vpop.f32.mrb[0].mxu0
      %v5797 = vadd.f32 %v5744, %v5796
      %5798 = vmatprep.mubr.bf16.mxu0 %v1139
      %5799 = vmatmul.mubr.bf16.gmra.mrb[0].mxu0 %v1138
      %v5800 = vpop.f32.mrb[0].mxu0
      %v5801 = vadd.f32 %v5748, %v5800
      %v5802 = vpop.f32.mrb[0].mxu0
      %v5803 = vadd.f32 %v5750, %v5802
      %v5804 = vpop.f32.mrb[0].mxu0
      %v5805 = vadd.f32 %v5752, %v5804
      %v5806 = vpop.f32.mrb[0].mxu0
      %v5807 = vadd.f32 %v5754, %v5806
      %5808 = vdwg.mxu0
      %5809 = vmatprep.subr.bf16.mxu0 %v4153
      %5810 = vmatpush1.bf16.msra.mxu0 %v4152
      %5811 = vmatprep.subr.bf16.mxu0 %v4159
      %5812 = vmatpush1.bf16.msra.mxu0 %v4158
      %5813 = vmatprep.subr.bf16.mxu0 %v4165
      %5814 = vmatpush1.bf16.msra.mxu0 %v4164
      %5815 = vmatprep.subr.bf16.mxu0 %v4171
      %5816 = vmatpush1.bf16.msra.mxu0 %v4170
      %5817 = vmatprep.subr.bf16.mxu0 %v4177
      %5818 = vmatpush1.bf16.msra.mxu0 %v4176
      %5819 = vmatprep.subr.bf16.mxu0 %v4183
      %5820 = vmatpush1.bf16.msra.mxu0 %v4182
      %5821 = vmatprep.subr.bf16.mxu0 %v4189
      %5822 = vmatpush1.bf16.msra.mxu0 %v4188
      %5823 = vmatprep.subr.bf16.mxu0 %v4195
      %5824 = vmatpush1.bf16.msra.mxu0 %v4194
      %5825 = vmatprep.subr.bf16.mxu0 %v4201
      %5826 = vmatpush1.bf16.msra.mxu0 %v4200
      %5827 = vmatprep.subr.bf16.mxu0 %v4207
      %5828 = vmatpush1.bf16.msra.mxu0 %v4206
      %5829 = vmatprep.subr.bf16.mxu0 %v4213
      %5830 = vmatpush1.bf16.msra.mxu0 %v4212
      %5831 = vmatprep.subr.bf16.mxu0 %v4219
      %5832 = vmatpush1.bf16.msra.mxu0 %v4218
      %5833 = vmatprep.subr.bf16.mxu0 %v4225
      %5834 = vmatpush1.bf16.msra.mxu0 %v4224
      %5835 = vmatprep.subr.bf16.mxu0 %v4231
      %5836 = vmatpush1.bf16.msra.mxu0 %v4230
      %5837 = vmatprep.subr.bf16.mxu0 %v4237
      %5838 = vmatpush1.bf16.msra.mxu0 %v4236
      %5839 = vmatprep.subr.bf16.mxu0 %v4243
      %5840 = vmatpush1.bf16.msra.mxu0 %v4242
      %5841 = vmatprep.mubr.bf16.mxu0 %v1125
      %5842 = vmatmul.mubr.bf16.gmra.mrb[0].mxu0 %v1124
      %v5843 = vpop.f32.mrb[0].mxu0
      %v5844 = vadd.f32 %v5791, %v5843
      %v5845 = vpop.f32.mrb[0].mxu0
      %v5846 = vadd.f32 %v5793, %v5845
      %v5847 = vpop.f32.mrb[0].mxu0
      %v5848 = vadd.f32 %v5795, %v5847
      %v5849 = vpop.f32.mrb[0].mxu0
      %v5850 = vadd.f32 %v5797, %v5849
      %5851 = vmatprep.mubr.bf16.mxu0 %v1141
      %5852 = vmatmul.mubr.bf16.gmra.mrb[0].mxu0 %v1140
      %v5853 = vpop.f32.mrb[0].mxu0
      %v5854 = vadd.f32 %v5801, %v5853
      %v5855 = vpop.f32.mrb[0].mxu0
      %v5856 = vadd.f32 %v5803, %v5855
      %v5857 = vpop.f32.mrb[0].mxu0
      %v5858 = vadd.f32 %v5805, %v5857
      %v5859 = vpop.f32.mrb[0].mxu0
      %v5860 = vadd.f32 %v5807, %v5859
      %5861 = vdwg.mxu0
      %5862 = vmatprep.subr.bf16.mxu0 %v3483
      %5863 = vmatpush1.bf16.msra.mxu0 %v3482
      %5864 = vmatprep.subr.bf16.mxu0 %v3489
      %5865 = vmatpush1.bf16.msra.mxu0 %v3488
      %5866 = vmatprep.subr.bf16.mxu0 %v3495
      %5867 = vmatpush1.bf16.msra.mxu0 %v3494
      %5868 = vmatprep.subr.bf16.mxu0 %v3501
      %5869 = vmatpush1.bf16.msra.mxu0 %v3500
      %5870 = vmatprep.subr.bf16.mxu0 %v3507
      %5871 = vmatpush1.bf16.msra.mxu0 %v3506
      %5872 = vmatprep.subr.bf16.mxu0 %v3513
      %5873 = vmatpush1.bf16.msra.mxu0 %v3512
      %5874 = vmatprep.subr.bf16.mxu0 %v3519
      %5875 = vmatpush1.bf16.msra.mxu0 %v3518
      %5876 = vmatprep.subr.bf16.mxu0 %v3525
      %5877 = vmatpush1.bf16.msra.mxu0 %v3524
      %5878 = vmatprep.subr.bf16.mxu0 %v3531
      %5879 = vmatpush1.bf16.msra.mxu0 %v3530
      %5880 = vmatprep.subr.bf16.mxu0 %v3537
      %5881 = vmatpush1.bf16.msra.mxu0 %v3536
      %5882 = vmatprep.subr.bf16.mxu0 %v3543
      %5883 = vmatpush1.bf16.msra.mxu0 %v3542
      %5884 = vmatprep.subr.bf16.mxu0 %v3549
      %5885 = vmatpush1.bf16.msra.mxu0 %v3548
      %5886 = vmatprep.subr.bf16.mxu0 %v3555
      %5887 = vmatpush1.bf16.msra.mxu0 %v3554
      %5888 = vmatprep.subr.bf16.mxu0 %v3561
      %5889 = vmatpush1.bf16.msra.mxu0 %v3560
      %5890 = vmatprep.subr.bf16.mxu0 %v3567
      %5891 = vmatpush1.bf16.msra.mxu0 %v3566
      %5892 = vmatprep.subr.bf16.mxu0 %v3573
      %5893 = vmatpush1.bf16.msra.mxu0 %v3572
      %5894 = vmatprep.mubr.bf16.mxu0 %v1111
      %5895 = vmatmul.mubr.bf16.gmra.mrb[0].mxu0 %v1110
      %v5896 = vpop.f32.mrb[0].mxu0
      %v5897 = vadd.f32 0.0, %v5896
      %v5898 = vpop.f32.mrb[0].mxu0
      %v5899 = vadd.f32 0.0, %v5898
      %v5900 = vpop.f32.mrb[0].mxu0
      %v5901 = vadd.f32 0.0, %v5900
      %v5902 = vpop.f32.mrb[0].mxu0
      %v5903 = vadd.f32 0.0, %v5902
      %5904 = vmatprep.mubr.bf16.mxu0 %v1127
      %5905 = vmatmul.mubr.bf16.gmra.mrb[0].mxu0 %v1126
      %v5906 = vpop.f32.mrb[0].mxu0
      %v5907 = vadd.f32 0.0, %v5906
      %v5908 = vpop.f32.mrb[0].mxu0
      %v5909 = vadd.f32 0.0, %v5908
      %v5910 = vpop.f32.mrb[0].mxu0
      %v5911 = vadd.f32 0.0, %v5910
      %v5912 = vpop.f32.mrb[0].mxu0
      %v5913 = vadd.f32 0.0, %v5912
      %5914 = vdwg.mxu0
      %5915 = vmatprep.subr.bf16.mxu0 %v3579
      %5916 = vmatpush1.bf16.msra.mxu0 %v3578
      %5917 = vmatprep.subr.bf16.mxu0 %v3585
      %5918 = vmatpush1.bf16.msra.mxu0 %v3584
      %5919 = vmatprep.subr.bf16.mxu0 %v3591
      %5920 = vmatpush1.bf16.msra.mxu0 %v3590
      %5921 = vmatprep.subr.bf16.mxu0 %v3597
      %5922 = vmatpush1.bf16.msra.mxu0 %v3596
      %5923 = vmatprep.subr.bf16.mxu0 %v3603
      %5924 = vmatpush1.bf16.msra.mxu0 %v3602
      %5925 = vmatprep.subr.bf16.mxu0 %v3609
      %5926 = vmatpush1.bf16.msra.mxu0 %v3608
      %5927 = vmatprep.subr.bf16.mxu0 %v3615
      %5928 = vmatpush1.bf16.msra.mxu0 %v3614
      %5929 = vmatprep.subr.bf16.mxu0 %v3621
      %5930 = vmatpush1.bf16.msra.mxu0 %v3620
      %5931 = vmatprep.subr.bf16.mxu0 %v3627
      %5932 = vmatpush1.bf16.msra.mxu0 %v3626
      %5933 = vmatprep.subr.bf16.mxu0 %v3633
      %5934 = vmatpush1.bf16.msra.mxu0 %v3632
      %5935 = vmatprep.subr.bf16.mxu0 %v3639
      %5936 = vmatpush1.bf16.msra.mxu0 %v3638
      %5937 = vmatprep.subr.bf16.mxu0 %v3645
      %5938 = vmatpush1.bf16.msra.mxu0 %v3644
      %5939 = vmatprep.subr.bf16.mxu0 %v3651
      %5940 = vmatpush1.bf16.msra.mxu0 %v3650
      %5941 = vmatprep.subr.bf16.mxu0 %v3657
      %5942 = vmatpush1.bf16.msra.mxu0 %v3656
      %5943 = vmatprep.subr.bf16.mxu0 %v3663
      %5944 = vmatpush1.bf16.msra.mxu0 %v3662
      %5945 = vmatprep.subr.bf16.mxu0 %v3669
      %5946 = vmatpush1.bf16.msra.mxu0 %v3668
      %5947 = vmatprep.mubr.bf16.mxu0 %v1113
      %5948 = vmatmul.mubr.bf16.gmra.mrb[0].mxu0 %v1112
      %v5949 = vpop.f32.mrb[0].mxu0
      %v5950 = vadd.f32 %v5897, %v5949
      %v5951 = vpop.f32.mrb[0].mxu0
      %v5952 = vadd.f32 %v5899, %v5951
      %v5953 = vpop.f32.mrb[0].mxu0
      %v5954 = vadd.f32 %v5901, %v5953
      %v5955 = vpop.f32.mrb[0].mxu0
      %v5956 = vadd.f32 %v5903, %v5955
      %5957 = vmatprep.mubr.bf16.mxu0 %v1129
      %5958 = vmatmul.mubr.bf16.gmra.mrb[0].mxu0 %v1128
      %v5959 = vpop.f32.mrb[0].mxu0
      %v5960 = vadd.f32 %v5907, %v5959
      %v5961 = vpop.f32.mrb[0].mxu0
      %v5962 = vadd.f32 %v5909, %v5961
      %v5963 = vpop.f32.mrb[0].mxu0
      %v5964 = vadd.f32 %v5911, %v5963
      %v5965 = vpop.f32.mrb[0].mxu0
      %v5966 = vadd.f32 %v5913, %v5965
      %5967 = vdwg.mxu0
      %5968 = vmatprep.subr.bf16.mxu0 %v3675
      %5969 = vmatpush1.bf16.msra.mxu0 %v3674
      %5970 = vmatprep.subr.bf16.mxu0 %v3681
      %5971 = vmatpush1.bf16.msra.mxu0 %v3680
      %5972 = vmatprep.subr.bf16.mxu0 %v3687
      %5973 = vmatpush1.bf16.msra.mxu0 %v3686
      %5974 = vmatprep.subr.bf16.mxu0 %v3693
      %5975 = vmatpush1.bf16.msra.mxu0 %v3692
      %5976 = vmatprep.subr.bf16.mxu0 %v3699
      %5977 = vmatpush1.bf16.msra.mxu0 %v3698
      %5978 = vmatprep.subr.bf16.mxu0 %v3705
      %5979 = vmatpush1.bf16.msra.mxu0 %v3704
      %5980 = vmatprep.subr.bf16.mxu0 %v3711
      %5981 = vmatpush1.bf16.msra.mxu0 %v3710
      %5982 = vmatprep.subr.bf16.mxu0 %v3717
      %5983 = vmatpush1.bf16.msra.mxu0 %v3716
      %5984 = vmatprep.subr.bf16.mxu0 %v3723
      %5985 = vmatpush1.bf16.msra.mxu0 %v3722
      %5986 = vmatprep.subr.bf16.mxu0 %v3729
      %5987 = vmatpush1.bf16.msra.mxu0 %v3728
      %5988 = vmatprep.subr.bf16.mxu0 %v3735
      %5989 = vmatpush1.bf16.msra.mxu0 %v3734
      %5990 = vmatprep.subr.bf16.mxu0 %v3741
      %5991 = vmatpush1.bf16.msra.mxu0 %v3740
      %5992 = vmatprep.subr.bf16.mxu0 %v3747
      %5993 = vmatpush1.bf16.msra.mxu0 %v3746
      %5994 = vmatprep.subr.bf16.mxu0 %v3753
      %5995 = vmatpush1.bf16.msra.mxu0 %v3752
      %5996 = vmatprep.subr.bf16.mxu0 %v3759
      %5997 = vmatpush1.bf16.msra.mxu0 %v3758
      %5998 = vmatprep.subr.bf16.mxu0 %v3765
      %5999 = vmatpush1.bf16.msra.mxu0 %v3764
      %6000 = vmatprep.mubr.bf16.mxu0 %v1115
      %6001 = vmatmul.mubr.bf16.gmra.mrb[0].mxu0 %v1114
      %v6002 = vpop.f32.mrb[0].mxu0
      %v6003 = vadd.f32 %v5950, %v6002
      %v6004 = vpop.f32.mrb[0].mxu0
      %v6005 = vadd.f32 %v5952, %v6004
      %v6006 = vpop.f32.mrb[0].mxu0
      %v6007 = vadd.f32 %v5954, %v6006
      %v6008 = vpop.f32.mrb[0].mxu0
      %v6009 = vadd.f32 %v5956, %v6008
      %6010 = vmatprep.mubr.bf16.mxu0 %v1131
      %6011 = vmatmul.mubr.bf16.gmra.mrb[0].mxu0 %v1130
      %v6012 = vpop.f32.mrb[0].mxu0
      %v6013 = vadd.f32 %v5960, %v6012
      %v6014 = vpop.f32.mrb[0].mxu0
      %v6015 = vadd.f32 %v5962, %v6014
      %v6016 = vpop.f32.mrb[0].mxu0
      %v6017 = vadd.f32 %v5964, %v6016
      %v6018 = vpop.f32.mrb[0].mxu0
      %v6019 = vadd.f32 %v5966, %v6018
      %6020 = vdwg.mxu0
      %6021 = vmatprep.subr.bf16.mxu0 %v3771
      %6022 = vmatpush1.bf16.msra.mxu0 %v3770
      %6023 = vmatprep.subr.bf16.mxu0 %v3777
      %6024 = vmatpush1.bf16.msra.mxu0 %v3776
      %6025 = vmatprep.subr.bf16.mxu0 %v3783
      %6026 = vmatpush1.bf16.msra.mxu0 %v3782
      %6027 = vmatprep.subr.bf16.mxu0 %v3789
      %6028 = vmatpush1.bf16.msra.mxu0 %v3788
      %6029 = vmatprep.subr.bf16.mxu0 %v3795
      %6030 = vmatpush1.bf16.msra.mxu0 %v3794
      %6031 = vmatprep.subr.bf16.mxu0 %v3801
      %6032 = vmatpush1.bf16.msra.mxu0 %v3800
      %6033 = vmatprep.subr.bf16.mxu0 %v3807
      %6034 = vmatpush1.bf16.msra.mxu0 %v3806
      %6035 = vmatprep.subr.bf16.mxu0 %v3813
      %6036 = vmatpush1.bf16.msra.mxu0 %v3812
      %6037 = vmatprep.subr.bf16.mxu0 %v3819
      %6038 = vmatpush1.bf16.msra.mxu0 %v3818
      %6039 = vmatprep.subr.bf16.mxu0 %v3825
      %6040 = vmatpush1.bf16.msra.mxu0 %v3824
      %6041 = vmatprep.subr.bf16.mxu0 %v3831
      %6042 = vmatpush1.bf16.msra.mxu0 %v3830
      %6043 = vmatprep.subr.bf16.mxu0 %v3837
      %6044 = vmatpush1.bf16.msra.mxu0 %v3836
      %6045 = vmatprep.subr.bf16.mxu0 %v3843
      %6046 = vmatpush1.bf16.msra.mxu0 %v3842
      %6047 = vmatprep.subr.bf16.mxu0 %v3849
      %6048 = vmatpush1.bf16.msra.mxu0 %v3848
      %6049 = vmatprep.subr.bf16.mxu0 %v3855
      %6050 = vmatpush1.bf16.msra.mxu0 %v3854
      %6051 = vmatprep.subr.bf16.mxu0 %v3861
      %6052 = vmatpush1.bf16.msra.mxu0 %v3860
      %6053 = vmatprep.mubr.bf16.mxu0 %v1117
      %6054 = vmatmul.mubr.bf16.gmra.mrb[0].mxu0 %v1116
      %v6055 = vpop.f32.mrb[0].mxu0
      %v6056 = vadd.f32 %v6003, %v6055
      %v6057 = vpop.f32.mrb[0].mxu0
      %v6058 = vadd.f32 %v6005, %v6057
      %v6059 = vpop.f32.mrb[0].mxu0
      %v6060 = vadd.f32 %v6007, %v6059
      %v6061 = vpop.f32.mrb[0].mxu0
      %v6062 = vadd.f32 %v6009, %v6061
      %6063 = vmatprep.mubr.bf16.mxu0 %v1133
      %6064 = vmatmul.mubr.bf16.gmra.mrb[0].mxu0 %v1132
      %v6065 = vpop.f32.mrb[0].mxu0
      %v6066 = vadd.f32 %v6013, %v6065
      %v6067 = vpop.f32.mrb[0].mxu0
      %v6068 = vadd.f32 %v6015, %v6067
      %v6069 = vpop.f32.mrb[0].mxu0
      %v6070 = vadd.f32 %v6017, %v6069
      %v6071 = vpop.f32.mrb[0].mxu0
      %v6072 = vadd.f32 %v6019, %v6071
      %6073 = vdwg.mxu0
      %6074 = vmatprep.subr.bf16.mxu0 %v3867
      %6075 = vmatpush1.bf16.msra.mxu0 %v3866
      %6076 = vmatprep.subr.bf16.mxu0 %v3873
      %6077 = vmatpush1.bf16.msra.mxu0 %v3872
      %6078 = vmatprep.subr.bf16.mxu0 %v3879
      %6079 = vmatpush1.bf16.msra.mxu0 %v3878
      %6080 = vmatprep.subr.bf16.mxu0 %v3885
      %6081 = vmatpush1.bf16.msra.mxu0 %v3884
      %6082 = vmatprep.subr.bf16.mxu0 %v3891
      %6083 = vmatpush1.bf16.msra.mxu0 %v3890
      %6084 = vmatprep.subr.bf16.mxu0 %v3897
      %6085 = vmatpush1.bf16.msra.mxu0 %v3896
      %6086 = vmatprep.subr.bf16.mxu0 %v3903
      %6087 = vmatpush1.bf16.msra.mxu0 %v3902
      %6088 = vmatprep.subr.bf16.mxu0 %v3909
      %6089 = vmatpush1.bf16.msra.mxu0 %v3908
      %6090 = vmatprep.subr.bf16.mxu0 %v3915
      %6091 = vmatpush1.bf16.msra.mxu0 %v3914
      %6092 = vmatprep.subr.bf16.mxu0 %v3921
      %6093 = vmatpush1.bf16.msra.mxu0 %v3920
      %6094 = vmatprep.subr.bf16.mxu0 %v3927
      %6095 = vmatpush1.bf16.msra.mxu0 %v3926
      %6096 = vmatprep.subr.bf16.mxu0 %v3933
      %6097 = vmatpush1.bf16.msra.mxu0 %v3932
      %6098 = vmatprep.subr.bf16.mxu0 %v3939
      %6099 = vmatpush1.bf16.msra.mxu0 %v3938
      %6100 = vmatprep.subr.bf16.mxu0 %v3945
      %6101 = vmatpush1.bf16.msra.mxu0 %v3944
      %6102 = vmatprep.subr.bf16.mxu0 %v3951
      %6103 = vmatpush1.bf16.msra.mxu0 %v3950
      %6104 = vmatprep.subr.bf16.mxu0 %v3957
      %6105 = vmatpush1.bf16.msra.mxu0 %v3956
      %6106 = vmatprep.mubr.bf16.mxu0 %v1119
      %6107 = vmatmul.mubr.bf16.gmra.mrb[0].mxu0 %v1118
      %v6108 = vpop.f32.mrb[0].mxu0
      %v6109 = vadd.f32 %v6056, %v6108
      %v6110 = vpop.f32.mrb[0].mxu0
      %v6111 = vadd.f32 %v6058, %v6110
      %v6112 = vpop.f32.mrb[0].mxu0
      %v6113 = vadd.f32 %v6060, %v6112
      %v6114 = vpop.f32.mrb[0].mxu0
      %v6115 = vadd.f32 %v6062, %v6114
      %6116 = vmatprep.mubr.bf16.mxu0 %v1135
      %6117 = vmatmul.mubr.bf16.gmra.mrb[0].mxu0 %v1134
      %v6118 = vpop.f32.mrb[0].mxu0
      %v6119 = vadd.f32 %v6066, %v6118
      %v6120 = vpop.f32.mrb[0].mxu0
      %v6121 = vadd.f32 %v6068, %v6120
      %v6122 = vpop.f32.mrb[0].mxu0
      %v6123 = vadd.f32 %v6070, %v6122
      %v6124 = vpop.f32.mrb[0].mxu0
      %v6125 = vadd.f32 %v6072, %v6124
      %6126 = vdwg.mxu0
      %6127 = vmatprep.subr.bf16.mxu0 %v3963
      %6128 = vmatpush1.bf16.msra.mxu0 %v3962
      %6129 = vmatprep.subr.bf16.mxu0 %v3969
      %6130 = vmatpush1.bf16.msra.mxu0 %v3968
      %6131 = vmatprep.subr.bf16.mxu0 %v3975
      %6132 = vmatpush1.bf16.msra.mxu0 %v3974
      %6133 = vmatprep.subr.bf16.mxu0 %v3981
      %6134 = vmatpush1.bf16.msra.mxu0 %v3980
      %6135 = vmatprep.subr.bf16.mxu0 %v3987
      %6136 = vmatpush1.bf16.msra.mxu0 %v3986
      %6137 = vmatprep.subr.bf16.mxu0 %v3993
      %6138 = vmatpush1.bf16.msra.mxu0 %v3992
      %6139 = vmatprep.subr.bf16.mxu0 %v3999
      %6140 = vmatpush1.bf16.msra.mxu0 %v3998
      %6141 = vmatprep.subr.bf16.mxu0 %v4005
      %6142 = vmatpush1.bf16.msra.mxu0 %v4004
      %6143 = vmatprep.subr.bf16.mxu0 %v4011
      %6144 = vmatpush1.bf16.msra.mxu0 %v4010
      %6145 = vmatprep.subr.bf16.mxu0 %v4017
      %6146 = vmatpush1.bf16.msra.mxu0 %v4016
      %6147 = vmatprep.subr.bf16.mxu0 %v4023
      %6148 = vmatpush1.bf16.msra.mxu0 %v4022
      %6149 = vmatprep.subr.bf16.mxu0 %v4029
      %6150 = vmatpush1.bf16.msra.mxu0 %v4028
      %6151 = vmatprep.subr.bf16.mxu0 %v4035
      %6152 = vmatpush1.bf16.msra.mxu0 %v4034
      %6153 = vmatprep.subr.bf16.mxu0 %v4041
      %6154 = vmatpush1.bf16.msra.mxu0 %v4040
      %6155 = vmatprep.subr.bf16.mxu0 %v4047
      %6156 = vmatpush1.bf16.msra.mxu0 %v4046
      %6157 = vmatprep.subr.bf16.mxu0 %v4053
      %6158 = vmatpush1.bf16.msra.mxu0 %v4052
      %6159 = vmatprep.mubr.bf16.mxu0 %v1121
      %6160 = vmatmul.mubr.bf16.gmra.mrb[0].mxu0 %v1120
      %v6161 = vpop.f32.mrb[0].mxu0
      %v6162 = vadd.f32 %v6109, %v6161
      %v6163 = vpop.f32.mrb[0].mxu0
      %v6164 = vadd.f32 %v6111, %v6163
      %v6165 = vpop.f32.mrb[0].mxu0
      %v6166 = vadd.f32 %v6113, %v6165
      %v6167 = vpop.f32.mrb[0].mxu0
      %v6168 = vadd.f32 %v6115, %v6167
      %6169 = vmatprep.mubr.bf16.mxu0 %v1137
      %6170 = vmatmul.mubr.bf16.gmra.mrb[0].mxu0 %v1136
      %v6171 = vpop.f32.mrb[0].mxu0
      %v6172 = vadd.f32 %v6119, %v6171
      %v6173 = vpop.f32.mrb[0].mxu0
      %v6174 = vadd.f32 %v6121, %v6173
      %v6175 = vpop.f32.mrb[0].mxu0
      %v6176 = vadd.f32 %v6123, %v6175
      %v6177 = vpop.f32.mrb[0].mxu0
      %v6178 = vadd.f32 %v6125, %v6177
      %6179 = vdwg.mxu0
      %6180 = vmatprep.subr.bf16.mxu0 %v4059
      %6181 = vmatpush1.bf16.msra.mxu0 %v4058
      %6182 = vmatprep.subr.bf16.mxu0 %v4065
      %6183 = vmatpush1.bf16.msra.mxu0 %v4064
      %6184 = vmatprep.subr.bf16.mxu0 %v4071
      %6185 = vmatpush1.bf16.msra.mxu0 %v4070
      %6186 = vmatprep.subr.bf16.mxu0 %v4077
      %6187 = vmatpush1.bf16.msra.mxu0 %v4076
      %6188 = vmatprep.subr.bf16.mxu0 %v4083
      %6189 = vmatpush1.bf16.msra.mxu0 %v4082
      %6190 = vmatprep.subr.bf16.mxu0 %v4089
      %6191 = vmatpush1.bf16.msra.mxu0 %v4088
      %6192 = vmatprep.subr.bf16.mxu0 %v4095
      %6193 = vmatpush1.bf16.msra.mxu0 %v4094
      %6194 = vmatprep.subr.bf16.mxu0 %v4101
      %6195 = vmatpush1.bf16.msra.mxu0 %v4100
      %6196 = vmatprep.subr.bf16.mxu0 %v4107
      %6197 = vmatpush1.bf16.msra.mxu0 %v4106
      %6198 = vmatprep.subr.bf16.mxu0 %v4113
      %6199 = vmatpush1.bf16.msra.mxu0 %v4112
      %6200 = vmatprep.subr.bf16.mxu0 %v4119
      %6201 = vmatpush1.bf16.msra.mxu0 %v4118
      %6202 = vmatprep.subr.bf16.mxu0 %v4125
      %6203 = vmatpush1.bf16.msra.mxu0 %v4124
      %6204 = vmatprep.subr.bf16.mxu0 %v4131
      %6205 = vmatpush1.bf16.msra.mxu0 %v4130
      %6206 = vmatprep.subr.bf16.mxu0 %v4137
      %6207 = vmatpush1.bf16.msra.mxu0 %v4136
      %6208 = vmatprep.subr.bf16.mxu0 %v4143
      %6209 = vmatpush1.bf16.msra.mxu0 %v4142
      %6210 = vmatprep.subr.bf16.mxu0 %v4149
      %6211 = vmatpush1.bf16.msra.mxu0 %v4148
      %6212 = vmatprep.mubr.bf16.mxu0 %v1123
      %6213 = vmatmul.mubr.bf16.gmra.mrb[0].mxu0 %v1122
      %v6214 = vpop.f32.mrb[0].mxu0
      %v6215 = vadd.f32 %v6162, %v6214
      %v6216 = vpop.f32.mrb[0].mxu0
      %v6217 = vadd.f32 %v6164, %v6216
      %v6218 = vpop.f32.mrb[0].mxu0
      %v6219 = vadd.f32 %v6166, %v6218
      %v6220 = vpop.f32.mrb[0].mxu0
      %v6221 = vadd.f32 %v6168, %v6220
      %6222 = vmatprep.mubr.bf16.mxu0 %v1139
      %6223 = vmatmul.mubr.bf16.gmra.mrb[0].mxu0 %v1138
      %v6224 = vpop.f32.mrb[0].mxu0
      %v6225 = vadd.f32 %v6172, %v6224
      %v6226 = vpop.f32.mrb[0].mxu0
      %v6227 = vadd.f32 %v6174, %v6226
      %v6228 = vpop.f32.mrb[0].mxu0
      %v6229 = vadd.f32 %v6176, %v6228
      %v6230 = vpop.f32.mrb[0].mxu0
      %v6231 = vadd.f32 %v6178, %v6230
      %6232 = vdwg.mxu0
      %6233 = vmatprep.subr.bf16.mxu0 %v4155
      %6234 = vmatpush1.bf16.msra.mxu0 %v4154
      %6235 = vmatprep.subr.bf16.mxu0 %v4161
      %6236 = vmatpush1.bf16.msra.mxu0 %v4160
      %6237 = vmatprep.subr.bf16.mxu0 %v4167
      %6238 = vmatpush1.bf16.msra.mxu0 %v4166
      %6239 = vmatprep.subr.bf16.mxu0 %v4173
      %6240 = vmatpush1.bf16.msra.mxu0 %v4172
      %6241 = vmatprep.subr.bf16.mxu0 %v4179
      %6242 = vmatpush1.bf16.msra.mxu0 %v4178
      %6243 = vmatprep.subr.bf16.mxu0 %v4185
      %6244 = vmatpush1.bf16.msra.mxu0 %v4184
      %6245 = vmatprep.subr.bf16.mxu0 %v4191
      %6246 = vmatpush1.bf16.msra.mxu0 %v4190
      %6247 = vmatprep.subr.bf16.mxu0 %v4197
      %6248 = vmatpush1.bf16.msra.mxu0 %v4196
      %6249 = vmatprep.subr.bf16.mxu0 %v4203
      %6250 = vmatpush1.bf16.msra.mxu0 %v4202
      %6251 = vmatprep.subr.bf16.mxu0 %v4209
      %6252 = vmatpush1.bf16.msra.mxu0 %v4208
      %6253 = vmatprep.subr.bf16.mxu0 %v4215
      %6254 = vmatpush1.bf16.msra.mxu0 %v4214
      %6255 = vmatprep.subr.bf16.mxu0 %v4221
      %6256 = vmatpush1.bf16.msra.mxu0 %v4220
      %6257 = vmatprep.subr.bf16.mxu0 %v4227
      %6258 = vmatpush1.bf16.msra.mxu0 %v4226
      %6259 = vmatprep.subr.bf16.mxu0 %v4233
      %6260 = vmatpush1.bf16.msra.mxu0 %v4232
      %6261 = vmatprep.subr.bf16.mxu0 %v4239
      %6262 = vmatpush1.bf16.msra.mxu0 %v4238
      %6263 = vmatprep.subr.bf16.mxu0 %v4245
      %6264 = vmatpush1.bf16.msra.mxu0 %v4244
      %6265 = vmatprep.mubr.bf16.mxu0 %v1125
      %6266 = vmatmul.mubr.bf16.gmra.mrb[0].mxu0 %v1124
      %v6267 = vpop.f32.mrb[0].mxu0
      %v6268 = vadd.f32 %v6215, %v6267
      %v6269 = vpop.f32.mrb[0].mxu0
      %v6270 = vadd.f32 %v6217, %v6269
      %v6271 = vpop.f32.mrb[0].mxu0
      %v6272 = vadd.f32 %v6219, %v6271
      %v6273 = vpop.f32.mrb[0].mxu0
      %v6274 = vadd.f32 %v6221, %v6273
      %6275 = vmatprep.mubr.bf16.mxu0 %v1141
      %6276 = vmatmul.mubr.bf16.gmra.mrb[0].mxu0 %v1140
      %v6277 = vpop.f32.mrb[0].mxu0
      %v6278 = vadd.f32 %v6225, %v6277
      %v6279 = vpop.f32.mrb[0].mxu0
      %v6280 = vadd.f32 %v6227, %v6279
      %v6281 = vpop.f32.mrb[0].mxu0
      %v6282 = vadd.f32 %v6229, %v6281
      %v6283 = vpop.f32.mrb[0].mxu0
      %v6284 = vadd.f32 %v6231, %v6283
      %6285 = vdwg.mxu0
      %v6286 = vmul.f32 %v5420, %v5420
      %v6287 = vmul.f32 %v5422, %v5422
      %v6288 = vmul.f32 %v5844, %v5844
      %v6289 = vmul.f32 %v5424, %v5424
      %v6290 = vmul.f32 %v5426, %v5426
      %v6291 = vmul.f32 %v5848, %v5848
      %v6292 = vmul.f32 %v5846, %v5846
      %v6293 = vmul.f32 %v6268, %v6268
      %v6294 = vmul.f32 %v6270, %v6270
      %v6295 = vmul.f32 %v5850, %v5850
      %v6296 = vmul.f32 %v6272, %v6272
      %v6297 = vmul.f32 %v6274, %v6274
      %v6298 = vadd.f32 %v6286, %v6292
      %v6299 = vadd.f32 %v6287, %v6293
      %v6300 = vadd.f32 %v6288, %v6294
      %v6301 = vadd.f32 %v6289, %v6295
      %v6302 = vadd.f32 %v6290, %v6296
      %v6303 = vadd.f32 %v6291, %v6297
      %v6304 = vmul.f32 %v5430, %v5430
      %v6305 = vmul.f32 %v5432, %v5432
      %v6306 = vmul.f32 %v5854, %v5854
      %v6307 = vmul.f32 %v5434, %v5434
      %v6308 = vmul.f32 %v5436, %v5436
      %v6309 = vmul.f32 %v5858, %v5858
      %v6310 = vmul.f32 %v5856, %v5856
      %v6311 = vmul.f32 %v6278, %v6278
      %v6312 = vmul.f32 %v6280, %v6280
      %v6313 = vmul.f32 %v5860, %v5860
      %v6314 = vmul.f32 %v6282, %v6282
      %v6315 = vmul.f32 %v6284, %v6284
      %v6316 = vadd.f32 %v6304, %v6310
      %v6317 = vadd.f32 %v6305, %v6311
      %v6318 = vadd.f32 %v6306, %v6312
      %v6319 = vadd.f32 %v6307, %v6313
      %v6320 = vadd.f32 %v6308, %v6314
      %v6321 = vadd.f32 %v6309, %v6315
      %v6322 = vsub.f32 %v6298, %v6316
      %v6323 = vsub.f32 %v6299, %v6317
      %v6324 = vsub.f32 %v6300, %v6318
      %v6325 = vsub.f32 %v6301, %v6319
      %v6326 = vsub.f32 %v6302, %v6320
      %v6327 = vsub.f32 %v6303, %v6321
      %v6328 = vand.u32 2147483647, %v6322
      %v6329 = vand.u32 2147483647, %v6323
      %v6330 = vand.u32 2147483647, %v6324
      %v6331 = vand.u32 2147483647, %v6325
      %v6332 = vand.u32 2147483647, %v6326
      %v6333 = vand.u32 2147483647, %v6327
      %v6334 = vadd.f32 %v6298, 1e-10
      %v6335 = vadd.f32 %v6299, 1e-10
      %v6336 = vadd.f32 %v6300, 1e-10
      %v6337 = vadd.f32 %v6301, 1e-10
      %v6338 = vadd.f32 %v6302, 1e-10
      %v6339 = vadd.f32 %v6303, 1e-10
      %v6340 = vadd.f32 %v6316, 1e-10
      %v6341 = vadd.f32 %v6317, 1e-10
      %v6342 = vadd.f32 %v6318, 1e-10
      %v6343 = vadd.f32 %v6319, 1e-10
      %v6344 = vadd.f32 %v6320, 1e-10
      %v6345 = vadd.f32 %v6321, 1e-10
      %v6346 = vrcp.pop %v6340
      %v6347 = vmul.f32 %v6334, %v6346
      %v6348 = vrcp.pop %v6341
      %v6349 = vmul.f32 %v6335, %v6348
      %v6350 = vrcp.pop %v6342
      %v6351 = vmul.f32 %v6336, %v6350
      %v6352 = vrcp.pop %v6343
      %v6353 = vmul.f32 %v6337, %v6352
      %v6354 = vrcp.pop %v6344
      %v6355 = vmul.f32 %v6338, %v6354
      %v6356 = vrcp.pop %v6345
      %v6357 = vmul.f32 %v6339, %v6356
      %v6358 = vlog2.pop %v6347
      %v6359 = vmul.f32 %v6358, 0.6931472
      %v6360 = vlog2.pop %v6349
      %v6361 = vmul.f32 %v6360, 0.6931472
      %v6362 = vlog2.pop %v6351
      %v6363 = vmul.f32 %v6362, 0.6931472
      %v6364 = vlog2.pop %v6353
      %v6365 = vmul.f32 %v6364, 0.6931472
      %v6366 = vlog2.pop %v6355
      %v6367 = vmul.f32 %v6366, 0.6931472
      %v6368 = vlog2.pop %v6357
      %v6369 = vmul.f32 %v6368, 0.6931472
      %v6370 = vand.u32 2147483647, %v6359
      %v6371 = vand.u32 2147483647, %v6361
      %v6372 = vand.u32 2147483647, %v6363
      %v6373 = vand.u32 2147483647, %v6365
      %v6374 = vand.u32 2147483647, %v6367
      %v6375 = vand.u32 2147483647, %v6369
      %v6376 = vld [vmem:[%s195] sm:$0xff]
      %v6377 = vld [vmem:[%s195 + $0x8] sm:$0xff]
      %v6378 = vld [vmem:[%s195 + $0x10] sm:$0xff]
      %v6379 = vadd.f32 %v6328, %v6331
      %v6380 = vadd.f32 %v6329, %v6332
      %v6381 = vadd.f32 %v6330, %v6333
      %v6382 = vadd.f32 %v6376, %v6379
      %v6383 = vadd.f32 %v6377, %v6380
      %v6384 = vadd.f32 %v6378, %v6381
      %6385 = vst [vmem:[%s195] sm:$0xff] %v6382
      %6386 = vst [vmem:[%s195 + $0x8] sm:$0xff] %v6383
      %6387 = vst [vmem:[%s195 + $0x10] sm:$0xff] %v6384
      %v6388 = vld [vmem:[%s200] sm:$0xff]
      %v6389 = vld [vmem:[%s200 + $0x8] sm:$0xff]
      %v6390 = vld [vmem:[%s200 + $0x10] sm:$0xff]
      %v6391 = vadd.f32 %v6370, %v6373
      %v6392 = vadd.f32 %v6371, %v6374
      %v6393 = vadd.f32 %v6372, %v6375
      %v6394 = vadd.f32 %v6388, %v6391
      %v6395 = vadd.f32 %v6389, %v6392
      %v6396 = vadd.f32 %v6390, %v6393
      %6397 = vst [vmem:[%s200] sm:$0xff] %v6394
      %6398 = vst [vmem:[%s200 + $0x8] sm:$0xff] %v6395
      %6399 = vst [vmem:[%s200 + $0x10] sm:$0xff] %v6396
      %p6400 = scmp.lt.s32.totalorder %s19, 1
      %s6401 = scalar_select %p6400, %s19, 1
      %s6402 = smul.addr %s6401, 3
      %s6403 = smul.addr %s6402, 8
      %s6404 = scalar_lea.vmem %s2, %s6403
      %p6405 = scmp.lt.s32.totalorder %s19, 1
      %s6406 = scalar_select %p6405, %s19, 1
      %s6407 = smul.addr %s6406, 3
      %s6408 = smul.addr %s6407, 8
      %s6409 = scalar_lea.vmem %s3, %s6408
      // Predicated region
      $region33: #{multi_scale_spectral_loss.5} parent=27 // pred_check
        %p6410 = pneg %p92
      $region34: #{multi_scale_spectral_loss.5} parent=27 // pred_check_branch
        %6412 = sbr.rel (%p6410) target = $region36
      $region35: #{multi_scale_spectral_loss.5} parent=27 // pred_region
        _
      $region36: #{multi_scale_spectral_loss.5} parent=27 // pred_fallthru
        _
      // Predicated region
      $region37: #{multi_scale_spectral_loss.5} parent=27 // pred_check
        %p6413 = pneg %p118
      $region38: #{multi_scale_spectral_loss.5} parent=27 // pred_check_branch
        %6415 = sbr.rel (%p6413) target = $region40
      $region39: #{multi_scale_spectral_loss.5} parent=27 // pred_region
        _
      $region40: #{multi_scale_spectral_loss.5} parent=27 // pred_fallthru
        _
    $region28: #{multi_scale_spectral_loss.5} parent=5 // pred_fallthru
      _
    %p6416 = scmp.le.s32.totalorder 2, %s10
    // Predicated region
    $region41: #{multi_scale_spectral_loss.5} parent=5 // pred_check
      %p6417 = pneg %p6416
    $region42: #{multi_scale_spectral_loss.5} parent=5 // pred_check_branch
      %6419 = sbr.rel (%p6417) target = $region44
    $region43: #{multi_scale_spectral_loss.5} parent=5 // pred_region
      %s6420 = ssub.s32 %s10, 2
      // Predicated region
      $region45: #{multi_scale_spectral_loss.5} parent=43 // pred_check
        %p6421 = pneg %p98
      $region46: #{multi_scale_spectral_loss.5} parent=43 // pred_check_branch
        %6423 = sbr.rel (%p6421) target = $region48
      $region47: #{multi_scale_spectral_loss.5} parent=43 // pred_region
        %p6424 = scmp.lt.s32.totalorder %s21, 1
        %s6425 = scalar_select %p6424, %s21, 1
        %s6426 = smul.addr %s6425, 3
        %s6427 = smul.addr %s6426, 8
        %s6428 = scalar_lea.vmem %s2, %s6427
      $region48: #{multi_scale_spectral_loss.5} parent=43 // pred_fallthru
        _
      // Predicated region
      $region49: #{multi_scale_spectral_loss.5} parent=43 // pred_check
        %p6429 = pneg %p124
      $region50: #{multi_scale_spectral_loss.5} parent=43 // pred_check_branch
        %6431 = sbr.rel (%p6429) target = $region52
      $region51: #{multi_scale_spectral_loss.5} parent=43 // pred_region
        %p6432 = scmp.lt.s32.totalorder %s21, 1
        %s6433 = scalar_select %p6432, %s21, 1
        %s6434 = smul.addr %s6433, 3
        %s6435 = smul.addr %s6434, 8
        %s6436 = scalar_lea.vmem %s3, %s6435
      $region52: #{multi_scale_spectral_loss.5} parent=43 // pred_fallthru
        _
    $region44: #{multi_scale_spectral_loss.5} parent=5 // pred_fallthru
      _
  $region6: #{multi_scale_spectral_loss.5} parent=0 // loop_footer
    %s14 = sadd.s32 1, %s10
  $region7: #{multi_scale_spectral_loss.5} parent=0 // loop_footer_branch
    %9 = sbr.rel target = $region3
  $region8: #{multi_scale_spectral_loss.5} parent=0 // loop_exit
    _

// kernel: multi_scale_spectral_loss.7
$region0: #{multi_scale_spectral_loss.7}
  #allocation0 [shape = 'u32[]', space=smem, size = 0x4, offset = 0x4, fixed_abs, tag = 'smem constant byte address 0x4 - core index']
  #allocation1 [shape = 'u32[144,128]{1,0:T(1,128)}', space=vmem, size = 0x12000, scoped, tag = 'internal scratch']
  %s0 = inlined_call_operand.vmem [shape: bf16[288,256], index: 0, kind: input, shape index: {}]
  %s1 = inlined_call_operand.vmem [shape: bf16[1,256,512], index: 1, kind: input, shape index: {}]
  %s2 = inlined_call_operand.vmem [shape: f32[16,256], index: 2, kind: output, shape index: {0}]
  %s3 = inlined_call_operand.vmem [shape: f32[16,256], index: 3, kind: output, shape index: {1}]
  %4 = xla_tuple %s2, %s3
  %s5 = sld [smem:[#allocation0]]
  $region53: #{multi_scale_spectral_loss.7} parent=0
    _
  %s7 = ssub.s32 1, %s5
  %s8 = scalar_select 0, %s7, %s5
  loop: start=0, step=1, limit=4
  $region2: #{multi_scale_spectral_loss.7} parent=0 // loop_pre_header
    _
  $region3: #{multi_scale_spectral_loss.7} parent=0 // loop_header
    %s10 = sphi 0, %s14
    %p11 = scmp.ge.s32.totalorder %s10, 4
    %s17 = sphi 0, %s29
    %s18 = sphi 0, %s25
    %s19 = sphi 0, %s17
    %s20 = sphi 0, %s18
    %s21 = sphi 0, %s19
    %s22 = sphi 0, %s20
    %s32 = sphi 0, %s34
    %s35 = sphi 0, %s32
    %s36 = sphi 0, %s35
    %s52 = sphi 0, %s36
    %s56 = sphi 0, %s56
    %s58 = sphi 0, %s56
    %s59 = sphi 0, %s58
    %s73 = sphi 0, %s59
    %s79 = sphi 0, %s81
    %s82 = sphi 0, %s79
    %s83 = sphi 0, %s82
    %s99 = sphi 0, %s83
    %s105 = sphi 0, %s107
    %s108 = sphi 0, %s105
    %s109 = sphi 0, %s108
    %s125 = sphi 0, %s109
  $region4: #{multi_scale_spectral_loss.7} parent=0 // loop_header_branch
    %13 = sbr.rel (%p11) target = $region8
  $region5: #{multi_scale_spectral_loss.7} parent=0 // loop_body
    %s15 = ssub.s32 %s10, 1
    %s16 = ssub.s32 %s10, 2
    %s23 = sadd.s32 1, %s18
    %p24 = scmp.ge.s32.totalorder %s23, 1
    %s25 = scalar_select %p24, 0, %s23
    %s26 = sadd.s32 1, %s17
    %s27 = scalar_select %p24, %s26, %s17
    %p28 = scmp.ge.s32.totalorder %s27, 2
    %s29 = scalar_select %p28, 0, %s27
    %s30 = ssub.s32 %s17, %s29
    %p31 = scmp.eq.s32.totalorder %s30, 0
    %s33 = sadd.s32 %s32, 1
    %s34 = scalar_select %p31, %s32, %s33
    %p37 = pneg %p31
    %p38 = scmp.eq.s32.totalorder %s10, 1
    %p39 = por %p37, %p38
    %p40 = scmp.ne.s32.totalorder %s32, %s35
    %p41 = scmp.eq.s32.totalorder %s10, 0
    %p42 = por %p40, %p41
    %p43 = scmp.ne.s32.totalorder %s32, %s35
    %p44 = scmp.eq.s32.totalorder %s15, 1
    %p45 = por %p43, %p44
    %p46 = scmp.ne.s32.totalorder %s35, %s36
    %p47 = scmp.eq.s32.totalorder %s15, 0
    %p48 = por %p46, %p47
    %p49 = scmp.ne.s32.totalorder %s35, %s36
    %p50 = scmp.eq.s32.totalorder %s16, 1
    %p51 = por %p49, %p50
    %p53 = scmp.ne.s32.totalorder %s36, %s52
    %p54 = scmp.eq.s32.totalorder %s16, 0
    %p55 = por %p53, %p54
    %s57 = sadd.s32 %s56, 1
    %p60 = scmp.eq.s32.totalorder %s10, 1
    %p61 = scmp.ne.s32.totalorder %s56, %s58
    %p62 = scmp.eq.s32.totalorder %s10, 0
    %p63 = por %p61, %p62
    %p64 = scmp.ne.s32.totalorder %s56, %s58
    %p65 = scmp.eq.s32.totalorder %s15, 1
    %p66 = por %p64, %p65
    %p67 = scmp.ne.s32.totalorder %s58, %s59
    %p68 = scmp.eq.s32.totalorder %s15, 0
    %p69 = por %p67, %p68
    %p70 = scmp.ne.s32.totalorder %s58, %s59
    %p71 = scmp.eq.s32.totalorder %s16, 1
    %p72 = por %p70, %p71
    %p74 = scmp.ne.s32.totalorder %s59, %s73
    %p75 = scmp.eq.s32.totalorder %s16, 0
    %p76 = por %p74, %p75
    %s77 = ssub.s32 %s17, %s29
    %p78 = scmp.eq.s32.totalorder %s77, 0
    %s80 = sadd.s32 %s79, 1
    %s81 = scalar_select %p78, %s79, %s80
    %p84 = pneg %p78
    %p85 = scmp.eq.s32.totalorder %s10, 1
    %p86 = por %p84, %p85
    %p87 = scmp.ne.s32.totalorder %s79, %s82
    %p88 = scmp.eq.s32.totalorder %s10, 0
    %p89 = por %p87, %p88
    %p90 = scmp.ne.s32.totalorder %s79, %s82
    %p91 = scmp.eq.s32.totalorder %s15, 1
    %p92 = por %p90, %p91
    %p93 = scmp.ne.s32.totalorder %s82, %s83
    %p94 = scmp.eq.s32.totalorder %s15, 0
    %p95 = por %p93, %p94
    %p96 = scmp.ne.s32.totalorder %s82, %s83
    %p97 = scmp.eq.s32.totalorder %s16, 1
    %p98 = por %p96, %p97
    %p100 = scmp.ne.s32.totalorder %s83, %s99
    %p101 = scmp.eq.s32.totalorder %s16, 0
    %p102 = por %p100, %p101
    %s103 = ssub.s32 %s17, %s29
    %p104 = scmp.eq.s32.totalorder %s103, 0
    %s106 = sadd.s32 %s105, 1
    %s107 = scalar_select %p104, %s105, %s106
    %p110 = pneg %p104
    %p111 = scmp.eq.s32.totalorder %s10, 1
    %p112 = por %p110, %p111
    %p113 = scmp.ne.s32.totalorder %s105, %s108
    %p114 = scmp.eq.s32.totalorder %s10, 0
    %p115 = por %p113, %p114
    %p116 = scmp.ne.s32.totalorder %s105, %s108
    %p117 = scmp.eq.s32.totalorder %s15, 1
    %p118 = por %p116, %p117
    %p119 = scmp.ne.s32.totalorder %s108, %s109
    %p120 = scmp.eq.s32.totalorder %s15, 0
    %p121 = por %p119, %p120
    %p122 = scmp.ne.s32.totalorder %s108, %s109
    %p123 = scmp.eq.s32.totalorder %s16, 1
    %p124 = por %p122, %p123
    %p126 = scmp.ne.s32.totalorder %s109, %s125
    %p127 = scmp.eq.s32.totalorder %s16, 0
    %p128 = por %p126, %p127
    %p129 = scmp.le.s32.totalorder 1, %s10
    %p130 = scmp.lt.s32.totalorder %s10, 3
    %p131 = pnand %p129, %p130
    %p132 = pneg %p131
    // Predicated region
    $region9: #{multi_scale_spectral_loss.7} parent=5 // pred_check
      _
    $region10: #{multi_scale_spectral_loss.7} parent=5 // pred_check_branch
      %134 = sbr.rel (%p131) target = $region12
    $region11: #{multi_scale_spectral_loss.7} parent=5 // pred_region
      %s135 = ssub.s32 %s10, 1
      // Predicated region
      $region13: #{multi_scale_spectral_loss.7} parent=11 // pred_check
        %p136 = pneg %p69
      $region14: #{multi_scale_spectral_loss.7} parent=11 // pred_check_branch
        %138 = sbr.rel (%p136) target = $region16
      $region15: #{multi_scale_spectral_loss.7} parent=11 // pred_region
        _
      $region16: #{multi_scale_spectral_loss.7} parent=11 // pred_fallthru
        _
    $region12: #{multi_scale_spectral_loss.7} parent=5 // pred_fallthru
      _
    %p139 = scmp.lt.s32.totalorder %s10, 2
    // Predicated region
    $region17: #{multi_scale_spectral_loss.7} parent=5 // pred_check
      %p140 = pneg %p139
    $region18: #{multi_scale_spectral_loss.7} parent=5 // pred_check_branch
      %142 = sbr.rel (%p140) target = $region20
    $region19: #{multi_scale_spectral_loss.7} parent=5 // pred_region
      // Predicated region
      $region21: #{multi_scale_spectral_loss.7} parent=19 // pred_check
        %p143 = pneg %p42
      $region22: #{multi_scale_spectral_loss.7} parent=19 // pred_check_branch
        %145 = sbr.rel (%p143) target = $region24
      $region23: #{multi_scale_spectral_loss.7} parent=19 // pred_region
        %s146 = smul.u32 18, %s17
        %p147 = scmp.lt.s32.totalorder %s146, 35
        %s148 = scalar_select %p147, %s146, 35
        %s149 = smul.addr %s148, 2
        %s150 = smul.addr %s149, 4
        %s151 = scalar_lea.vmem %s0, %s150
        %s152 = smul.u32 18, %s17
      $region24: #{multi_scale_spectral_loss.7} parent=19 // pred_fallthru
        _
    $region20: #{multi_scale_spectral_loss.7} parent=5 // pred_fallthru
      _
    %p153 = scmp.le.s32.totalorder 1, %s10
    %p154 = scmp.lt.s32.totalorder %s10, 3
    %p155 = pnand %p153, %p154
    %p156 = pneg %p155
    // Predicated region
    $region25: #{multi_scale_spectral_loss.7} parent=5 // pred_check
      _
    $region26: #{multi_scale_spectral_loss.7} parent=5 // pred_check_branch
      %158 = sbr.rel (%p155) target = $region28
    $region27: #{multi_scale_spectral_loss.7} parent=5 // pred_region
      %s159 = ssub.s32 %s10, 1
      %s160 = smul.u32 18, %s19
      %p161 = scmp.lt.s32.totalorder %s160, 35
      %s162 = scalar_select %p161, %s160, 35
      %s163 = smul.addr %s162, 2
      %s164 = smul.addr %s163, 4
      %s165 = scalar_lea.vmem %s0, %s164
      %p166 = pneg %p48
      %p167 = pneg %p45
      %p168 = pneg %p69
      %p169 = pneg %p66
      %p170 = pneg %p95
      %p171 = pneg %p92
      %p172 = scmp.lt.s32.totalorder %s19, 1
      %s173 = scalar_select %p172, %s19, 1
      %s174 = smul.addr %s173, 2
      %s175 = smul.addr %s174, 8
      %s176 = scalar_lea.vmem %s2, %s175
      %p177 = pneg %p121
      %p178 = pneg %p118
      %p179 = scmp.lt.s32.totalorder %s19, 1
      %s180 = scalar_select %p179, %s19, 1
      %s181 = smul.addr %s180, 2
      %s182 = smul.addr %s181, 8
      %s183 = scalar_lea.vmem %s3, %s182
      %s184 = smul.u32 18, %s19
      %p185 = scmp.lt.s32.totalorder %s184, 35
      %s186 = scalar_select %p185, %s184, 35
      %s187 = smul.addr %s186, 2
      %s188 = smul.addr %s187, 4
      %s189 = scalar_lea.vmem %s0, %s188
      %s190 = smul.u32 18, %s19
      %p191 = scmp.lt.s32.totalorder %s19, 1
      %s192 = scalar_select %p191, %s19, 1
      %s193 = smul.addr %s192, 2
      %s194 = smul.addr %s193, 8
      %s195 = scalar_lea.vmem %s2, %s194
      %p196 = scmp.lt.s32.totalorder %s19, 1
      %s197 = scalar_select %p196, %s19, 1
      %s198 = smul.addr %s197, 2
      %s199 = smul.addr %s198, 8
      %s200 = scalar_lea.vmem %s3, %s199
      %p201 = scmp.eq.s32.totalorder %s20, 0
      // Predicated region
      $region29: #{multi_scale_spectral_loss.7} parent=27 // pred_check
        %p202 = pneg %p201
      $region30: #{multi_scale_spectral_loss.7} parent=27 // pred_check_branch
        %204 = sbr.rel (%p202) target = $region32
      $region31: #{multi_scale_spectral_loss.7} parent=27 // pred_region
        %205 = vst [vmem:[%s195] sm:$0xff] 0.0
        %206 = vst [vmem:[%s195 + $0x8] sm:$0xff] 0.0
        %207 = vst [vmem:[%s200] sm:$0xff] 0.0
        %208 = vst [vmem:[%s200 + $0x8] sm:$0xff] 0.0
      $region32: #{multi_scale_spectral_loss.7} parent=27 // pred_fallthru
        _
      %v209 = vld [vmem:[%s189] sm:$0xff]
      %v210 = vld [vmem:[%s189 + $0x8] sm:$0xff]
      %v211 = vld [vmem:[%s189 + $0x10] sm:$0xff]
      %v212 = vld [vmem:[%s189 + $0x18] sm:$0xff]
      %v213 = vld [vmem:[%s189 + $0x20] sm:$0xff]
      %v214 = vld [vmem:[%s189 + $0x28] sm:$0xff]
      %v215 = vld [vmem:[%s189 + $0x30] sm:$0xff]
      %v216 = vld [vmem:[%s189 + $0x38] sm:$0xff]
      %v217 = vld [vmem:[%s189 + $0x40] sm:$0xff]
      %v218 = vld [vmem:[%s189 + $0x48] sm:$0xff]
      %v219 = vld [vmem:[%s189 + $0x50] sm:$0xff]
      %v220 = vld [vmem:[%s189 + $0x58] sm:$0xff]
      %v221 = vld [vmem:[%s189 + $0x60] sm:$0xff]
      %v222 = vld [vmem:[%s189 + $0x68] sm:$0xff]
      %v223 = vld [vmem:[%s189 + $0x70] sm:$0xff]
      %v224 = vld [vmem:[%s189 + $0x78] sm:$0xff]
      %v225 = vld [vmem:[%s189 + $0x80] sm:$0xff]
      %v226 = vld [vmem:[%s189 + $0x88] sm:$0xff]
      %v227 = vld [vmem:[%s1] sm:$0xff]
      %v228 = vld [vmem:[%s1 + $0x8] sm:$0xff]
      %v229 = vld [vmem:[%s1 + $0x10] sm:$0xff]
      %v230 = vld [vmem:[%s1 + $0x18] sm:$0xff]
      %v231 = vld [vmem:[%s1 + $0x20] sm:$0xff]
      %v232 = vld [vmem:[%s1 + $0x28] sm:$0xff]
      %v233 = vld [vmem:[%s1 + $0x30] sm:$0xff]
      %v234 = vld [vmem:[%s1 + $0x38] sm:$0xff]
      %v235 = vld [vmem:[%s1 + $0x40] sm:$0xff]
      %v236 = vld [vmem:[%s1 + $0x48] sm:$0xff]
      %v237 = vld [vmem:[%s1 + $0x50] sm:$0xff]
      %v238 = vld [vmem:[%s1 + $0x58] sm:$0xff]
      %v239 = vld [vmem:[%s1 + $0x60] sm:$0xff]
      %v240 = vld [vmem:[%s1 + $0x68] sm:$0xff]
      %v241 = vld [vmem:[%s1 + $0x70] sm:$0xff]
      %v242 = vld [vmem:[%s1 + $0x78] sm:$0xff]
      %v243 = vld [vmem:[%s1 + $0x80] sm:$0xff]
      %v244 = vld [vmem:[%s1 + $0x88] sm:$0xff]
      %v245 = vld [vmem:[%s1 + $0x90] sm:$0xff]
      %v246 = vld [vmem:[%s1 + $0x98] sm:$0xff]
      %v247 = vld [vmem:[%s1 + $0xa0] sm:$0xff]
      %v248 = vld [vmem:[%s1 + $0xa8] sm:$0xff]
      %v249 = vld [vmem:[%s1 + $0xb0] sm:$0xff]
      %v250 = vld [vmem:[%s1 + $0xb8] sm:$0xff]
      %v251 = vld [vmem:[%s1 + $0xc0] sm:$0xff]
      %v252 = vld [vmem:[%s1 + $0xc8] sm:$0xff]
      %v253 = vld [vmem:[%s1 + $0xd0] sm:$0xff]
      %v254 = vld [vmem:[%s1 + $0xd8] sm:$0xff]
      %v255 = vld [vmem:[%s1 + $0xe0] sm:$0xff]
      %v256 = vld [vmem:[%s1 + $0xe8] sm:$0xff]
      %v257 = vld [vmem:[%s1 + $0xf0] sm:$0xff]
      %v258 = vld [vmem:[%s1 + $0xf8] sm:$0xff]
      %v259 = vld [vmem:[%s1 + $0x100] sm:$0xff]
      %v260 = vld [vmem:[%s1 + $0x108] sm:$0xff]
      %v261 = vld [vmem:[%s1 + $0x110] sm:$0xff]
      %v262 = vld [vmem:[%s1 + $0x118] sm:$0xff]
      %v263 = vld [vmem:[%s1 + $0x120] sm:$0xff]
      %v264 = vld [vmem:[%s1 + $0x128] sm:$0xff]
      %v265 = vld [vmem:[%s1 + $0x130] sm:$0xff]
      %v266 = vld [vmem:[%s1 + $0x138] sm:$0xff]
      %v267 = vld [vmem:[%s1 + $0x140] sm:$0xff]
      %v268 = vld [vmem:[%s1 + $0x148] sm:$0xff]
      %v269 = vld [vmem:[%s1 + $0x150] sm:$0xff]
      %v270 = vld [vmem:[%s1 + $0x158] sm:$0xff]
      %v271 = vld [vmem:[%s1 + $0x160] sm:$0xff]
      %v272 = vld [vmem:[%s1 + $0x168] sm:$0xff]
      %v273 = vld [vmem:[%s1 + $0x170] sm:$0xff]
      %v274 = vld [vmem:[%s1 + $0x178] sm:$0xff]
      %v275 = vld [vmem:[%s1 + $0x180] sm:$0xff]
      %v276 = vld [vmem:[%s1 + $0x188] sm:$0xff]
      %v277 = vld [vmem:[%s1 + $0x190] sm:$0xff]
      %v278 = vld [vmem:[%s1 + $0x198] sm:$0xff]
      %v279 = vld [vmem:[%s1 + $0x1a0] sm:$0xff]
      %v280 = vld [vmem:[%s1 + $0x1a8] sm:$0xff]
      %v281 = vld [vmem:[%s1 + $0x1b0] sm:$0xff]
      %v282 = vld [vmem:[%s1 + $0x1b8] sm:$0xff]
      %v283 = vld [vmem:[%s1 + $0x1c0] sm:$0xff]
      %v284 = vld [vmem:[%s1 + $0x1c8] sm:$0xff]
      %v285 = vld [vmem:[%s1 + $0x1d0] sm:$0xff]
      %v286 = vld [vmem:[%s1 + $0x1d8] sm:$0xff]
      %v287 = vld [vmem:[%s1 + $0x1e0] sm:$0xff]
      %v288 = vld [vmem:[%s1 + $0x1e8] sm:$0xff]
      %v289 = vld [vmem:[%s1 + $0x1f0] sm:$0xff]
      %v290 = vld [vmem:[%s1 + $0x1f8] sm:$0xff]
      %v309 = vunpack.c.l.b16 %v209
      %v310 = vunpack.c.h.b16 %v209
      %v311 = vunpack.c.l.b16 %v210
      %v312 = vunpack.c.h.b16 %v210
      %v313 = vunpack.c.l.b16 %v211
      %v314 = vunpack.c.h.b16 %v211
      %v315 = vunpack.c.l.b16 %v212
      %v316 = vunpack.c.h.b16 %v212
      %v317 = vunpack.c.l.b16 %v213
      %v318 = vunpack.c.h.b16 %v213
      %v319 = vunpack.c.l.b16 %v214
      %v320 = vunpack.c.h.b16 %v214
      %v321 = vunpack.c.l.b16 %v215
      %v322 = vunpack.c.h.b16 %v215
      %v323 = vunpack.c.l.b16 %v216
      %v324 = vunpack.c.h.b16 %v216
      %v325 = vunpack.c.l.b16 %v217
      %v326 = vunpack.c.h.b16 %v217
      %v327 = vunpack.c.l.b16 %v218
      %v328 = vunpack.c.h.b16 %v218
      %v329 = vunpack.c.l.b16 %v219
      %v330 = vunpack.c.h.b16 %v219
      %v331 = vunpack.c.l.b16 %v220
      %v332 = vunpack.c.h.b16 %v220
      %v333 = vunpack.c.l.b16 %v221
      %v334 = vunpack.c.h.b16 %v221
      %v335 = vunpack.c.l.b16 %v222
      %v336 = vunpack.c.h.b16 %v222
      %v337 = vunpack.c.l.b16 %v223
      %v338 = vunpack.c.h.b16 %v223
      %v339 = vunpack.c.l.b16 %v224
      %v340 = vunpack.c.h.b16 %v224
      %v341 = vunpack.c.l.b16 %v225
      %v342 = vunpack.c.h.b16 %v225
      %v343 = vunpack.c.l.b16 %v226
      %v344 = vunpack.c.h.b16 %v226
      %v345 = vpack.c.b16 %v311, %v309
      %v346 = vpack.c.b16 %v312, %v310
      %v347 = vpack.c.b16 %v315, %v313
      %v348 = vpack.c.b16 %v316, %v314
      %v349 = vpack.c.b16 %v319, %v317
      %v350 = vpack.c.b16 %v320, %v318
      %v351 = vpack.c.b16 %v323, %v321
      %v352 = vpack.c.b16 %v324, %v322
      %v353 = vpack.c.b16 %v327, %v325
      %v354 = vpack.c.b16 %v328, %v326
      %v355 = vpack.c.b16 %v331, %v329
      %v356 = vpack.c.b16 %v332, %v330
      %v357 = vpack.c.b16 %v335, %v333
      %v358 = vpack.c.b16 %v336, %v334
      %v359 = vpack.c.b16 %v339, %v337
      %v360 = vpack.c.b16 %v340, %v338
      %v361 = vpack.c.b16 %v343, %v341
      %v362 = vpack.c.b16 %v344, %v342
      %v445 = vunpack.c.l.b16 %v227
      %v446 = vunpack.c.h.b16 %v227
      %v447 = vunpack.c.l.b16 %v228
      %v448 = vunpack.c.h.b16 %v228
      %v449 = vunpack.c.l.b16 %v229
      %v450 = vunpack.c.h.b16 %v229
      %v451 = vunpack.c.l.b16 %v230
      %v452 = vunpack.c.h.b16 %v230
      %v453 = vunpack.c.l.b16 %v231
      %v454 = vunpack.c.h.b16 %v231
      %v455 = vunpack.c.l.b16 %v232
      %v456 = vunpack.c.h.b16 %v232
      %v457 = vunpack.c.l.b16 %v233
      %v458 = vunpack.c.h.b16 %v233
      %v459 = vunpack.c.l.b16 %v234
      %v460 = vunpack.c.h.b16 %v234
      %v461 = vunpack.c.l.b16 %v235
      %v462 = vunpack.c.h.b16 %v235
      %v463 = vunpack.c.l.b16 %v236
      %v464 = vunpack.c.h.b16 %v236
      %v465 = vunpack.c.l.b16 %v237
      %v466 = vunpack.c.h.b16 %v237
      %v467 = vunpack.c.l.b16 %v238
      %v468 = vunpack.c.h.b16 %v238
      %v469 = vunpack.c.l.b16 %v239
      %v470 = vunpack.c.h.b16 %v239
      %v471 = vunpack.c.l.b16 %v240
      %v472 = vunpack.c.h.b16 %v240
      %v473 = vunpack.c.l.b16 %v241
      %v474 = vunpack.c.h.b16 %v241
      %v475 = vunpack.c.l.b16 %v242
      %v476 = vunpack.c.h.b16 %v242
      %v477 = vunpack.c.l.b16 %v243
      %v478 = vunpack.c.h.b16 %v243
      %v479 = vunpack.c.l.b16 %v244
      %v480 = vunpack.c.h.b16 %v244
      %v481 = vunpack.c.l.b16 %v245
      %v482 = vunpack.c.h.b16 %v245
      %v483 = vunpack.c.l.b16 %v246
      %v484 = vunpack.c.h.b16 %v246
      %v485 = vunpack.c.l.b16 %v247
      %v486 = vunpack.c.h.b16 %v247
      %v487 = vunpack.c.l.b16 %v248
      %v488 = vunpack.c.h.b16 %v248
      %v489 = vunpack.c.l.b16 %v249
      %v490 = vunpack.c.h.b16 %v249
      %v491 = vunpack.c.l.b16 %v250
      %v492 = vunpack.c.h.b16 %v250
      %v493 = vunpack.c.l.b16 %v251
      %v494 = vunpack.c.h.b16 %v251
      %v495 = vunpack.c.l.b16 %v252
      %v496 = vunpack.c.h.b16 %v252
      %v497 = vunpack.c.l.b16 %v253
      %v498 = vunpack.c.h.b16 %v253
      %v499 = vunpack.c.l.b16 %v254
      %v500 = vunpack.c.h.b16 %v254
      %v501 = vunpack.c.l.b16 %v255
      %v502 = vunpack.c.h.b16 %v255
      %v503 = vunpack.c.l.b16 %v256
      %v504 = vunpack.c.h.b16 %v256
      %v505 = vunpack.c.l.b16 %v257
      %v506 = vunpack.c.h.b16 %v257
      %v507 = vunpack.c.l.b16 %v258
      %v508 = vunpack.c.h.b16 %v258
      %v509 = vunpack.c.l.b16 %v259
      %v510 = vunpack.c.h.b16 %v259
      %v511 = vunpack.c.l.b16 %v260
      %v512 = vunpack.c.h.b16 %v260
      %v513 = vunpack.c.l.b16 %v261
      %v514 = vunpack.c.h.b16 %v261
      %v515 = vunpack.c.l.b16 %v262
      %v516 = vunpack.c.h.b16 %v262
      %v517 = vunpack.c.l.b16 %v263
      %v518 = vunpack.c.h.b16 %v263
      %v519 = vunpack.c.l.b16 %v264
      %v520 = vunpack.c.h.b16 %v264
      %v521 = vunpack.c.l.b16 %v265
      %v522 = vunpack.c.h.b16 %v265
      %v523 = vunpack.c.l.b16 %v266
      %v524 = vunpack.c.h.b16 %v266
      %v525 = vunpack.c.l.b16 %v267
      %v526 = vunpack.c.h.b16 %v267
      %v527 = vunpack.c.l.b16 %v268
      %v528 = vunpack.c.h.b16 %v268
      %v529 = vunpack.c.l.b16 %v269
      %v530 = vunpack.c.h.b16 %v269
      %v531 = vunpack.c.l.b16 %v270
      %v532 = vunpack.c.h.b16 %v270
      %v533 = vunpack.c.l.b16 %v271
      %v534 = vunpack.c.h.b16 %v271
      %v535 = vunpack.c.l.b16 %v272
      %v536 = vunpack.c.h.b16 %v272
      %v537 = vunpack.c.l.b16 %v273
      %v538 = vunpack.c.h.b16 %v273
      %v539 = vunpack.c.l.b16 %v274
      %v540 = vunpack.c.h.b16 %v274
      %v541 = vunpack.c.l.b16 %v275
      %v542 = vunpack.c.h.b16 %v275
      %v543 = vunpack.c.l.b16 %v276
      %v544 = vunpack.c.h.b16 %v276
      %v545 = vunpack.c.l.b16 %v277
      %v546 = vunpack.c.h.b16 %v277
      %v547 = vunpack.c.l.b16 %v278
      %v548 = vunpack.c.h.b16 %v278
      %v549 = vunpack.c.l.b16 %v279
      %v550 = vunpack.c.h.b16 %v279
      %v551 = vunpack.c.l.b16 %v280
      %v552 = vunpack.c.h.b16 %v280
      %v553 = vunpack.c.l.b16 %v281
      %v554 = vunpack.c.h.b16 %v281
      %v555 = vunpack.c.l.b16 %v282
      %v556 = vunpack.c.h.b16 %v282
      %v557 = vunpack.c.l.b16 %v283
      %v558 = vunpack.c.h.b16 %v283
      %v559 = vunpack.c.l.b16 %v284
      %v560 = vunpack.c.h.b16 %v284
      %v561 = vunpack.c.l.b16 %v285
      %v562 = vunpack.c.h.b16 %v285
      %v563 = vunpack.c.l.b16 %v286
      %v564 = vunpack.c.h.b16 %v286
      %v565 = vunpack.c.l.b16 %v287
      %v566 = vunpack.c.h.b16 %v287
      %v567 = vunpack.c.l.b16 %v288
      %v568 = vunpack.c.h.b16 %v288
      %v569 = vunpack.c.l.b16 %v289
      %v570 = vunpack.c.h.b16 %v289
      %v571 = vunpack.c.l.b16 %v290
      %v572 = vunpack.c.h.b16 %v290
      %v573 = vpack.c.b16 %v449, %v445
      %v574 = vpack.c.b16 %v450, %v446
      %v575 = vpack.c.b16 %v451, %v447
      %v576 = vpack.c.b16 %v452, %v448
      %v577 = vpack.c.b16 %v457, %v453
      %v578 = vpack.c.b16 %v458, %v454
      %v579 = vpack.c.b16 %v459, %v455
      %v580 = vpack.c.b16 %v460, %v456
      %v581 = vpack.c.b16 %v465, %v461
      %v582 = vpack.c.b16 %v466, %v462
      %v583 = vpack.c.b16 %v467, %v463
      %v584 = vpack.c.b16 %v468, %v464
      %v585 = vpack.c.b16 %v473, %v469
      %v586 = vpack.c.b16 %v474, %v470
      %v587 = vpack.c.b16 %v475, %v471
      %v588 = vpack.c.b16 %v476, %v472
      %v589 = vpack.c.b16 %v481, %v477
      %v590 = vpack.c.b16 %v482, %v478
      %v591 = vpack.c.b16 %v483, %v479
      %v592 = vpack.c.b16 %v484, %v480
      %v593 = vpack.c.b16 %v489, %v485
      %v594 = vpack.c.b16 %v490, %v486
      %v595 = vpack.c.b16 %v491, %v487
      %v596 = vpack.c.b16 %v492, %v488
      %v597 = vpack.c.b16 %v497, %v493
      %v598 = vpack.c.b16 %v498, %v494
      %v599 = vpack.c.b16 %v499, %v495
      %v600 = vpack.c.b16 %v500, %v496
      %v601 = vpack.c.b16 %v505, %v501
      %v602 = vpack.c.b16 %v506, %v502
      %v603 = vpack.c.b16 %v507, %v503
      %v604 = vpack.c.b16 %v508, %v504
      %v605 = vpack.c.b16 %v513, %v509
      %v606 = vpack.c.b16 %v514, %v510
      %v607 = vpack.c.b16 %v515, %v511
      %v608 = vpack.c.b16 %v516, %v512
      %v609 = vpack.c.b16 %v521, %v517
      %v610 = vpack.c.b16 %v522, %v518
      %v611 = vpack.c.b16 %v523, %v519
      %v612 = vpack.c.b16 %v524, %v520
      %v613 = vpack.c.b16 %v529, %v525
      %v614 = vpack.c.b16 %v530, %v526
      %v615 = vpack.c.b16 %v531, %v527
      %v616 = vpack.c.b16 %v532, %v528
      %v617 = vpack.c.b16 %v537, %v533
      %v618 = vpack.c.b16 %v538, %v534
      %v619 = vpack.c.b16 %v539, %v535
      %v620 = vpack.c.b16 %v540, %v536
      %v621 = vpack.c.b16 %v545, %v541
      %v622 = vpack.c.b16 %v546, %v542
      %v623 = vpack.c.b16 %v547, %v543
      %v624 = vpack.c.b16 %v548, %v544
      %v625 = vpack.c.b16 %v553, %v549
      %v626 = vpack.c.b16 %v554, %v550
      %v627 = vpack.c.b16 %v555, %v551
      %v628 = vpack.c.b16 %v556, %v552
      %v629 = vpack.c.b16 %v561, %v557
      %v630 = vpack.c.b16 %v562, %v558
      %v631 = vpack.c.b16 %v563, %v559
      %v632 = vpack.c.b16 %v564, %v560
      %v633 = vpack.c.b16 %v569, %v565
      %v634 = vpack.c.b16 %v570, %v566
      %v635 = vpack.c.b16 %v571, %v567
      %v636 = vpack.c.b16 %v572, %v568
      %701 = vmatprep.subr.bf16.mxu0 %v574
      %702 = vmatpush1.bf16.msra.mxu0 %v573
      %703 = vmatprep.subr.bf16.mxu0 %v578
      %704 = vmatpush1.bf16.msra.mxu0 %v577
      %705 = vmatprep.subr.bf16.mxu0 %v582
      %706 = vmatpush1.bf16.msra.mxu0 %v581
      %707 = vmatprep.subr.bf16.mxu0 %v586
      %708 = vmatpush1.bf16.msra.mxu0 %v585
      %709 = vmatprep.subr.bf16.mxu0 %v590
      %710 = vmatpush1.bf16.msra.mxu0 %v589
      %711 = vmatprep.subr.bf16.mxu0 %v594
      %712 = vmatpush1.bf16.msra.mxu0 %v593
      %713 = vmatprep.subr.bf16.mxu0 %v598
      %714 = vmatpush1.bf16.msra.mxu0 %v597
      %715 = vmatprep.subr.bf16.mxu0 %v602
      %716 = vmatpush1.bf16.msra.mxu0 %v601
      %717 = vmatprep.subr.bf16.mxu0 %v606
      %718 = vmatpush1.bf16.msra.mxu0 %v605
      %719 = vmatprep.subr.bf16.mxu0 %v610
      %720 = vmatpush1.bf16.msra.mxu0 %v609
      %721 = vmatprep.subr.bf16.mxu0 %v614
      %722 = vmatpush1.bf16.msra.mxu0 %v613
      %723 = vmatprep.subr.bf16.mxu0 %v618
      %724 = vmatpush1.bf16.msra.mxu0 %v617
      %725 = vmatprep.subr.bf16.mxu0 %v622
      %726 = vmatpush1.bf16.msra.mxu0 %v621
      %727 = vmatprep.subr.bf16.mxu0 %v626
      %728 = vmatpush1.bf16.msra.mxu0 %v625
      %729 = vmatprep.subr.bf16.mxu0 %v630
      %730 = vmatpush1.bf16.msra.mxu0 %v629
      %731 = vmatprep.subr.bf16.mxu0 %v634
      %732 = vmatpush1.bf16.msra.mxu0 %v633
      %733 = vmatprep.mubr.bf16.mxu0 %v346
      %734 = vmatmul.mubr.bf16.gmra.mrb[0].mxu0 %v345
      %v735 = vpop.f32.mrb[0].mxu0
      %v736 = vadd.f32 0.0, %v735
      %v737 = vpop.f32.mrb[0].mxu0
      %v738 = vadd.f32 0.0, %v737
      %v739 = vpop.f32.mrb[0].mxu0
      %v740 = vadd.f32 0.0, %v739
      %v741 = vpop.f32.mrb[0].mxu0
      %v742 = vadd.f32 0.0, %v741
      %743 = vmatprep.mubr.bf16.mxu0 %v348
      %744 = vmatmul.mubr.bf16.gmra.mrb[0].mxu0 %v347
      %v745 = vpop.f32.mrb[0].mxu0
      %v746 = vadd.f32 0.0, %v745
      %v747 = vpop.f32.mrb[0].mxu0
      %v748 = vadd.f32 0.0, %v747
      %v749 = vpop.f32.mrb[0].mxu0
      %v750 = vadd.f32 0.0, %v749
      %v751 = vpop.f32.mrb[0].mxu0
      %v752 = vadd.f32 0.0, %v751
      %753 = vmatprep.mubr.bf16.mxu0 %v350
      %754 = vmatmul.mubr.bf16.gmra.mrb[0].mxu0 %v349
      %v755 = vpop.f32.mrb[0].mxu0
      %v756 = vadd.f32 0.0, %v755
      %v757 = vpop.f32.mrb[0].mxu0
      %v758 = vadd.f32 0.0, %v757
      %v759 = vpop.f32.mrb[0].mxu0
      %v760 = vadd.f32 0.0, %v759
      %v761 = vpop.f32.mrb[0].mxu0
      %v762 = vadd.f32 0.0, %v761
      %763 = vmatprep.mubr.bf16.mxu0 %v352
      %764 = vmatmul.mubr.bf16.gmra.mrb[0].mxu0 %v351
      %v765 = vpop.f32.mrb[0].mxu0
      %v766 = vadd.f32 0.0, %v765
      %v767 = vpop.f32.mrb[0].mxu0
      %v768 = vadd.f32 0.0, %v767
      %v769 = vpop.f32.mrb[0].mxu0
      %v770 = vadd.f32 0.0, %v769
      %v771 = vpop.f32.mrb[0].mxu0
      %v772 = vadd.f32 0.0, %v771
      %773 = vmatprep.mubr.bf16.mxu0 %v354
      %774 = vmatmul.mubr.bf16.gmra.mrb[0].mxu0 %v353
      %v775 = vpop.f32.mrb[0].mxu0
      %v776 = vadd.f32 0.0, %v775
      %v777 = vpop.f32.mrb[0].mxu0
      %v778 = vadd.f32 0.0, %v777
      %v779 = vpop.f32.mrb[0].mxu0
      %v780 = vadd.f32 0.0, %v779
      %v781 = vpop.f32.mrb[0].mxu0
      %v782 = vadd.f32 0.0, %v781
      %783 = vmatprep.mubr.bf16.mxu0 %v356
      %784 = vmatmul.mubr.bf16.gmra.mrb[0].mxu0 %v355
      %v785 = vpop.f32.mrb[0].mxu0
      %v786 = vadd.f32 0.0, %v785
      %v787 = vpop.f32.mrb[0].mxu0
      %v788 = vadd.f32 0.0, %v787
      %v789 = vpop.f32.mrb[0].mxu0
      %v790 = vadd.f32 0.0, %v789
      %v791 = vpop.f32.mrb[0].mxu0
      %v792 = vadd.f32 0.0, %v791
      %793 = vmatprep.mubr.bf16.mxu0 %v358
      %794 = vmatmul.mubr.bf16.gmra.mrb[0].mxu0 %v357
      %v795 = vpop.f32.mrb[0].mxu0
      %v796 = vadd.f32 0.0, %v795
      %v797 = vpop.f32.mrb[0].mxu0
      %v798 = vadd.f32 0.0, %v797
      %v799 = vpop.f32.mrb[0].mxu0
      %v800 = vadd.f32 0.0, %v799
      %v801 = vpop.f32.mrb[0].mxu0
      %v802 = vadd.f32 0.0, %v801
      %803 = vmatprep.mubr.bf16.mxu0 %v360
      %804 = vmatmul.mubr.bf16.gmra.mrb[0].mxu0 %v359
      %v805 = vpop.f32.mrb[0].mxu0
      %v806 = vadd.f32 0.0, %v805
      %v807 = vpop.f32.mrb[0].mxu0
      %v808 = vadd.f32 0.0, %v807
      %v809 = vpop.f32.mrb[0].mxu0
      %v810 = vadd.f32 0.0, %v809
      %v811 = vpop.f32.mrb[0].mxu0
      %v812 = vadd.f32 0.0, %v811
      %813 = vmatprep.mubr.bf16.mxu0 %v362
      %814 = vmatmul.mubr.bf16.gmra.mrb[0].mxu0 %v361
      %v815 = vpop.f32.mrb[0].mxu0
      %v816 = vadd.f32 0.0, %v815
      %v817 = vpop.f32.mrb[0].mxu0
      %v818 = vadd.f32 0.0, %v817
      %v819 = vpop.f32.mrb[0].mxu0
      %v820 = vadd.f32 0.0, %v819
      %v821 = vpop.f32.mrb[0].mxu0
      %v822 = vadd.f32 0.0, %v821
      %823 = vdwg.mxu0
      %824 = vmatprep.subr.bf16.mxu0 %v576
      %825 = vmatpush1.bf16.msra.mxu0 %v575
      %826 = vmatprep.subr.bf16.mxu0 %v580
      %827 = vmatpush1.bf16.msra.mxu0 %v579
      %828 = vmatprep.subr.bf16.mxu0 %v584
      %829 = vmatpush1.bf16.msra.mxu0 %v583
      %830 = vmatprep.subr.bf16.mxu0 %v588
      %831 = vmatpush1.bf16.msra.mxu0 %v587
      %832 = vmatprep.subr.bf16.mxu0 %v592
      %833 = vmatpush1.bf16.msra.mxu0 %v591
      %834 = vmatprep.subr.bf16.mxu0 %v596
      %835 = vmatpush1.bf16.msra.mxu0 %v595
      %836 = vmatprep.subr.bf16.mxu0 %v600
      %837 = vmatpush1.bf16.msra.mxu0 %v599
      %838 = vmatprep.subr.bf16.mxu0 %v604
      %839 = vmatpush1.bf16.msra.mxu0 %v603
      %840 = vmatprep.subr.bf16.mxu0 %v608
      %841 = vmatpush1.bf16.msra.mxu0 %v607
      %842 = vmatprep.subr.bf16.mxu0 %v612
      %843 = vmatpush1.bf16.msra.mxu0 %v611
      %844 = vmatprep.subr.bf16.mxu0 %v616
      %845 = vmatpush1.bf16.msra.mxu0 %v615
      %846 = vmatprep.subr.bf16.mxu0 %v620
      %847 = vmatpush1.bf16.msra.mxu0 %v619
      %848 = vmatprep.subr.bf16.mxu0 %v624
      %849 = vmatpush1.bf16.msra.mxu0 %v623
      %850 = vmatprep.subr.bf16.mxu0 %v628
      %851 = vmatpush1.bf16.msra.mxu0 %v627
      %852 = vmatprep.subr.bf16.mxu0 %v632
      %853 = vmatpush1.bf16.msra.mxu0 %v631
      %854 = vmatprep.subr.bf16.mxu0 %v636
      %855 = vmatpush1.bf16.msra.mxu0 %v635
      %856 = vmatprep.mubr.bf16.mxu0 %v346
      %857 = vmatmul.mubr.bf16.gmra.mrb[0].mxu0 %v345
      %v858 = vpop.f32.mrb[0].mxu0
      %v859 = vadd.f32 0.0, %v858
      %v860 = vpop.f32.mrb[0].mxu0
      %v861 = vadd.f32 0.0, %v860
      %v862 = vpop.f32.mrb[0].mxu0
      %v863 = vadd.f32 0.0, %v862
      %v864 = vpop.f32.mrb[0].mxu0
      %v865 = vadd.f32 0.0, %v864
      %866 = vmatprep.mubr.bf16.mxu0 %v348
      %867 = vmatmul.mubr.bf16.gmra.mrb[0].mxu0 %v347
      %v868 = vpop.f32.mrb[0].mxu0
      %v869 = vadd.f32 0.0, %v868
      %v870 = vpop.f32.mrb[0].mxu0
      %v871 = vadd.f32 0.0, %v870
      %v872 = vpop.f32.mrb[0].mxu0
      %v873 = vadd.f32 0.0, %v872
      %v874 = vpop.f32.mrb[0].mxu0
      %v875 = vadd.f32 0.0, %v874
      %876 = vmatprep.mubr.bf16.mxu0 %v350
      %877 = vmatmul.mubr.bf16.gmra.mrb[0].mxu0 %v349
      %v878 = vpop.f32.mrb[0].mxu0
      %v879 = vadd.f32 0.0, %v878
      %v880 = vpop.f32.mrb[0].mxu0
      %v881 = vadd.f32 0.0, %v880
      %v882 = vpop.f32.mrb[0].mxu0
      %v883 = vadd.f32 0.0, %v882
      %v884 = vpop.f32.mrb[0].mxu0
      %v885 = vadd.f32 0.0, %v884
      %886 = vmatprep.mubr.bf16.mxu0 %v352
      %887 = vmatmul.mubr.bf16.gmra.mrb[0].mxu0 %v351
      %v888 = vpop.f32.mrb[0].mxu0
      %v889 = vadd.f32 0.0, %v888
      %v890 = vpop.f32.mrb[0].mxu0
      %v891 = vadd.f32 0.0, %v890
      %v892 = vpop.f32.mrb[0].mxu0
      %v893 = vadd.f32 0.0, %v892
      %v894 = vpop.f32.mrb[0].mxu0
      %v895 = vadd.f32 0.0, %v894
      %896 = vmatprep.mubr.bf16.mxu0 %v354
      %897 = vmatmul.mubr.bf16.gmra.mrb[0].mxu0 %v353
      %v898 = vpop.f32.mrb[0].mxu0
      %v899 = vadd.f32 0.0, %v898
      %v900 = vpop.f32.mrb[0].mxu0
      %v901 = vadd.f32 0.0, %v900
      %v902 = vpop.f32.mrb[0].mxu0
      %v903 = vadd.f32 0.0, %v902
      %v904 = vpop.f32.mrb[0].mxu0
      %v905 = vadd.f32 0.0, %v904
      %906 = vmatprep.mubr.bf16.mxu0 %v356
      %907 = vmatmul.mubr.bf16.gmra.mrb[0].mxu0 %v355
      %v908 = vpop.f32.mrb[0].mxu0
      %v909 = vadd.f32 0.0, %v908
      %v910 = vpop.f32.mrb[0].mxu0
      %v911 = vadd.f32 0.0, %v910
      %v912 = vpop.f32.mrb[0].mxu0
      %v913 = vadd.f32 0.0, %v912
      %v914 = vpop.f32.mrb[0].mxu0
      %v915 = vadd.f32 0.0, %v914
      %916 = vmatprep.mubr.bf16.mxu0 %v358
      %917 = vmatmul.mubr.bf16.gmra.mrb[0].mxu0 %v357
      %v918 = vpop.f32.mrb[0].mxu0
      %v919 = vadd.f32 0.0, %v918
      %v920 = vpop.f32.mrb[0].mxu0
      %v921 = vadd.f32 0.0, %v920
      %v922 = vpop.f32.mrb[0].mxu0
      %v923 = vadd.f32 0.0, %v922
      %v924 = vpop.f32.mrb[0].mxu0
      %v925 = vadd.f32 0.0, %v924
      %926 = vmatprep.mubr.bf16.mxu0 %v360
      %927 = vmatmul.mubr.bf16.gmra.mrb[0].mxu0 %v359
      %v928 = vpop.f32.mrb[0].mxu0
      %v929 = vadd.f32 0.0, %v928
      %v930 = vpop.f32.mrb[0].mxu0
      %v931 = vadd.f32 0.0, %v930
      %v932 = vpop.f32.mrb[0].mxu0
      %v933 = vadd.f32 0.0, %v932
      %v934 = vpop.f32.mrb[0].mxu0
      %v935 = vadd.f32 0.0, %v934
      %936 = vmatprep.mubr.bf16.mxu0 %v362
      %937 = vmatmul.mubr.bf16.gmra.mrb[0].mxu0 %v361
      %v938 = vpop.f32.mrb[0].mxu0
      %v939 = vadd.f32 0.0, %v938
      %v940 = vpop.f32.mrb[0].mxu0
      %v941 = vadd.f32 0.0, %v940
      %v942 = vpop.f32.mrb[0].mxu0
      %v943 = vadd.f32 0.0, %v942
      %v944 = vpop.f32.mrb[0].mxu0
      %v945 = vadd.f32 0.0, %v944
      %946 = vdwg.mxu0
      %v947 = vmul.f32 %v736, %v736
      %v948 = vmul.f32 %v738, %v738
      %v949 = vmul.f32 %v740, %v740
      %v950 = vmul.f32 %v742, %v742
      %v951 = vmul.f32 %v746, %v746
      %v952 = vmul.f32 %v748, %v748
      %v953 = vmul.f32 %v750, %v750
      %v954 = vmul.f32 %v752, %v752
      %v955 = vmul.f32 %v756, %v756
      %v956 = vmul.f32 %v758, %v758
      %v957 = vmul.f32 %v760, %v760
      %v958 = vmul.f32 %v762, %v762
      %v959 = vmul.f32 %v766, %v766
      %v960 = vmul.f32 %v768, %v768
      %v961 = vmul.f32 %v770, %v770
      %v962 = vmul.f32 %v772, %v772
      %v963 = vmul.f32 %v776, %v776
      %v964 = vmul.f32 %v778, %v778
      %v965 = vmul.f32 %v859, %v859
      %v966 = vmul.f32 %v861, %v861
      %v967 = vmul.f32 %v863, %v863
      %v968 = vmul.f32 %v865, %v865
      %v969 = vmul.f32 %v869, %v869
      %v970 = vmul.f32 %v871, %v871
      %v971 = vmul.f32 %v873, %v873
      %v972 = vmul.f32 %v875, %v875
      %v973 = vmul.f32 %v879, %v879
      %v974 = vmul.f32 %v881, %v881
      %v975 = vmul.f32 %v883, %v883
      %v976 = vmul.f32 %v885, %v885
      %v977 = vmul.f32 %v889, %v889
      %v978 = vmul.f32 %v891, %v891
      %v979 = vmul.f32 %v893, %v893
      %v980 = vmul.f32 %v895, %v895
      %v981 = vmul.f32 %v899, %v899
      %v982 = vmul.f32 %v901, %v901
      %v983 = vadd.f32 %v947, %v965
      %v984 = vadd.f32 %v948, %v966
      %v985 = vadd.f32 %v949, %v967
      %v986 = vadd.f32 %v950, %v968
      %v987 = vadd.f32 %v951, %v969
      %v988 = vadd.f32 %v952, %v970
      %v989 = vadd.f32 %v953, %v971
      %v990 = vadd.f32 %v954, %v972
      %v991 = vadd.f32 %v955, %v973
      %v992 = vadd.f32 %v956, %v974
      %v993 = vadd.f32 %v957, %v975
      %v994 = vadd.f32 %v958, %v976
      %v995 = vadd.f32 %v959, %v977
      %v996 = vadd.f32 %v960, %v978
      %v997 = vadd.f32 %v961, %v979
      %v998 = vadd.f32 %v962, %v980
      %v999 = vadd.f32 %v963, %v981
      %v1000 = vadd.f32 %v964, %v982
      %v1001 = vmul.f32 %v780, %v780
      %v1002 = vmul.f32 %v782, %v782
      %v1003 = vmul.f32 %v786, %v786
      %v1004 = vmul.f32 %v788, %v788
      %v1005 = vmul.f32 %v790, %v790
      %v1006 = vmul.f32 %v792, %v792
      %v1007 = vmul.f32 %v796, %v796
      %v1008 = vmul.f32 %v798, %v798
      %v1009 = vmul.f32 %v800, %v800
      %v1010 = vmul.f32 %v802, %v802
      %v1011 = vmul.f32 %v806, %v806
      %v1012 = vmul.f32 %v808, %v808
      %v1013 = vmul.f32 %v810, %v810
      %v1014 = vmul.f32 %v812, %v812
      %v1015 = vmul.f32 %v816, %v816
      %v1016 = vmul.f32 %v818, %v818
      %v1017 = vmul.f32 %v820, %v820
      %v1018 = vmul.f32 %v822, %v822
      %v1019 = vmul.f32 %v903, %v903
      %v1020 = vmul.f32 %v905, %v905
      %v1021 = vmul.f32 %v909, %v909
      %v1022 = vmul.f32 %v911, %v911
      %v1023 = vmul.f32 %v913, %v913
      %v1024 = vmul.f32 %v915, %v915
      %v1025 = vmul.f32 %v919, %v919
      %v1026 = vmul.f32 %v921, %v921
      %v1027 = vmul.f32 %v923, %v923
      %v1028 = vmul.f32 %v925, %v925
      %v1029 = vmul.f32 %v929, %v929
      %v1030 = vmul.f32 %v931, %v931
      %v1031 = vmul.f32 %v933, %v933
      %v1032 = vmul.f32 %v935, %v935
      %v1033 = vmul.f32 %v939, %v939
      %v1034 = vmul.f32 %v941, %v941
      %v1035 = vmul.f32 %v943, %v943
      %v1036 = vmul.f32 %v945, %v945
      %v1037 = vadd.f32 %v1001, %v1019
      %v1038 = vadd.f32 %v1002, %v1020
      %v1039 = vadd.f32 %v1003, %v1021
      %v1040 = vadd.f32 %v1004, %v1022
      %v1041 = vadd.f32 %v1005, %v1023
      %v1042 = vadd.f32 %v1006, %v1024
      %v1043 = vadd.f32 %v1007, %v1025
      %v1044 = vadd.f32 %v1008, %v1026
      %v1045 = vadd.f32 %v1009, %v1027
      %v1046 = vadd.f32 %v1010, %v1028
      %v1047 = vadd.f32 %v1011, %v1029
      %v1048 = vadd.f32 %v1012, %v1030
      %v1049 = vadd.f32 %v1013, %v1031
      %v1050 = vadd.f32 %v1014, %v1032
      %v1051 = vadd.f32 %v1015, %v1033
      %v1052 = vadd.f32 %v1016, %v1034
      %v1053 = vadd.f32 %v1017, %v1035
      %v1054 = vadd.f32 %v1018, %v1036
      %v1055 = vsub.f32 %v983, %v1037
      %v1056 = vsub.f32 %v984, %v1038
      %v1057 = vsub.f32 %v985, %v1039
      %v1058 = vsub.f32 %v986, %v1040
      %v1059 = vsub.f32 %v987, %v1041
      %v1060 = vsub.f32 %v988, %v1042
      %v1061 = vsub.f32 %v989, %v1043
      %v1062 = vsub.f32 %v990, %v1044
      %v1063 = vsub.f32 %v991, %v1045
      %v1064 = vsub.f32 %v992, %v1046
      %v1065 = vsub.f32 %v993, %v1047
      %v1066 = vsub.f32 %v994, %v1048
      %v1067 = vsub.f32 %v995, %v1049
      %v1068 = vsub.f32 %v996, %v1050
      %v1069 = vsub.f32 %v997, %v1051
      %v1070 = vsub.f32 %v998, %v1052
      %v1071 = vsub.f32 %v999, %v1053
      %v1072 = vsub.f32 %v1000, %v1054
      %v1073 = vand.u32 2147483647, %v1055
      %v1074 = vand.u32 2147483647, %v1056
      %v1075 = vand.u32 2147483647, %v1057
      %v1076 = vand.u32 2147483647, %v1058
      %v1077 = vand.u32 2147483647, %v1059
      %v1078 = vand.u32 2147483647, %v1060
      %v1079 = vand.u32 2147483647, %v1061
      %v1080 = vand.u32 2147483647, %v1062
      %v1081 = vand.u32 2147483647, %v1063
      %v1082 = vand.u32 2147483647, %v1064
      %v1083 = vand.u32 2147483647, %v1065
      %v1084 = vand.u32 2147483647, %v1066
      %v1085 = vand.u32 2147483647, %v1067
      %v1086 = vand.u32 2147483647, %v1068
      %v1087 = vand.u32 2147483647, %v1069
      %v1088 = vand.u32 2147483647, %v1070
      %v1089 = vand.u32 2147483647, %v1071
      %v1090 = vand.u32 2147483647, %v1072
      %v1091 = vadd.f32 %v983, 1e-10
      %v1092 = vadd.f32 %v984, 1e-10
      %v1093 = vadd.f32 %v985, 1e-10
      %v1094 = vadd.f32 %v986, 1e-10
      %v1095 = vadd.f32 %v987, 1e-10
      %v1096 = vadd.f32 %v988, 1e-10
      %v1097 = vadd.f32 %v989, 1e-10
      %v1098 = vadd.f32 %v990, 1e-10
      %v1099 = vadd.f32 %v991, 1e-10
      %v1100 = vadd.f32 %v992, 1e-10
      %v1101 = vadd.f32 %v993, 1e-10
      %v1102 = vadd.f32 %v994, 1e-10
      %v1103 = vadd.f32 %v995, 1e-10
      %v1104 = vadd.f32 %v996, 1e-10
      %v1105 = vadd.f32 %v997, 1e-10
      %v1106 = vadd.f32 %v998, 1e-10
      %v1107 = vadd.f32 %v999, 1e-10
      %v1108 = vadd.f32 %v1000, 1e-10
      %v1109 = vadd.f32 %v1037, 1e-10
      %v1110 = vadd.f32 %v1038, 1e-10
      %v1111 = vadd.f32 %v1039, 1e-10
      %v1112 = vadd.f32 %v1040, 1e-10
      %v1113 = vadd.f32 %v1041, 1e-10
      %v1114 = vadd.f32 %v1042, 1e-10
      %v1115 = vadd.f32 %v1043, 1e-10
      %v1116 = vadd.f32 %v1044, 1e-10
      %v1117 = vadd.f32 %v1045, 1e-10
      %v1118 = vadd.f32 %v1046, 1e-10
      %v1119 = vadd.f32 %v1047, 1e-10
      %v1120 = vadd.f32 %v1048, 1e-10
      %v1121 = vadd.f32 %v1049, 1e-10
      %v1122 = vadd.f32 %v1050, 1e-10
      %v1123 = vadd.f32 %v1051, 1e-10
      %v1124 = vadd.f32 %v1052, 1e-10
      %v1125 = vadd.f32 %v1053, 1e-10
      %v1126 = vadd.f32 %v1054, 1e-10
      %v1127 = vrcp.pop %v1109
      %v1128 = vmul.f32 %v1091, %v1127
      %v1129 = vrcp.pop %v1110
      %v1130 = vmul.f32 %v1092, %v1129
      %v1131 = vrcp.pop %v1111
      %v1132 = vmul.f32 %v1093, %v1131
      %v1133 = vrcp.pop %v1112
      %v1134 = vmul.f32 %v1094, %v1133
      %v1135 = vrcp.pop %v1113
      %v1136 = vmul.f32 %v1095, %v1135
      %v1137 = vrcp.pop %v1114
      %v1138 = vmul.f32 %v1096, %v1137
      %v1139 = vrcp.pop %v1115
      %v1140 = vmul.f32 %v1097, %v1139
      %v1141 = vrcp.pop %v1116
      %v1142 = vmul.f32 %v1098, %v1141
      %v1143 = vrcp.pop %v1117
      %v1144 = vmul.f32 %v1099, %v1143
      %v1145 = vrcp.pop %v1118
      %v1146 = vmul.f32 %v1100, %v1145
      %v1147 = vrcp.pop %v1119
      %v1148 = vmul.f32 %v1101, %v1147
      %v1149 = vrcp.pop %v1120
      %v1150 = vmul.f32 %v1102, %v1149
      %v1151 = vrcp.pop %v1121
      %v1152 = vmul.f32 %v1103, %v1151
      %v1153 = vrcp.pop %v1122
      %v1154 = vmul.f32 %v1104, %v1153
      %v1155 = vrcp.pop %v1123
      %v1156 = vmul.f32 %v1105, %v1155
      %v1157 = vrcp.pop %v1124
      %v1158 = vmul.f32 %v1106, %v1157
      %v1159 = vrcp.pop %v1125
      %v1160 = vmul.f32 %v1107, %v1159
      %v1161 = vrcp.pop %v1126
      %v1162 = vmul.f32 %v1108, %v1161
      %v1163 = vlog2.pop %v1128
      %v1164 = vmul.f32 %v1163, 0.6931472
      %v1165 = vlog2.pop %v1130
      %v1166 = vmul.f32 %v1165, 0.6931472
      %v1167 = vlog2.pop %v1132
      %v1168 = vmul.f32 %v1167, 0.6931472
      %v1169 = vlog2.pop %v1134
      %v1170 = vmul.f32 %v1169, 0.6931472
      %v1171 = vlog2.pop %v1136
      %v1172 = vmul.f32 %v1171, 0.6931472
      %v1173 = vlog2.pop %v1138
      %v1174 = vmul.f32 %v1173, 0.6931472
      %v1175 = vlog2.pop %v1140
      %v1176 = vmul.f32 %v1175, 0.6931472
      %v1177 = vlog2.pop %v1142
      %v1178 = vmul.f32 %v1177, 0.6931472
      %v1179 = vlog2.pop %v1144
      %v1180 = vmul.f32 %v1179, 0.6931472
      %v1181 = vlog2.pop %v1146
      %v1182 = vmul.f32 %v1181, 0.6931472
      %v1183 = vlog2.pop %v1148
      %v1184 = vmul.f32 %v1183, 0.6931472
      %v1185 = vlog2.pop %v1150
      %v1186 = vmul.f32 %v1185, 0.6931472
      %v1187 = vlog2.pop %v1152
      %v1188 = vmul.f32 %v1187, 0.6931472
      %v1189 = vlog2.pop %v1154
      %v1190 = vmul.f32 %v1189, 0.6931472
      %v1191 = vlog2.pop %v1156
      %v1192 = vmul.f32 %v1191, 0.6931472
      %v1193 = vlog2.pop %v1158
      %v1194 = vmul.f32 %v1193, 0.6931472
      %v1195 = vlog2.pop %v1160
      %v1196 = vmul.f32 %v1195, 0.6931472
      %v1197 = vlog2.pop %v1162
      %v1198 = vmul.f32 %v1197, 0.6931472
      %v1199 = vand.u32 2147483647, %v1164
      %v1200 = vand.u32 2147483647, %v1166
      %v1201 = vand.u32 2147483647, %v1168
      %v1202 = vand.u32 2147483647, %v1170
      %v1203 = vand.u32 2147483647, %v1172
      %v1204 = vand.u32 2147483647, %v1174
      %v1205 = vand.u32 2147483647, %v1176
      %v1206 = vand.u32 2147483647, %v1178
      %v1207 = vand.u32 2147483647, %v1180
      %v1208 = vand.u32 2147483647, %v1182
      %v1209 = vand.u32 2147483647, %v1184
      %v1210 = vand.u32 2147483647, %v1186
      %v1211 = vand.u32 2147483647, %v1188
      %v1212 = vand.u32 2147483647, %v1190
      %v1213 = vand.u32 2147483647, %v1192
      %v1214 = vand.u32 2147483647, %v1194
      %v1215 = vand.u32 2147483647, %v1196
      %v1216 = vand.u32 2147483647, %v1198
      %v1217 = vld [vmem:[%s195] sm:$0xff]
      %v1218 = vld [vmem:[%s195 + $0x8] sm:$0xff]
      %v1219 = vadd.f32 %v1073, %v1075
      %v1220 = vadd.f32 %v1219, %v1077
      %v1221 = vadd.f32 %v1220, %v1079
      %v1222 = vadd.f32 %v1221, %v1081
      %v1223 = vadd.f32 %v1222, %v1083
      %v1224 = vadd.f32 %v1223, %v1085
      %v1225 = vadd.f32 %v1224, %v1087
      %v1226 = vadd.f32 %v1225, %v1089
      %v1227 = vadd.f32 %v1074, %v1076
      %v1228 = vadd.f32 %v1227, %v1078
      %v1229 = vadd.f32 %v1228, %v1080
      %v1230 = vadd.f32 %v1229, %v1082
      %v1231 = vadd.f32 %v1230, %v1084
      %v1232 = vadd.f32 %v1231, %v1086
      %v1233 = vadd.f32 %v1232, %v1088
      %v1234 = vadd.f32 %v1233, %v1090
      %v1235 = vadd.f32 %v1217, %v1226
      %v1236 = vadd.f32 %v1218, %v1234
      %1237 = vst [vmem:[%s195] sm:$0xff] %v1235
      %1238 = vst [vmem:[%s195 + $0x8] sm:$0xff] %v1236
      %v1239 = vld [vmem:[%s200] sm:$0xff]
      %v1240 = vld [vmem:[%s200 + $0x8] sm:$0xff]
      %v1241 = vadd.f32 %v1199, %v1201
      %v1242 = vadd.f32 %v1241, %v1203
      %v1243 = vadd.f32 %v1242, %v1205
      %v1244 = vadd.f32 %v1243, %v1207
      %v1245 = vadd.f32 %v1244, %v1209
      %v1246 = vadd.f32 %v1245, %v1211
      %v1247 = vadd.f32 %v1246, %v1213
      %v1248 = vadd.f32 %v1247, %v1215
      %v1249 = vadd.f32 %v1200, %v1202
      %v1250 = vadd.f32 %v1249, %v1204
      %v1251 = vadd.f32 %v1250, %v1206
      %v1252 = vadd.f32 %v1251, %v1208
      %v1253 = vadd.f32 %v1252, %v1210
      %v1254 = vadd.f32 %v1253, %v1212
      %v1255 = vadd.f32 %v1254, %v1214
      %v1256 = vadd.f32 %v1255, %v1216
      %v1257 = vadd.f32 %v1239, %v1248
      %v1258 = vadd.f32 %v1240, %v1256
      %1259 = vst [vmem:[%s200] sm:$0xff] %v1257
      %1260 = vst [vmem:[%s200 + $0x8] sm:$0xff] %v1258
      %p1261 = scmp.lt.s32.totalorder %s19, 1
      %s1262 = scalar_select %p1261, %s19, 1
      %s1263 = smul.addr %s1262, 2
      %s1264 = smul.addr %s1263, 8
      %s1265 = scalar_lea.vmem %s2, %s1264
      %p1266 = scmp.lt.s32.totalorder %s19, 1
      %s1267 = scalar_select %p1266, %s19, 1
      %s1268 = smul.addr %s1267, 2
      %s1269 = smul.addr %s1268, 8
      %s1270 = scalar_lea.vmem %s3, %s1269
      // Predicated region
      $region33: #{multi_scale_spectral_loss.7} parent=27 // pred_check
        %p1271 = pneg %p92
      $region34: #{multi_scale_spectral_loss.7} parent=27 // pred_check_branch
        %1273 = sbr.rel (%p1271) target = $region36
      $region35: #{multi_scale_spectral_loss.7} parent=27 // pred_region
        _
      $region36: #{multi_scale_spectral_loss.7} parent=27 // pred_fallthru
        _
      // Predicated region
      $region37: #{multi_scale_spectral_loss.7} parent=27 // pred_check
        %p1274 = pneg %p118
      $region38: #{multi_scale_spectral_loss.7} parent=27 // pred_check_branch
        %1276 = sbr.rel (%p1274) target = $region40
      $region39: #{multi_scale_spectral_loss.7} parent=27 // pred_region
        _
      $region40: #{multi_scale_spectral_loss.7} parent=27 // pred_fallthru
        _
    $region28: #{multi_scale_spectral_loss.7} parent=5 // pred_fallthru
      _
    %p1277 = scmp.le.s32.totalorder 2, %s10
    // Predicated region
    $region41: #{multi_scale_spectral_loss.7} parent=5 // pred_check
      %p1278 = pneg %p1277
    $region42: #{multi_scale_spectral_loss.7} parent=5 // pred_check_branch
      %1280 = sbr.rel (%p1278) target = $region44
    $region43: #{multi_scale_spectral_loss.7} parent=5 // pred_region
      %s1281 = ssub.s32 %s10, 2
      // Predicated region
      $region45: #{multi_scale_spectral_loss.7} parent=43 // pred_check
        %p1282 = pneg %p98
      $region46: #{multi_scale_spectral_loss.7} parent=43 // pred_check_branch
        %1284 = sbr.rel (%p1282) target = $region48
      $region47: #{multi_scale_spectral_loss.7} parent=43 // pred_region
        %p1285 = scmp.lt.s32.totalorder %s21, 1
        %s1286 = scalar_select %p1285, %s21, 1
        %s1287 = smul.addr %s1286, 2
        %s1288 = smul.addr %s1287, 8
        %s1289 = scalar_lea.vmem %s2, %s1288
      $region48: #{multi_scale_spectral_loss.7} parent=43 // pred_fallthru
        _
      // Predicated region
      $region49: #{multi_scale_spectral_loss.7} parent=43 // pred_check
        %p1290 = pneg %p124
      $region50: #{multi_scale_spectral_loss.7} parent=43 // pred_check_branch
        %1292 = sbr.rel (%p1290) target = $region52
      $region51: #{multi_scale_spectral_loss.7} parent=43 // pred_region
        %p1293 = scmp.lt.s32.totalorder %s21, 1
        %s1294 = scalar_select %p1293, %s21, 1
        %s1295 = smul.addr %s1294, 2
        %s1296 = smul.addr %s1295, 8
        %s1297 = scalar_lea.vmem %s3, %s1296
      $region52: #{multi_scale_spectral_loss.7} parent=43 // pred_fallthru
        _
    $region44: #{multi_scale_spectral_loss.7} parent=5 // pred_fallthru
      _
  $region6: #{multi_scale_spectral_loss.7} parent=0 // loop_footer
    %s14 = sadd.s32 1, %s10
  $region7: #{multi_scale_spectral_loss.7} parent=0 // loop_footer_branch
    %9 = sbr.rel target = $region3
  $region8: #{multi_scale_spectral_loss.7} parent=0 // loop_exit
    _

// kernel: multi_scale_spectral_loss.8
$region0: #{multi_scale_spectral_loss.8}
  #allocation0 [shape = 'u32[]', space=smem, size = 0x4, offset = 0x4, fixed_abs, tag = 'smem constant byte address 0x4 - core index']
  #allocation1 [shape = 'u32[144,128]{1,0:T(1,128)}', space=vmem, size = 0x12000, scoped, tag = 'internal scratch']
  %s0 = inlined_call_operand.vmem [shape: bf16[544,128], index: 0, kind: input, shape index: {}]
  %s1 = inlined_call_operand.vmem [shape: bf16[1,128,256], index: 1, kind: input, shape index: {}]
  %s2 = inlined_call_operand.vmem [shape: f32[16,128], index: 2, kind: output, shape index: {0}]
  %s3 = inlined_call_operand.vmem [shape: f32[16,128], index: 3, kind: output, shape index: {1}]
  %4 = xla_tuple %s2, %s3
  %s5 = sld [smem:[#allocation0]]
  $region53: #{multi_scale_spectral_loss.8} parent=0
    _
  %s7 = ssub.s32 1, %s5
  %s8 = scalar_select 0, %s7, %s5
  loop: start=0, step=1, limit=4
  $region2: #{multi_scale_spectral_loss.8} parent=0 // loop_pre_header
    _
  $region3: #{multi_scale_spectral_loss.8} parent=0 // loop_header
    %s10 = sphi 0, %s14
    %p11 = scmp.ge.s32.totalorder %s10, 4
    %s17 = sphi 0, %s29
    %s18 = sphi 0, %s25
    %s19 = sphi 0, %s17
    %s20 = sphi 0, %s18
    %s21 = sphi 0, %s19
    %s22 = sphi 0, %s20
    %s32 = sphi 0, %s34
    %s35 = sphi 0, %s32
    %s36 = sphi 0, %s35
    %s52 = sphi 0, %s36
    %s56 = sphi 0, %s56
    %s58 = sphi 0, %s56
    %s59 = sphi 0, %s58
    %s73 = sphi 0, %s59
    %s79 = sphi 0, %s81
    %s82 = sphi 0, %s79
    %s83 = sphi 0, %s82
    %s99 = sphi 0, %s83
    %s105 = sphi 0, %s107
    %s108 = sphi 0, %s105
    %s109 = sphi 0, %s108
    %s125 = sphi 0, %s109
  $region4: #{multi_scale_spectral_loss.8} parent=0 // loop_header_branch
    %13 = sbr.rel (%p11) target = $region8
  $region5: #{multi_scale_spectral_loss.8} parent=0 // loop_body
    %s15 = ssub.s32 %s10, 1
    %s16 = ssub.s32 %s10, 2
    %s23 = sadd.s32 1, %s18
    %p24 = scmp.ge.s32.totalorder %s23, 1
    %s25 = scalar_select %p24, 0, %s23
    %s26 = sadd.s32 1, %s17
    %s27 = scalar_select %p24, %s26, %s17
    %p28 = scmp.ge.s32.totalorder %s27, 2
    %s29 = scalar_select %p28, 0, %s27
    %s30 = ssub.s32 %s17, %s29
    %p31 = scmp.eq.s32.totalorder %s30, 0
    %s33 = sadd.s32 %s32, 1
    %s34 = scalar_select %p31, %s32, %s33
    %p37 = pneg %p31
    %p38 = scmp.eq.s32.totalorder %s10, 1
    %p39 = por %p37, %p38
    %p40 = scmp.ne.s32.totalorder %s32, %s35
    %p41 = scmp.eq.s32.totalorder %s10, 0
    %p42 = por %p40, %p41
    %p43 = scmp.ne.s32.totalorder %s32, %s35
    %p44 = scmp.eq.s32.totalorder %s15, 1
    %p45 = por %p43, %p44
    %p46 = scmp.ne.s32.totalorder %s35, %s36
    %p47 = scmp.eq.s32.totalorder %s15, 0
    %p48 = por %p46, %p47
    %p49 = scmp.ne.s32.totalorder %s35, %s36
    %p50 = scmp.eq.s32.totalorder %s16, 1
    %p51 = por %p49, %p50
    %p53 = scmp.ne.s32.totalorder %s36, %s52
    %p54 = scmp.eq.s32.totalorder %s16, 0
    %p55 = por %p53, %p54
    %s57 = sadd.s32 %s56, 1
    %p60 = scmp.eq.s32.totalorder %s10, 1
    %p61 = scmp.ne.s32.totalorder %s56, %s58
    %p62 = scmp.eq.s32.totalorder %s10, 0
    %p63 = por %p61, %p62
    %p64 = scmp.ne.s32.totalorder %s56, %s58
    %p65 = scmp.eq.s32.totalorder %s15, 1
    %p66 = por %p64, %p65
    %p67 = scmp.ne.s32.totalorder %s58, %s59
    %p68 = scmp.eq.s32.totalorder %s15, 0
    %p69 = por %p67, %p68
    %p70 = scmp.ne.s32.totalorder %s58, %s59
    %p71 = scmp.eq.s32.totalorder %s16, 1
    %p72 = por %p70, %p71
    %p74 = scmp.ne.s32.totalorder %s59, %s73
    %p75 = scmp.eq.s32.totalorder %s16, 0
    %p76 = por %p74, %p75
    %s77 = ssub.s32 %s17, %s29
    %p78 = scmp.eq.s32.totalorder %s77, 0
    %s80 = sadd.s32 %s79, 1
    %s81 = scalar_select %p78, %s79, %s80
    %p84 = pneg %p78
    %p85 = scmp.eq.s32.totalorder %s10, 1
    %p86 = por %p84, %p85
    %p87 = scmp.ne.s32.totalorder %s79, %s82
    %p88 = scmp.eq.s32.totalorder %s10, 0
    %p89 = por %p87, %p88
    %p90 = scmp.ne.s32.totalorder %s79, %s82
    %p91 = scmp.eq.s32.totalorder %s15, 1
    %p92 = por %p90, %p91
    %p93 = scmp.ne.s32.totalorder %s82, %s83
    %p94 = scmp.eq.s32.totalorder %s15, 0
    %p95 = por %p93, %p94
    %p96 = scmp.ne.s32.totalorder %s82, %s83
    %p97 = scmp.eq.s32.totalorder %s16, 1
    %p98 = por %p96, %p97
    %p100 = scmp.ne.s32.totalorder %s83, %s99
    %p101 = scmp.eq.s32.totalorder %s16, 0
    %p102 = por %p100, %p101
    %s103 = ssub.s32 %s17, %s29
    %p104 = scmp.eq.s32.totalorder %s103, 0
    %s106 = sadd.s32 %s105, 1
    %s107 = scalar_select %p104, %s105, %s106
    %p110 = pneg %p104
    %p111 = scmp.eq.s32.totalorder %s10, 1
    %p112 = por %p110, %p111
    %p113 = scmp.ne.s32.totalorder %s105, %s108
    %p114 = scmp.eq.s32.totalorder %s10, 0
    %p115 = por %p113, %p114
    %p116 = scmp.ne.s32.totalorder %s105, %s108
    %p117 = scmp.eq.s32.totalorder %s15, 1
    %p118 = por %p116, %p117
    %p119 = scmp.ne.s32.totalorder %s108, %s109
    %p120 = scmp.eq.s32.totalorder %s15, 0
    %p121 = por %p119, %p120
    %p122 = scmp.ne.s32.totalorder %s108, %s109
    %p123 = scmp.eq.s32.totalorder %s16, 1
    %p124 = por %p122, %p123
    %p126 = scmp.ne.s32.totalorder %s109, %s125
    %p127 = scmp.eq.s32.totalorder %s16, 0
    %p128 = por %p126, %p127
    %p129 = scmp.le.s32.totalorder 1, %s10
    %p130 = scmp.lt.s32.totalorder %s10, 3
    %p131 = pnand %p129, %p130
    %p132 = pneg %p131
    // Predicated region
    $region9: #{multi_scale_spectral_loss.8} parent=5 // pred_check
      _
    $region10: #{multi_scale_spectral_loss.8} parent=5 // pred_check_branch
      %134 = sbr.rel (%p131) target = $region12
    $region11: #{multi_scale_spectral_loss.8} parent=5 // pred_region
      %s135 = ssub.s32 %s10, 1
      // Predicated region
      $region13: #{multi_scale_spectral_loss.8} parent=11 // pred_check
        %p136 = pneg %p69
      $region14: #{multi_scale_spectral_loss.8} parent=11 // pred_check_branch
        %138 = sbr.rel (%p136) target = $region16
      $region15: #{multi_scale_spectral_loss.8} parent=11 // pred_region
        _
      $region16: #{multi_scale_spectral_loss.8} parent=11 // pred_fallthru
        _
    $region12: #{multi_scale_spectral_loss.8} parent=5 // pred_fallthru
      _
    %p139 = scmp.lt.s32.totalorder %s10, 2
    // Predicated region
    $region17: #{multi_scale_spectral_loss.8} parent=5 // pred_check
      %p140 = pneg %p139
    $region18: #{multi_scale_spectral_loss.8} parent=5 // pred_check_branch
      %142 = sbr.rel (%p140) target = $region20
    $region19: #{multi_scale_spectral_loss.8} parent=5 // pred_region
      // Predicated region
      $region21: #{multi_scale_spectral_loss.8} parent=19 // pred_check
        %p143 = pneg %p42
      $region22: #{multi_scale_spectral_loss.8} parent=19 // pred_check_branch
        %145 = sbr.rel (%p143) target = $region24
      $region23: #{multi_scale_spectral_loss.8} parent=19 // pred_region
        %s146 = smul.u32 34, %s17
        %p147 = scmp.lt.s32.totalorder %s146, 67
        %s148 = scalar_select %p147, %s146, 67
        %s149 = smul.addr %s148, 4
        %s150 = scalar_lea.vmem %s0, %s149
        %s151 = smul.u32 34, %s17
      $region24: #{multi_scale_spectral_loss.8} parent=19 // pred_fallthru
        _
    $region20: #{multi_scale_spectral_loss.8} parent=5 // pred_fallthru
      _
    %p152 = scmp.le.s32.totalorder 1, %s10
    %p153 = scmp.lt.s32.totalorder %s10, 3
    %p154 = pnand %p152, %p153
    %p155 = pneg %p154
    // Predicated region
    $region25: #{multi_scale_spectral_loss.8} parent=5 // pred_check
      _
    $region26: #{multi_scale_spectral_loss.8} parent=5 // pred_check_branch
      %157 = sbr.rel (%p154) target = $region28
    $region27: #{multi_scale_spectral_loss.8} parent=5 // pred_region
      %s158 = ssub.s32 %s10, 1
      %s159 = smul.u32 34, %s19
      %p160 = scmp.lt.s32.totalorder %s159, 67
      %s161 = scalar_select %p160, %s159, 67
      %s162 = smul.addr %s161, 4
      %s163 = scalar_lea.vmem %s0, %s162
      %p164 = pneg %p48
      %p165 = pneg %p45
      %p166 = pneg %p69
      %p167 = pneg %p66
      %p168 = pneg %p95
      %p169 = pneg %p92
      %p170 = scmp.lt.s32.totalorder %s19, 1
      %s171 = scalar_select %p170, %s19, 1
      %s172 = smul.addr %s171, 8
      %s173 = scalar_lea.vmem %s2, %s172
      %p174 = pneg %p121
      %p175 = pneg %p118
      %p176 = scmp.lt.s32.totalorder %s19, 1
      %s177 = scalar_select %p176, %s19, 1
      %s178 = smul.addr %s177, 8
      %s179 = scalar_lea.vmem %s3, %s178
      %s180 = smul.u32 34, %s19
      %p181 = scmp.lt.s32.totalorder %s180, 67
      %s182 = scalar_select %p181, %s180, 67
      %s183 = smul.addr %s182, 4
      %s184 = scalar_lea.vmem %s0, %s183
      %s185 = smul.u32 34, %s19
      %p186 = scmp.lt.s32.totalorder %s19, 1
      %s187 = scalar_select %p186, %s19, 1
      %s188 = smul.addr %s187, 8
      %s189 = scalar_lea.vmem %s2, %s188
      %p190 = scmp.lt.s32.totalorder %s19, 1
      %s191 = scalar_select %p190, %s19, 1
      %s192 = smul.addr %s191, 8
      %s193 = scalar_lea.vmem %s3, %s192
      %p195 = scmp.eq.s32.totalorder %s20, 0
      // Predicated region
      $region29: #{multi_scale_spectral_loss.8} parent=27 // pred_check
        %p196 = pneg %p195
      $region30: #{multi_scale_spectral_loss.8} parent=27 // pred_check_branch
        %198 = sbr.rel (%p196) target = $region32
      $region31: #{multi_scale_spectral_loss.8} parent=27 // pred_region
        %199 = vst [vmem:[%s189] sm:$0xff] 0.0
        %200 = vst [vmem:[%s193] sm:$0xff] 0.0
      $region32: #{multi_scale_spectral_loss.8} parent=27 // pred_fallthru
        _
      %v201 = vld [vmem:[%s184] sm:$0xf]
      %v202 = vld [vmem:[%s184 + $0x4] sm:$0xf]
      %v203 = vld [vmem:[%s184 + $0x8] sm:$0xf]
      %v204 = vld [vmem:[%s184 + $0xc] sm:$0xf]
      %v205 = vld [vmem:[%s184 + $0x10] sm:$0xf]
      %v206 = vld [vmem:[%s184 + $0x14] sm:$0xf]
      %v207 = vld [vmem:[%s184 + $0x18] sm:$0xf]
      %v208 = vld [vmem:[%s184 + $0x1c] sm:$0xf]
      %v209 = vld [vmem:[%s184 + $0x20] sm:$0xf]
      %v210 = vld [vmem:[%s184 + $0x24] sm:$0xf]
      %v211 = vld [vmem:[%s184 + $0x28] sm:$0xf]
      %v212 = vld [vmem:[%s184 + $0x2c] sm:$0xf]
      %v213 = vld [vmem:[%s184 + $0x30] sm:$0xf]
      %v214 = vld [vmem:[%s184 + $0x34] sm:$0xf]
      %v215 = vld [vmem:[%s184 + $0x38] sm:$0xf]
      %v216 = vld [vmem:[%s184 + $0x3c] sm:$0xf]
      %v217 = vld [vmem:[%s184 + $0x40] sm:$0xf]
      %v218 = vld [vmem:[%s184 + $0x44] sm:$0xf]
      %v219 = vld [vmem:[%s184 + $0x48] sm:$0xf]
      %v220 = vld [vmem:[%s184 + $0x4c] sm:$0xf]
      %v221 = vld [vmem:[%s184 + $0x50] sm:$0xf]
      %v222 = vld [vmem:[%s184 + $0x54] sm:$0xf]
      %v223 = vld [vmem:[%s184 + $0x58] sm:$0xf]
      %v224 = vld [vmem:[%s184 + $0x5c] sm:$0xf]
      %v225 = vld [vmem:[%s184 + $0x60] sm:$0xf]
      %v226 = vld [vmem:[%s184 + $0x64] sm:$0xf]
      %v227 = vld [vmem:[%s184 + $0x68] sm:$0xf]
      %v228 = vld [vmem:[%s184 + $0x6c] sm:$0xf]
      %v229 = vld [vmem:[%s184 + $0x70] sm:$0xf]
      %v230 = vld [vmem:[%s184 + $0x74] sm:$0xf]
      %v231 = vld [vmem:[%s184 + $0x78] sm:$0xf]
      %v232 = vld [vmem:[%s184 + $0x7c] sm:$0xf]
      %v233 = vld [vmem:[%s184 + $0x80] sm:$0xf]
      %v234 = vld [vmem:[%s184 + $0x84] sm:$0xf]
      %v235 = vld [vmem:[%s1] sm:$0xff]
      %v236 = vld [vmem:[%s1 + $0x8] sm:$0xff]
      %v237 = vld [vmem:[%s1 + $0x10] sm:$0xff]
      %v238 = vld [vmem:[%s1 + $0x18] sm:$0xff]
      %v239 = vld [vmem:[%s1 + $0x20] sm:$0xff]
      %v240 = vld [vmem:[%s1 + $0x28] sm:$0xff]
      %v241 = vld [vmem:[%s1 + $0x30] sm:$0xff]
      %v242 = vld [vmem:[%s1 + $0x38] sm:$0xff]
      %v243 = vld [vmem:[%s1 + $0x40] sm:$0xff]
      %v244 = vld [vmem:[%s1 + $0x48] sm:$0xff]
      %v245 = vld [vmem:[%s1 + $0x50] sm:$0xff]
      %v246 = vld [vmem:[%s1 + $0x58] sm:$0xff]
      %v247 = vld [vmem:[%s1 + $0x60] sm:$0xff]
      %v248 = vld [vmem:[%s1 + $0x68] sm:$0xff]
      %v249 = vld [vmem:[%s1 + $0x70] sm:$0xff]
      %v250 = vld [vmem:[%s1 + $0x78] sm:$0xff]
      %v285 = vunpack.c.l.b16 %v201
      %v286 = vunpack.c.l.b16 %v202
      %v287 = vunpack.c.l.b16 %v203
      %v288 = vunpack.c.l.b16 %v204
      %v289 = vunpack.c.l.b16 %v205
      %v290 = vunpack.c.l.b16 %v206
      %v291 = vunpack.c.l.b16 %v207
      %v292 = vunpack.c.l.b16 %v208
      %v293 = vunpack.c.l.b16 %v209
      %v294 = vunpack.c.l.b16 %v210
      %v295 = vunpack.c.l.b16 %v211
      %v296 = vunpack.c.l.b16 %v212
      %v297 = vunpack.c.l.b16 %v213
      %v298 = vunpack.c.l.b16 %v214
      %v299 = vunpack.c.l.b16 %v215
      %v300 = vunpack.c.l.b16 %v216
      %v301 = vunpack.c.l.b16 %v217
      %v302 = vunpack.c.l.b16 %v218
      %v303 = vunpack.c.l.b16 %v219
      %v304 = vunpack.c.l.b16 %v220
      %v305 = vunpack.c.l.b16 %v221
      %v306 = vunpack.c.l.b16 %v222
      %v307 = vunpack.c.l.b16 %v223
      %v308 = vunpack.c.l.b16 %v224
      %v309 = vunpack.c.l.b16 %v225
      %v310 = vunpack.c.l.b16 %v226
      %v311 = vunpack.c.l.b16 %v227
      %v312 = vunpack.c.l.b16 %v228
      %v313 = vunpack.c.l.b16 %v229
      %v314 = vunpack.c.l.b16 %v230
      %v315 = vunpack.c.l.b16 %v231
      %v316 = vunpack.c.l.b16 %v232
      %v317 = vunpack.c.l.b16 %v233
      %v318 = vunpack.c.l.b16 %v234
      %v319 = vpack.c.b16 %v286, %v285
      %v320 = vpack.c.b16 %v288, %v287
      %v321 = vpack.c.b16 %v290, %v289
      %v322 = vpack.c.b16 %v292, %v291
      %v323 = vpack.c.b16 %v294, %v293
      %v324 = vpack.c.b16 %v296, %v295
      %v325 = vpack.c.b16 %v298, %v297
      %v326 = vpack.c.b16 %v300, %v299
      %v327 = vpack.c.b16 %v302, %v301
      %v328 = vpack.c.b16 %v304, %v303
      %v329 = vpack.c.b16 %v306, %v305
      %v330 = vpack.c.b16 %v308, %v307
      %v331 = vpack.c.b16 %v310, %v309
      %v332 = vpack.c.b16 %v312, %v311
      %v333 = vpack.c.b16 %v314, %v313
      %v334 = vpack.c.b16 %v316, %v315
      %v335 = vpack.c.b16 %v318, %v317
      %v369 = vunpack.c.l.b16 %v235
      %v370 = vunpack.c.h.b16 %v235
      %v371 = vunpack.c.l.b16 %v236
      %v372 = vunpack.c.h.b16 %v236
      %v373 = vunpack.c.l.b16 %v237
      %v374 = vunpack.c.h.b16 %v237
      %v375 = vunpack.c.l.b16 %v238
      %v376 = vunpack.c.h.b16 %v238
      %v377 = vunpack.c.l.b16 %v239
      %v378 = vunpack.c.h.b16 %v239
      %v379 = vunpack.c.l.b16 %v240
      %v380 = vunpack.c.h.b16 %v240
      %v381 = vunpack.c.l.b16 %v241
      %v382 = vunpack.c.h.b16 %v241
      %v383 = vunpack.c.l.b16 %v242
      %v384 = vunpack.c.h.b16 %v242
      %v385 = vunpack.c.l.b16 %v243
      %v386 = vunpack.c.h.b16 %v243
      %v387 = vunpack.c.l.b16 %v244
      %v388 = vunpack.c.h.b16 %v244
      %v389 = vunpack.c.l.b16 %v245
      %v390 = vunpack.c.h.b16 %v245
      %v391 = vunpack.c.l.b16 %v246
      %v392 = vunpack.c.h.b16 %v246
      %v393 = vunpack.c.l.b16 %v247
      %v394 = vunpack.c.h.b16 %v247
      %v395 = vunpack.c.l.b16 %v248
      %v396 = vunpack.c.h.b16 %v248
      %v397 = vunpack.c.l.b16 %v249
      %v398 = vunpack.c.h.b16 %v249
      %v399 = vunpack.c.l.b16 %v250
      %v400 = vunpack.c.h.b16 %v250
      %v401 = vpack.c.b16 %v371, %v369
      %v402 = vpack.c.b16 %v372, %v370
      %v403 = vpack.c.b16 %v375, %v373
      %v404 = vpack.c.b16 %v376, %v374
      %v405 = vpack.c.b16 %v379, %v377
      %v406 = vpack.c.b16 %v380, %v378
      %v407 = vpack.c.b16 %v383, %v381
      %v408 = vpack.c.b16 %v384, %v382
      %v409 = vpack.c.b16 %v387, %v385
      %v410 = vpack.c.b16 %v388, %v386
      %v411 = vpack.c.b16 %v391, %v389
      %v412 = vpack.c.b16 %v392, %v390
      %v413 = vpack.c.b16 %v395, %v393
      %v414 = vpack.c.b16 %v396, %v394
      %v415 = vpack.c.b16 %v399, %v397
      %v416 = vpack.c.b16 %v400, %v398
      %433 = vmatprep.subr.bf16.mxu0 %v402
      %434 = vmatpush1.bf16.msra.mxu0 %v401
      %435 = vmatprep.subr.bf16.mxu0 %v404
      %436 = vmatpush1.bf16.msra.mxu0 %v403
      %437 = vmatprep.subr.bf16.mxu0 %v406
      %438 = vmatpush1.bf16.msra.mxu0 %v405
      %439 = vmatprep.subr.bf16.mxu0 %v408
      %440 = vmatpush1.bf16.msra.mxu0 %v407
      %441 = vmatprep.subr.bf16.mxu0 %v410
      %442 = vmatpush1.bf16.msra.mxu0 %v409
      %443 = vmatprep.subr.bf16.mxu0 %v412
      %444 = vmatpush1.bf16.msra.mxu0 %v411
      %445 = vmatprep.subr.bf16.mxu0 %v414
      %446 = vmatpush1.bf16.msra.mxu0 %v413
      %447 = vmatprep.subr.bf16.mxu0 %v416
      %448 = vmatpush1.bf16.msra.mxu0 %v415
      %449 = vmatprep.subr.bf16.mxu0 0
      %450 = vmatpush1.bf16.msra.mxu0 0
      %451 = vmatprep.subr.bf16.mxu0 0
      %452 = vmatpush1.bf16.msra.mxu0 0
      %453 = vmatprep.subr.bf16.mxu0 0
      %454 = vmatpush1.bf16.msra.mxu0 0
      %455 = vmatprep.subr.bf16.mxu0 0
      %456 = vmatpush1.bf16.msra.mxu0 0
      %457 = vmatprep.subr.bf16.mxu0 0
      %458 = vmatpush1.bf16.msra.mxu0 0
      %459 = vmatprep.subr.bf16.mxu0 0
      %460 = vmatpush1.bf16.msra.mxu0 0
      %461 = vmatprep.subr.bf16.mxu0 0
      %462 = vmatpush1.bf16.msra.mxu0 0
      %463 = vmatprep.subr.bf16.mxu0 0
      %464 = vmatpush1.bf16.msra.mxu0 0
      %465 = vmatprep.mubr.bf16.mxu0 0
      %466 = vmatmul.mubr.bf16.gmra.mrb[0].mxu0 %v319
      %v467 = vpop.f32.mrb[0].mxu0
      %v468 = vadd.f32 0.0, %v467
      %v469 = vpop.f32.mrb[0].mxu0
      %v470 = vadd.f32 0.0, %v469
      %v471 = vpop.f32.mrb[0].mxu0
      %v472 = vadd.f32 0.0, %v471
      %v473 = vpop.f32.mrb[0].mxu0
      %v474 = vadd.f32 0.0, %v473
      %475 = vmatprep.mubr.bf16.mxu0 0
      %476 = vmatmul.mubr.bf16.gmra.mrb[0].mxu0 %v320
      %v477 = vpop.f32.mrb[0].mxu0
      %v478 = vadd.f32 0.0, %v477
      %v479 = vpop.f32.mrb[0].mxu0
      %v480 = vadd.f32 0.0, %v479
      %v481 = vpop.f32.mrb[0].mxu0
      %v482 = vadd.f32 0.0, %v481
      %v483 = vpop.f32.mrb[0].mxu0
      %v484 = vadd.f32 0.0, %v483
      %485 = vmatprep.mubr.bf16.mxu0 0
      %486 = vmatmul.mubr.bf16.gmra.mrb[0].mxu0 %v321
      %v487 = vpop.f32.mrb[0].mxu0
      %v488 = vadd.f32 0.0, %v487
      %v489 = vpop.f32.mrb[0].mxu0
      %v490 = vadd.f32 0.0, %v489
      %v491 = vpop.f32.mrb[0].mxu0
      %v492 = vadd.f32 0.0, %v491
      %v493 = vpop.f32.mrb[0].mxu0
      %v494 = vadd.f32 0.0, %v493
      %495 = vmatprep.mubr.bf16.mxu0 0
      %496 = vmatmul.mubr.bf16.gmra.mrb[0].mxu0 %v322
      %v497 = vpop.f32.mrb[0].mxu0
      %v498 = vadd.f32 0.0, %v497
      %v499 = vpop.f32.mrb[0].mxu0
      %v500 = vadd.f32 0.0, %v499
      %v501 = vpop.f32.mrb[0].mxu0
      %v502 = vadd.f32 0.0, %v501
      %v503 = vpop.f32.mrb[0].mxu0
      %v504 = vadd.f32 0.0, %v503
      %505 = vmatprep.mubr.bf16.mxu0 0
      %506 = vmatmul.mubr.bf16.gmra.mrb[0].mxu0 %v323
      %v507 = vpop.f32.mrb[0].mxu0
      %v508 = vadd.f32 0.0, %v507
      %v509 = vpop.f32.mrb[0].mxu0
      %v510 = vadd.f32 0.0, %v509
      %v511 = vpop.f32.mrb[0].mxu0
      %v512 = vadd.f32 0.0, %v511
      %v513 = vpop.f32.mrb[0].mxu0
      %v514 = vadd.f32 0.0, %v513
      %515 = vmatprep.mubr.bf16.mxu0 0
      %516 = vmatmul.mubr.bf16.gmra.mrb[0].mxu0 %v324
      %v517 = vpop.f32.mrb[0].mxu0
      %v518 = vadd.f32 0.0, %v517
      %v519 = vpop.f32.mrb[0].mxu0
      %v520 = vadd.f32 0.0, %v519
      %v521 = vpop.f32.mrb[0].mxu0
      %v522 = vadd.f32 0.0, %v521
      %v523 = vpop.f32.mrb[0].mxu0
      %v524 = vadd.f32 0.0, %v523
      %525 = vmatprep.mubr.bf16.mxu0 0
      %526 = vmatmul.mubr.bf16.gmra.mrb[0].mxu0 %v325
      %v527 = vpop.f32.mrb[0].mxu0
      %v528 = vadd.f32 0.0, %v527
      %v529 = vpop.f32.mrb[0].mxu0
      %v530 = vadd.f32 0.0, %v529
      %v531 = vpop.f32.mrb[0].mxu0
      %v532 = vadd.f32 0.0, %v531
      %v533 = vpop.f32.mrb[0].mxu0
      %v534 = vadd.f32 0.0, %v533
      %535 = vmatprep.mubr.bf16.mxu0 0
      %536 = vmatmul.mubr.bf16.gmra.mrb[0].mxu0 %v326
      %v537 = vpop.f32.mrb[0].mxu0
      %v538 = vadd.f32 0.0, %v537
      %v539 = vpop.f32.mrb[0].mxu0
      %v540 = vadd.f32 0.0, %v539
      %v541 = vpop.f32.mrb[0].mxu0
      %v542 = vadd.f32 0.0, %v541
      %v543 = vpop.f32.mrb[0].mxu0
      %v544 = vadd.f32 0.0, %v543
      %545 = vmatprep.mubr.bf16.mxu0 0
      %546 = vmatmul.mubr.bf16.gmra.mrb[0].mxu0 %v327
      %v547 = vpop.f32.mrb[0].mxu0
      %v548 = vadd.f32 0.0, %v547
      %v549 = vpop.f32.mrb[0].mxu0
      %v550 = vadd.f32 0.0, %v549
      %v551 = vpop.f32.mrb[0].mxu0
      %v552 = vadd.f32 0.0, %v551
      %v553 = vpop.f32.mrb[0].mxu0
      %v554 = vadd.f32 0.0, %v553
      %555 = vmatprep.mubr.bf16.mxu0 0
      %556 = vmatmul.mubr.bf16.gmra.mrb[0].mxu0 %v328
      %v557 = vpop.f32.mrb[0].mxu0
      %v558 = vadd.f32 0.0, %v557
      %v559 = vpop.f32.mrb[0].mxu0
      %v560 = vadd.f32 0.0, %v559
      %v561 = vpop.f32.mrb[0].mxu0
      %v562 = vadd.f32 0.0, %v561
      %v563 = vpop.f32.mrb[0].mxu0
      %v564 = vadd.f32 0.0, %v563
      %565 = vmatprep.mubr.bf16.mxu0 0
      %566 = vmatmul.mubr.bf16.gmra.mrb[0].mxu0 %v329
      %v567 = vpop.f32.mrb[0].mxu0
      %v568 = vadd.f32 0.0, %v567
      %v569 = vpop.f32.mrb[0].mxu0
      %v570 = vadd.f32 0.0, %v569
      %v571 = vpop.f32.mrb[0].mxu0
      %v572 = vadd.f32 0.0, %v571
      %v573 = vpop.f32.mrb[0].mxu0
      %v574 = vadd.f32 0.0, %v573
      %575 = vmatprep.mubr.bf16.mxu0 0
      %576 = vmatmul.mubr.bf16.gmra.mrb[0].mxu0 %v330
      %v577 = vpop.f32.mrb[0].mxu0
      %v578 = vadd.f32 0.0, %v577
      %v579 = vpop.f32.mrb[0].mxu0
      %v580 = vadd.f32 0.0, %v579
      %v581 = vpop.f32.mrb[0].mxu0
      %v582 = vadd.f32 0.0, %v581
      %v583 = vpop.f32.mrb[0].mxu0
      %v584 = vadd.f32 0.0, %v583
      %585 = vmatprep.mubr.bf16.mxu0 0
      %586 = vmatmul.mubr.bf16.gmra.mrb[0].mxu0 %v331
      %v587 = vpop.f32.mrb[0].mxu0
      %v588 = vadd.f32 0.0, %v587
      %v589 = vpop.f32.mrb[0].mxu0
      %v590 = vadd.f32 0.0, %v589
      %v591 = vpop.f32.mrb[0].mxu0
      %v592 = vadd.f32 0.0, %v591
      %v593 = vpop.f32.mrb[0].mxu0
      %v594 = vadd.f32 0.0, %v593
      %595 = vmatprep.mubr.bf16.mxu0 0
      %596 = vmatmul.mubr.bf16.gmra.mrb[0].mxu0 %v332
      %v597 = vpop.f32.mrb[0].mxu0
      %v598 = vadd.f32 0.0, %v597
      %v599 = vpop.f32.mrb[0].mxu0
      %v600 = vadd.f32 0.0, %v599
      %v601 = vpop.f32.mrb[0].mxu0
      %v602 = vadd.f32 0.0, %v601
      %v603 = vpop.f32.mrb[0].mxu0
      %v604 = vadd.f32 0.0, %v603
      %605 = vmatprep.mubr.bf16.mxu0 0
      %606 = vmatmul.mubr.bf16.gmra.mrb[0].mxu0 %v333
      %v607 = vpop.f32.mrb[0].mxu0
      %v608 = vadd.f32 0.0, %v607
      %v609 = vpop.f32.mrb[0].mxu0
      %v610 = vadd.f32 0.0, %v609
      %v611 = vpop.f32.mrb[0].mxu0
      %v612 = vadd.f32 0.0, %v611
      %v613 = vpop.f32.mrb[0].mxu0
      %v614 = vadd.f32 0.0, %v613
      %615 = vmatprep.mubr.bf16.mxu0 0
      %616 = vmatmul.mubr.bf16.gmra.mrb[0].mxu0 %v334
      %v617 = vpop.f32.mrb[0].mxu0
      %v618 = vadd.f32 0.0, %v617
      %v619 = vpop.f32.mrb[0].mxu0
      %v620 = vadd.f32 0.0, %v619
      %v621 = vpop.f32.mrb[0].mxu0
      %v622 = vadd.f32 0.0, %v621
      %v623 = vpop.f32.mrb[0].mxu0
      %v624 = vadd.f32 0.0, %v623
      %625 = vmatprep.mubr.bf16.mxu0 0
      %626 = vmatmul.mubr.bf16.gmra.mrb[0].mxu0 %v335
      %v627 = vpop.f32.mrb[0].mxu0
      %v628 = vadd.f32 0.0, %v627
      %v629 = vpop.f32.mrb[0].mxu0
      %v630 = vadd.f32 0.0, %v629
      %v631 = vpop.f32.mrb[0].mxu0
      %v632 = vadd.f32 0.0, %v631
      %v633 = vpop.f32.mrb[0].mxu0
      %v634 = vadd.f32 0.0, %v633
      %635 = vdwg.mxu0
      %v636 = vmul.f32 %v468, %v468
      %v637 = vmul.f32 %v472, %v472
      %v638 = vmul.f32 %v478, %v478
      %v639 = vmul.f32 %v482, %v482
      %v640 = vmul.f32 %v488, %v488
      %v641 = vmul.f32 %v492, %v492
      %v642 = vmul.f32 %v498, %v498
      %v643 = vmul.f32 %v502, %v502
      %v644 = vmul.f32 %v508, %v508
      %v645 = vmul.f32 %v512, %v512
      %v646 = vmul.f32 %v518, %v518
      %v647 = vmul.f32 %v522, %v522
      %v648 = vmul.f32 %v528, %v528
      %v649 = vmul.f32 %v532, %v532
      %v650 = vmul.f32 %v538, %v538
      %v651 = vmul.f32 %v542, %v542
      %v652 = vmul.f32 %v548, %v548
      %v653 = vmul.f32 %v470, %v470
      %v654 = vmul.f32 %v474, %v474
      %v655 = vmul.f32 %v480, %v480
      %v656 = vmul.f32 %v484, %v484
      %v657 = vmul.f32 %v490, %v490
      %v658 = vmul.f32 %v494, %v494
      %v659 = vmul.f32 %v500, %v500
      %v660 = vmul.f32 %v504, %v504
      %v661 = vmul.f32 %v510, %v510
      %v662 = vmul.f32 %v514, %v514
      %v663 = vmul.f32 %v520, %v520
      %v664 = vmul.f32 %v524, %v524
      %v665 = vmul.f32 %v530, %v530
      %v666 = vmul.f32 %v534, %v534
      %v667 = vmul.f32 %v540, %v540
      %v668 = vmul.f32 %v544, %v544
      %v669 = vmul.f32 %v550, %v550
      %v670 = vadd.f32 %v636, %v653
      %v671 = vadd.f32 %v637, %v654
      %v672 = vadd.f32 %v638, %v655
      %v673 = vadd.f32 %v639, %v656
      %v674 = vadd.f32 %v640, %v657
      %v675 = vadd.f32 %v641, %v658
      %v676 = vadd.f32 %v642, %v659
      %v677 = vadd.f32 %v643, %v660
      %v678 = vadd.f32 %v644, %v661
      %v679 = vadd.f32 %v645, %v662
      %v680 = vadd.f32 %v646, %v663
      %v681 = vadd.f32 %v647, %v664
      %v682 = vadd.f32 %v648, %v665
      %v683 = vadd.f32 %v649, %v666
      %v684 = vadd.f32 %v650, %v667
      %v685 = vadd.f32 %v651, %v668
      %v686 = vadd.f32 %v652, %v669
      %v687 = vmul.f32 %v552, %v552
      %v688 = vmul.f32 %v558, %v558
      %v689 = vmul.f32 %v562, %v562
      %v690 = vmul.f32 %v568, %v568
      %v691 = vmul.f32 %v572, %v572
      %v692 = vmul.f32 %v578, %v578
      %v693 = vmul.f32 %v582, %v582
      %v694 = vmul.f32 %v588, %v588
      %v695 = vmul.f32 %v592, %v592
      %v696 = vmul.f32 %v598, %v598
      %v697 = vmul.f32 %v602, %v602
      %v698 = vmul.f32 %v608, %v608
      %v699 = vmul.f32 %v612, %v612
      %v700 = vmul.f32 %v618, %v618
      %v701 = vmul.f32 %v622, %v622
      %v702 = vmul.f32 %v628, %v628
      %v703 = vmul.f32 %v632, %v632
      %v704 = vmul.f32 %v554, %v554
      %v705 = vmul.f32 %v560, %v560
      %v706 = vmul.f32 %v564, %v564
      %v707 = vmul.f32 %v570, %v570
      %v708 = vmul.f32 %v574, %v574
      %v709 = vmul.f32 %v580, %v580
      %v710 = vmul.f32 %v584, %v584
      %v711 = vmul.f32 %v590, %v590
      %v712 = vmul.f32 %v594, %v594
      %v713 = vmul.f32 %v600, %v600
      %v714 = vmul.f32 %v604, %v604
      %v715 = vmul.f32 %v610, %v610
      %v716 = vmul.f32 %v614, %v614
      %v717 = vmul.f32 %v620, %v620
      %v718 = vmul.f32 %v624, %v624
      %v719 = vmul.f32 %v630, %v630
      %v720 = vmul.f32 %v634, %v634
      %v721 = vadd.f32 %v687, %v704
      %v722 = vadd.f32 %v688, %v705
      %v723 = vadd.f32 %v689, %v706
      %v724 = vadd.f32 %v690, %v707
      %v725 = vadd.f32 %v691, %v708
      %v726 = vadd.f32 %v692, %v709
      %v727 = vadd.f32 %v693, %v710
      %v728 = vadd.f32 %v694, %v711
      %v729 = vadd.f32 %v695, %v712
      %v730 = vadd.f32 %v696, %v713
      %v731 = vadd.f32 %v697, %v714
      %v732 = vadd.f32 %v698, %v715
      %v733 = vadd.f32 %v699, %v716
      %v734 = vadd.f32 %v700, %v717
      %v735 = vadd.f32 %v701, %v718
      %v736 = vadd.f32 %v702, %v719
      %v737 = vadd.f32 %v703, %v720
      %v738 = vsub.f32 %v670, %v721
      %v739 = vsub.f32 %v671, %v722
      %v740 = vsub.f32 %v672, %v723
      %v741 = vsub.f32 %v673, %v724
      %v742 = vsub.f32 %v674, %v725
      %v743 = vsub.f32 %v675, %v726
      %v744 = vsub.f32 %v676, %v727
      %v745 = vsub.f32 %v677, %v728
      %v746 = vsub.f32 %v678, %v729
      %v747 = vsub.f32 %v679, %v730
      %v748 = vsub.f32 %v680, %v731
      %v749 = vsub.f32 %v681, %v732
      %v750 = vsub.f32 %v682, %v733
      %v751 = vsub.f32 %v683, %v734
      %v752 = vsub.f32 %v684, %v735
      %v753 = vsub.f32 %v685, %v736
      %v754 = vsub.f32 %v686, %v737
      %v755 = vand.u32 2147483647, %v738
      %v756 = vand.u32 2147483647, %v739
      %v757 = vand.u32 2147483647, %v740
      %v758 = vand.u32 2147483647, %v741
      %v759 = vand.u32 2147483647, %v742
      %v760 = vand.u32 2147483647, %v743
      %v761 = vand.u32 2147483647, %v744
      %v762 = vand.u32 2147483647, %v745
      %v763 = vand.u32 2147483647, %v746
      %v764 = vand.u32 2147483647, %v747
      %v765 = vand.u32 2147483647, %v748
      %v766 = vand.u32 2147483647, %v749
      %v767 = vand.u32 2147483647, %v750
      %v768 = vand.u32 2147483647, %v751
      %v769 = vand.u32 2147483647, %v752
      %v770 = vand.u32 2147483647, %v753
      %v771 = vand.u32 2147483647, %v754
      %v772 = vadd.f32 %v670, 1e-10
      %v773 = vadd.f32 %v671, 1e-10
      %v774 = vadd.f32 %v672, 1e-10
      %v775 = vadd.f32 %v673, 1e-10
      %v776 = vadd.f32 %v674, 1e-10
      %v777 = vadd.f32 %v675, 1e-10
      %v778 = vadd.f32 %v676, 1e-10
      %v779 = vadd.f32 %v677, 1e-10
      %v780 = vadd.f32 %v678, 1e-10
      %v781 = vadd.f32 %v679, 1e-10
      %v782 = vadd.f32 %v680, 1e-10
      %v783 = vadd.f32 %v681, 1e-10
      %v784 = vadd.f32 %v682, 1e-10
      %v785 = vadd.f32 %v683, 1e-10
      %v786 = vadd.f32 %v684, 1e-10
      %v787 = vadd.f32 %v685, 1e-10
      %v788 = vadd.f32 %v686, 1e-10
      %v789 = vadd.f32 %v721, 1e-10
      %v790 = vadd.f32 %v722, 1e-10
      %v791 = vadd.f32 %v723, 1e-10
      %v792 = vadd.f32 %v724, 1e-10
      %v793 = vadd.f32 %v725, 1e-10
      %v794 = vadd.f32 %v726, 1e-10
      %v795 = vadd.f32 %v727, 1e-10
      %v796 = vadd.f32 %v728, 1e-10
      %v797 = vadd.f32 %v729, 1e-10
      %v798 = vadd.f32 %v730, 1e-10
      %v799 = vadd.f32 %v731, 1e-10
      %v800 = vadd.f32 %v732, 1e-10
      %v801 = vadd.f32 %v733, 1e-10
      %v802 = vadd.f32 %v734, 1e-10
      %v803 = vadd.f32 %v735, 1e-10
      %v804 = vadd.f32 %v736, 1e-10
      %v805 = vadd.f32 %v737, 1e-10
      %v806 = vrcp.pop %v789
      %v807 = vmul.f32 %v772, %v806
      %v808 = vrcp.pop %v790
      %v809 = vmul.f32 %v773, %v808
      %v810 = vrcp.pop %v791
      %v811 = vmul.f32 %v774, %v810
      %v812 = vrcp.pop %v792
      %v813 = vmul.f32 %v775, %v812
      %v814 = vrcp.pop %v793
      %v815 = vmul.f32 %v776, %v814
      %v816 = vrcp.pop %v794
      %v817 = vmul.f32 %v777, %v816
      %v818 = vrcp.pop %v795
      %v819 = vmul.f32 %v778, %v818
      %v820 = vrcp.pop %v796
      %v821 = vmul.f32 %v779, %v820
      %v822 = vrcp.pop %v797
      %v823 = vmul.f32 %v780, %v822
      %v824 = vrcp.pop %v798
      %v825 = vmul.f32 %v781, %v824
      %v826 = vrcp.pop %v799
      %v827 = vmul.f32 %v782, %v826
      %v828 = vrcp.pop %v800
      %v829 = vmul.f32 %v783, %v828
      %v830 = vrcp.pop %v801
      %v831 = vmul.f32 %v784, %v830
      %v832 = vrcp.pop %v802
      %v833 = vmul.f32 %v785, %v832
      %v834 = vrcp.pop %v803
      %v835 = vmul.f32 %v786, %v834
      %v836 = vrcp.pop %v804
      %v837 = vmul.f32 %v787, %v836
      %v838 = vrcp.pop %v805
      %v839 = vmul.f32 %v788, %v838
      %v840 = vlog2.pop %v807
      %v841 = vmul.f32 %v840, 0.6931472
      %v842 = vlog2.pop %v809
      %v843 = vmul.f32 %v842, 0.6931472
      %v844 = vlog2.pop %v811
      %v845 = vmul.f32 %v844, 0.6931472
      %v846 = vlog2.pop %v813
      %v847 = vmul.f32 %v846, 0.6931472
      %v848 = vlog2.pop %v815
      %v849 = vmul.f32 %v848, 0.6931472
      %v850 = vlog2.pop %v817
      %v851 = vmul.f32 %v850, 0.6931472
      %v852 = vlog2.pop %v819
      %v853 = vmul.f32 %v852, 0.6931472
      %v854 = vlog2.pop %v821
      %v855 = vmul.f32 %v854, 0.6931472
      %v856 = vlog2.pop %v823
      %v857 = vmul.f32 %v856, 0.6931472
      %v858 = vlog2.pop %v825
      %v859 = vmul.f32 %v858, 0.6931472
      %v860 = vlog2.pop %v827
      %v861 = vmul.f32 %v860, 0.6931472
      %v862 = vlog2.pop %v829
      %v863 = vmul.f32 %v862, 0.6931472
      %v864 = vlog2.pop %v831
      %v865 = vmul.f32 %v864, 0.6931472
      %v866 = vlog2.pop %v833
      %v867 = vmul.f32 %v866, 0.6931472
      %v868 = vlog2.pop %v835
      %v869 = vmul.f32 %v868, 0.6931472
      %v870 = vlog2.pop %v837
      %v871 = vmul.f32 %v870, 0.6931472
      %v872 = vlog2.pop %v839
      %v873 = vmul.f32 %v872, 0.6931472
      %v874 = vand.u32 2147483647, %v841
      %v875 = vand.u32 2147483647, %v843
      %v876 = vand.u32 2147483647, %v845
      %v877 = vand.u32 2147483647, %v847
      %v878 = vand.u32 2147483647, %v849
      %v879 = vand.u32 2147483647, %v851
      %v880 = vand.u32 2147483647, %v853
      %v881 = vand.u32 2147483647, %v855
      %v882 = vand.u32 2147483647, %v857
      %v883 = vand.u32 2147483647, %v859
      %v884 = vand.u32 2147483647, %v861
      %v885 = vand.u32 2147483647, %v863
      %v886 = vand.u32 2147483647, %v865
      %v887 = vand.u32 2147483647, %v867
      %v888 = vand.u32 2147483647, %v869
      %v889 = vand.u32 2147483647, %v871
      %v890 = vand.u32 2147483647, %v873
      %v891 = vld [vmem:[%s189] sm:$0xff]
      %v892 = vadd.f32 %v755, %v756
      %v893 = vadd.f32 %v892, %v757
      %v894 = vadd.f32 %v893, %v758
      %v895 = vadd.f32 %v894, %v759
      %v896 = vadd.f32 %v895, %v760
      %v897 = vadd.f32 %v896, %v761
      %v898 = vadd.f32 %v897, %v762
      %v899 = vadd.f32 %v898, %v763
      %v900 = vadd.f32 %v899, %v764
      %v901 = vadd.f32 %v900, %v765
      %v902 = vadd.f32 %v901, %v766
      %v903 = vadd.f32 %v902, %v767
      %v904 = vadd.f32 %v903, %v768
      %v905 = vadd.f32 %v904, %v769
      %v906 = vadd.f32 %v905, %v770
      %v907 = vadd.f32 %v906, %v771
      %v908 = vadd.f32 %v891, %v907
      %909 = vst [vmem:[%s189] sm:$0xff] %v908
      %v910 = vld [vmem:[%s193] sm:$0xff]
      %v911 = vadd.f32 %v874, %v875
      %v912 = vadd.f32 %v911, %v876
      %v913 = vadd.f32 %v912, %v877
      %v914 = vadd.f32 %v913, %v878
      %v915 = vadd.f32 %v914, %v879
      %v916 = vadd.f32 %v915, %v880
      %v917 = vadd.f32 %v916, %v881
      %v918 = vadd.f32 %v917, %v882
      %v919 = vadd.f32 %v918, %v883
      %v920 = vadd.f32 %v919, %v884
      %v921 = vadd.f32 %v920, %v885
      %v922 = vadd.f32 %v921, %v886
      %v923 = vadd.f32 %v922, %v887
      %v924 = vadd.f32 %v923, %v888
      %v925 = vadd.f32 %v924, %v889
      %v926 = vadd.f32 %v925, %v890
      %v927 = vadd.f32 %v910, %v926
      %928 = vst [vmem:[%s193] sm:$0xff] %v927
      %p929 = scmp.lt.s32.totalorder %s19, 1
      %s930 = scalar_select %p929, %s19, 1
      %s931 = smul.addr %s930, 8
      %s932 = scalar_lea.vmem %s2, %s931
      %p933 = scmp.lt.s32.totalorder %s19, 1
      %s934 = scalar_select %p933, %s19, 1
      %s935 = smul.addr %s934, 8
      %s936 = scalar_lea.vmem %s3, %s935
      // Predicated region
      $region33: #{multi_scale_spectral_loss.8} parent=27 // pred_check
        %p937 = pneg %p92
      $region34: #{multi_scale_spectral_loss.8} parent=27 // pred_check_branch
        %939 = sbr.rel (%p937) target = $region36
      $region35: #{multi_scale_spectral_loss.8} parent=27 // pred_region
        _
      $region36: #{multi_scale_spectral_loss.8} parent=27 // pred_fallthru
        _
      // Predicated region
      $region37: #{multi_scale_spectral_loss.8} parent=27 // pred_check
        %p940 = pneg %p118
      $region38: #{multi_scale_spectral_loss.8} parent=27 // pred_check_branch
        %942 = sbr.rel (%p940) target = $region40
      $region39: #{multi_scale_spectral_loss.8} parent=27 // pred_region
        _
      $region40: #{multi_scale_spectral_loss.8} parent=27 // pred_fallthru
        _
    $region28: #{multi_scale_spectral_loss.8} parent=5 // pred_fallthru
      _
    %p943 = scmp.le.s32.totalorder 2, %s10
    // Predicated region
    $region41: #{multi_scale_spectral_loss.8} parent=5 // pred_check
      %p944 = pneg %p943
    $region42: #{multi_scale_spectral_loss.8} parent=5 // pred_check_branch
      %946 = sbr.rel (%p944) target = $region44
    $region43: #{multi_scale_spectral_loss.8} parent=5 // pred_region
      %s947 = ssub.s32 %s10, 2
      // Predicated region
      $region45: #{multi_scale_spectral_loss.8} parent=43 // pred_check
        %p948 = pneg %p98
      $region46: #{multi_scale_spectral_loss.8} parent=43 // pred_check_branch
        %950 = sbr.rel (%p948) target = $region48
      $region47: #{multi_scale_spectral_loss.8} parent=43 // pred_region
        %p951 = scmp.lt.s32.totalorder %s21, 1
        %s952 = scalar_select %p951, %s21, 1
        %s953 = smul.addr %s952, 8
        %s954 = scalar_lea.vmem %s2, %s953
      $region48: #{multi_scale_spectral_loss.8} parent=43 // pred_fallthru
        _
      // Predicated region
      $region49: #{multi_scale_spectral_loss.8} parent=43 // pred_check
        %p955 = pneg %p124
      $region50: #{multi_scale_spectral_loss.8} parent=43 // pred_check_branch
        %957 = sbr.rel (%p955) target = $region52
      $region51: #{multi_scale_spectral_loss.8} parent=43 // pred_region
        %p958 = scmp.lt.s32.totalorder %s21, 1
        %s959 = scalar_select %p958, %s21, 1
        %s960 = smul.addr %s959, 8
        %s961 = scalar_lea.vmem %s3, %s960
      $region52: #{multi_scale_spectral_loss.8} parent=43 // pred_fallthru
        _
    $region44: #{multi_scale_spectral_loss.8} parent=5 // pred_fallthru
      _
  $region6: #{multi_scale_spectral_loss.8} parent=0 // loop_footer
    %s14 = sadd.s32 1, %s10
  $region7: #{multi_scale_spectral_loss.8} parent=0 // loop_footer_branch
    %9 = sbr.rel target = $region3
  $region8: #{multi_scale_spectral_loss.8} parent=0 // loop_exit
    _

// kernel: multi_scale_spectral_loss.9
$region0: #{multi_scale_spectral_loss.9}
  #allocation0 [shape = 'u32[]', space=smem, size = 0x4, offset = 0x4, fixed_abs, tag = 'smem constant byte address 0x4 - core index']
  #allocation1 [shape = 'u32[144,128]{1,0:T(1,128)}', space=vmem, size = 0x12000, scoped, tag = 'internal scratch']
  %s0 = inlined_call_operand.vmem [shape: bf16[1056,64], index: 0, kind: input, shape index: {}]
  %s1 = inlined_call_operand.vmem [shape: bf16[1,64,256], index: 1, kind: input, shape index: {}]
  %s2 = inlined_call_operand.vmem [shape: f32[16,128], index: 2, kind: output, shape index: {0}]
  %s3 = inlined_call_operand.vmem [shape: f32[16,128], index: 3, kind: output, shape index: {1}]
  %4 = xla_tuple %s2, %s3
  %s5 = sld [smem:[#allocation0]]
  $region53: #{multi_scale_spectral_loss.9} parent=0
    _
  %s7 = ssub.s32 1, %s5
  %s8 = scalar_select 0, %s7, %s5
  loop: start=0, step=1, limit=4
  $region2: #{multi_scale_spectral_loss.9} parent=0 // loop_pre_header
    _
  $region3: #{multi_scale_spectral_loss.9} parent=0 // loop_header
    %s10 = sphi 0, %s14
    %p11 = scmp.ge.s32.totalorder %s10, 4
    %s17 = sphi 0, %s29
    %s18 = sphi 0, %s25
    %s19 = sphi 0, %s17
    %s20 = sphi 0, %s18
    %s21 = sphi 0, %s19
    %s22 = sphi 0, %s20
    %s32 = sphi 0, %s34
    %s35 = sphi 0, %s32
    %s36 = sphi 0, %s35
    %s52 = sphi 0, %s36
    %s56 = sphi 0, %s56
    %s58 = sphi 0, %s56
    %s59 = sphi 0, %s58
    %s73 = sphi 0, %s59
    %s79 = sphi 0, %s81
    %s82 = sphi 0, %s79
    %s83 = sphi 0, %s82
    %s99 = sphi 0, %s83
    %s105 = sphi 0, %s107
    %s108 = sphi 0, %s105
    %s109 = sphi 0, %s108
    %s125 = sphi 0, %s109
  $region4: #{multi_scale_spectral_loss.9} parent=0 // loop_header_branch
    %13 = sbr.rel (%p11) target = $region8
  $region5: #{multi_scale_spectral_loss.9} parent=0 // loop_body
    %s15 = ssub.s32 %s10, 1
    %s16 = ssub.s32 %s10, 2
    %s23 = sadd.s32 1, %s18
    %p24 = scmp.ge.s32.totalorder %s23, 1
    %s25 = scalar_select %p24, 0, %s23
    %s26 = sadd.s32 1, %s17
    %s27 = scalar_select %p24, %s26, %s17
    %p28 = scmp.ge.s32.totalorder %s27, 2
    %s29 = scalar_select %p28, 0, %s27
    %s30 = ssub.s32 %s17, %s29
    %p31 = scmp.eq.s32.totalorder %s30, 0
    %s33 = sadd.s32 %s32, 1
    %s34 = scalar_select %p31, %s32, %s33
    %p37 = pneg %p31
    %p38 = scmp.eq.s32.totalorder %s10, 1
    %p39 = por %p37, %p38
    %p40 = scmp.ne.s32.totalorder %s32, %s35
    %p41 = scmp.eq.s32.totalorder %s10, 0
    %p42 = por %p40, %p41
    %p43 = scmp.ne.s32.totalorder %s32, %s35
    %p44 = scmp.eq.s32.totalorder %s15, 1
    %p45 = por %p43, %p44
    %p46 = scmp.ne.s32.totalorder %s35, %s36
    %p47 = scmp.eq.s32.totalorder %s15, 0
    %p48 = por %p46, %p47
    %p49 = scmp.ne.s32.totalorder %s35, %s36
    %p50 = scmp.eq.s32.totalorder %s16, 1
    %p51 = por %p49, %p50
    %p53 = scmp.ne.s32.totalorder %s36, %s52
    %p54 = scmp.eq.s32.totalorder %s16, 0
    %p55 = por %p53, %p54
    %s57 = sadd.s32 %s56, 1
    %p60 = scmp.eq.s32.totalorder %s10, 1
    %p61 = scmp.ne.s32.totalorder %s56, %s58
    %p62 = scmp.eq.s32.totalorder %s10, 0
    %p63 = por %p61, %p62
    %p64 = scmp.ne.s32.totalorder %s56, %s58
    %p65 = scmp.eq.s32.totalorder %s15, 1
    %p66 = por %p64, %p65
    %p67 = scmp.ne.s32.totalorder %s58, %s59
    %p68 = scmp.eq.s32.totalorder %s15, 0
    %p69 = por %p67, %p68
    %p70 = scmp.ne.s32.totalorder %s58, %s59
    %p71 = scmp.eq.s32.totalorder %s16, 1
    %p72 = por %p70, %p71
    %p74 = scmp.ne.s32.totalorder %s59, %s73
    %p75 = scmp.eq.s32.totalorder %s16, 0
    %p76 = por %p74, %p75
    %s77 = ssub.s32 %s17, %s29
    %p78 = scmp.eq.s32.totalorder %s77, 0
    %s80 = sadd.s32 %s79, 1
    %s81 = scalar_select %p78, %s79, %s80
    %p84 = pneg %p78
    %p85 = scmp.eq.s32.totalorder %s10, 1
    %p86 = por %p84, %p85
    %p87 = scmp.ne.s32.totalorder %s79, %s82
    %p88 = scmp.eq.s32.totalorder %s10, 0
    %p89 = por %p87, %p88
    %p90 = scmp.ne.s32.totalorder %s79, %s82
    %p91 = scmp.eq.s32.totalorder %s15, 1
    %p92 = por %p90, %p91
    %p93 = scmp.ne.s32.totalorder %s82, %s83
    %p94 = scmp.eq.s32.totalorder %s15, 0
    %p95 = por %p93, %p94
    %p96 = scmp.ne.s32.totalorder %s82, %s83
    %p97 = scmp.eq.s32.totalorder %s16, 1
    %p98 = por %p96, %p97
    %p100 = scmp.ne.s32.totalorder %s83, %s99
    %p101 = scmp.eq.s32.totalorder %s16, 0
    %p102 = por %p100, %p101
    %s103 = ssub.s32 %s17, %s29
    %p104 = scmp.eq.s32.totalorder %s103, 0
    %s106 = sadd.s32 %s105, 1
    %s107 = scalar_select %p104, %s105, %s106
    %p110 = pneg %p104
    %p111 = scmp.eq.s32.totalorder %s10, 1
    %p112 = por %p110, %p111
    %p113 = scmp.ne.s32.totalorder %s105, %s108
    %p114 = scmp.eq.s32.totalorder %s10, 0
    %p115 = por %p113, %p114
    %p116 = scmp.ne.s32.totalorder %s105, %s108
    %p117 = scmp.eq.s32.totalorder %s15, 1
    %p118 = por %p116, %p117
    %p119 = scmp.ne.s32.totalorder %s108, %s109
    %p120 = scmp.eq.s32.totalorder %s15, 0
    %p121 = por %p119, %p120
    %p122 = scmp.ne.s32.totalorder %s108, %s109
    %p123 = scmp.eq.s32.totalorder %s16, 1
    %p124 = por %p122, %p123
    %p126 = scmp.ne.s32.totalorder %s109, %s125
    %p127 = scmp.eq.s32.totalorder %s16, 0
    %p128 = por %p126, %p127
    %p129 = scmp.le.s32.totalorder 1, %s10
    %p130 = scmp.lt.s32.totalorder %s10, 3
    %p131 = pnand %p129, %p130
    %p132 = pneg %p131
    // Predicated region
    $region9: #{multi_scale_spectral_loss.9} parent=5 // pred_check
      _
    $region10: #{multi_scale_spectral_loss.9} parent=5 // pred_check_branch
      %134 = sbr.rel (%p131) target = $region12
    $region11: #{multi_scale_spectral_loss.9} parent=5 // pred_region
      %s135 = ssub.s32 %s10, 1
      // Predicated region
      $region13: #{multi_scale_spectral_loss.9} parent=11 // pred_check
        %p136 = pneg %p69
      $region14: #{multi_scale_spectral_loss.9} parent=11 // pred_check_branch
        %138 = sbr.rel (%p136) target = $region16
      $region15: #{multi_scale_spectral_loss.9} parent=11 // pred_region
        _
      $region16: #{multi_scale_spectral_loss.9} parent=11 // pred_fallthru
        _
    $region12: #{multi_scale_spectral_loss.9} parent=5 // pred_fallthru
      _
    %p139 = scmp.lt.s32.totalorder %s10, 2
    // Predicated region
    $region17: #{multi_scale_spectral_loss.9} parent=5 // pred_check
      %p140 = pneg %p139
    $region18: #{multi_scale_spectral_loss.9} parent=5 // pred_check_branch
      %142 = sbr.rel (%p140) target = $region20
    $region19: #{multi_scale_spectral_loss.9} parent=5 // pred_region
      // Predicated region
      $region21: #{multi_scale_spectral_loss.9} parent=19 // pred_check
        %p143 = pneg %p42
      $region22: #{multi_scale_spectral_loss.9} parent=19 // pred_check_branch
        %145 = sbr.rel (%p143) target = $region24
      $region23: #{multi_scale_spectral_loss.9} parent=19 // pred_region
        %s146 = smul.u32 66, %s17
        %p147 = scmp.lt.s32.totalorder %s146, 131
        %s148 = scalar_select %p147, %s146, 131
        %s149 = smul.addr %s148, 4
        %s150 = scalar_lea.vmem %s0, %s149
        %s151 = smul.u32 66, %s17
      $region24: #{multi_scale_spectral_loss.9} parent=19 // pred_fallthru
        _
    $region20: #{multi_scale_spectral_loss.9} parent=5 // pred_fallthru
      _
    %p152 = scmp.le.s32.totalorder 1, %s10
    %p153 = scmp.lt.s32.totalorder %s10, 3
    %p154 = pnand %p152, %p153
    %p155 = pneg %p154
    // Predicated region
    $region25: #{multi_scale_spectral_loss.9} parent=5 // pred_check
      _
    $region26: #{multi_scale_spectral_loss.9} parent=5 // pred_check_branch
      %157 = sbr.rel (%p154) target = $region28
    $region27: #{multi_scale_spectral_loss.9} parent=5 // pred_region
      %s158 = ssub.s32 %s10, 1
      %s159 = smul.u32 66, %s19
      %p160 = scmp.lt.s32.totalorder %s159, 131
      %s161 = scalar_select %p160, %s159, 131
      %s162 = smul.addr %s161, 4
      %s163 = scalar_lea.vmem %s0, %s162
      %p164 = pneg %p48
      %p165 = pneg %p45
      %p166 = pneg %p69
      %p167 = pneg %p66
      %p168 = pneg %p95
      %p169 = pneg %p92
      %p170 = scmp.lt.s32.totalorder %s19, 1
      %s171 = scalar_select %p170, %s19, 1
      %s172 = smul.addr %s171, 8
      %s173 = scalar_lea.vmem %s2, %s172
      %p174 = pneg %p121
      %p175 = pneg %p118
      %p176 = scmp.lt.s32.totalorder %s19, 1
      %s177 = scalar_select %p176, %s19, 1
      %s178 = smul.addr %s177, 8
      %s179 = scalar_lea.vmem %s3, %s178
      %s180 = smul.u32 66, %s19
      %p181 = scmp.lt.s32.totalorder %s180, 131
      %s182 = scalar_select %p181, %s180, 131
      %s183 = smul.addr %s182, 4
      %s184 = scalar_lea.vmem %s0, %s183
      %s185 = smul.u32 66, %s19
      %p186 = scmp.lt.s32.totalorder %s19, 1
      %s187 = scalar_select %p186, %s19, 1
      %s188 = smul.addr %s187, 8
      %s189 = scalar_lea.vmem %s2, %s188
      %p190 = scmp.lt.s32.totalorder %s19, 1
      %s191 = scalar_select %p190, %s19, 1
      %s192 = smul.addr %s191, 8
      %s193 = scalar_lea.vmem %s3, %s192
      %p195 = scmp.eq.s32.totalorder %s20, 0
      // Predicated region
      $region29: #{multi_scale_spectral_loss.9} parent=27 // pred_check
        %p196 = pneg %p195
      $region30: #{multi_scale_spectral_loss.9} parent=27 // pred_check_branch
        %198 = sbr.rel (%p196) target = $region32
      $region31: #{multi_scale_spectral_loss.9} parent=27 // pred_region
        %199 = vst [vmem:[%s189] sm:$0xff] 0.0
        %200 = vst [vmem:[%s193] sm:$0xff] 0.0
      $region32: #{multi_scale_spectral_loss.9} parent=27 // pred_fallthru
        _
      %v201 = vld [vmem:[%s184] sm:$0xf]
      %v202 = vld [vmem:[%s184 + $0x4] sm:$0xf]
      %v203 = vld [vmem:[%s184 + $0x8] sm:$0xf]
      %v204 = vld [vmem:[%s184 + $0xc] sm:$0xf]
      %v205 = vld [vmem:[%s184 + $0x10] sm:$0xf]
      %v206 = vld [vmem:[%s184 + $0x14] sm:$0xf]
      %v207 = vld [vmem:[%s184 + $0x18] sm:$0xf]
      %v208 = vld [vmem:[%s184 + $0x1c] sm:$0xf]
      %v209 = vld [vmem:[%s184 + $0x20] sm:$0xf]
      %v210 = vld [vmem:[%s184 + $0x24] sm:$0xf]
      %v211 = vld [vmem:[%s184 + $0x28] sm:$0xf]
      %v212 = vld [vmem:[%s184 + $0x2c] sm:$0xf]
      %v213 = vld [vmem:[%s184 + $0x30] sm:$0xf]
      %v214 = vld [vmem:[%s184 + $0x34] sm:$0xf]
      %v215 = vld [vmem:[%s184 + $0x38] sm:$0xf]
      %v216 = vld [vmem:[%s184 + $0x3c] sm:$0xf]
      %v217 = vld [vmem:[%s184 + $0x40] sm:$0xf]
      %v218 = vld [vmem:[%s184 + $0x44] sm:$0xf]
      %v219 = vld [vmem:[%s184 + $0x48] sm:$0xf]
      %v220 = vld [vmem:[%s184 + $0x4c] sm:$0xf]
      %v221 = vld [vmem:[%s184 + $0x50] sm:$0xf]
      %v222 = vld [vmem:[%s184 + $0x54] sm:$0xf]
      %v223 = vld [vmem:[%s184 + $0x58] sm:$0xf]
      %v224 = vld [vmem:[%s184 + $0x5c] sm:$0xf]
      %v225 = vld [vmem:[%s184 + $0x60] sm:$0xf]
      %v226 = vld [vmem:[%s184 + $0x64] sm:$0xf]
      %v227 = vld [vmem:[%s184 + $0x68] sm:$0xf]
      %v228 = vld [vmem:[%s184 + $0x6c] sm:$0xf]
      %v229 = vld [vmem:[%s184 + $0x70] sm:$0xf]
      %v230 = vld [vmem:[%s184 + $0x74] sm:$0xf]
      %v231 = vld [vmem:[%s184 + $0x78] sm:$0xf]
      %v232 = vld [vmem:[%s184 + $0x7c] sm:$0xf]
      %v233 = vld [vmem:[%s184 + $0x80] sm:$0xf]
      %v234 = vld [vmem:[%s184 + $0x84] sm:$0xf]
      %v235 = vld [vmem:[%s184 + $0x88] sm:$0xf]
      %v236 = vld [vmem:[%s184 + $0x8c] sm:$0xf]
      %v237 = vld [vmem:[%s184 + $0x90] sm:$0xf]
      %v238 = vld [vmem:[%s184 + $0x94] sm:$0xf]
      %v239 = vld [vmem:[%s184 + $0x98] sm:$0xf]
      %v240 = vld [vmem:[%s184 + $0x9c] sm:$0xf]
      %v241 = vld [vmem:[%s184 + $0xa0] sm:$0xf]
      %v242 = vld [vmem:[%s184 + $0xa4] sm:$0xf]
      %v243 = vld [vmem:[%s184 + $0xa8] sm:$0xf]
      %v244 = vld [vmem:[%s184 + $0xac] sm:$0xf]
      %v245 = vld [vmem:[%s184 + $0xb0] sm:$0xf]
      %v246 = vld [vmem:[%s184 + $0xb4] sm:$0xf]
      %v247 = vld [vmem:[%s184 + $0xb8] sm:$0xf]
      %v248 = vld [vmem:[%s184 + $0xbc] sm:$0xf]
      %v249 = vld [vmem:[%s184 + $0xc0] sm:$0xf]
      %v250 = vld [vmem:[%s184 + $0xc4] sm:$0xf]
      %v251 = vld [vmem:[%s184 + $0xc8] sm:$0xf]
      %v252 = vld [vmem:[%s184 + $0xcc] sm:$0xf]
      %v253 = vld [vmem:[%s184 + $0xd0] sm:$0xf]
      %v254 = vld [vmem:[%s184 + $0xd4] sm:$0xf]
      %v255 = vld [vmem:[%s184 + $0xd8] sm:$0xf]
      %v256 = vld [vmem:[%s184 + $0xdc] sm:$0xf]
      %v257 = vld [vmem:[%s184 + $0xe0] sm:$0xf]
      %v258 = vld [vmem:[%s184 + $0xe4] sm:$0xf]
      %v259 = vld [vmem:[%s184 + $0xe8] sm:$0xf]
      %v260 = vld [vmem:[%s184 + $0xec] sm:$0xf]
      %v261 = vld [vmem:[%s184 + $0xf0] sm:$0xf]
      %v262 = vld [vmem:[%s184 + $0xf4] sm:$0xf]
      %v263 = vld [vmem:[%s184 + $0xf8] sm:$0xf]
      %v264 = vld [vmem:[%s184 + $0xfc] sm:$0xf]
      %v265 = vld [vmem:[%s184 + $0x100] sm:$0xf]
      %v266 = vld [vmem:[%s184 + $0x104] sm:$0xf]
      %v267 = vld [vmem:[%s1] sm:$0xff]
      %v268 = vld [vmem:[%s1 + $0x8] sm:$0xff]
      %v269 = vld [vmem:[%s1 + $0x10] sm:$0xff]
      %v270 = vld [vmem:[%s1 + $0x18] sm:$0xff]
      %v271 = vld [vmem:[%s1 + $0x20] sm:$0xff]
      %v272 = vld [vmem:[%s1 + $0x28] sm:$0xff]
      %v273 = vld [vmem:[%s1 + $0x30] sm:$0xff]
      %v274 = vld [vmem:[%s1 + $0x38] sm:$0xff]
      %v341 = vunpack.c.l.b16 %v201
      %v342 = vunpack.c.l.b16 %v202
      %v343 = vunpack.c.l.b16 %v203
      %v344 = vunpack.c.l.b16 %v204
      %v345 = vunpack.c.l.b16 %v205
      %v346 = vunpack.c.l.b16 %v206
      %v347 = vunpack.c.l.b16 %v207
      %v348 = vunpack.c.l.b16 %v208
      %v349 = vunpack.c.l.b16 %v209
      %v350 = vunpack.c.l.b16 %v210
      %v351 = vunpack.c.l.b16 %v211
      %v352 = vunpack.c.l.b16 %v212
      %v353 = vunpack.c.l.b16 %v213
      %v354 = vunpack.c.l.b16 %v214
      %v355 = vunpack.c.l.b16 %v215
      %v356 = vunpack.c.l.b16 %v216
      %v357 = vunpack.c.l.b16 %v217
      %v358 = vunpack.c.l.b16 %v218
      %v359 = vunpack.c.l.b16 %v219
      %v360 = vunpack.c.l.b16 %v220
      %v361 = vunpack.c.l.b16 %v221
      %v362 = vunpack.c.l.b16 %v222
      %v363 = vunpack.c.l.b16 %v223
      %v364 = vunpack.c.l.b16 %v224
      %v365 = vunpack.c.l.b16 %v225
      %v366 = vunpack.c.l.b16 %v226
      %v367 = vunpack.c.l.b16 %v227
      %v368 = vunpack.c.l.b16 %v228
      %v369 = vunpack.c.l.b16 %v229
      %v370 = vunpack.c.l.b16 %v230
      %v371 = vunpack.c.l.b16 %v231
      %v372 = vunpack.c.l.b16 %v232
      %v373 = vunpack.c.l.b16 %v233
      %v374 = vunpack.c.l.b16 %v234
      %v375 = vunpack.c.l.b16 %v235
      %v376 = vunpack.c.l.b16 %v236
      %v377 = vunpack.c.l.b16 %v237
      %v378 = vunpack.c.l.b16 %v238
      %v379 = vunpack.c.l.b16 %v239
      %v380 = vunpack.c.l.b16 %v240
      %v381 = vunpack.c.l.b16 %v241
      %v382 = vunpack.c.l.b16 %v242
      %v383 = vunpack.c.l.b16 %v243
      %v384 = vunpack.c.l.b16 %v244
      %v385 = vunpack.c.l.b16 %v245
      %v386 = vunpack.c.l.b16 %v246
      %v387 = vunpack.c.l.b16 %v247
      %v388 = vunpack.c.l.b16 %v248
      %v389 = vunpack.c.l.b16 %v249
      %v390 = vunpack.c.l.b16 %v250
      %v391 = vunpack.c.l.b16 %v251
      %v392 = vunpack.c.l.b16 %v252
      %v393 = vunpack.c.l.b16 %v253
      %v394 = vunpack.c.l.b16 %v254
      %v395 = vunpack.c.l.b16 %v255
      %v396 = vunpack.c.l.b16 %v256
      %v397 = vunpack.c.l.b16 %v257
      %v398 = vunpack.c.l.b16 %v258
      %v399 = vunpack.c.l.b16 %v259
      %v400 = vunpack.c.l.b16 %v260
      %v401 = vunpack.c.l.b16 %v261
      %v402 = vunpack.c.l.b16 %v262
      %v403 = vunpack.c.l.b16 %v263
      %v404 = vunpack.c.l.b16 %v264
      %v405 = vunpack.c.l.b16 %v265
      %v406 = vunpack.c.l.b16 %v266
      %v407 = vpack.c.b16 %v342, %v341
      %v408 = vpack.c.b16 %v344, %v343
      %v409 = vpack.c.b16 %v346, %v345
      %v410 = vpack.c.b16 %v348, %v347
      %v411 = vpack.c.b16 %v350, %v349
      %v412 = vpack.c.b16 %v352, %v351
      %v413 = vpack.c.b16 %v354, %v353
      %v414 = vpack.c.b16 %v356, %v355
      %v415 = vpack.c.b16 %v358, %v357
      %v416 = vpack.c.b16 %v360, %v359
      %v417 = vpack.c.b16 %v362, %v361
      %v418 = vpack.c.b16 %v364, %v363
      %v419 = vpack.c.b16 %v366, %v365
      %v420 = vpack.c.b16 %v368, %v367
      %v421 = vpack.c.b16 %v370, %v369
      %v422 = vpack.c.b16 %v372, %v371
      %v423 = vpack.c.b16 %v374, %v373
      %v424 = vpack.c.b16 %v376, %v375
      %v425 = vpack.c.b16 %v378, %v377
      %v426 = vpack.c.b16 %v380, %v379
      %v427 = vpack.c.b16 %v382, %v381
      %v428 = vpack.c.b16 %v384, %v383
      %v429 = vpack.c.b16 %v386, %v385
      %v430 = vpack.c.b16 %v388, %v387
      %v431 = vpack.c.b16 %v390, %v389
      %v432 = vpack.c.b16 %v392, %v391
      %v433 = vpack.c.b16 %v394, %v393
      %v434 = vpack.c.b16 %v396, %v395
      %v435 = vpack.c.b16 %v398, %v397
      %v436 = vpack.c.b16 %v400, %v399
      %v437 = vpack.c.b16 %v402, %v401
      %v438 = vpack.c.b16 %v404, %v403
      %v439 = vpack.c.b16 %v406, %v405
      %v448 = vunpack.c.l.b16 %v267
      %v449 = vunpack.c.h.b16 %v267
      %v450 = vunpack.c.l.b16 %v268
      %v451 = vunpack.c.h.b16 %v268
      %v452 = vunpack.c.l.b16 %v269
      %v453 = vunpack.c.h.b16 %v269
      %v454 = vunpack.c.l.b16 %v270
      %v455 = vunpack.c.h.b16 %v270
      %v456 = vunpack.c.l.b16 %v271
      %v457 = vunpack.c.h.b16 %v271
      %v458 = vunpack.c.l.b16 %v272
      %v459 = vunpack.c.h.b16 %v272
      %v460 = vunpack.c.l.b16 %v273
      %v461 = vunpack.c.h.b16 %v273
      %v462 = vunpack.c.l.b16 %v274
      %v463 = vunpack.c.h.b16 %v274
      %v464 = vpack.c.b16 %v450, %v448
      %v465 = vpack.c.b16 %v451, %v449
      %v466 = vpack.c.b16 %v454, %v452
      %v467 = vpack.c.b16 %v455, %v453
      %v468 = vpack.c.b16 %v458, %v456
      %v469 = vpack.c.b16 %v459, %v457
      %v470 = vpack.c.b16 %v462, %v460
      %v471 = vpack.c.b16 %v463, %v461
      %vm480 = vcmask 523264
      %v482 = vsel %vm480, %v407, 0
      %v485 = vsel %vm480, %v408, 0
      %v488 = vsel %vm480, %v409, 0
      %v491 = vsel %vm480, %v410, 0
      %v494 = vsel %vm480, %v411, 0
      %v497 = vsel %vm480, %v412, 0
      %v500 = vsel %vm480, %v413, 0
      %v503 = vsel %vm480, %v414, 0
      %v506 = vsel %vm480, %v415, 0
      %v509 = vsel %vm480, %v416, 0
      %v512 = vsel %vm480, %v417, 0
      %v515 = vsel %vm480, %v418, 0
      %v518 = vsel %vm480, %v419, 0
      %v521 = vsel %vm480, %v420, 0
      %v524 = vsel %vm480, %v421, 0
      %v527 = vsel %vm480, %v422, 0
      %v530 = vsel %vm480, %v423, 0
      %v533 = vsel %vm480, %v424, 0
      %v536 = vsel %vm480, %v425, 0
      %v539 = vsel %vm480, %v426, 0
      %v542 = vsel %vm480, %v427, 0
      %v545 = vsel %vm480, %v428, 0
      %v548 = vsel %vm480, %v429, 0
      %v551 = vsel %vm480, %v430, 0
      %v554 = vsel %vm480, %v431, 0
      %v557 = vsel %vm480, %v432, 0
      %v560 = vsel %vm480, %v433, 0
      %v563 = vsel %vm480, %v434, 0
      %v566 = vsel %vm480, %v435, 0
      %v569 = vsel %vm480, %v436, 0
      %v572 = vsel %vm480, %v437, 0
      %v575 = vsel %vm480, %v438, 0
      %v578 = vsel %vm480, %v439, 0
      %580 = vmatprep.subr.bf16.mxu0 %v465
      %581 = vmatpush1.bf16.msra.mxu0 %v464
      %582 = vmatprep.subr.bf16.mxu0 %v467
      %583 = vmatpush1.bf16.msra.mxu0 %v466
      %584 = vmatprep.subr.bf16.mxu0 %v469
      %585 = vmatpush1.bf16.msra.mxu0 %v468
      %586 = vmatprep.subr.bf16.mxu0 %v471
      %587 = vmatpush1.bf16.msra.mxu0 %v470
      %588 = vmatprep.subr.bf16.mxu0 0
      %589 = vmatpush1.bf16.msra.mxu0 0
      %590 = vmatprep.subr.bf16.mxu0 0
      %591 = vmatpush1.bf16.msra.mxu0 0
      %592 = vmatprep.subr.bf16.mxu0 0
      %593 = vmatpush1.bf16.msra.mxu0 0
      %594 = vmatprep.subr.bf16.mxu0 0
      %595 = vmatpush1.bf16.msra.mxu0 0
      %596 = vmatprep.subr.bf16.mxu0 0
      %597 = vmatpush1.bf16.msra.mxu0 0
      %598 = vmatprep.subr.bf16.mxu0 0
      %599 = vmatpush1.bf16.msra.mxu0 0
      %600 = vmatprep.subr.bf16.mxu0 0
      %601 = vmatpush1.bf16.msra.mxu0 0
      %602 = vmatprep.subr.bf16.mxu0 0
      %603 = vmatpush1.bf16.msra.mxu0 0
      %604 = vmatprep.subr.bf16.mxu0 0
      %605 = vmatpush1.bf16.msra.mxu0 0
      %606 = vmatprep.subr.bf16.mxu0 0
      %607 = vmatpush1.bf16.msra.mxu0 0
      %608 = vmatprep.subr.bf16.mxu0 0
      %609 = vmatpush1.bf16.msra.mxu0 0
      %610 = vmatprep.subr.bf16.mxu0 0
      %611 = vmatpush1.bf16.msra.mxu0 0
      %612 = vmatprep.mubr.bf16.mxu0 0
      %613 = vmatmul.mubr.bf16.gmra.mrb[0].mxu0 %v482
      %v614 = vpop.f32.mrb[0].mxu0
      %v615 = vadd.f32 0.0, %v614
      %v616 = vpop.f32.mrb[0].mxu0
      %v617 = vadd.f32 0.0, %v616
      %v618 = vpop.f32.mrb[0].mxu0
      %v619 = vadd.f32 0.0, %v618
      %v620 = vpop.f32.mrb[0].mxu0
      %v621 = vadd.f32 0.0, %v620
      %622 = vmatprep.mubr.bf16.mxu0 0
      %623 = vmatmul.mubr.bf16.gmra.mrb[0].mxu0 %v485
      %v624 = vpop.f32.mrb[0].mxu0
      %v625 = vadd.f32 0.0, %v624
      %v626 = vpop.f32.mrb[0].mxu0
      %v627 = vadd.f32 0.0, %v626
      %v628 = vpop.f32.mrb[0].mxu0
      %v629 = vadd.f32 0.0, %v628
      %v630 = vpop.f32.mrb[0].mxu0
      %v631 = vadd.f32 0.0, %v630
      %632 = vmatprep.mubr.bf16.mxu0 0
      %633 = vmatmul.mubr.bf16.gmra.mrb[0].mxu0 %v488
      %v634 = vpop.f32.mrb[0].mxu0
      %v635 = vadd.f32 0.0, %v634
      %v636 = vpop.f32.mrb[0].mxu0
      %v637 = vadd.f32 0.0, %v636
      %v638 = vpop.f32.mrb[0].mxu0
      %v639 = vadd.f32 0.0, %v638
      %v640 = vpop.f32.mrb[0].mxu0
      %v641 = vadd.f32 0.0, %v640
      %642 = vmatprep.mubr.bf16.mxu0 0
      %643 = vmatmul.mubr.bf16.gmra.mrb[0].mxu0 %v491
      %v644 = vpop.f32.mrb[0].mxu0
      %v645 = vadd.f32 0.0, %v644
      %v646 = vpop.f32.mrb[0].mxu0
      %v647 = vadd.f32 0.0, %v646
      %v648 = vpop.f32.mrb[0].mxu0
      %v649 = vadd.f32 0.0, %v648
      %v650 = vpop.f32.mrb[0].mxu0
      %v651 = vadd.f32 0.0, %v650
      %652 = vmatprep.mubr.bf16.mxu0 0
      %653 = vmatmul.mubr.bf16.gmra.mrb[0].mxu0 %v494
      %v654 = vpop.f32.mrb[0].mxu0
      %v655 = vadd.f32 0.0, %v654
      %v656 = vpop.f32.mrb[0].mxu0
      %v657 = vadd.f32 0.0, %v656
      %v658 = vpop.f32.mrb[0].mxu0
      %v659 = vadd.f32 0.0, %v658
      %v660 = vpop.f32.mrb[0].mxu0
      %v661 = vadd.f32 0.0, %v660
      %662 = vmatprep.mubr.bf16.mxu0 0
      %663 = vmatmul.mubr.bf16.gmra.mrb[0].mxu0 %v497
      %v664 = vpop.f32.mrb[0].mxu0
      %v665 = vadd.f32 0.0, %v664
      %v666 = vpop.f32.mrb[0].mxu0
      %v667 = vadd.f32 0.0, %v666
      %v668 = vpop.f32.mrb[0].mxu0
      %v669 = vadd.f32 0.0, %v668
      %v670 = vpop.f32.mrb[0].mxu0
      %v671 = vadd.f32 0.0, %v670
      %672 = vmatprep.mubr.bf16.mxu0 0
      %673 = vmatmul.mubr.bf16.gmra.mrb[0].mxu0 %v500
      %v674 = vpop.f32.mrb[0].mxu0
      %v675 = vadd.f32 0.0, %v674
      %v676 = vpop.f32.mrb[0].mxu0
      %v677 = vadd.f32 0.0, %v676
      %v678 = vpop.f32.mrb[0].mxu0
      %v679 = vadd.f32 0.0, %v678
      %v680 = vpop.f32.mrb[0].mxu0
      %v681 = vadd.f32 0.0, %v680
      %682 = vmatprep.mubr.bf16.mxu0 0
      %683 = vmatmul.mubr.bf16.gmra.mrb[0].mxu0 %v503
      %v684 = vpop.f32.mrb[0].mxu0
      %v685 = vadd.f32 0.0, %v684
      %v686 = vpop.f32.mrb[0].mxu0
      %v687 = vadd.f32 0.0, %v686
      %v688 = vpop.f32.mrb[0].mxu0
      %v689 = vadd.f32 0.0, %v688
      %v690 = vpop.f32.mrb[0].mxu0
      %v691 = vadd.f32 0.0, %v690
      %692 = vmatprep.mubr.bf16.mxu0 0
      %693 = vmatmul.mubr.bf16.gmra.mrb[0].mxu0 %v506
      %v694 = vpop.f32.mrb[0].mxu0
      %v695 = vadd.f32 0.0, %v694
      %v696 = vpop.f32.mrb[0].mxu0
      %v697 = vadd.f32 0.0, %v696
      %v698 = vpop.f32.mrb[0].mxu0
      %v699 = vadd.f32 0.0, %v698
      %v700 = vpop.f32.mrb[0].mxu0
      %v701 = vadd.f32 0.0, %v700
      %702 = vmatprep.mubr.bf16.mxu0 0
      %703 = vmatmul.mubr.bf16.gmra.mrb[0].mxu0 %v509
      %v704 = vpop.f32.mrb[0].mxu0
      %v705 = vadd.f32 0.0, %v704
      %v706 = vpop.f32.mrb[0].mxu0
      %v707 = vadd.f32 0.0, %v706
      %v708 = vpop.f32.mrb[0].mxu0
      %v709 = vadd.f32 0.0, %v708
      %v710 = vpop.f32.mrb[0].mxu0
      %v711 = vadd.f32 0.0, %v710
      %712 = vmatprep.mubr.bf16.mxu0 0
      %713 = vmatmul.mubr.bf16.gmra.mrb[0].mxu0 %v512
      %v714 = vpop.f32.mrb[0].mxu0
      %v715 = vadd.f32 0.0, %v714
      %v716 = vpop.f32.mrb[0].mxu0
      %v717 = vadd.f32 0.0, %v716
      %v718 = vpop.f32.mrb[0].mxu0
      %v719 = vadd.f32 0.0, %v718
      %v720 = vpop.f32.mrb[0].mxu0
      %v721 = vadd.f32 0.0, %v720
      %722 = vmatprep.mubr.bf16.mxu0 0
      %723 = vmatmul.mubr.bf16.gmra.mrb[0].mxu0 %v515
      %v724 = vpop.f32.mrb[0].mxu0
      %v725 = vadd.f32 0.0, %v724
      %v726 = vpop.f32.mrb[0].mxu0
      %v727 = vadd.f32 0.0, %v726
      %v728 = vpop.f32.mrb[0].mxu0
      %v729 = vadd.f32 0.0, %v728
      %v730 = vpop.f32.mrb[0].mxu0
      %v731 = vadd.f32 0.0, %v730
      %732 = vmatprep.mubr.bf16.mxu0 0
      %733 = vmatmul.mubr.bf16.gmra.mrb[0].mxu0 %v518
      %v734 = vpop.f32.mrb[0].mxu0
      %v735 = vadd.f32 0.0, %v734
      %v736 = vpop.f32.mrb[0].mxu0
      %v737 = vadd.f32 0.0, %v736
      %v738 = vpop.f32.mrb[0].mxu0
      %v739 = vadd.f32 0.0, %v738
      %v740 = vpop.f32.mrb[0].mxu0
      %v741 = vadd.f32 0.0, %v740
      %742 = vmatprep.mubr.bf16.mxu0 0
      %743 = vmatmul.mubr.bf16.gmra.mrb[0].mxu0 %v521
      %v744 = vpop.f32.mrb[0].mxu0
      %v745 = vadd.f32 0.0, %v744
      %v746 = vpop.f32.mrb[0].mxu0
      %v747 = vadd.f32 0.0, %v746
      %v748 = vpop.f32.mrb[0].mxu0
      %v749 = vadd.f32 0.0, %v748
      %v750 = vpop.f32.mrb[0].mxu0
      %v751 = vadd.f32 0.0, %v750
      %752 = vmatprep.mubr.bf16.mxu0 0
      %753 = vmatmul.mubr.bf16.gmra.mrb[0].mxu0 %v524
      %v754 = vpop.f32.mrb[0].mxu0
      %v755 = vadd.f32 0.0, %v754
      %v756 = vpop.f32.mrb[0].mxu0
      %v757 = vadd.f32 0.0, %v756
      %v758 = vpop.f32.mrb[0].mxu0
      %v759 = vadd.f32 0.0, %v758
      %v760 = vpop.f32.mrb[0].mxu0
      %v761 = vadd.f32 0.0, %v760
      %762 = vmatprep.mubr.bf16.mxu0 0
      %763 = vmatmul.mubr.bf16.gmra.mrb[0].mxu0 %v527
      %v764 = vpop.f32.mrb[0].mxu0
      %v765 = vadd.f32 0.0, %v764
      %v766 = vpop.f32.mrb[0].mxu0
      %v767 = vadd.f32 0.0, %v766
      %v768 = vpop.f32.mrb[0].mxu0
      %v769 = vadd.f32 0.0, %v768
      %v770 = vpop.f32.mrb[0].mxu0
      %v771 = vadd.f32 0.0, %v770
      %772 = vmatprep.mubr.bf16.mxu0 0
      %773 = vmatmul.mubr.bf16.gmra.mrb[0].mxu0 %v530
      %v774 = vpop.f32.mrb[0].mxu0
      %v775 = vadd.f32 0.0, %v774
      %v776 = vpop.f32.mrb[0].mxu0
      %v777 = vadd.f32 0.0, %v776
      %v778 = vpop.f32.mrb[0].mxu0
      %v779 = vadd.f32 0.0, %v778
      %v780 = vpop.f32.mrb[0].mxu0
      %v781 = vadd.f32 0.0, %v780
      %782 = vmatprep.mubr.bf16.mxu0 0
      %783 = vmatmul.mubr.bf16.gmra.mrb[0].mxu0 %v533
      %v784 = vpop.f32.mrb[0].mxu0
      %v785 = vadd.f32 0.0, %v784
      %v786 = vpop.f32.mrb[0].mxu0
      %v787 = vadd.f32 0.0, %v786
      %v788 = vpop.f32.mrb[0].mxu0
      %v789 = vadd.f32 0.0, %v788
      %v790 = vpop.f32.mrb[0].mxu0
      %v791 = vadd.f32 0.0, %v790
      %792 = vmatprep.mubr.bf16.mxu0 0
      %793 = vmatmul.mubr.bf16.gmra.mrb[0].mxu0 %v536
      %v794 = vpop.f32.mrb[0].mxu0
      %v795 = vadd.f32 0.0, %v794
      %v796 = vpop.f32.mrb[0].mxu0
      %v797 = vadd.f32 0.0, %v796
      %v798 = vpop.f32.mrb[0].mxu0
      %v799 = vadd.f32 0.0, %v798
      %v800 = vpop.f32.mrb[0].mxu0
      %v801 = vadd.f32 0.0, %v800
      %802 = vmatprep.mubr.bf16.mxu0 0
      %803 = vmatmul.mubr.bf16.gmra.mrb[0].mxu0 %v539
      %v804 = vpop.f32.mrb[0].mxu0
      %v805 = vadd.f32 0.0, %v804
      %v806 = vpop.f32.mrb[0].mxu0
      %v807 = vadd.f32 0.0, %v806
      %v808 = vpop.f32.mrb[0].mxu0
      %v809 = vadd.f32 0.0, %v808
      %v810 = vpop.f32.mrb[0].mxu0
      %v811 = vadd.f32 0.0, %v810
      %812 = vmatprep.mubr.bf16.mxu0 0
      %813 = vmatmul.mubr.bf16.gmra.mrb[0].mxu0 %v542
      %v814 = vpop.f32.mrb[0].mxu0
      %v815 = vadd.f32 0.0, %v814
      %v816 = vpop.f32.mrb[0].mxu0
      %v817 = vadd.f32 0.0, %v816
      %v818 = vpop.f32.mrb[0].mxu0
      %v819 = vadd.f32 0.0, %v818
      %v820 = vpop.f32.mrb[0].mxu0
      %v821 = vadd.f32 0.0, %v820
      %822 = vmatprep.mubr.bf16.mxu0 0
      %823 = vmatmul.mubr.bf16.gmra.mrb[0].mxu0 %v545
      %v824 = vpop.f32.mrb[0].mxu0
      %v825 = vadd.f32 0.0, %v824
      %v826 = vpop.f32.mrb[0].mxu0
      %v827 = vadd.f32 0.0, %v826
      %v828 = vpop.f32.mrb[0].mxu0
      %v829 = vadd.f32 0.0, %v828
      %v830 = vpop.f32.mrb[0].mxu0
      %v831 = vadd.f32 0.0, %v830
      %832 = vmatprep.mubr.bf16.mxu0 0
      %833 = vmatmul.mubr.bf16.gmra.mrb[0].mxu0 %v548
      %v834 = vpop.f32.mrb[0].mxu0
      %v835 = vadd.f32 0.0, %v834
      %v836 = vpop.f32.mrb[0].mxu0
      %v837 = vadd.f32 0.0, %v836
      %v838 = vpop.f32.mrb[0].mxu0
      %v839 = vadd.f32 0.0, %v838
      %v840 = vpop.f32.mrb[0].mxu0
      %v841 = vadd.f32 0.0, %v840
      %842 = vmatprep.mubr.bf16.mxu0 0
      %843 = vmatmul.mubr.bf16.gmra.mrb[0].mxu0 %v551
      %v844 = vpop.f32.mrb[0].mxu0
      %v845 = vadd.f32 0.0, %v844
      %v846 = vpop.f32.mrb[0].mxu0
      %v847 = vadd.f32 0.0, %v846
      %v848 = vpop.f32.mrb[0].mxu0
      %v849 = vadd.f32 0.0, %v848
      %v850 = vpop.f32.mrb[0].mxu0
      %v851 = vadd.f32 0.0, %v850
      %852 = vmatprep.mubr.bf16.mxu0 0
      %853 = vmatmul.mubr.bf16.gmra.mrb[0].mxu0 %v554
      %v854 = vpop.f32.mrb[0].mxu0
      %v855 = vadd.f32 0.0, %v854
      %v856 = vpop.f32.mrb[0].mxu0
      %v857 = vadd.f32 0.0, %v856
      %v858 = vpop.f32.mrb[0].mxu0
      %v859 = vadd.f32 0.0, %v858
      %v860 = vpop.f32.mrb[0].mxu0
      %v861 = vadd.f32 0.0, %v860
      %862 = vmatprep.mubr.bf16.mxu0 0
      %863 = vmatmul.mubr.bf16.gmra.mrb[0].mxu0 %v557
      %v864 = vpop.f32.mrb[0].mxu0
      %v865 = vadd.f32 0.0, %v864
      %v866 = vpop.f32.mrb[0].mxu0
      %v867 = vadd.f32 0.0, %v866
      %v868 = vpop.f32.mrb[0].mxu0
      %v869 = vadd.f32 0.0, %v868
      %v870 = vpop.f32.mrb[0].mxu0
      %v871 = vadd.f32 0.0, %v870
      %872 = vmatprep.mubr.bf16.mxu0 0
      %873 = vmatmul.mubr.bf16.gmra.mrb[0].mxu0 %v560
      %v874 = vpop.f32.mrb[0].mxu0
      %v875 = vadd.f32 0.0, %v874
      %v876 = vpop.f32.mrb[0].mxu0
      %v877 = vadd.f32 0.0, %v876
      %v878 = vpop.f32.mrb[0].mxu0
      %v879 = vadd.f32 0.0, %v878
      %v880 = vpop.f32.mrb[0].mxu0
      %v881 = vadd.f32 0.0, %v880
      %882 = vmatprep.mubr.bf16.mxu0 0
      %883 = vmatmul.mubr.bf16.gmra.mrb[0].mxu0 %v563
      %v884 = vpop.f32.mrb[0].mxu0
      %v885 = vadd.f32 0.0, %v884
      %v886 = vpop.f32.mrb[0].mxu0
      %v887 = vadd.f32 0.0, %v886
      %v888 = vpop.f32.mrb[0].mxu0
      %v889 = vadd.f32 0.0, %v888
      %v890 = vpop.f32.mrb[0].mxu0
      %v891 = vadd.f32 0.0, %v890
      %892 = vmatprep.mubr.bf16.mxu0 0
      %893 = vmatmul.mubr.bf16.gmra.mrb[0].mxu0 %v566
      %v894 = vpop.f32.mrb[0].mxu0
      %v895 = vadd.f32 0.0, %v894
      %v896 = vpop.f32.mrb[0].mxu0
      %v897 = vadd.f32 0.0, %v896
      %v898 = vpop.f32.mrb[0].mxu0
      %v899 = vadd.f32 0.0, %v898
      %v900 = vpop.f32.mrb[0].mxu0
      %v901 = vadd.f32 0.0, %v900
      %902 = vmatprep.mubr.bf16.mxu0 0
      %903 = vmatmul.mubr.bf16.gmra.mrb[0].mxu0 %v569
      %v904 = vpop.f32.mrb[0].mxu0
      %v905 = vadd.f32 0.0, %v904
      %v906 = vpop.f32.mrb[0].mxu0
      %v907 = vadd.f32 0.0, %v906
      %v908 = vpop.f32.mrb[0].mxu0
      %v909 = vadd.f32 0.0, %v908
      %v910 = vpop.f32.mrb[0].mxu0
      %v911 = vadd.f32 0.0, %v910
      %912 = vmatprep.mubr.bf16.mxu0 0
      %913 = vmatmul.mubr.bf16.gmra.mrb[0].mxu0 %v572
      %v914 = vpop.f32.mrb[0].mxu0
      %v915 = vadd.f32 0.0, %v914
      %v916 = vpop.f32.mrb[0].mxu0
      %v917 = vadd.f32 0.0, %v916
      %v918 = vpop.f32.mrb[0].mxu0
      %v919 = vadd.f32 0.0, %v918
      %v920 = vpop.f32.mrb[0].mxu0
      %v921 = vadd.f32 0.0, %v920
      %922 = vmatprep.mubr.bf16.mxu0 0
      %923 = vmatmul.mubr.bf16.gmra.mrb[0].mxu0 %v575
      %v924 = vpop.f32.mrb[0].mxu0
      %v925 = vadd.f32 0.0, %v924
      %v926 = vpop.f32.mrb[0].mxu0
      %v927 = vadd.f32 0.0, %v926
      %v928 = vpop.f32.mrb[0].mxu0
      %v929 = vadd.f32 0.0, %v928
      %v930 = vpop.f32.mrb[0].mxu0
      %v931 = vadd.f32 0.0, %v930
      %932 = vmatprep.mubr.bf16.mxu0 0
      %933 = vmatmul.mubr.bf16.gmra.mrb[0].mxu0 %v578
      %v934 = vpop.f32.mrb[0].mxu0
      %v935 = vadd.f32 0.0, %v934
      %v936 = vpop.f32.mrb[0].mxu0
      %v937 = vadd.f32 0.0, %v936
      %v938 = vpop.f32.mrb[0].mxu0
      %v939 = vadd.f32 0.0, %v938
      %v940 = vpop.f32.mrb[0].mxu0
      %v941 = vadd.f32 0.0, %v940
      %942 = vdwg.mxu0
      %v943 = vmul.f32 %v615, %v615
      %v944 = vmul.f32 %v619, %v619
      %v945 = vmul.f32 %v625, %v625
      %v946 = vmul.f32 %v629, %v629
      %v947 = vmul.f32 %v635, %v635
      %v948 = vmul.f32 %v639, %v639
      %v949 = vmul.f32 %v645, %v645
      %v950 = vmul.f32 %v649, %v649
      %v951 = vmul.f32 %v655, %v655
      %v952 = vmul.f32 %v659, %v659
      %v953 = vmul.f32 %v665, %v665
      %v954 = vmul.f32 %v669, %v669
      %v955 = vmul.f32 %v675, %v675
      %v956 = vmul.f32 %v679, %v679
      %v957 = vmul.f32 %v685, %v685
      %v958 = vmul.f32 %v689, %v689
      %v959 = vmul.f32 %v695, %v695
      %v960 = vmul.f32 %v699, %v699
      %v961 = vmul.f32 %v705, %v705
      %v962 = vmul.f32 %v709, %v709
      %v963 = vmul.f32 %v715, %v715
      %v964 = vmul.f32 %v719, %v719
      %v965 = vmul.f32 %v725, %v725
      %v966 = vmul.f32 %v729, %v729
      %v967 = vmul.f32 %v735, %v735
      %v968 = vmul.f32 %v739, %v739
      %v969 = vmul.f32 %v745, %v745
      %v970 = vmul.f32 %v749, %v749
      %v971 = vmul.f32 %v755, %v755
      %v972 = vmul.f32 %v759, %v759
      %v973 = vmul.f32 %v765, %v765
      %v974 = vmul.f32 %v769, %v769
      %v975 = vmul.f32 %v775, %v775
      %v976 = vmul.f32 %v617, %v617
      %v977 = vmul.f32 %v621, %v621
      %v978 = vmul.f32 %v627, %v627
      %v979 = vmul.f32 %v631, %v631
      %v980 = vmul.f32 %v637, %v637
      %v981 = vmul.f32 %v641, %v641
      %v982 = vmul.f32 %v647, %v647
      %v983 = vmul.f32 %v651, %v651
      %v984 = vmul.f32 %v657, %v657
      %v985 = vmul.f32 %v661, %v661
      %v986 = vmul.f32 %v667, %v667
      %v987 = vmul.f32 %v671, %v671
      %v988 = vmul.f32 %v677, %v677
      %v989 = vmul.f32 %v681, %v681
      %v990 = vmul.f32 %v687, %v687
      %v991 = vmul.f32 %v691, %v691
      %v992 = vmul.f32 %v697, %v697
      %v993 = vmul.f32 %v701, %v701
      %v994 = vmul.f32 %v707, %v707
      %v995 = vmul.f32 %v711, %v711
      %v996 = vmul.f32 %v717, %v717
      %v997 = vmul.f32 %v721, %v721
      %v998 = vmul.f32 %v727, %v727
      %v999 = vmul.f32 %v731, %v731
      %v1000 = vmul.f32 %v737, %v737
      %v1001 = vmul.f32 %v741, %v741
      %v1002 = vmul.f32 %v747, %v747
      %v1003 = vmul.f32 %v751, %v751
      %v1004 = vmul.f32 %v757, %v757
      %v1005 = vmul.f32 %v761, %v761
      %v1006 = vmul.f32 %v767, %v767
      %v1007 = vmul.f32 %v771, %v771
      %v1008 = vmul.f32 %v777, %v777
      %v1009 = vadd.f32 %v943, %v976
      %v1010 = vadd.f32 %v944, %v977
      %v1011 = vadd.f32 %v945, %v978
      %v1012 = vadd.f32 %v946, %v979
      %v1013 = vadd.f32 %v947, %v980
      %v1014 = vadd.f32 %v948, %v981
      %v1015 = vadd.f32 %v949, %v982
      %v1016 = vadd.f32 %v950, %v983
      %v1017 = vadd.f32 %v951, %v984
      %v1018 = vadd.f32 %v952, %v985
      %v1019 = vadd.f32 %v953, %v986
      %v1020 = vadd.f32 %v954, %v987
      %v1021 = vadd.f32 %v955, %v988
      %v1022 = vadd.f32 %v956, %v989
      %v1023 = vadd.f32 %v957, %v990
      %v1024 = vadd.f32 %v958, %v991
      %v1025 = vadd.f32 %v959, %v992
      %v1026 = vadd.f32 %v960, %v993
      %v1027 = vadd.f32 %v961, %v994
      %v1028 = vadd.f32 %v962, %v995
      %v1029 = vadd.f32 %v963, %v996
      %v1030 = vadd.f32 %v964, %v997
      %v1031 = vadd.f32 %v965, %v998
      %v1032 = vadd.f32 %v966, %v999
      %v1033 = vadd.f32 %v967, %v1000
      %v1034 = vadd.f32 %v968, %v1001
      %v1035 = vadd.f32 %v969, %v1002
      %v1036 = vadd.f32 %v970, %v1003
      %v1037 = vadd.f32 %v971, %v1004
      %v1038 = vadd.f32 %v972, %v1005
      %v1039 = vadd.f32 %v973, %v1006
      %v1040 = vadd.f32 %v974, %v1007
      %v1041 = vadd.f32 %v975, %v1008
      %v1042 = vmul.f32 %v779, %v779
      %v1043 = vmul.f32 %v785, %v785
      %v1044 = vmul.f32 %v789, %v789
      %v1045 = vmul.f32 %v795, %v795
      %v1046 = vmul.f32 %v799, %v799
      %v1047 = vmul.f32 %v805, %v805
      %v1048 = vmul.f32 %v809, %v809
      %v1049 = vmul.f32 %v815, %v815
      %v1050 = vmul.f32 %v819, %v819
      %v1051 = vmul.f32 %v825, %v825
      %v1052 = vmul.f32 %v829, %v829
      %v1053 = vmul.f32 %v835, %v835
      %v1054 = vmul.f32 %v839, %v839
      %v1055 = vmul.f32 %v845, %v845
      %v1056 = vmul.f32 %v849, %v849
      %v1057 = vmul.f32 %v855, %v855
      %v1058 = vmul.f32 %v859, %v859
      %v1059 = vmul.f32 %v865, %v865
      %v1060 = vmul.f32 %v869, %v869
      %v1061 = vmul.f32 %v875, %v875
      %v1062 = vmul.f32 %v879, %v879
      %v1063 = vmul.f32 %v885, %v885
      %v1064 = vmul.f32 %v889, %v889
      %v1065 = vmul.f32 %v895, %v895
      %v1066 = vmul.f32 %v899, %v899
      %v1067 = vmul.f32 %v905, %v905
      %v1068 = vmul.f32 %v909, %v909
      %v1069 = vmul.f32 %v915, %v915
      %v1070 = vmul.f32 %v919, %v919
      %v1071 = vmul.f32 %v925, %v925
      %v1072 = vmul.f32 %v929, %v929
      %v1073 = vmul.f32 %v935, %v935
      %v1074 = vmul.f32 %v939, %v939
      %v1075 = vmul.f32 %v781, %v781
      %v1076 = vmul.f32 %v787, %v787
      %v1077 = vmul.f32 %v791, %v791
      %v1078 = vmul.f32 %v797, %v797
      %v1079 = vmul.f32 %v801, %v801
      %v1080 = vmul.f32 %v807, %v807
      %v1081 = vmul.f32 %v811, %v811
      %v1082 = vmul.f32 %v817, %v817
      %v1083 = vmul.f32 %v821, %v821
      %v1084 = vmul.f32 %v827, %v827
      %v1085 = vmul.f32 %v831, %v831
      %v1086 = vmul.f32 %v837, %v837
      %v1087 = vmul.f32 %v841, %v841
      %v1088 = vmul.f32 %v847, %v847
      %v1089 = vmul.f32 %v851, %v851
      %v1090 = vmul.f32 %v857, %v857
      %v1091 = vmul.f32 %v861, %v861
      %v1092 = vmul.f32 %v867, %v867
      %v1093 = vmul.f32 %v871, %v871
      %v1094 = vmul.f32 %v877, %v877
      %v1095 = vmul.f32 %v881, %v881
      %v1096 = vmul.f32 %v887, %v887
      %v1097 = vmul.f32 %v891, %v891
      %v1098 = vmul.f32 %v897, %v897
      %v1099 = vmul.f32 %v901, %v901
      %v1100 = vmul.f32 %v907, %v907
      %v1101 = vmul.f32 %v911, %v911
      %v1102 = vmul.f32 %v917, %v917
      %v1103 = vmul.f32 %v921, %v921
      %v1104 = vmul.f32 %v927, %v927
      %v1105 = vmul.f32 %v931, %v931
      %v1106 = vmul.f32 %v937, %v937
      %v1107 = vmul.f32 %v941, %v941
      %v1108 = vadd.f32 %v1042, %v1075
      %v1109 = vadd.f32 %v1043, %v1076
      %v1110 = vadd.f32 %v1044, %v1077
      %v1111 = vadd.f32 %v1045, %v1078
      %v1112 = vadd.f32 %v1046, %v1079
      %v1113 = vadd.f32 %v1047, %v1080
      %v1114 = vadd.f32 %v1048, %v1081
      %v1115 = vadd.f32 %v1049, %v1082
      %v1116 = vadd.f32 %v1050, %v1083
      %v1117 = vadd.f32 %v1051, %v1084
      %v1118 = vadd.f32 %v1052, %v1085
      %v1119 = vadd.f32 %v1053, %v1086
      %v1120 = vadd.f32 %v1054, %v1087
      %v1121 = vadd.f32 %v1055, %v1088
      %v1122 = vadd.f32 %v1056, %v1089
      %v1123 = vadd.f32 %v1057, %v1090
      %v1124 = vadd.f32 %v1058, %v1091
      %v1125 = vadd.f32 %v1059, %v1092
      %v1126 = vadd.f32 %v1060, %v1093
      %v1127 = vadd.f32 %v1061, %v1094
      %v1128 = vadd.f32 %v1062, %v1095
      %v1129 = vadd.f32 %v1063, %v1096
      %v1130 = vadd.f32 %v1064, %v1097
      %v1131 = vadd.f32 %v1065, %v1098
      %v1132 = vadd.f32 %v1066, %v1099
      %v1133 = vadd.f32 %v1067, %v1100
      %v1134 = vadd.f32 %v1068, %v1101
      %v1135 = vadd.f32 %v1069, %v1102
      %v1136 = vadd.f32 %v1070, %v1103
      %v1137 = vadd.f32 %v1071, %v1104
      %v1138 = vadd.f32 %v1072, %v1105
      %v1139 = vadd.f32 %v1073, %v1106
      %v1140 = vadd.f32 %v1074, %v1107
      %v1141 = vsub.f32 %v1009, %v1108
      %v1142 = vsub.f32 %v1010, %v1109
      %v1143 = vsub.f32 %v1011, %v1110
      %v1144 = vsub.f32 %v1012, %v1111
      %v1145 = vsub.f32 %v1013, %v1112
      %v1146 = vsub.f32 %v1014, %v1113
      %v1147 = vsub.f32 %v1015, %v1114
      %v1148 = vsub.f32 %v1016, %v1115
      %v1149 = vsub.f32 %v1017, %v1116
      %v1150 = vsub.f32 %v1018, %v1117
      %v1151 = vsub.f32 %v1019, %v1118
      %v1152 = vsub.f32 %v1020, %v1119
      %v1153 = vsub.f32 %v1021, %v1120
      %v1154 = vsub.f32 %v1022, %v1121
      %v1155 = vsub.f32 %v1023, %v1122
      %v1156 = vsub.f32 %v1024, %v1123
      %v1157 = vsub.f32 %v1025, %v1124
      %v1158 = vsub.f32 %v1026, %v1125
      %v1159 = vsub.f32 %v1027, %v1126
      %v1160 = vsub.f32 %v1028, %v1127
      %v1161 = vsub.f32 %v1029, %v1128
      %v1162 = vsub.f32 %v1030, %v1129
      %v1163 = vsub.f32 %v1031, %v1130
      %v1164 = vsub.f32 %v1032, %v1131
      %v1165 = vsub.f32 %v1033, %v1132
      %v1166 = vsub.f32 %v1034, %v1133
      %v1167 = vsub.f32 %v1035, %v1134
      %v1168 = vsub.f32 %v1036, %v1135
      %v1169 = vsub.f32 %v1037, %v1136
      %v1170 = vsub.f32 %v1038, %v1137
      %v1171 = vsub.f32 %v1039, %v1138
      %v1172 = vsub.f32 %v1040, %v1139
      %v1173 = vsub.f32 %v1041, %v1140
      %v1174 = vand.u32 2147483647, %v1141
      %v1175 = vand.u32 2147483647, %v1142
      %v1176 = vand.u32 2147483647, %v1143
      %v1177 = vand.u32 2147483647, %v1144
      %v1178 = vand.u32 2147483647, %v1145
      %v1179 = vand.u32 2147483647, %v1146
      %v1180 = vand.u32 2147483647, %v1147
      %v1181 = vand.u32 2147483647, %v1148
      %v1182 = vand.u32 2147483647, %v1149
      %v1183 = vand.u32 2147483647, %v1150
      %v1184 = vand.u32 2147483647, %v1151
      %v1185 = vand.u32 2147483647, %v1152
      %v1186 = vand.u32 2147483647, %v1153
      %v1187 = vand.u32 2147483647, %v1154
      %v1188 = vand.u32 2147483647, %v1155
      %v1189 = vand.u32 2147483647, %v1156
      %v1190 = vand.u32 2147483647, %v1157
      %v1191 = vand.u32 2147483647, %v1158
      %v1192 = vand.u32 2147483647, %v1159
      %v1193 = vand.u32 2147483647, %v1160
      %v1194 = vand.u32 2147483647, %v1161
      %v1195 = vand.u32 2147483647, %v1162
      %v1196 = vand.u32 2147483647, %v1163
      %v1197 = vand.u32 2147483647, %v1164
      %v1198 = vand.u32 2147483647, %v1165
      %v1199 = vand.u32 2147483647, %v1166
      %v1200 = vand.u32 2147483647, %v1167
      %v1201 = vand.u32 2147483647, %v1168
      %v1202 = vand.u32 2147483647, %v1169
      %v1203 = vand.u32 2147483647, %v1170
      %v1204 = vand.u32 2147483647, %v1171
      %v1205 = vand.u32 2147483647, %v1172
      %v1206 = vand.u32 2147483647, %v1173
      %v1207 = vadd.f32 %v1009, 1e-10
      %v1208 = vadd.f32 %v1010, 1e-10
      %v1209 = vadd.f32 %v1011, 1e-10
      %v1210 = vadd.f32 %v1012, 1e-10
      %v1211 = vadd.f32 %v1013, 1e-10
      %v1212 = vadd.f32 %v1014, 1e-10
      %v1213 = vadd.f32 %v1015, 1e-10
      %v1214 = vadd.f32 %v1016, 1e-10
      %v1215 = vadd.f32 %v1017, 1e-10
      %v1216 = vadd.f32 %v1018, 1e-10
      %v1217 = vadd.f32 %v1019, 1e-10
      %v1218 = vadd.f32 %v1020, 1e-10
      %v1219 = vadd.f32 %v1021, 1e-10
      %v1220 = vadd.f32 %v1022, 1e-10
      %v1221 = vadd.f32 %v1023, 1e-10
      %v1222 = vadd.f32 %v1024, 1e-10
      %v1223 = vadd.f32 %v1025, 1e-10
      %v1224 = vadd.f32 %v1026, 1e-10
      %v1225 = vadd.f32 %v1027, 1e-10
      %v1226 = vadd.f32 %v1028, 1e-10
      %v1227 = vadd.f32 %v1029, 1e-10
      %v1228 = vadd.f32 %v1030, 1e-10
      %v1229 = vadd.f32 %v1031, 1e-10
      %v1230 = vadd.f32 %v1032, 1e-10
      %v1231 = vadd.f32 %v1033, 1e-10
      %v1232 = vadd.f32 %v1034, 1e-10
      %v1233 = vadd.f32 %v1035, 1e-10
      %v1234 = vadd.f32 %v1036, 1e-10
      %v1235 = vadd.f32 %v1037, 1e-10
      %v1236 = vadd.f32 %v1038, 1e-10
      %v1237 = vadd.f32 %v1039, 1e-10
      %v1238 = vadd.f32 %v1040, 1e-10
      %v1239 = vadd.f32 %v1041, 1e-10
      %v1240 = vadd.f32 %v1108, 1e-10
      %v1241 = vadd.f32 %v1109, 1e-10
      %v1242 = vadd.f32 %v1110, 1e-10
      %v1243 = vadd.f32 %v1111, 1e-10
      %v1244 = vadd.f32 %v1112, 1e-10
      %v1245 = vadd.f32 %v1113, 1e-10
      %v1246 = vadd.f32 %v1114, 1e-10
      %v1247 = vadd.f32 %v1115, 1e-10
      %v1248 = vadd.f32 %v1116, 1e-10
      %v1249 = vadd.f32 %v1117, 1e-10
      %v1250 = vadd.f32 %v1118, 1e-10
      %v1251 = vadd.f32 %v1119, 1e-10
      %v1252 = vadd.f32 %v1120, 1e-10
      %v1253 = vadd.f32 %v1121, 1e-10
      %v1254 = vadd.f32 %v1122, 1e-10
      %v1255 = vadd.f32 %v1123, 1e-10
      %v1256 = vadd.f32 %v1124, 1e-10
      %v1257 = vadd.f32 %v1125, 1e-10
      %v1258 = vadd.f32 %v1126, 1e-10
      %v1259 = vadd.f32 %v1127, 1e-10
      %v1260 = vadd.f32 %v1128, 1e-10
      %v1261 = vadd.f32 %v1129, 1e-10
      %v1262 = vadd.f32 %v1130, 1e-10
      %v1263 = vadd.f32 %v1131, 1e-10
      %v1264 = vadd.f32 %v1132, 1e-10
      %v1265 = vadd.f32 %v1133, 1e-10
      %v1266 = vadd.f32 %v1134, 1e-10
      %v1267 = vadd.f32 %v1135, 1e-10
      %v1268 = vadd.f32 %v1136, 1e-10
      %v1269 = vadd.f32 %v1137, 1e-10
      %v1270 = vadd.f32 %v1138, 1e-10
      %v1271 = vadd.f32 %v1139, 1e-10
      %v1272 = vadd.f32 %v1140, 1e-10
      %v1273 = vrcp.pop %v1240
      %v1274 = vmul.f32 %v1207, %v1273
      %v1275 = vrcp.pop %v1241
      %v1276 = vmul.f32 %v1208, %v1275
      %v1277 = vrcp.pop %v1242
      %v1278 = vmul.f32 %v1209, %v1277
      %v1279 = vrcp.pop %v1243
      %v1280 = vmul.f32 %v1210, %v1279
      %v1281 = vrcp.pop %v1244
      %v1282 = vmul.f32 %v1211, %v1281
      %v1283 = vrcp.pop %v1245
      %v1284 = vmul.f32 %v1212, %v1283
      %v1285 = vrcp.pop %v1246
      %v1286 = vmul.f32 %v1213, %v1285
      %v1287 = vrcp.pop %v1247
      %v1288 = vmul.f32 %v1214, %v1287
      %v1289 = vrcp.pop %v1248
      %v1290 = vmul.f32 %v1215, %v1289
      %v1291 = vrcp.pop %v1249
      %v1292 = vmul.f32 %v1216, %v1291
      %v1293 = vrcp.pop %v1250
      %v1294 = vmul.f32 %v1217, %v1293
      %v1295 = vrcp.pop %v1251
      %v1296 = vmul.f32 %v1218, %v1295
      %v1297 = vrcp.pop %v1252
      %v1298 = vmul.f32 %v1219, %v1297
      %v1299 = vrcp.pop %v1253
      %v1300 = vmul.f32 %v1220, %v1299
      %v1301 = vrcp.pop %v1254
      %v1302 = vmul.f32 %v1221, %v1301
      %v1303 = vrcp.pop %v1255
      %v1304 = vmul.f32 %v1222, %v1303
      %v1305 = vrcp.pop %v1256
      %v1306 = vmul.f32 %v1223, %v1305
      %v1307 = vrcp.pop %v1257
      %v1308 = vmul.f32 %v1224, %v1307
      %v1309 = vrcp.pop %v1258
      %v1310 = vmul.f32 %v1225, %v1309
      %v1311 = vrcp.pop %v1259
      %v1312 = vmul.f32 %v1226, %v1311
      %v1313 = vrcp.pop %v1260
      %v1314 = vmul.f32 %v1227, %v1313
      %v1315 = vrcp.pop %v1261
      %v1316 = vmul.f32 %v1228, %v1315
      %v1317 = vrcp.pop %v1262
      %v1318 = vmul.f32 %v1229, %v1317
      %v1319 = vrcp.pop %v1263
      %v1320 = vmul.f32 %v1230, %v1319
      %v1321 = vrcp.pop %v1264
      %v1322 = vmul.f32 %v1231, %v1321
      %v1323 = vrcp.pop %v1265
      %v1324 = vmul.f32 %v1232, %v1323
      %v1325 = vrcp.pop %v1266
      %v1326 = vmul.f32 %v1233, %v1325
      %v1327 = vrcp.pop %v1267
      %v1328 = vmul.f32 %v1234, %v1327
      %v1329 = vrcp.pop %v1268
      %v1330 = vmul.f32 %v1235, %v1329
      %v1331 = vrcp.pop %v1269
      %v1332 = vmul.f32 %v1236, %v1331
      %v1333 = vrcp.pop %v1270
      %v1334 = vmul.f32 %v1237, %v1333
      %v1335 = vrcp.pop %v1271
      %v1336 = vmul.f32 %v1238, %v1335
      %v1337 = vrcp.pop %v1272
      %v1338 = vmul.f32 %v1239, %v1337
      %v1339 = vlog2.pop %v1274
      %v1340 = vmul.f32 %v1339, 0.6931472
      %v1341 = vlog2.pop %v1276
      %v1342 = vmul.f32 %v1341, 0.6931472
      %v1343 = vlog2.pop %v1278
      %v1344 = vmul.f32 %v1343, 0.6931472
      %v1345 = vlog2.pop %v1280
      %v1346 = vmul.f32 %v1345, 0.6931472
      %v1347 = vlog2.pop %v1282
      %v1348 = vmul.f32 %v1347, 0.6931472
      %v1349 = vlog2.pop %v1284
      %v1350 = vmul.f32 %v1349, 0.6931472
      %v1351 = vlog2.pop %v1286
      %v1352 = vmul.f32 %v1351, 0.6931472
      %v1353 = vlog2.pop %v1288
      %v1354 = vmul.f32 %v1353, 0.6931472
      %v1355 = vlog2.pop %v1290
      %v1356 = vmul.f32 %v1355, 0.6931472
      %v1357 = vlog2.pop %v1292
      %v1358 = vmul.f32 %v1357, 0.6931472
      %v1359 = vlog2.pop %v1294
      %v1360 = vmul.f32 %v1359, 0.6931472
      %v1361 = vlog2.pop %v1296
      %v1362 = vmul.f32 %v1361, 0.6931472
      %v1363 = vlog2.pop %v1298
      %v1364 = vmul.f32 %v1363, 0.6931472
      %v1365 = vlog2.pop %v1300
      %v1366 = vmul.f32 %v1365, 0.6931472
      %v1367 = vlog2.pop %v1302
      %v1368 = vmul.f32 %v1367, 0.6931472
      %v1369 = vlog2.pop %v1304
      %v1370 = vmul.f32 %v1369, 0.6931472
      %v1371 = vlog2.pop %v1306
      %v1372 = vmul.f32 %v1371, 0.6931472
      %v1373 = vlog2.pop %v1308
      %v1374 = vmul.f32 %v1373, 0.6931472
      %v1375 = vlog2.pop %v1310
      %v1376 = vmul.f32 %v1375, 0.6931472
      %v1377 = vlog2.pop %v1312
      %v1378 = vmul.f32 %v1377, 0.6931472
      %v1379 = vlog2.pop %v1314
      %v1380 = vmul.f32 %v1379, 0.6931472
      %v1381 = vlog2.pop %v1316
      %v1382 = vmul.f32 %v1381, 0.6931472
      %v1383 = vlog2.pop %v1318
      %v1384 = vmul.f32 %v1383, 0.6931472
      %v1385 = vlog2.pop %v1320
      %v1386 = vmul.f32 %v1385, 0.6931472
      %v1387 = vlog2.pop %v1322
      %v1388 = vmul.f32 %v1387, 0.6931472
      %v1389 = vlog2.pop %v1324
      %v1390 = vmul.f32 %v1389, 0.6931472
      %v1391 = vlog2.pop %v1326
      %v1392 = vmul.f32 %v1391, 0.6931472
      %v1393 = vlog2.pop %v1328
      %v1394 = vmul.f32 %v1393, 0.6931472
      %v1395 = vlog2.pop %v1330
      %v1396 = vmul.f32 %v1395, 0.6931472
      %v1397 = vlog2.pop %v1332
      %v1398 = vmul.f32 %v1397, 0.6931472
      %v1399 = vlog2.pop %v1334
      %v1400 = vmul.f32 %v1399, 0.6931472
      %v1401 = vlog2.pop %v1336
      %v1402 = vmul.f32 %v1401, 0.6931472
      %v1403 = vlog2.pop %v1338
      %v1404 = vmul.f32 %v1403, 0.6931472
      %v1405 = vand.u32 2147483647, %v1340
      %v1406 = vand.u32 2147483647, %v1342
      %v1407 = vand.u32 2147483647, %v1344
      %v1408 = vand.u32 2147483647, %v1346
      %v1409 = vand.u32 2147483647, %v1348
      %v1410 = vand.u32 2147483647, %v1350
      %v1411 = vand.u32 2147483647, %v1352
      %v1412 = vand.u32 2147483647, %v1354
      %v1413 = vand.u32 2147483647, %v1356
      %v1414 = vand.u32 2147483647, %v1358
      %v1415 = vand.u32 2147483647, %v1360
      %v1416 = vand.u32 2147483647, %v1362
      %v1417 = vand.u32 2147483647, %v1364
      %v1418 = vand.u32 2147483647, %v1366
      %v1419 = vand.u32 2147483647, %v1368
      %v1420 = vand.u32 2147483647, %v1370
      %v1421 = vand.u32 2147483647, %v1372
      %v1422 = vand.u32 2147483647, %v1374
      %v1423 = vand.u32 2147483647, %v1376
      %v1424 = vand.u32 2147483647, %v1378
      %v1425 = vand.u32 2147483647, %v1380
      %v1426 = vand.u32 2147483647, %v1382
      %v1427 = vand.u32 2147483647, %v1384
      %v1428 = vand.u32 2147483647, %v1386
      %v1429 = vand.u32 2147483647, %v1388
      %v1430 = vand.u32 2147483647, %v1390
      %v1431 = vand.u32 2147483647, %v1392
      %v1432 = vand.u32 2147483647, %v1394
      %v1433 = vand.u32 2147483647, %v1396
      %v1434 = vand.u32 2147483647, %v1398
      %v1435 = vand.u32 2147483647, %v1400
      %v1436 = vand.u32 2147483647, %v1402
      %v1437 = vand.u32 2147483647, %v1404
      %v1438 = vld [vmem:[%s189] sm:$0xff]
      %v1439 = vadd.f32 %v1174, %v1175
      %v1440 = vadd.f32 %v1439, %v1176
      %v1441 = vadd.f32 %v1440, %v1177
      %v1442 = vadd.f32 %v1441, %v1178
      %v1443 = vadd.f32 %v1442, %v1179
      %v1444 = vadd.f32 %v1443, %v1180
      %v1445 = vadd.f32 %v1444, %v1181
      %v1446 = vadd.f32 %v1445, %v1182
      %v1447 = vadd.f32 %v1446, %v1183
      %v1448 = vadd.f32 %v1447, %v1184
      %v1449 = vadd.f32 %v1448, %v1185
      %v1450 = vadd.f32 %v1449, %v1186
      %v1451 = vadd.f32 %v1450, %v1187
      %v1452 = vadd.f32 %v1451, %v1188
      %v1453 = vadd.f32 %v1452, %v1189
      %v1454 = vadd.f32 %v1453, %v1190
      %v1455 = vadd.f32 %v1454, %v1191
      %v1456 = vadd.f32 %v1455, %v1192
      %v1457 = vadd.f32 %v1456, %v1193
      %v1458 = vadd.f32 %v1457, %v1194
      %v1459 = vadd.f32 %v1458, %v1195
      %v1460 = vadd.f32 %v1459, %v1196
      %v1461 = vadd.f32 %v1460, %v1197
      %v1462 = vadd.f32 %v1461, %v1198
      %v1463 = vadd.f32 %v1462, %v1199
      %v1464 = vadd.f32 %v1463, %v1200
      %v1465 = vadd.f32 %v1464, %v1201
      %v1466 = vadd.f32 %v1465, %v1202
      %v1467 = vadd.f32 %v1466, %v1203
      %v1468 = vadd.f32 %v1467, %v1204
      %v1469 = vadd.f32 %v1468, %v1205
      %v1470 = vadd.f32 %v1469, %v1206
      %v1471 = vadd.f32 %v1438, %v1470
      %1472 = vst [vmem:[%s189] sm:$0xff] %v1471
      %v1473 = vld [vmem:[%s193] sm:$0xff]
      %v1474 = vadd.f32 %v1405, %v1406
      %v1475 = vadd.f32 %v1474, %v1407
      %v1476 = vadd.f32 %v1475, %v1408
      %v1477 = vadd.f32 %v1476, %v1409
      %v1478 = vadd.f32 %v1477, %v1410
      %v1479 = vadd.f32 %v1478, %v1411
      %v1480 = vadd.f32 %v1479, %v1412
      %v1481 = vadd.f32 %v1480, %v1413
      %v1482 = vadd.f32 %v1481, %v1414
      %v1483 = vadd.f32 %v1482, %v1415
      %v1484 = vadd.f32 %v1483, %v1416
      %v1485 = vadd.f32 %v1484, %v1417
      %v1486 = vadd.f32 %v1485, %v1418
      %v1487 = vadd.f32 %v1486, %v1419
      %v1488 = vadd.f32 %v1487, %v1420
      %v1489 = vadd.f32 %v1488, %v1421
      %v1490 = vadd.f32 %v1489, %v1422
      %v1491 = vadd.f32 %v1490, %v1423
      %v1492 = vadd.f32 %v1491, %v1424
      %v1493 = vadd.f32 %v1492, %v1425
      %v1494 = vadd.f32 %v1493, %v1426
      %v1495 = vadd.f32 %v1494, %v1427
      %v1496 = vadd.f32 %v1495, %v1428
      %v1497 = vadd.f32 %v1496, %v1429
      %v1498 = vadd.f32 %v1497, %v1430
      %v1499 = vadd.f32 %v1498, %v1431
      %v1500 = vadd.f32 %v1499, %v1432
      %v1501 = vadd.f32 %v1500, %v1433
      %v1502 = vadd.f32 %v1501, %v1434
      %v1503 = vadd.f32 %v1502, %v1435
      %v1504 = vadd.f32 %v1503, %v1436
      %v1505 = vadd.f32 %v1504, %v1437
      %v1506 = vadd.f32 %v1473, %v1505
      %1507 = vst [vmem:[%s193] sm:$0xff] %v1506
      %p1508 = scmp.lt.s32.totalorder %s19, 1
      %s1509 = scalar_select %p1508, %s19, 1
      %s1510 = smul.addr %s1509, 8
      %s1511 = scalar_lea.vmem %s2, %s1510
      %p1512 = scmp.lt.s32.totalorder %s19, 1
      %s1513 = scalar_select %p1512, %s19, 1
      %s1514 = smul.addr %s1513, 8
      %s1515 = scalar_lea.vmem %s3, %s1514
      // Predicated region
      $region33: #{multi_scale_spectral_loss.9} parent=27 // pred_check
        %p1516 = pneg %p92
      $region34: #{multi_scale_spectral_loss.9} parent=27 // pred_check_branch
        %1518 = sbr.rel (%p1516) target = $region36
      $region35: #{multi_scale_spectral_loss.9} parent=27 // pred_region
        _
      $region36: #{multi_scale_spectral_loss.9} parent=27 // pred_fallthru
        _
      // Predicated region
      $region37: #{multi_scale_spectral_loss.9} parent=27 // pred_check
        %p1519 = pneg %p118
      $region38: #{multi_scale_spectral_loss.9} parent=27 // pred_check_branch
        %1521 = sbr.rel (%p1519) target = $region40
      $region39: #{multi_scale_spectral_loss.9} parent=27 // pred_region
        _
      $region40: #{multi_scale_spectral_loss.9} parent=27 // pred_fallthru
        _
    $region28: #{multi_scale_spectral_loss.9} parent=5 // pred_fallthru
      _
    %p1522 = scmp.le.s32.totalorder 2, %s10
    // Predicated region
    $region41: #{multi_scale_spectral_loss.9} parent=5 // pred_check
      %p1523 = pneg %p1522
    $region42: #{multi_scale_spectral_loss.9} parent=5 // pred_check_branch
      %1525 = sbr.rel (%p1523) target = $region44
    $region43: #{multi_scale_spectral_loss.9} parent=5 // pred_region
      %s1526 = ssub.s32 %s10, 2
      // Predicated region
      $region45: #{multi_scale_spectral_loss.9} parent=43 // pred_check
        %p1527 = pneg %p98
      $region46: #{multi_scale_spectral_loss.9} parent=43 // pred_check_branch
        %1529 = sbr.rel (%p1527) target = $region48
      $region47: #{multi_scale_spectral_loss.9} parent=43 // pred_region
        %p1530 = scmp.lt.s32.totalorder %s21, 1
        %s1531 = scalar_select %p1530, %s21, 1
        %s1532 = smul.addr %s1531, 8
        %s1533 = scalar_lea.vmem %s2, %s1532
      $region48: #{multi_scale_spectral_loss.9} parent=43 // pred_fallthru
        _
      // Predicated region
      $region49: #{multi_scale_spectral_loss.9} parent=43 // pred_check
        %p1534 = pneg %p124
      $region50: #{multi_scale_spectral_loss.9} parent=43 // pred_check_branch
        %1536 = sbr.rel (%p1534) target = $region52
      $region51: #{multi_scale_spectral_loss.9} parent=43 // pred_region
        %p1537 = scmp.lt.s32.totalorder %s21, 1
        %s1538 = scalar_select %p1537, %s21, 1
        %s1539 = smul.addr %s1538, 8
        %s1540 = scalar_lea.vmem %s3, %s1539
      $region52: #{multi_scale_spectral_loss.9} parent=43 // pred_fallthru
        _
    $region44: #{multi_scale_spectral_loss.9} parent=5 // pred_fallthru
      _
  $region6: #{multi_scale_spectral_loss.9} parent=0 // loop_footer
    %s14 = sadd.s32 1, %s10
  $region7: #{multi_scale_spectral_loss.9} parent=0 // loop_footer_branch
    %9 = sbr.rel target = $region3
  $region8: #{multi_scale_spectral_loss.9} parent=0 // loop_exit
    _

</llo_original>
